<compile_context>
chip_gen: v7x
topology: tpu7x:2x2x1
jax: 0.10.0
libtpu: 0.0.40
codegen_flags: <defaults>
</compile_context>

<pallas_src>
import functools

import jax
import jax.numpy as jnp
import numpy as np
from jax.experimental import pallas as pl
from jax.experimental.pallas import tpu as pltpu


# --------------------------------- kernel -----------------------------------

def _awms_kernel(x_ref, wc_ref, bc_ref, wf_ref, bf_ref, wo_ref, bo_ref,
                 out_ref, pad_ref, *, B, H, W, C):
    # Shapes seen per grid step (B stacked images):
    #   x_ref   : (B, H, W*C)       f32   NHWC rows, lane-dense (lane = W*C)
    #   wc_ref  : (5, W*C, W*C)     bf16  Toeplitz bands, combined 3x3+5x5
    #   wf_ref  : (3, W*C, W*C)     bf16  Toeplitz bands, fuse conv
    #   wo_ref  : (3, W*C, W*Co)    bf16  Toeplitz bands, w_conv
    #   b*_ref  : (1, W*Cout)       f32   per-pixel-tiled biases
    #   out_ref : (B, H, W*Co)      f32
    #   pad_ref : VMEM (B*(H+4), W*C) bf16  stacked pad buffer, 2-row halos
    WC = W * C
    P = H + 4                    # per-image row stride in the pad buffer
    M = B * P - 4                # rows of every big dot (valid + garbage)

    # Zero only the per-image halo ROWS (x-padding lives inside the bands).
    # Done every step on purpose: no program_id==0 guard (megacore-safe).
    z2 = jnp.zeros((2, WC), pad_ref.dtype)
    for i in range(B):
        pad_ref[i * P:i * P + 2, :] = z2
        pad_ref[i * P + H + 2:(i + 1) * P, :] = z2

    # x -> pad interiors (single f32->bf16 cast per row, even row offsets).
    for i in range(B):
        pad_ref[i * P + 2:i * P + 2 + H, :] = x_ref[i].astype(pad_ref.dtype)

    def conv(row0, w_ref, b_ref, relu=False):
        # out[r, :] = bias + sum_dy  pad[row0 + dy + r, :] @ B[dy]
        # Each dot: (M, W*C) x (W*C, n_out) on the MXU, f32 accumulation,
        # contraction = W*C = 256 (exact MXU depth multiple).
        K = w_ref.shape[0]
        n_out = w_ref.shape[2]
        acc = jnp.broadcast_to(b_ref[...], (M, n_out)).astype(jnp.float32)
        for dy in range(K):                           # static unroll: K dots
            acc = acc + jnp.dot(pad_ref[row0 + dy:row0 + dy + M, :],
                                w_ref[dy],
                                preferred_element_type=jnp.float32)
        if relu:
            acc = jnp.maximum(acc, 0.0)
        return acc

    def scatter_to_pad(vals):
        # Keep only each image's H valid rows; halo rows stay zero.
        for i in range(B):
            pad_ref[i * P + 2:i * P + 2 + H, :] = (
                vals[i * P:i * P + H, :].astype(pad_ref.dtype))

    # scale_k3*tail_k3(x) + scale_k5*tail_k5(x), folded into one 5x5 conv.
    scatter_to_pad(conv(0, wc_ref, bc_ref))
    # fuse conv + ReLU (same pad buffer, same stacked layout, row0 = 1).
    scatter_to_pad(conv(1, wf_ref, bf_ref, relu=True))
    # w_conv -> lane-dense output (H, W*Co) per image.
    out = conv(1, wo_ref, bo_ref)
    for i in range(B):
        out_ref[i] = out[i * P:i * P + H, :].astype(out_ref.dtype)


# --------------------------------- wrapper ----------------------------------

def awms_forward(x, ops, images_per_step=None):
    """x: (N, H, W, C) float32 NHWC.  ops: prepared kernel operands."""
    N, H, W, C = x.shape
    WC = W * C
    WCo = ops["bo"].shape[1]
    Co = WCo // W

    # Images stacked per grid step (raises the MXU M-dim).  On v7x keep
    # N // B even so both TensorCores get grid steps under "parallel".
    B = images_per_step if images_per_step is not None else min(N, 8)
    assert N % B == 0, "batch must be divisible by images_per_step"
    grid = (N // B,)

    x2 = x.reshape(N, H, WC).astype(jnp.float32)     # free layout flatten
    kernel = functools.partial(_awms_kernel, B=B, H=H, W=W, C=C)

    def call(single_buffer_weights):
        # Weights/biases never change across grid steps -> single buffer.
        res = ({"pipeline_mode": pl.Buffered(1)}
               if single_buffer_weights else {})
        return pl.pallas_call(
            kernel,
            out_shape=jax.ShapeDtypeStruct((N, H, WCo), jnp.float32),
            grid_spec=pltpu.PrefetchScalarGridSpec(
                num_scalar_prefetch=0,
                grid=grid,
                in_specs=[
                    pl.BlockSpec((B, H, WC), lambda n: (n, 0, 0)),       # x
                    pl.BlockSpec((5, WC, WC), lambda n: (0, 0, 0), **res),
                    pl.BlockSpec((1, WC), lambda n: (0, 0), **res),
                    pl.BlockSpec((3, WC, WC), lambda n: (0, 0, 0), **res),
                    pl.BlockSpec((1, WC), lambda n: (0, 0), **res),
                    pl.BlockSpec((3, WC, WCo), lambda n: (0, 0, 0), **res),
                    pl.BlockSpec((1, WCo), lambda n: (0, 0), **res),
                ],
                out_specs=pl.BlockSpec((B, H, WCo), lambda n: (n, 0, 0)),
                scratch_shapes=[
                    pltpu.VMEM((B * (H + 4), WC), jnp.bfloat16),  # pad buffer
                ],
            ),
            compiler_params=pltpu.CompilerParams(
                dimension_semantics=("parallel",)),
        )(x2, ops["wc"], ops["bc"], ops["wf"], ops["bf"],
          ops["wo"], ops["bo"])

    try:
        out = call(True)
    except Exception:
        # pl.Buffered(1) not supported on this jax build: fall back to the
        # default double-buffering (identical kernel, slightly more VMEM).
        out = call(False)

    return out.reshape(N, H, W, Co)


# ---------------------------- parameter preparation --------------------------

def _wn_conv_params(key, cout, cin, k):
    """Deterministic init of a weight-normed Conv2d; returns HWIO weight + bias."""
    kv, kg, kb = jax.random.split(key, 3)
    v = jax.random.normal(kv, (cout, cin, k, k), jnp.float32) * 0.1
    g = 1.0 + 0.1 * jax.random.normal(kg, (cout,), jnp.float32)
    b = 0.1 * jax.random.normal(kb, (cout,), jnp.float32)
    norm = jnp.sqrt(jnp.sum(v * v, axis=(1, 2, 3), keepdims=True))
    w_oihw = v * (g.reshape(-1, 1, 1, 1) / norm)        # effective WN weight
    w_hwio = jnp.transpose(w_oihw, (2, 3, 1, 0))        # (K, K, Cin, Cout)
    return w_hwio, b


def make_awms_params(key, nf, out_chl):
    k3, k5, kf, ko = jax.random.split(key, 4)
    w3, b3 = _wn_conv_params(k3, nf, nf, 3)
    w5, b5 = _wn_conv_params(k5, nf, nf, 5)
    wf, bf = _wn_conv_params(kf, nf, nf, 3)
    wo, bo = _wn_conv_params(ko, out_chl, nf, 3)
    return dict(w3=w3, b3=b3, w5=w5, b5=b5, wf=wf, bf=bf, wo=wo, bo=bo,
                s3=jnp.float32(0.5), s5=jnp.float32(0.5))   # Scale(0.5)


def _toeplitz_bands(w_hwio, W):
    """HWIO (K,K,Cin,Cout) -> bands (K, W*Cin, W*Cout) with x-SAME padding folded.

    B[dy][wt*Cin+c, ww*Cout+co] = w[dy, wt-ww+K//2, c, co] if |wt-ww| <= K//2
    else 0 (out-of-range taps dropped == zero column padding), so
       conv_row_contrib(dy) = unpadded_row[h + dy - K//2, :] @ B[dy].
    Contraction is exactly W*Cin (256 at toy size).
    """
    w = np.asarray(w_hwio, np.float32)
    K, _, Cin, Cout = w.shape
    p = K // 2
    bands = np.zeros((K, W * Cin, W * Cout), np.float32)
    for dy in range(K):
        for ww in range(W):              # output column
            for dx in range(K):
                wt = ww + dx - p         # input column under SAME padding
                if 0 <= wt < W:
                    bands[dy, wt * Cin:(wt + 1) * Cin,
                          ww * Cout:(ww + 1) * Cout] = w[dy, dx]
    return jnp.asarray(bands)


def _tile_bias(b, W):
    return jnp.tile(b, W).reshape(1, -1).astype(jnp.float32)


def prepare_kernel_operands(params, W):
    """Fold WN+Scale, merge k3/k5 into one 5x5 conv, build Toeplitz bands."""
    # Exact linear fold: 0.5*conv3(x) + 0.5*conv5(x) == conv5_combined(x).
    w_comb = (params["s5"] * params["w5"]
              + params["s3"] * jnp.pad(params["w3"],
                                       ((1, 1), (1, 1), (0, 0), (0, 0))))
    b_comb = params["s5"] * params["b5"] + params["s3"] * params["b3"]

    ops = dict(
        wc=_toeplitz_bands(w_comb, W).astype(jnp.bfloat16),
        bc=_tile_bias(b_comb, W),
        wf=_toeplitz_bands(params["wf"], W).astype(jnp.bfloat16),
        bf=_tile_bias(params["bf"], W),
        wo=_toeplitz_bands(params["wo"], W).astype(jnp.bfloat16),
        bo=_tile_bias(params["bo"], W),
    )
    eff = dict(w_comb=w_comb, b_comb=b_comb,
               wf=params["wf"], bf=params["bf"],
               wo=params["wo"], bo=params["bo"])
    return ops, eff


# ------------------------------ pure-JAX references -------------------------

def _conv_nhwc(x, w, b, in_dtype=None):
    if in_dtype is not None:
        x = x.astype(in_dtype)
        w = w.astype(in_dtype)
    y = jax.lax.conv_general_dilated(
        x, w, window_strides=(1, 1), padding="SAME",
        dimension_numbers=("NHWC", "HWIO", "NHWC"),
        preferred_element_type=jnp.float32)
    return y + b.reshape(1, 1, 1, -1).astype(jnp.float32)


def awms_ref_f32(x, p):
    """Exact f32 module semantics (tail_k3/tail_k5/scales/fuse/w_conv)."""
    x0 = _conv_nhwc(x, p["w3"], p["b3"]) * p["s3"]
    x1 = _conv_nhwc(x, p["w5"], p["b5"]) * p["s5"]
    cur = x0 + x1
    fuse = jax.nn.relu(_conv_nhwc(cur, p["wf"], p["bf"]))
    return _conv_nhwc(fuse, p["wo"], p["bo"])


def awms_ref_matched(x, eff):
    """Reference with the same bf16-operand / f32-accumulate precision."""
    cur = _conv_nhwc(x, eff["w_comb"], eff["b_comb"], in_dtype=jnp.bfloat16)
    fuse = jax.nn.relu(_conv_nhwc(cur, eff["wf"], eff["bf"],
                                  in_dtype=jnp.bfloat16))
    return _conv_nhwc(fuse, eff["wo"], eff["bo"], in_dtype=jnp.bfloat16)


# ----------------------------------- main ------------------------------------

if __name__ == "__main__":
    key = jax.random.PRNGKey(0)
    kx, kp = jax.random.split(key)

    N, H, W = 4, 16, 16
    nf, out_chl = 16, 8

    # NHWC input (the PyTorch module is NCHW (N, nf, H, W); transpose in glue
    # if starting from NCHW data).
    x = jax.random.normal(kx, (N, H, W, nf), jnp.float32)
    params = make_awms_params(kp, nf, out_chl)
    ops, eff = prepare_kernel_operands(params, W)

    # 2 images per grid step -> grid=(2,), M = 2*(H+4)-4 = 36 rows per dot,
    # and the grid stays even for v7x megacore sharding.
    out = jax.block_until_ready(awms_forward(x, ops, images_per_step=2))

    # Tight check against a reference with matched (bf16 x bf16 -> f32) precision.
    ref_matched = jax.block_until_ready(awms_ref_matched(x, eff))
    np.testing.assert_allclose(np.asarray(out), np.asarray(ref_matched),
                               rtol=2e-3, atol=2e-3)

    # Loose check against the exact f32 module semantics (bf16 mixed precision).
    ref_f32 = jax.block_until_ready(awms_ref_f32(x, params))
    np.testing.assert_allclose(np.asarray(out), np.asarray(ref_f32),
                               rtol=5e-2, atol=5e-2)

    print("KERNEL_OK")
</pallas_src>

<mosaic_0001>
module attributes {stable_mosaic.version = 11 : i64} {
  func.func @_awms_kernel(%arg0: i32, %arg1: memref<2x16x256xf32, #tpu.memory_space<vmem>>, %arg2: memref<5x256x256xbf16, #tpu.memory_space<vmem>>, %arg3: memref<1x256xf32, #tpu.memory_space<vmem>>, %arg4: memref<3x256x256xbf16, #tpu.memory_space<vmem>>, %arg5: memref<1x256xf32, #tpu.memory_space<vmem>>, %arg6: memref<3x256x128xbf16, #tpu.memory_space<vmem>>, %arg7: memref<1x128xf32, #tpu.memory_space<vmem>>, %arg8: memref<2x16x128xf32, #tpu.memory_space<vmem>>, %arg9: memref<40x256xbf16, #tpu.memory_space<vmem>>) attributes {dimension_semantics = [#tpu.dimension_semantics<parallel>], iteration_bounds = array<i64: 2>, scalar_prefetch = 0 : i64, scratch_operands = 1 : i64, tpu.core_type = #tpu.core_type<tc>, window_params = [{transform_indices = @transform_0, window_bounds = array<i64: 2, 16, 256>}, {pipeline_mode = #tpu.pipeline_mode<synchronous>, transform_indices = @transform_1, window_bounds = array<i64: 5, 256, 256>}, {pipeline_mode = #tpu.pipeline_mode<synchronous>, transform_indices = @transform_2, window_bounds = array<i64: 1, 256>}, {pipeline_mode = #tpu.pipeline_mode<synchronous>, transform_indices = @transform_3, window_bounds = array<i64: 3, 256, 256>}, {pipeline_mode = #tpu.pipeline_mode<synchronous>, transform_indices = @transform_4, window_bounds = array<i64: 1, 256>}, {pipeline_mode = #tpu.pipeline_mode<synchronous>, transform_indices = @transform_5, window_bounds = array<i64: 3, 256, 128>}, {pipeline_mode = #tpu.pipeline_mode<synchronous>, transform_indices = @transform_6, window_bounds = array<i64: 1, 128>}, {transform_indices = @transform_7, window_bounds = array<i64: 2, 16, 128>}]} {
    %cst = arith.constant 0.000000e+00 : bf16
    %0 = vector.broadcast %cst : bf16 to vector<2x256xbf16>
    %c0 = arith.constant 0 : index
    %c0_0 = arith.constant 0 : index
    %1 = vector.load %arg9[%c0, %c0_0] : memref<40x256xbf16, #tpu.memory_space<vmem>>, vector<2x256xbf16>
    tpu.vector_store %arg9[%c0, %c0_0], %0 {strides = array<i32>} : memref<40x256xbf16, #tpu.memory_space<vmem>>, vector<2x256xbf16>,
    %c18 = arith.constant 18 : index
    %c0_1 = arith.constant 0 : index
    %2 = vector.load %arg9[%c18, %c0_1] : memref<40x256xbf16, #tpu.memory_space<vmem>>, vector<2x256xbf16>
    tpu.vector_store %arg9[%c18, %c0_1], %0 {strides = array<i32>} : memref<40x256xbf16, #tpu.memory_space<vmem>>, vector<2x256xbf16>,
    %c20 = arith.constant 20 : index
    %c0_2 = arith.constant 0 : index
    %3 = vector.load %arg9[%c20, %c0_2] : memref<40x256xbf16, #tpu.memory_space<vmem>>, vector<2x256xbf16>
    tpu.vector_store %arg9[%c20, %c0_2], %0 {strides = array<i32>} : memref<40x256xbf16, #tpu.memory_space<vmem>>, vector<2x256xbf16>,
    %c38 = arith.constant 38 : index
    %c0_3 = arith.constant 0 : index
    %4 = vector.load %arg9[%c38, %c0_3] : memref<40x256xbf16, #tpu.memory_space<vmem>>, vector<2x256xbf16>
    tpu.vector_store %arg9[%c38, %c0_3], %0 {strides = array<i32>} : memref<40x256xbf16, #tpu.memory_space<vmem>>, vector<2x256xbf16>,
    %c0_4 = arith.constant 0 : index
    %c0_5 = arith.constant 0 : index
    %c0_6 = arith.constant 0 : index
    %5 = vector.load %arg1[%c0_4, %c0_5, %c0_6] : memref<2x16x256xf32, #tpu.memory_space<vmem>>, vector<1x16x256xf32>
    %6 = vector.shape_cast %5 : vector<1x16x256xf32> to vector<16x256xf32>
    %7 = arith.truncf %6 : vector<16x256xf32> to vector<16x256xbf16>
    %c2 = arith.constant 2 : index
    %c0_7 = arith.constant 0 : index
    %8 = vector.load %arg9[%c2, %c0_7] : memref<40x256xbf16, #tpu.memory_space<vmem>>, vector<16x256xbf16>
    tpu.vector_store %arg9[%c2, %c0_7], %7 {strides = array<i32>} : memref<40x256xbf16, #tpu.memory_space<vmem>>, vector<16x256xbf16>,
    %c1 = arith.constant 1 : index
    %c0_8 = arith.constant 0 : index
    %c0_9 = arith.constant 0 : index
    %9 = vector.load %arg1[%c1, %c0_8, %c0_9] : memref<2x16x256xf32, #tpu.memory_space<vmem>>, vector<1x16x256xf32>
    %10 = vector.shape_cast %9 : vector<1x16x256xf32> to vector<16x256xf32>
    %11 = arith.truncf %10 : vector<16x256xf32> to vector<16x256xbf16>
    %c22 = arith.constant 22 : index
    %c0_10 = arith.constant 0 : index
    %12 = vector.load %arg9[%c22, %c0_10] : memref<40x256xbf16, #tpu.memory_space<vmem>>, vector<16x256xbf16>
    tpu.vector_store %arg9[%c22, %c0_10], %11 {strides = array<i32>} : memref<40x256xbf16, #tpu.memory_space<vmem>>, vector<16x256xbf16>,
    %c0_11 = arith.constant 0 : index
    %c0_12 = arith.constant 0 : index
    %13 = vector.load %arg3[%c0_11, %c0_12] : memref<1x256xf32, #tpu.memory_space<vmem>>, vector<1x256xf32>
    %14 = vector.shape_cast %13 : vector<1x256xf32> to vector<1x256xf32>
    %15 = vector.broadcast %14 : vector<1x256xf32> to vector<36x256xf32>
    %c0_13 = arith.constant 0 : index
    %c0_14 = arith.constant 0 : index
    %16 = vector.load %arg9[%c0_13, %c0_14] : memref<40x256xbf16, #tpu.memory_space<vmem>>, vector<36x256xbf16>
    %c0_15 = arith.constant 0 : index
    %c0_16 = arith.constant 0 : index
    %c0_17 = arith.constant 0 : index
    %17 = vector.load %arg2[%c0_15, %c0_16, %c0_17] : memref<5x256x256xbf16, #tpu.memory_space<vmem>>, vector<1x256x256xbf16>
    %18 = vector.shape_cast %17 : vector<1x256x256xbf16> to vector<256x256xbf16>
    %cst_18 = arith.constant dense<0.000000e+00> : vector<36x256xf32>
    %19 = tpu.matmul %16, %18, %cst_18 {dimension_numbers = #tpu.dot_dimension_numbers<[1], [0], [0], [1], [0, 0, 1, 1], [], []>} : vector<36x256xbf16>, vector<256x256xbf16>, vector<36x256xf32> -> vector<36x256xf32>
    %20 = arith.addf %15, %19 : vector<36x256xf32>
    %c1_19 = arith.constant 1 : index
    %c0_20 = arith.constant 0 : index
    %21 = vector.load %arg9[%c1_19, %c0_20] : memref<40x256xbf16, #tpu.memory_space<vmem>>, vector<36x256xbf16>
    %c1_21 = arith.constant 1 : index
    %c0_22 = arith.constant 0 : index
    %c0_23 = arith.constant 0 : index
    %22 = vector.load %arg2[%c1_21, %c0_22, %c0_23] : memref<5x256x256xbf16, #tpu.memory_space<vmem>>, vector<1x256x256xbf16>
    %23 = vector.shape_cast %22 : vector<1x256x256xbf16> to vector<256x256xbf16>
    %cst_24 = arith.constant dense<0.000000e+00> : vector<36x256xf32>
    %24 = tpu.matmul %21, %23, %cst_24 {dimension_numbers = #tpu.dot_dimension_numbers<[1], [0], [0], [1], [0, 0, 1, 1], [], []>} : vector<36x256xbf16>, vector<256x256xbf16>, vector<36x256xf32> -> vector<36x256xf32>
    %25 = arith.addf %20, %24 : vector<36x256xf32>
    %c2_25 = arith.constant 2 : index
    %c0_26 = arith.constant 0 : index
    %26 = vector.load %arg9[%c2_25, %c0_26] : memref<40x256xbf16, #tpu.memory_space<vmem>>, vector<36x256xbf16>
    %c2_27 = arith.constant 2 : index
    %c0_28 = arith.constant 0 : index
    %c0_29 = arith.constant 0 : index
    %27 = vector.load %arg2[%c2_27, %c0_28, %c0_29] : memref<5x256x256xbf16, #tpu.memory_space<vmem>>, vector<1x256x256xbf16>
    %28 = vector.shape_cast %27 : vector<1x256x256xbf16> to vector<256x256xbf16>
    %cst_30 = arith.constant dense<0.000000e+00> : vector<36x256xf32>
    %29 = tpu.matmul %26, %28, %cst_30 {dimension_numbers = #tpu.dot_dimension_numbers<[1], [0], [0], [1], [0, 0, 1, 1], [], []>} : vector<36x256xbf16>, vector<256x256xbf16>, vector<36x256xf32> -> vector<36x256xf32>
    %30 = arith.addf %25, %29 : vector<36x256xf32>
    %c3 = arith.constant 3 : index
    %c0_31 = arith.constant 0 : index
    %31 = vector.load %arg9[%c3, %c0_31] : memref<40x256xbf16, #tpu.memory_space<vmem>>, vector<36x256xbf16>
    %c3_32 = arith.constant 3 : index
    %c0_33 = arith.constant 0 : index
    %c0_34 = arith.constant 0 : index
    %32 = vector.load %arg2[%c3_32, %c0_33, %c0_34] : memref<5x256x256xbf16, #tpu.memory_space<vmem>>, vector<1x256x256xbf16>
    %33 = vector.shape_cast %32 : vector<1x256x256xbf16> to vector<256x256xbf16>
    %cst_35 = arith.constant dense<0.000000e+00> : vector<36x256xf32>
    %34 = tpu.matmul %31, %33, %cst_35 {dimension_numbers = #tpu.dot_dimension_numbers<[1], [0], [0], [1], [0, 0, 1, 1], [], []>} : vector<36x256xbf16>, vector<256x256xbf16>, vector<36x256xf32> -> vector<36x256xf32>
    %35 = arith.addf %30, %34 : vector<36x256xf32>
    %c4 = arith.constant 4 : index
    %c0_36 = arith.constant 0 : index
    %36 = vector.load %arg9[%c4, %c0_36] : memref<40x256xbf16, #tpu.memory_space<vmem>>, vector<36x256xbf16>
    %c4_37 = arith.constant 4 : index
    %c0_38 = arith.constant 0 : index
    %c0_39 = arith.constant 0 : index
    %37 = vector.load %arg2[%c4_37, %c0_38, %c0_39] : memref<5x256x256xbf16, #tpu.memory_space<vmem>>, vector<1x256x256xbf16>
    %38 = vector.shape_cast %37 : vector<1x256x256xbf16> to vector<256x256xbf16>
    %cst_40 = arith.constant dense<0.000000e+00> : vector<36x256xf32>
    %39 = tpu.matmul %36, %38, %cst_40 {dimension_numbers = #tpu.dot_dimension_numbers<[1], [0], [0], [1], [0, 0, 1, 1], [], []>} : vector<36x256xbf16>, vector<256x256xbf16>, vector<36x256xf32> -> vector<36x256xf32>
    %40 = arith.addf %35, %39 : vector<36x256xf32>
    %41 = vector.extract_strided_slice %40 {offsets = [0, 0], sizes = [16, 256], strides = [1, 1]} : vector<36x256xf32> to vector<16x256xf32>
    %42 = arith.truncf %41 : vector<16x256xf32> to vector<16x256xbf16>
    %c2_41 = arith.constant 2 : index
    %c0_42 = arith.constant 0 : index
    %43 = vector.load %arg9[%c2_41, %c0_42] : memref<40x256xbf16, #tpu.memory_space<vmem>>, vector<16x256xbf16>
    tpu.vector_store %arg9[%c2_41, %c0_42], %42 {strides = array<i32>} : memref<40x256xbf16, #tpu.memory_space<vmem>>, vector<16x256xbf16>,
    %44 = vector.extract_strided_slice %40 {offsets = [20, 0], sizes = [16, 256], strides = [1, 1]} : vector<36x256xf32> to vector<16x256xf32>
    %45 = arith.truncf %44 : vector<16x256xf32> to vector<16x256xbf16>
    %c22_43 = arith.constant 22 : index
    %c0_44 = arith.constant 0 : index
    %46 = vector.load %arg9[%c22_43, %c0_44] : memref<40x256xbf16, #tpu.memory_space<vmem>>, vector<16x256xbf16>
    tpu.vector_store %arg9[%c22_43, %c0_44], %45 {strides = array<i32>} : memref<40x256xbf16, #tpu.memory_space<vmem>>, vector<16x256xbf16>,
    %c0_45 = arith.constant 0 : index
    %c0_46 = arith.constant 0 : index
    %47 = vector.load %arg5[%c0_45, %c0_46] : memref<1x256xf32, #tpu.memory_space<vmem>>, vector<1x256xf32>
    %48 = vector.shape_cast %47 : vector<1x256xf32> to vector<1x256xf32>
    %49 = vector.broadcast %48 : vector<1x256xf32> to vector<36x256xf32>
    %c1_47 = arith.constant 1 : index
    %c0_48 = arith.constant 0 : index
    %50 = vector.load %arg9[%c1_47, %c0_48] : memref<40x256xbf16, #tpu.memory_space<vmem>>, vector<36x256xbf16>
    %c0_49 = arith.constant 0 : index
    %c0_50 = arith.constant 0 : index
    %c0_51 = arith.constant 0 : index
    %51 = vector.load %arg4[%c0_49, %c0_50, %c0_51] : memref<3x256x256xbf16, #tpu.memory_space<vmem>>, vector<1x256x256xbf16>
    %52 = vector.shape_cast %51 : vector<1x256x256xbf16> to vector<256x256xbf16>
    %cst_52 = arith.constant dense<0.000000e+00> : vector<36x256xf32>
    %53 = tpu.matmul %50, %52, %cst_52 {dimension_numbers = #tpu.dot_dimension_numbers<[1], [0], [0], [1], [0, 0, 1, 1], [], []>} : vector<36x256xbf16>, vector<256x256xbf16>, vector<36x256xf32> -> vector<36x256xf32>
    %54 = arith.addf %49, %53 : vector<36x256xf32>
    %c2_53 = arith.constant 2 : index
    %c0_54 = arith.constant 0 : index
    %55 = vector.load %arg9[%c2_53, %c0_54] : memref<40x256xbf16, #tpu.memory_space<vmem>>, vector<36x256xbf16>
    %c1_55 = arith.constant 1 : index
    %c0_56 = arith.constant 0 : index
    %c0_57 = arith.constant 0 : index
    %56 = vector.load %arg4[%c1_55, %c0_56, %c0_57] : memref<3x256x256xbf16, #tpu.memory_space<vmem>>, vector<1x256x256xbf16>
    %57 = vector.shape_cast %56 : vector<1x256x256xbf16> to vector<256x256xbf16>
    %cst_58 = arith.constant dense<0.000000e+00> : vector<36x256xf32>
    %58 = tpu.matmul %55, %57, %cst_58 {dimension_numbers = #tpu.dot_dimension_numbers<[1], [0], [0], [1], [0, 0, 1, 1], [], []>} : vector<36x256xbf16>, vector<256x256xbf16>, vector<36x256xf32> -> vector<36x256xf32>
    %59 = arith.addf %54, %58 : vector<36x256xf32>
    %c3_59 = arith.constant 3 : index
    %c0_60 = arith.constant 0 : index
    %60 = vector.load %arg9[%c3_59, %c0_60] : memref<40x256xbf16, #tpu.memory_space<vmem>>, vector<36x256xbf16>
    %c2_61 = arith.constant 2 : index
    %c0_62 = arith.constant 0 : index
    %c0_63 = arith.constant 0 : index
    %61 = vector.load %arg4[%c2_61, %c0_62, %c0_63] : memref<3x256x256xbf16, #tpu.memory_space<vmem>>, vector<1x256x256xbf16>
    %62 = vector.shape_cast %61 : vector<1x256x256xbf16> to vector<256x256xbf16>
    %cst_64 = arith.constant dense<0.000000e+00> : vector<36x256xf32>
    %63 = tpu.matmul %60, %62, %cst_64 {dimension_numbers = #tpu.dot_dimension_numbers<[1], [0], [0], [1], [0, 0, 1, 1], [], []>} : vector<36x256xbf16>, vector<256x256xbf16>, vector<36x256xf32> -> vector<36x256xf32>
    %64 = arith.addf %59, %63 : vector<36x256xf32>
    %cst_65 = arith.constant 0.000000e+00 : f32
    %65 = vector.broadcast %cst_65 : f32 to vector<36x256xf32>
    %66 = arith.maximumf %64, %65 : vector<36x256xf32>
    %67 = vector.extract_strided_slice %66 {offsets = [0, 0], sizes = [16, 256], strides = [1, 1]} : vector<36x256xf32> to vector<16x256xf32>
    %68 = arith.truncf %67 : vector<16x256xf32> to vector<16x256xbf16>
    %c2_66 = arith.constant 2 : index
    %c0_67 = arith.constant 0 : index
    %69 = vector.load %arg9[%c2_66, %c0_67] : memref<40x256xbf16, #tpu.memory_space<vmem>>, vector<16x256xbf16>
    tpu.vector_store %arg9[%c2_66, %c0_67], %68 {strides = array<i32>} : memref<40x256xbf16, #tpu.memory_space<vmem>>, vector<16x256xbf16>,
    %70 = vector.extract_strided_slice %66 {offsets = [20, 0], sizes = [16, 256], strides = [1, 1]} : vector<36x256xf32> to vector<16x256xf32>
    %71 = arith.truncf %70 : vector<16x256xf32> to vector<16x256xbf16>
    %c22_68 = arith.constant 22 : index
    %c0_69 = arith.constant 0 : index
    %72 = vector.load %arg9[%c22_68, %c0_69] : memref<40x256xbf16, #tpu.memory_space<vmem>>, vector<16x256xbf16>
    tpu.vector_store %arg9[%c22_68, %c0_69], %71 {strides = array<i32>} : memref<40x256xbf16, #tpu.memory_space<vmem>>, vector<16x256xbf16>,
    %c0_70 = arith.constant 0 : index
    %c0_71 = arith.constant 0 : index
    %73 = vector.load %arg7[%c0_70, %c0_71] : memref<1x128xf32, #tpu.memory_space<vmem>>, vector<1x128xf32>
    %74 = vector.shape_cast %73 : vector<1x128xf32> to vector<1x128xf32>
    %75 = vector.broadcast %74 : vector<1x128xf32> to vector<36x128xf32>
    %c1_72 = arith.constant 1 : index
    %c0_73 = arith.constant 0 : index
    %76 = vector.load %arg9[%c1_72, %c0_73] : memref<40x256xbf16, #tpu.memory_space<vmem>>, vector<36x256xbf16>
    %c0_74 = arith.constant 0 : index
    %c0_75 = arith.constant 0 : index
    %c0_76 = arith.constant 0 : index
    %77 = vector.load %arg6[%c0_74, %c0_75, %c0_76] : memref<3x256x128xbf16, #tpu.memory_space<vmem>>, vector<1x256x128xbf16>
    %78 = vector.shape_cast %77 : vector<1x256x128xbf16> to vector<256x128xbf16>
    %cst_77 = arith.constant dense<0.000000e+00> : vector<36x128xf32>
    %79 = tpu.matmul %76, %78, %cst_77 {dimension_numbers = #tpu.dot_dimension_numbers<[1], [0], [0], [1], [0, 0, 1, 1], [], []>} : vector<36x256xbf16>, vector<256x128xbf16>, vector<36x128xf32> -> vector<36x128xf32>
    %80 = arith.addf %75, %79 : vector<36x128xf32>
    %c2_78 = arith.constant 2 : index
    %c0_79 = arith.constant 0 : index
    %81 = vector.load %arg9[%c2_78, %c0_79] : memref<40x256xbf16, #tpu.memory_space<vmem>>, vector<36x256xbf16>
    %c1_80 = arith.constant 1 : index
    %c0_81 = arith.constant 0 : index
    %c0_82 = arith.constant 0 : index
    %82 = vector.load %arg6[%c1_80, %c0_81, %c0_82] : memref<3x256x128xbf16, #tpu.memory_space<vmem>>, vector<1x256x128xbf16>
    %83 = vector.shape_cast %82 : vector<1x256x128xbf16> to vector<256x128xbf16>
    %cst_83 = arith.constant dense<0.000000e+00> : vector<36x128xf32>
    %84 = tpu.matmul %81, %83, %cst_83 {dimension_numbers = #tpu.dot_dimension_numbers<[1], [0], [0], [1], [0, 0, 1, 1], [], []>} : vector<36x256xbf16>, vector<256x128xbf16>, vector<36x128xf32> -> vector<36x128xf32>
    %85 = arith.addf %80, %84 : vector<36x128xf32>
    %c3_84 = arith.constant 3 : index
    %c0_85 = arith.constant 0 : index
    %86 = vector.load %arg9[%c3_84, %c0_85] : memref<40x256xbf16, #tpu.memory_space<vmem>>, vector<36x256xbf16>
    %c2_86 = arith.constant 2 : index
    %c0_87 = arith.constant 0 : index
    %c0_88 = arith.constant 0 : index
    %87 = vector.load %arg6[%c2_86, %c0_87, %c0_88] : memref<3x256x128xbf16, #tpu.memory_space<vmem>>, vector<1x256x128xbf16>
    %88 = vector.shape_cast %87 : vector<1x256x128xbf16> to vector<256x128xbf16>
    %cst_89 = arith.constant dense<0.000000e+00> : vector<36x128xf32>
    %89 = tpu.matmul %86, %88, %cst_89 {dimension_numbers = #tpu.dot_dimension_numbers<[1], [0], [0], [1], [0, 0, 1, 1], [], []>} : vector<36x256xbf16>, vector<256x128xbf16>, vector<36x128xf32> -> vector<36x128xf32>
    %90 = arith.addf %85, %89 : vector<36x128xf32>
    %91 = vector.extract_strided_slice %90 {offsets = [0, 0], sizes = [16, 128], strides = [1, 1]} : vector<36x128xf32> to vector<16x128xf32>
    %c0_90 = arith.constant 0 : index
    %c0_91 = arith.constant 0 : index
    %c0_92 = arith.constant 0 : index
    %92 = vector.load %arg8[%c0_90, %c0_91, %c0_92] : memref<2x16x128xf32, #tpu.memory_space<vmem>>, vector<1x16x128xf32>
    %93 = vector.shape_cast %92 : vector<1x16x128xf32> to vector<16x128xf32>
    %94 = vector.shape_cast %91 : vector<16x128xf32> to vector<1x16x128xf32>
    tpu.vector_store %arg8[%c0_90, %c0_91, %c0_92], %94 {strides = array<i32>} : memref<2x16x128xf32, #tpu.memory_space<vmem>>, vector<1x16x128xf32>,
    %95 = vector.extract_strided_slice %90 {offsets = [20, 0], sizes = [16, 128], strides = [1, 1]} : vector<36x128xf32> to vector<16x128xf32>
    %c1_93 = arith.constant 1 : index
    %c0_94 = arith.constant 0 : index
    %c0_95 = arith.constant 0 : index
    %96 = vector.load %arg8[%c1_93, %c0_94, %c0_95] : memref<2x16x128xf32, #tpu.memory_space<vmem>>, vector<1x16x128xf32>
    %97 = vector.shape_cast %96 : vector<1x16x128xf32> to vector<16x128xf32>
    %98 = vector.shape_cast %95 : vector<16x128xf32> to vector<1x16x128xf32>
    tpu.vector_store %arg8[%c1_93, %c0_94, %c0_95], %98 {strides = array<i32>} : memref<2x16x128xf32, #tpu.memory_space<vmem>>, vector<1x16x128xf32>,
    return
  }
  func.func @transform_0(%arg0: i32) -> (i32, i32, i32) {
    %c0_i32 = arith.constant 0 : i32
    %c0_i32_0 = arith.constant 0 : i32
    %c0_i32_1 = arith.constant 0 : i32
    return %arg0, %c0_i32, %c0_i32_0 : i32, i32, i32
  }
  func.func @transform_1(%arg0: i32) -> (i32, i32, i32) {
    %c0_i32 = arith.constant 0 : i32
    %c0_i32_0 = arith.constant 0 : i32
    %c0_i32_1 = arith.constant 0 : i32
    %c0_i32_2 = arith.constant 0 : i32
    return %c0_i32, %c0_i32_0, %c0_i32_1 : i32, i32, i32
  }
  func.func @transform_2(%arg0: i32) -> (i32, i32) {
    %c0_i32 = arith.constant 0 : i32
    %c0_i32_0 = arith.constant 0 : i32
    %c0_i32_1 = arith.constant 0 : i32
    return %c0_i32, %c0_i32_0 : i32, i32
  }
  func.func @transform_3(%arg0: i32) -> (i32, i32, i32) {
    %c0_i32 = arith.constant 0 : i32
    %c0_i32_0 = arith.constant 0 : i32
    %c0_i32_1 = arith.constant 0 : i32
    %c0_i32_2 = arith.constant 0 : i32
    return %c0_i32, %c0_i32_0, %c0_i32_1 : i32, i32, i32
  }
  func.func @transform_4(%arg0: i32) -> (i32, i32) {
    %c0_i32 = arith.constant 0 : i32
    %c0_i32_0 = arith.constant 0 : i32
    %c0_i32_1 = arith.constant 0 : i32
    return %c0_i32, %c0_i32_0 : i32, i32
  }
  func.func @transform_5(%arg0: i32) -> (i32, i32, i32) {
    %c0_i32 = arith.constant 0 : i32
    %c0_i32_0 = arith.constant 0 : i32
    %c0_i32_1 = arith.constant 0 : i32
    %c0_i32_2 = arith.constant 0 : i32
    return %c0_i32, %c0_i32_0, %c0_i32_1 : i32, i32, i32
  }
  func.func @transform_6(%arg0: i32) -> (i32, i32) {
    %c0_i32 = arith.constant 0 : i32
    %c0_i32_0 = arith.constant 0 : i32
    %c0_i32_1 = arith.constant 0 : i32
    return %c0_i32, %c0_i32_0 : i32, i32
  }
  func.func @transform_7(%arg0: i32) -> (i32, i32, i32) {
    %c0_i32 = arith.constant 0 : i32
    %c0_i32_0 = arith.constant 0 : i32
    %c0_i32_1 = arith.constant 0 : i32
    return %arg0, %c0_i32, %c0_i32_0 : i32, i32, i32
  }
}

module attributes {stable_mosaic.version = 11 : i64} {
  func.func @_awms_kernel(%arg0: i32, %arg1: memref<2x16x256xf32, #tpu.memory_space<vmem>>, %arg2: memref<5x256x256xbf16, #tpu.memory_space<vmem>>, %arg3: memref<1x256xf32, #tpu.memory_space<vmem>>, %arg4: memref<3x256x256xbf16, #tpu.memory_space<vmem>>, %arg5: memref<1x256xf32, #tpu.memory_space<vmem>>, %arg6: memref<3x256x128xbf16, #tpu.memory_space<vmem>>, %arg7: memref<1x128xf32, #tpu.memory_space<vmem>>, %arg8: memref<2x16x128xf32, #tpu.memory_space<vmem>>, %arg9: memref<40x256xbf16, #tpu.memory_space<vmem>>) attributes {dimension_semantics = [#tpu.dimension_semantics<parallel>], iteration_bounds = array<i64: 2>, scalar_prefetch = 0 : i64, scratch_operands = 1 : i64, tpu.core_type = #tpu.core_type<tc>, window_params = [{transform_indices = @transform_0, window_bounds = array<i64: 2, 16, 256>}, {pipeline_mode = #tpu.pipeline_mode<synchronous>, transform_indices = @transform_1, window_bounds = array<i64: 5, 256, 256>}, {pipeline_mode = #tpu.pipeline_mode<synchronous>, transform_indices = @transform_2, window_bounds = array<i64: 1, 256>}, {pipeline_mode = #tpu.pipeline_mode<synchronous>, transform_indices = @transform_3, window_bounds = array<i64: 3, 256, 256>}, {pipeline_mode = #tpu.pipeline_mode<synchronous>, transform_indices = @transform_4, window_bounds = array<i64: 1, 256>}, {pipeline_mode = #tpu.pipeline_mode<synchronous>, transform_indices = @transform_5, window_bounds = array<i64: 3, 256, 128>}, {pipeline_mode = #tpu.pipeline_mode<synchronous>, transform_indices = @transform_6, window_bounds = array<i64: 1, 128>}, {transform_indices = @transform_7, window_bounds = array<i64: 2, 16, 128>}]} {
    %cst = arith.constant 0.000000e+00 : bf16
    %0 = vector.broadcast %cst : bf16 to vector<2x256xbf16>
    %c0 = arith.constant 0 : index
    %c0_0 = arith.constant 0 : index
    %1 = vector.load %arg9[%c0, %c0_0] : memref<40x256xbf16, #tpu.memory_space<vmem>>, vector<2x256xbf16>
    tpu.vector_store %arg9[%c0, %c0_0], %0 {strides = array<i32>} : memref<40x256xbf16, #tpu.memory_space<vmem>>, vector<2x256xbf16>,
    %c18 = arith.constant 18 : index
    %c0_1 = arith.constant 0 : index
    %2 = vector.load %arg9[%c18, %c0_1] : memref<40x256xbf16, #tpu.memory_space<vmem>>, vector<2x256xbf16>
    tpu.vector_store %arg9[%c18, %c0_1], %0 {strides = array<i32>} : memref<40x256xbf16, #tpu.memory_space<vmem>>, vector<2x256xbf16>,
    %c20 = arith.constant 20 : index
    %c0_2 = arith.constant 0 : index
    %3 = vector.load %arg9[%c20, %c0_2] : memref<40x256xbf16, #tpu.memory_space<vmem>>, vector<2x256xbf16>
    tpu.vector_store %arg9[%c20, %c0_2], %0 {strides = array<i32>} : memref<40x256xbf16, #tpu.memory_space<vmem>>, vector<2x256xbf16>,
    %c38 = arith.constant 38 : index
    %c0_3 = arith.constant 0 : index
    %4 = vector.load %arg9[%c38, %c0_3] : memref<40x256xbf16, #tpu.memory_space<vmem>>, vector<2x256xbf16>
    tpu.vector_store %arg9[%c38, %c0_3], %0 {strides = array<i32>} : memref<40x256xbf16, #tpu.memory_space<vmem>>, vector<2x256xbf16>,
    %c0_4 = arith.constant 0 : index
    %c0_5 = arith.constant 0 : index
    %c0_6 = arith.constant 0 : index
    %5 = vector.load %arg1[%c0_4, %c0_5, %c0_6] : memref<2x16x256xf32, #tpu.memory_space<vmem>>, vector<1x16x256xf32>
    %6 = vector.shape_cast %5 : vector<1x16x256xf32> to vector<16x256xf32>
    %7 = arith.truncf %6 : vector<16x256xf32> to vector<16x256xbf16>
    %c2 = arith.constant 2 : index
    %c0_7 = arith.constant 0 : index
    %8 = vector.load %arg9[%c2, %c0_7] : memref<40x256xbf16, #tpu.memory_space<vmem>>, vector<16x256xbf16>
    tpu.vector_store %arg9[%c2, %c0_7], %7 {strides = array<i32>} : memref<40x256xbf16, #tpu.memory_space<vmem>>, vector<16x256xbf16>,
    %c1 = arith.constant 1 : index
    %c0_8 = arith.constant 0 : index
    %c0_9 = arith.constant 0 : index
    %9 = vector.load %arg1[%c1, %c0_8, %c0_9] : memref<2x16x256xf32, #tpu.memory_space<vmem>>, vector<1x16x256xf32>
    %10 = vector.shape_cast %9 : vector<1x16x256xf32> to vector<16x256xf32>
    %11 = arith.truncf %10 : vector<16x256xf32> to vector<16x256xbf16>
    %c22 = arith.constant 22 : index
    %c0_10 = arith.constant 0 : index
    %12 = vector.load %arg9[%c22, %c0_10] : memref<40x256xbf16, #tpu.memory_space<vmem>>, vector<16x256xbf16>
    tpu.vector_store %arg9[%c22, %c0_10], %11 {strides = array<i32>} : memref<40x256xbf16, #tpu.memory_space<vmem>>, vector<16x256xbf16>,
    %c0_11 = arith.constant 0 : index
    %c0_12 = arith.constant 0 : index
    %13 = vector.load %arg3[%c0_11, %c0_12] : memref<1x256xf32, #tpu.memory_space<vmem>>, vector<1x256xf32>
    %14 = vector.shape_cast %13 : vector<1x256xf32> to vector<1x256xf32>
    %15 = vector.broadcast %14 : vector<1x256xf32> to vector<36x256xf32>
    %c0_13 = arith.constant 0 : index
    %c0_14 = arith.constant 0 : index
    %16 = vector.load %arg9[%c0_13, %c0_14] : memref<40x256xbf16, #tpu.memory_space<vmem>>, vector<36x256xbf16>
    %c0_15 = arith.constant 0 : index
    %c0_16 = arith.constant 0 : index
    %c0_17 = arith.constant 0 : index
    %17 = vector.load %arg2[%c0_15, %c0_16, %c0_17] : memref<5x256x256xbf16, #tpu.memory_space<vmem>>, vector<1x256x256xbf16>
    %18 = vector.shape_cast %17 : vector<1x256x256xbf16> to vector<256x256xbf16>
    %cst_18 = arith.constant dense<0.000000e+00> : vector<36x256xf32>
    %19 = tpu.matmul %16, %18, %cst_18 {dimension_numbers = #tpu.dot_dimension_numbers<[1], [0], [0], [1], [0, 0, 1, 1], [], []>} : vector<36x256xbf16>, vector<256x256xbf16>, vector<36x256xf32> -> vector<36x256xf32>
    %20 = arith.addf %15, %19 : vector<36x256xf32>
    %c1_19 = arith.constant 1 : index
    %c0_20 = arith.constant 0 : index
    %21 = vector.load %arg9[%c1_19, %c0_20] : memref<40x256xbf16, #tpu.memory_space<vmem>>, vector<36x256xbf16>
    %c1_21 = arith.constant 1 : index
    %c0_22 = arith.constant 0 : index
    %c0_23 = arith.constant 0 : index
    %22 = vector.load %arg2[%c1_21, %c0_22, %c0_23] : memref<5x256x256xbf16, #tpu.memory_space<vmem>>, vector<1x256x256xbf16>
    %23 = vector.shape_cast %22 : vector<1x256x256xbf16> to vector<256x256xbf16>
    %cst_24 = arith.constant dense<0.000000e+00> : vector<36x256xf32>
    %24 = tpu.matmul %21, %23, %cst_24 {dimension_numbers = #tpu.dot_dimension_numbers<[1], [0], [0], [1], [0, 0, 1, 1], [], []>} : vector<36x256xbf16>, vector<256x256xbf16>, vector<36x256xf32> -> vector<36x256xf32>
    %25 = arith.addf %20, %24 : vector<36x256xf32>
    %c2_25 = arith.constant 2 : index
    %c0_26 = arith.constant 0 : index
    %26 = vector.load %arg9[%c2_25, %c0_26] : memref<40x256xbf16, #tpu.memory_space<vmem>>, vector<36x256xbf16>
    %c2_27 = arith.constant 2 : index
    %c0_28 = arith.constant 0 : index
    %c0_29 = arith.constant 0 : index
    %27 = vector.load %arg2[%c2_27, %c0_28, %c0_29] : memref<5x256x256xbf16, #tpu.memory_space<vmem>>, vector<1x256x256xbf16>
    %28 = vector.shape_cast %27 : vector<1x256x256xbf16> to vector<256x256xbf16>
    %cst_30 = arith.constant dense<0.000000e+00> : vector<36x256xf32>
    %29 = tpu.matmul %26, %28, %cst_30 {dimension_numbers = #tpu.dot_dimension_numbers<[1], [0], [0], [1], [0, 0, 1, 1], [], []>} : vector<36x256xbf16>, vector<256x256xbf16>, vector<36x256xf32> -> vector<36x256xf32>
    %30 = arith.addf %25, %29 : vector<36x256xf32>
    %c3 = arith.constant 3 : index
    %c0_31 = arith.constant 0 : index
    %31 = vector.load %arg9[%c3, %c0_31] : memref<40x256xbf16, #tpu.memory_space<vmem>>, vector<36x256xbf16>
    %c3_32 = arith.constant 3 : index
    %c0_33 = arith.constant 0 : index
    %c0_34 = arith.constant 0 : index
    %32 = vector.load %arg2[%c3_32, %c0_33, %c0_34] : memref<5x256x256xbf16, #tpu.memory_space<vmem>>, vector<1x256x256xbf16>
    %33 = vector.shape_cast %32 : vector<1x256x256xbf16> to vector<256x256xbf16>
    %cst_35 = arith.constant dense<0.000000e+00> : vector<36x256xf32>
    %34 = tpu.matmul %31, %33, %cst_35 {dimension_numbers = #tpu.dot_dimension_numbers<[1], [0], [0], [1], [0, 0, 1, 1], [], []>} : vector<36x256xbf16>, vector<256x256xbf16>, vector<36x256xf32> -> vector<36x256xf32>
    %35 = arith.addf %30, %34 : vector<36x256xf32>
    %c4 = arith.constant 4 : index
    %c0_36 = arith.constant 0 : index
    %36 = vector.load %arg9[%c4, %c0_36] : memref<40x256xbf16, #tpu.memory_space<vmem>>, vector<36x256xbf16>
    %c4_37 = arith.constant 4 : index
    %c0_38 = arith.constant 0 : index
    %c0_39 = arith.constant 0 : index
    %37 = vector.load %arg2[%c4_37, %c0_38, %c0_39] : memref<5x256x256xbf16, #tpu.memory_space<vmem>>, vector<1x256x256xbf16>
    %38 = vector.shape_cast %37 : vector<1x256x256xbf16> to vector<256x256xbf16>
    %cst_40 = arith.constant dense<0.000000e+00> : vector<36x256xf32>
    %39 = tpu.matmul %36, %38, %cst_40 {dimension_numbers = #tpu.dot_dimension_numbers<[1], [0], [0], [1], [0, 0, 1, 1], [], []>} : vector<36x256xbf16>, vector<256x256xbf16>, vector<36x256xf32> -> vector<36x256xf32>
    %40 = arith.addf %35, %39 : vector<36x256xf32>
    %41 = vector.extract_strided_slice %40 {offsets = [0, 0], sizes = [16, 256], strides = [1, 1]} : vector<36x256xf32> to vector<16x256xf32>
    %42 = arith.truncf %41 : vector<16x256xf32> to vector<16x256xbf16>
    %c2_41 = arith.constant 2 : index
    %c0_42 = arith.constant 0 : index
    %43 = vector.load %arg9[%c2_41, %c0_42] : memref<40x256xbf16, #tpu.memory_space<vmem>>, vector<16x256xbf16>
    tpu.vector_store %arg9[%c2_41, %c0_42], %42 {strides = array<i32>} : memref<40x256xbf16, #tpu.memory_space<vmem>>, vector<16x256xbf16>,
    %44 = vector.extract_strided_slice %40 {offsets = [20, 0], sizes = [16, 256], strides = [1, 1]} : vector<36x256xf32> to vector<16x256xf32>
    %45 = arith.truncf %44 : vector<16x256xf32> to vector<16x256xbf16>
    %c22_43 = arith.constant 22 : index
    %c0_44 = arith.constant 0 : index
    %46 = vector.load %arg9[%c22_43, %c0_44] : memref<40x256xbf16, #tpu.memory_space<vmem>>, vector<16x256xbf16>
    tpu.vector_store %arg9[%c22_43, %c0_44], %45 {strides = array<i32>} : memref<40x256xbf16, #tpu.memory_space<vmem>>, vector<16x256xbf16>,
    %c0_45 = arith.constant 0 : index
    %c0_46 = arith.constant 0 : index
    %47 = vector.load %arg5[%c0_45, %c0_46] : memref<1x256xf32, #tpu.memory_space<vmem>>, vector<1x256xf32>
    %48 = vector.shape_cast %47 : vector<1x256xf32> to vector<1x256xf32>
    %49 = vector.broadcast %48 : vector<1x256xf32> to vector<36x256xf32>
    %c1_47 = arith.constant 1 : index
    %c0_48 = arith.constant 0 : index
    %50 = vector.load %arg9[%c1_47, %c0_48] : memref<40x256xbf16, #tpu.memory_space<vmem>>, vector<36x256xbf16>
    %c0_49 = arith.constant 0 : index
    %c0_50 = arith.constant 0 : index
    %c0_51 = arith.constant 0 : index
    %51 = vector.load %arg4[%c0_49, %c0_50, %c0_51] : memref<3x256x256xbf16, #tpu.memory_space<vmem>>, vector<1x256x256xbf16>
    %52 = vector.shape_cast %51 : vector<1x256x256xbf16> to vector<256x256xbf16>
    %cst_52 = arith.constant dense<0.000000e+00> : vector<36x256xf32>
    %53 = tpu.matmul %50, %52, %cst_52 {dimension_numbers = #tpu.dot_dimension_numbers<[1], [0], [0], [1], [0, 0, 1, 1], [], []>} : vector<36x256xbf16>, vector<256x256xbf16>, vector<36x256xf32> -> vector<36x256xf32>
    %54 = arith.addf %49, %53 : vector<36x256xf32>
    %c2_53 = arith.constant 2 : index
    %c0_54 = arith.constant 0 : index
    %55 = vector.load %arg9[%c2_53, %c0_54] : memref<40x256xbf16, #tpu.memory_space<vmem>>, vector<36x256xbf16>
    %c1_55 = arith.constant 1 : index
    %c0_56 = arith.constant 0 : index
    %c0_57 = arith.constant 0 : index
    %56 = vector.load %arg4[%c1_55, %c0_56, %c0_57] : memref<3x256x256xbf16, #tpu.memory_space<vmem>>, vector<1x256x256xbf16>
    %57 = vector.shape_cast %56 : vector<1x256x256xbf16> to vector<256x256xbf16>
    %cst_58 = arith.constant dense<0.000000e+00> : vector<36x256xf32>
    %58 = tpu.matmul %55, %57, %cst_58 {dimension_numbers = #tpu.dot_dimension_numbers<[1], [0], [0], [1], [0, 0, 1, 1], [], []>} : vector<36x256xbf16>, vector<256x256xbf16>, vector<36x256xf32> -> vector<36x256xf32>
    %59 = arith.addf %54, %58 : vector<36x256xf32>
    %c3_59 = arith.constant 3 : index
    %c0_60 = arith.constant 0 : index
    %60 = vector.load %arg9[%c3_59, %c0_60] : memref<40x256xbf16, #tpu.memory_space<vmem>>, vector<36x256xbf16>
    %c2_61 = arith.constant 2 : index
    %c0_62 = arith.constant 0 : index
    %c0_63 = arith.constant 0 : index
    %61 = vector.load %arg4[%c2_61, %c0_62, %c0_63] : memref<3x256x256xbf16, #tpu.memory_space<vmem>>, vector<1x256x256xbf16>
    %62 = vector.shape_cast %61 : vector<1x256x256xbf16> to vector<256x256xbf16>
    %cst_64 = arith.constant dense<0.000000e+00> : vector<36x256xf32>
    %63 = tpu.matmul %60, %62, %cst_64 {dimension_numbers = #tpu.dot_dimension_numbers<[1], [0], [0], [1], [0, 0, 1, 1], [], []>} : vector<36x256xbf16>, vector<256x256xbf16>, vector<36x256xf32> -> vector<36x256xf32>
    %64 = arith.addf %59, %63 : vector<36x256xf32>
    %cst_65 = arith.constant 0.000000e+00 : f32
    %65 = vector.broadcast %cst_65 : f32 to vector<36x256xf32>
    %66 = arith.maximumf %64, %65 : vector<36x256xf32>
    %67 = vector.extract_strided_slice %66 {offsets = [0, 0], sizes = [16, 256], strides = [1, 1]} : vector<36x256xf32> to vector<16x256xf32>
    %68 = arith.truncf %67 : vector<16x256xf32> to vector<16x256xbf16>
    %c2_66 = arith.constant 2 : index
    %c0_67 = arith.constant 0 : index
    %69 = vector.load %arg9[%c2_66, %c0_67] : memref<40x256xbf16, #tpu.memory_space<vmem>>, vector<16x256xbf16>
    tpu.vector_store %arg9[%c2_66, %c0_67], %68 {strides = array<i32>} : memref<40x256xbf16, #tpu.memory_space<vmem>>, vector<16x256xbf16>,
    %70 = vector.extract_strided_slice %66 {offsets = [20, 0], sizes = [16, 256], strides = [1, 1]} : vector<36x256xf32> to vector<16x256xf32>
    %71 = arith.truncf %70 : vector<16x256xf32> to vector<16x256xbf16>
    %c22_68 = arith.constant 22 : index
    %c0_69 = arith.constant 0 : index
    %72 = vector.load %arg9[%c22_68, %c0_69] : memref<40x256xbf16, #tpu.memory_space<vmem>>, vector<16x256xbf16>
    tpu.vector_store %arg9[%c22_68, %c0_69], %71 {strides = array<i32>} : memref<40x256xbf16, #tpu.memory_space<vmem>>, vector<16x256xbf16>,
    %c0_70 = arith.constant 0 : index
    %c0_71 = arith.constant 0 : index
    %73 = vector.load %arg7[%c0_70, %c0_71] : memref<1x128xf32, #tpu.memory_space<vmem>>, vector<1x128xf32>
    %74 = vector.shape_cast %73 : vector<1x128xf32> to vector<1x128xf32>
    %75 = vector.broadcast %74 : vector<1x128xf32> to vector<36x128xf32>
    %c1_72 = arith.constant 1 : index
    %c0_73 = arith.constant 0 : index
    %76 = vector.load %arg9[%c1_72, %c0_73] : memref<40x256xbf16, #tpu.memory_space<vmem>>, vector<36x256xbf16>
    %c0_74 = arith.constant 0 : index
    %c0_75 = arith.constant 0 : index
    %c0_76 = arith.constant 0 : index
    %77 = vector.load %arg6[%c0_74, %c0_75, %c0_76] : memref<3x256x128xbf16, #tpu.memory_space<vmem>>, vector<1x256x128xbf16>
    %78 = vector.shape_cast %77 : vector<1x256x128xbf16> to vector<256x128xbf16>
    %cst_77 = arith.constant dense<0.000000e+00> : vector<36x128xf32>
    %79 = tpu.matmul %76, %78, %cst_77 {dimension_numbers = #tpu.dot_dimension_numbers<[1], [0], [0], [1], [0, 0, 1, 1], [], []>} : vector<36x256xbf16>, vector<256x128xbf16>, vector<36x128xf32> -> vector<36x128xf32>
    %80 = arith.addf %75, %79 : vector<36x128xf32>
    %c2_78 = arith.constant 2 : index
    %c0_79 = arith.constant 0 : index
    %81 = vector.load %arg9[%c2_78, %c0_79] : memref<40x256xbf16, #tpu.memory_space<vmem>>, vector<36x256xbf16>
    %c1_80 = arith.constant 1 : index
    %c0_81 = arith.constant 0 : index
    %c0_82 = arith.constant 0 : index
    %82 = vector.load %arg6[%c1_80, %c0_81, %c0_82] : memref<3x256x128xbf16, #tpu.memory_space<vmem>>, vector<1x256x128xbf16>
    %83 = vector.shape_cast %82 : vector<1x256x128xbf16> to vector<256x128xbf16>
    %cst_83 = arith.constant dense<0.000000e+00> : vector<36x128xf32>
    %84 = tpu.matmul %81, %83, %cst_83 {dimension_numbers = #tpu.dot_dimension_numbers<[1], [0], [0], [1], [0, 0, 1, 1], [], []>} : vector<36x256xbf16>, vector<256x128xbf16>, vector<36x128xf32> -> vector<36x128xf32>
    %85 = arith.addf %80, %84 : vector<36x128xf32>
    %c3_84 = arith.constant 3 : index
    %c0_85 = arith.constant 0 : index
    %86 = vector.load %arg9[%c3_84, %c0_85] : memref<40x256xbf16, #tpu.memory_space<vmem>>, vector<36x256xbf16>
    %c2_86 = arith.constant 2 : index
    %c0_87 = arith.constant 0 : index
    %c0_88 = arith.constant 0 : index
    %87 = vector.load %arg6[%c2_86, %c0_87, %c0_88] : memref<3x256x128xbf16, #tpu.memory_space<vmem>>, vector<1x256x128xbf16>
    %88 = vector.shape_cast %87 : vector<1x256x128xbf16> to vector<256x128xbf16>
    %cst_89 = arith.constant dense<0.000000e+00> : vector<36x128xf32>
    %89 = tpu.matmul %86, %88, %cst_89 {dimension_numbers = #tpu.dot_dimension_numbers<[1], [0], [0], [1], [0, 0, 1, 1], [], []>} : vector<36x256xbf16>, vector<256x128xbf16>, vector<36x128xf32> -> vector<36x128xf32>
    %90 = arith.addf %85, %89 : vector<36x128xf32>
    %91 = vector.extract_strided_slice %90 {offsets = [0, 0], sizes = [16, 128], strides = [1, 1]} : vector<36x128xf32> to vector<16x128xf32>
    %c0_90 = arith.constant 0 : index
    %c0_91 = arith.constant 0 : index
    %c0_92 = arith.constant 0 : index
    %92 = vector.load %arg8[%c0_90, %c0_91, %c0_92] : memref<2x16x128xf32, #tpu.memory_space<vmem>>, vector<1x16x128xf32>
    %93 = vector.shape_cast %92 : vector<1x16x128xf32> to vector<16x128xf32>
    %94 = vector.shape_cast %91 : vector<16x128xf32> to vector<1x16x128xf32>
    tpu.vector_store %arg8[%c0_90, %c0_91, %c0_92], %94 {strides = array<i32>} : memref<2x16x128xf32, #tpu.memory_space<vmem>>, vector<1x16x128xf32>,
    %95 = vector.extract_strided_slice %90 {offsets = [20, 0], sizes = [16, 128], strides = [1, 1]} : vector<36x128xf32> to vector<16x128xf32>
    %c1_93 = arith.constant 1 : index
    %c0_94 = arith.constant 0 : index
    %c0_95 = arith.constant 0 : index
    %96 = vector.load %arg8[%c1_93, %c0_94, %c0_95] : memref<2x16x128xf32, #tpu.memory_space<vmem>>, vector<1x16x128xf32>
    %97 = vector.shape_cast %96 : vector<1x16x128xf32> to vector<16x128xf32>
    %98 = vector.shape_cast %95 : vector<16x128xf32> to vector<1x16x128xf32>
    tpu.vector_store %arg8[%c1_93, %c0_94, %c0_95], %98 {strides = array<i32>} : memref<2x16x128xf32, #tpu.memory_space<vmem>>, vector<1x16x128xf32>,
    return
  }
  func.func @transform_0(%arg0: i32) -> (i32, i32, i32) {
    %c0_i32 = arith.constant 0 : i32
    %c0_i32_0 = arith.constant 0 : i32
    %c0_i32_1 = arith.constant 0 : i32
    return %arg0, %c0_i32, %c0_i32_0 : i32, i32, i32
  }
  func.func @transform_1(%arg0: i32) -> (i32, i32, i32) {
    %c0_i32 = arith.constant 0 : i32
    %c0_i32_0 = arith.constant 0 : i32
    %c0_i32_1 = arith.constant 0 : i32
    %c0_i32_2 = arith.constant 0 : i32
    return %c0_i32, %c0_i32_0, %c0_i32_1 : i32, i32, i32
  }
  func.func @transform_2(%arg0: i32) -> (i32, i32) {
    %c0_i32 = arith.constant 0 : i32
    %c0_i32_0 = arith.constant 0 : i32
    %c0_i32_1 = arith.constant 0 : i32
    return %c0_i32, %c0_i32_0 : i32, i32
  }
  func.func @transform_3(%arg0: i32) -> (i32, i32, i32) {
    %c0_i32 = arith.constant 0 : i32
    %c0_i32_0 = arith.constant 0 : i32
    %c0_i32_1 = arith.constant 0 : i32
    %c0_i32_2 = arith.constant 0 : i32
    return %c0_i32, %c0_i32_0, %c0_i32_1 : i32, i32, i32
  }
  func.func @transform_4(%arg0: i32) -> (i32, i32) {
    %c0_i32 = arith.constant 0 : i32
    %c0_i32_0 = arith.constant 0 : i32
    %c0_i32_1 = arith.constant 0 : i32
    return %c0_i32, %c0_i32_0 : i32, i32
  }
  func.func @transform_5(%arg0: i32) -> (i32, i32, i32) {
    %c0_i32 = arith.constant 0 : i32
    %c0_i32_0 = arith.constant 0 : i32
    %c0_i32_1 = arith.constant 0 : i32
    %c0_i32_2 = arith.constant 0 : i32
    return %c0_i32, %c0_i32_0, %c0_i32_1 : i32, i32, i32
  }
  func.func @transform_6(%arg0: i32) -> (i32, i32) {
    %c0_i32 = arith.constant 0 : i32
    %c0_i32_0 = arith.constant 0 : i32
    %c0_i32_1 = arith.constant 0 : i32
    return %c0_i32, %c0_i32_0 : i32, i32
  }
  func.func @transform_7(%arg0: i32) -> (i32, i32, i32) {
    %c0_i32 = arith.constant 0 : i32
    %c0_i32_0 = arith.constant 0 : i32
    %c0_i32_1 = arith.constant 0 : i32
    return %arg0, %c0_i32, %c0_i32_0 : i32, i32, i32
  }
}

</mosaic_0001>

<llo_original>
// kernel: tpu_custom_call.1
$region0: #{tpu_custom_call.1}
  #allocation0 [shape = 'u32[]', space=smem, size = 0x4, offset = 0x4, fixed_abs, tag = 'smem constant byte address 0x4 - core index']
  #allocation1 [shape = 'u32[144,128]{1,0:T(1,128)}', space=vmem, size = 0x12000, scoped, tag = 'internal scratch']
  #allocation2 [shape = 'bf16[40,256]{1,0:T(8,128)(2,1)}', space=vmem, size = 0x5000, scoped, tag = 'scratch operand']
  %s0 = inlined_call_operand.hbm [shape: f32[4,16,256], index: 0, kind: input, shape index: {}]
  %s1 = inlined_call_operand.hbm [shape: bf16[5,256,256], index: 1, kind: input, shape index: {}]
  %s2 = inlined_call_operand.vmem [shape: f32[1,256], index: 2, kind: input, shape index: {}]
  %s3 = inlined_call_operand.hbm [shape: bf16[3,256,256], index: 3, kind: input, shape index: {}]
  %s4 = inlined_call_operand.vmem [shape: f32[1,256], index: 4, kind: input, shape index: {}]
  %s5 = inlined_call_operand.hbm [shape: bf16[3,256,128], index: 5, kind: input, shape index: {}]
  %s6 = inlined_call_operand.vmem [shape: f32[1,128], index: 6, kind: input, shape index: {}]
  %s7 = inlined_call_operand.hbm [shape: f32[4,16,128], index: 7, kind: output, shape index: {}]
  %s8 = sld [smem:[#allocation0]]
  $region77: #{tpu_custom_call.1} parent=0
    _
  %s10 = ssub.s32 1, %s8
  %s11 = scalar_select 0, %s10, %s8
  $region1: #{tpu_custom_call.1} parent=0
    #allocation3 [shape = 'u8[65536]{0}', space=vmem, size = 0x10000, scoped, tag = 'input window, operand 0']
    #allocation4 [shape = 's32[2]{0}', space=sflag, size = 0x8, scoped, tag = 'scoped memory for tpu_custom_call.1']
    #allocation5 [shape = 's32[2]{0}', space=sflag, size = 0x8, scoped, tag = 'scoped memory for tpu_custom_call.1']
    #allocation6 [shape = 'u8[655360]{0}', space=vmem, size = 0xa0000, scoped, tag = 'input window, operand 1, single buffered']
    #allocation7 [shape = 's32[1]{0}', space=sflag, size = 0x4, scoped, tag = 'scoped memory for tpu_custom_call.1']
    #allocation8 [shape = 'u8[393216]{0}', space=vmem, size = 0x60000, scoped, tag = 'input window, operand 3, single buffered']
    #allocation9 [shape = 'u8[196608]{0}', space=vmem, size = 0x30000, scoped, tag = 'input window, operand 5, single buffered']
    #allocation10 [shape = 's32[1]{0}', space=sflag, size = 0x4, scoped, tag = 'scoped memory for tpu_custom_call.1']
    #allocation11 [shape = 'u8[32768]{0}', space=vmem, size = 0x8000, scoped, tag = 'output window, operand 0']
    %12 = vsyncpa [#allocation4], 0
    %s13 = scalar_lea.sflag [#allocation4], 1
    %14 = vsyncpa %s13, 0
    %15 = vsyncpa [#allocation7], 0
    %16 = vsyncpa [#allocation10], 0
    %17 = vsyncpa [#allocation5], 0
    %s18 = scalar_lea.sflag [#allocation5], 1
    %19 = vsyncpa %s18, 0
    loop: start=0, step=1, limit=4
    $region2: #{tpu_custom_call.1} parent=1 // loop_pre_header
      _
    $region3: #{tpu_custom_call.1} parent=1 // loop_header
      %s21 = sphi 0, %s25
      %p22 = scmp.ge.s32.totalorder %s21, 4
      %s31 = sphi 0, %s33
      %s34 = sphi 0, %s31
      %s35 = sphi 0, %s34
      %s51 = sphi 0, %s35
      %s55 = sphi 0, %s55
      %s57 = sphi 0, %s55
      %s58 = sphi 0, %s57
      %s72 = sphi 0, %s58
      %s76 = sphi 0, %s76
      %s78 = sphi 0, %s76
      %s79 = sphi 0, %s78
      %s93 = sphi 0, %s79
      %s97 = sphi 0, %s97
      %s99 = sphi 0, %s97
      %s100 = sphi 0, %s99
      %s114 = sphi 0, %s100
      %s118 = sphi 0, %s118
      %s120 = sphi 0, %s118
      %s121 = sphi 0, %s120
      %s135 = sphi 0, %s121
      %s139 = sphi 0, %s139
      %s141 = sphi 0, %s139
      %s142 = sphi 0, %s141
      %s156 = sphi 0, %s142
      %s160 = sphi 0, %s160
      %s162 = sphi 0, %s160
      %s163 = sphi 0, %s162
      %s177 = sphi 0, %s163
      %s183 = sphi 0, %s185
      %s186 = sphi 0, %s183
      %s187 = sphi 0, %s186
      %s203 = sphi 0, %s187
    $region4: #{tpu_custom_call.1} parent=1 // loop_header_branch
      %24 = sbr.rel (%p22) target = $region8
    $region5: #{tpu_custom_call.1} parent=1 // loop_body
      %s26 = ssub.s32 %s21, 1
      %s27 = ssub.s32 %s21, 2
      %s28 = sadd.s32 %s21, 1
      %s29 = ssub.s32 %s21, %s28
      %p30 = scmp.eq.s32.totalorder %s29, 0
      %s32 = sadd.s32 %s31, 1
      %s33 = scalar_select %p30, %s31, %s32
      %p36 = pneg %p30
      %p37 = scmp.eq.s32.totalorder %s21, 1
      %p38 = por %p36, %p37
      %p39 = scmp.ne.s32.totalorder %s31, %s34
      %p40 = scmp.eq.s32.totalorder %s21, 0
      %p41 = por %p39, %p40
      %p42 = scmp.ne.s32.totalorder %s31, %s34
      %p43 = scmp.eq.s32.totalorder %s26, 1
      %p44 = por %p42, %p43
      %p45 = scmp.ne.s32.totalorder %s34, %s35
      %p46 = scmp.eq.s32.totalorder %s26, 0
      %p47 = por %p45, %p46
      %p48 = scmp.ne.s32.totalorder %s34, %s35
      %p49 = scmp.eq.s32.totalorder %s27, 1
      %p50 = por %p48, %p49
      %p52 = scmp.ne.s32.totalorder %s35, %s51
      %p53 = scmp.eq.s32.totalorder %s27, 0
      %p54 = por %p52, %p53
      %s56 = sadd.s32 %s55, 1
      %p59 = scmp.eq.s32.totalorder %s21, 1
      %p60 = scmp.ne.s32.totalorder %s55, %s57
      %p61 = scmp.eq.s32.totalorder %s21, 0
      %p62 = por %p60, %p61
      %p63 = scmp.ne.s32.totalorder %s55, %s57
      %p64 = scmp.eq.s32.totalorder %s26, 1
      %p65 = por %p63, %p64
      %p66 = scmp.ne.s32.totalorder %s57, %s58
      %p67 = scmp.eq.s32.totalorder %s26, 0
      %p68 = por %p66, %p67
      %p69 = scmp.ne.s32.totalorder %s57, %s58
      %p70 = scmp.eq.s32.totalorder %s27, 1
      %p71 = por %p69, %p70
      %p73 = scmp.ne.s32.totalorder %s58, %s72
      %p74 = scmp.eq.s32.totalorder %s27, 0
      %p75 = por %p73, %p74
      %s77 = sadd.s32 %s76, 1
      %p80 = scmp.eq.s32.totalorder %s21, 1
      %p81 = scmp.ne.s32.totalorder %s76, %s78
      %p82 = scmp.eq.s32.totalorder %s21, 0
      %p83 = por %p81, %p82
      %p84 = scmp.ne.s32.totalorder %s76, %s78
      %p85 = scmp.eq.s32.totalorder %s26, 1
      %p86 = por %p84, %p85
      %p87 = scmp.ne.s32.totalorder %s78, %s79
      %p88 = scmp.eq.s32.totalorder %s26, 0
      %p89 = por %p87, %p88
      %p90 = scmp.ne.s32.totalorder %s78, %s79
      %p91 = scmp.eq.s32.totalorder %s27, 1
      %p92 = por %p90, %p91
      %p94 = scmp.ne.s32.totalorder %s79, %s93
      %p95 = scmp.eq.s32.totalorder %s27, 0
      %p96 = por %p94, %p95
      %s98 = sadd.s32 %s97, 1
      %p101 = scmp.eq.s32.totalorder %s21, 1
      %p102 = scmp.ne.s32.totalorder %s97, %s99
      %p103 = scmp.eq.s32.totalorder %s21, 0
      %p104 = por %p102, %p103
      %p105 = scmp.ne.s32.totalorder %s97, %s99
      %p106 = scmp.eq.s32.totalorder %s26, 1
      %p107 = por %p105, %p106
      %p108 = scmp.ne.s32.totalorder %s99, %s100
      %p109 = scmp.eq.s32.totalorder %s26, 0
      %p110 = por %p108, %p109
      %p111 = scmp.ne.s32.totalorder %s99, %s100
      %p112 = scmp.eq.s32.totalorder %s27, 1
      %p113 = por %p111, %p112
      %p115 = scmp.ne.s32.totalorder %s100, %s114
      %p116 = scmp.eq.s32.totalorder %s27, 0
      %p117 = por %p115, %p116
      %s119 = sadd.s32 %s118, 1
      %p122 = scmp.eq.s32.totalorder %s21, 1
      %p123 = scmp.ne.s32.totalorder %s118, %s120
      %p124 = scmp.eq.s32.totalorder %s21, 0
      %p125 = por %p123, %p124
      %p126 = scmp.ne.s32.totalorder %s118, %s120
      %p127 = scmp.eq.s32.totalorder %s26, 1
      %p128 = por %p126, %p127
      %p129 = scmp.ne.s32.totalorder %s120, %s121
      %p130 = scmp.eq.s32.totalorder %s26, 0
      %p131 = por %p129, %p130
      %p132 = scmp.ne.s32.totalorder %s120, %s121
      %p133 = scmp.eq.s32.totalorder %s27, 1
      %p134 = por %p132, %p133
      %p136 = scmp.ne.s32.totalorder %s121, %s135
      %p137 = scmp.eq.s32.totalorder %s27, 0
      %p138 = por %p136, %p137
      %s140 = sadd.s32 %s139, 1
      %p143 = scmp.eq.s32.totalorder %s21, 1
      %p144 = scmp.ne.s32.totalorder %s139, %s141
      %p145 = scmp.eq.s32.totalorder %s21, 0
      %p146 = por %p144, %p145
      %p147 = scmp.ne.s32.totalorder %s139, %s141
      %p148 = scmp.eq.s32.totalorder %s26, 1
      %p149 = por %p147, %p148
      %p150 = scmp.ne.s32.totalorder %s141, %s142
      %p151 = scmp.eq.s32.totalorder %s26, 0
      %p152 = por %p150, %p151
      %p153 = scmp.ne.s32.totalorder %s141, %s142
      %p154 = scmp.eq.s32.totalorder %s27, 1
      %p155 = por %p153, %p154
      %p157 = scmp.ne.s32.totalorder %s142, %s156
      %p158 = scmp.eq.s32.totalorder %s27, 0
      %p159 = por %p157, %p158
      %s161 = sadd.s32 %s160, 1
      %p164 = scmp.eq.s32.totalorder %s21, 1
      %p165 = scmp.ne.s32.totalorder %s160, %s162
      %p166 = scmp.eq.s32.totalorder %s21, 0
      %p167 = por %p165, %p166
      %p168 = scmp.ne.s32.totalorder %s160, %s162
      %p169 = scmp.eq.s32.totalorder %s26, 1
      %p170 = por %p168, %p169
      %p171 = scmp.ne.s32.totalorder %s162, %s163
      %p172 = scmp.eq.s32.totalorder %s26, 0
      %p173 = por %p171, %p172
      %p174 = scmp.ne.s32.totalorder %s162, %s163
      %p175 = scmp.eq.s32.totalorder %s27, 1
      %p176 = por %p174, %p175
      %p178 = scmp.ne.s32.totalorder %s163, %s177
      %p179 = scmp.eq.s32.totalorder %s27, 0
      %p180 = por %p178, %p179
      %s181 = ssub.s32 %s21, %s28
      %p182 = scmp.eq.s32.totalorder %s181, 0
      %s184 = sadd.s32 %s183, 1
      %s185 = scalar_select %p182, %s183, %s184
      %p188 = pneg %p182
      %p189 = scmp.eq.s32.totalorder %s21, 1
      %p190 = por %p188, %p189
      %p191 = scmp.ne.s32.totalorder %s183, %s186
      %p192 = scmp.eq.s32.totalorder %s21, 0
      %p193 = por %p191, %p192
      %p194 = scmp.ne.s32.totalorder %s183, %s186
      %p195 = scmp.eq.s32.totalorder %s26, 1
      %p196 = por %p194, %p195
      %p197 = scmp.ne.s32.totalorder %s186, %s187
      %p198 = scmp.eq.s32.totalorder %s26, 0
      %p199 = por %p197, %p198
      %p200 = scmp.ne.s32.totalorder %s186, %s187
      %p201 = scmp.eq.s32.totalorder %s27, 1
      %p202 = por %p200, %p201
      %p204 = scmp.ne.s32.totalorder %s187, %s203
      %p205 = scmp.eq.s32.totalorder %s27, 0
      %p206 = por %p204, %p205
      %p207 = scmp.le.s32.totalorder 1, %s21
      %p208 = scmp.lt.s32.totalorder %s21, 3
      %p209 = pnand %p207, %p208
      %p210 = pneg %p209
      // Predicated region
      $region9: #{tpu_custom_call.1} parent=5 // pred_check
        _
      $region10: #{tpu_custom_call.1} parent=5 // pred_check_branch
        %212 = sbr.rel (%p209) target = $region12
      $region11: #{tpu_custom_call.1} parent=5 // pred_region
        %s213 = ssub.s32 %s21, 1
        // Predicated region
        $region13: #{tpu_custom_call.1} parent=11 // pred_check
          %p214 = pneg %p68
        $region14: #{tpu_custom_call.1} parent=11 // pred_check_branch
          %216 = sbr.rel (%p214) target = $region16
        $region15: #{tpu_custom_call.1} parent=11 // pred_region
          %s218 = ssub.s32 20480, 20480
          %219 = vsyncadd [#allocation7], %s218
          %s220 = sshll.u32 [#allocation6], 4
          %s221 = int_to_ptr.vmem [resolvable:$true] %s220
          %226 = dma.hbm_to_vmem [thread:$0]  %s1, 20480, %s221, [#allocation7], 128, 128, 8
        $region16: #{tpu_custom_call.1} parent=11 // pred_fallthru
          _
        // Predicated region
        $region17: #{tpu_custom_call.1} parent=11 // pred_check
          %p227 = pneg %p89
        $region18: #{tpu_custom_call.1} parent=11 // pred_check_branch
          %229 = sbr.rel (%p227) target = $region20
        $region19: #{tpu_custom_call.1} parent=11 // pred_region
          _
        $region20: #{tpu_custom_call.1} parent=11 // pred_fallthru
          _
        // Predicated region
        $region21: #{tpu_custom_call.1} parent=11 // pred_check
          %p230 = pneg %p110
        $region22: #{tpu_custom_call.1} parent=11 // pred_check_branch
          %232 = sbr.rel (%p230) target = $region24
        $region23: #{tpu_custom_call.1} parent=11 // pred_region
          %s234 = ssub.s32 12288, 12288
          %235 = vsyncadd [#allocation7], %s234
          %s236 = sshll.u32 [#allocation8], 4
          %s237 = int_to_ptr.vmem [resolvable:$true] %s236
          %242 = dma.hbm_to_vmem [thread:$0]  %s3, 12288, %s237, [#allocation7], 128, 128, 8
        $region24: #{tpu_custom_call.1} parent=11 // pred_fallthru
          _
        // Predicated region
        $region25: #{tpu_custom_call.1} parent=11 // pred_check
          %p243 = pneg %p131
        $region26: #{tpu_custom_call.1} parent=11 // pred_check_branch
          %245 = sbr.rel (%p243) target = $region28
        $region27: #{tpu_custom_call.1} parent=11 // pred_region
          _
        $region28: #{tpu_custom_call.1} parent=11 // pred_fallthru
          _
        // Predicated region
        $region29: #{tpu_custom_call.1} parent=11 // pred_check
          %p246 = pneg %p152
        $region30: #{tpu_custom_call.1} parent=11 // pred_check_branch
          %248 = sbr.rel (%p246) target = $region32
        $region31: #{tpu_custom_call.1} parent=11 // pred_region
          %s250 = ssub.s32 6144, 6144
          %251 = vsyncadd [#allocation10], %s250
          %s252 = sshll.u32 [#allocation9], 4
          %s253 = int_to_ptr.vmem [resolvable:$true] %s252
          %258 = dma.hbm_to_vmem [thread:$0]  %s5, 6144, %s253, [#allocation10], 64, 64, 4
        $region32: #{tpu_custom_call.1} parent=11 // pred_fallthru
          _
        // Predicated region
        $region33: #{tpu_custom_call.1} parent=11 // pred_check
          %p259 = pneg %p173
        $region34: #{tpu_custom_call.1} parent=11 // pred_check_branch
          %261 = sbr.rel (%p259) target = $region36
        $region35: #{tpu_custom_call.1} parent=11 // pred_region
          _
        $region36: #{tpu_custom_call.1} parent=11 // pred_fallthru
          _
      $region12: #{tpu_custom_call.1} parent=5 // pred_fallthru
        _
      %p262 = scmp.lt.s32.totalorder %s21, 2
      // Predicated region
      $region37: #{tpu_custom_call.1} parent=5 // pred_check
        %p263 = pneg %p262
      $region38: #{tpu_custom_call.1} parent=5 // pred_check_branch
        %265 = sbr.rel (%p263) target = $region40
      $region39: #{tpu_custom_call.1} parent=5 // pred_region
        // Predicated region
        $region41: #{tpu_custom_call.1} parent=39 // pred_check
          %p266 = pneg %p41
        $region42: #{tpu_custom_call.1} parent=39 // pred_check_branch
          %268 = sbr.rel (%p266) target = $region44
        $region43: #{tpu_custom_call.1} parent=39 // pred_region
          %s269 = sand.u32 %s31, 1
          %s270 = scalar_lea.sflag [#allocation4], %s269
          %s271 = sand.u32 %s31, 1
          %s272 = smul.addr %s271, 64
          %s273 = scalar_lea.vmem [#allocation3], %s272
          %s274 = smul.u32 2, %s21
          %s276 = ssub.s32 1024, 1024
          %277 = vsyncadd %s270, %s276
          %s278 = smul.addr %s274, 4
          %s279 = smul.addr %s278, 128
          %s280 = scalar_lea.hbm %s0, %s279
          %s281 = sshll.u32 %s273, 4
          %s282 = int_to_ptr.vmem [resolvable:$true] %s281
          %287 = dma.hbm_to_vmem [thread:$0]  %s280, 1024, %s282, %s270, 256, 256, 16
        $region44: #{tpu_custom_call.1} parent=39 // pred_fallthru
          _
      $region40: #{tpu_custom_call.1} parent=5 // pred_fallthru
        _
      %p288 = scmp.le.s32.totalorder 1, %s21
      %p289 = scmp.lt.s32.totalorder %s21, 3
      %p290 = pnand %p288, %p289
      %p291 = pneg %p290
      // Predicated region
      $region45: #{tpu_custom_call.1} parent=5 // pred_check
        _
      $region46: #{tpu_custom_call.1} parent=5 // pred_check_branch
        %293 = sbr.rel (%p290) target = $region48
      $region47: #{tpu_custom_call.1} parent=5 // pred_region
        %s294 = ssub.s32 %s21, 1
        %s295 = sand.u32 %s34, 1
        %s296 = scalar_lea.sflag [#allocation4], %s295
        %s297 = sand.u32 %s34, 1
        %s298 = smul.addr %s297, 64
        %s299 = scalar_lea.vmem [#allocation3], %s298
        // Predicated region
        $region49: #{tpu_custom_call.1} parent=47 // pred_check
          %p300 = pneg %p47
        $region50: #{tpu_custom_call.1} parent=47 // pred_check_branch
          %302 = sbr.rel (%p300) target = $region52
        $region51: #{tpu_custom_call.1} parent=47 // pred_region
          %303 = dma.done %s296, 1024
        $region52: #{tpu_custom_call.1} parent=47 // pred_fallthru
          _
        // Predicated region
        $region53: #{tpu_custom_call.1} parent=47 // pred_check
          %p304 = pneg %p68
        $region54: #{tpu_custom_call.1} parent=47 // pred_check_branch
          %306 = sbr.rel (%p304) target = $region56
        $region55: #{tpu_custom_call.1} parent=47 // pred_region
          %307 = dma.done [#allocation7], 20480
        $region56: #{tpu_custom_call.1} parent=47 // pred_fallthru
          _
        // Predicated region
        $region57: #{tpu_custom_call.1} parent=47 // pred_check
          %p308 = pneg %p110
        $region58: #{tpu_custom_call.1} parent=47 // pred_check_branch
          %310 = sbr.rel (%p308) target = $region60
        $region59: #{tpu_custom_call.1} parent=47 // pred_region
          %311 = dma.done [#allocation7], 12288
        $region60: #{tpu_custom_call.1} parent=47 // pred_fallthru
          _
        // Predicated region
        $region61: #{tpu_custom_call.1} parent=47 // pred_check
          %p312 = pneg %p152
        $region62: #{tpu_custom_call.1} parent=47 // pred_check_branch
          %314 = sbr.rel (%p312) target = $region64
        $region63: #{tpu_custom_call.1} parent=47 // pred_region
          %315 = dma.done [#allocation10], 6144
        $region64: #{tpu_custom_call.1} parent=47 // pred_fallthru
          _
        %s316 = sand.u32 %s34, 1
        %s317 = scalar_lea.sflag [#allocation4], %s316
        %s318 = sand.u32 %s34, 1
        %s319 = smul.addr %s318, 64
        %s320 = scalar_lea.vmem [#allocation3], %s319
        %p321 = pneg %p47
        %p322 = pneg %p44
        %p323 = pneg %p68
        %p324 = pneg %p65
        %p325 = pneg %p89
        %p326 = pneg %p86
        %p327 = pneg %p110
        %p328 = pneg %p107
        %p329 = pneg %p131
        %p330 = pneg %p128
        %p331 = pneg %p152
        %p332 = pneg %p149
        %p333 = pneg %p173
        %p334 = pneg %p170
        %p335 = pneg %p199
        %p336 = pneg %p196
        %s337 = sand.u32 %s186, 1
        %s338 = scalar_lea.sflag [#allocation5], %s337
        %s339 = sand.u32 %s186, 1
        %s340 = smul.addr %s339, 32
        %s341 = scalar_lea.vmem [#allocation11], %s340
        %s342 = smul.u32 2, %s26
        %s343 = smul.u32 2, %s26
        %345 = vst [vmem:[#allocation2] sm:$0x11] 0
        %346 = vst [vmem:[#allocation2 + $0x10] sm:$0x22] 0
        %347 = vst [vmem:[#allocation2 + $0x10] sm:$0x44] 0
        %348 = vst [vmem:[#allocation2 + $0x20] sm:$0x88] 0
        %v349 = vld [vmem:[%s299] sm:$0xff]
        %v350 = vld [vmem:[%s299 + $0x8] sm:$0xff]
        %v351 = vld [vmem:[%s299 + $0x10] sm:$0xff]
        %v352 = vld [vmem:[%s299 + $0x18] sm:$0xff]
        %v353 = vpack.c.bf16 %v351, %v349
        %v354 = vpack.c.bf16 %v352, %v350
        %v357 = vunpack.c.l.b16 %v353
        %v358 = vunpack.c.l.b16 %v354
        %v359 = vunpack.c.h.b16 %v353
        %v360 = vunpack.c.h.b16 %v354
        %v361 = vpack.c.b16 %v358, %v357
        %v362 = vpack.c.b16 %v360, %v359
        %vm363 = vcmask 1040384
        %vm364 = vcmask 1044484
        %vm365 = vmor %vm363, %vm364
        %v366 = vrot.slane %v361, 7
        %v367 = vrot.slane %v366, 4
        %v368 = vrot.slane %v362, 7
        %v369 = vsel %vm365, %v367, %v368
        %v370 = vrot.slane %v368, 4
        %374 = vst [vmem:[#allocation2] sm:$0xee] %v366
        %375 = vst [vmem:[#allocation2 + $0x8] sm:$0xff] %v369
        %376 = vst [vmem:[#allocation2 + $0x10] sm:$0x11] %v370
        %s377 = scalar_lea.vmem %s299, 32 [#allocation3]
        %v378 = vld [vmem:[%s377] sm:$0xff]
        %v379 = vld [vmem:[%s377 + $0x8] sm:$0xff]
        %v380 = vld [vmem:[%s377 + $0x10] sm:$0xff]
        %v381 = vld [vmem:[%s377 + $0x18] sm:$0xff]
        %v382 = vpack.c.bf16 %v380, %v378
        %v383 = vpack.c.bf16 %v381, %v379
        %v386 = vunpack.c.l.b16 %v382
        %v387 = vunpack.c.l.b16 %v383
        %v388 = vunpack.c.h.b16 %v382
        %v389 = vunpack.c.h.b16 %v383
        %v390 = vpack.c.b16 %v387, %v386
        %v391 = vpack.c.b16 %v389, %v388
        %vm392 = vcmask 1042432
        %vm393 = vcmask 1046532
        %vm394 = vmor %vm392, %vm393
        %v395 = vrot.slane %v390, 5
        %v396 = vrot.slane %v395, 4
        %v397 = vrot.slane %v391, 5
        %v398 = vsel %vm394, %v396, %v397
        %v399 = vrot.slane %v397, 4
        %403 = vst [vmem:[#allocation2 + $0x10] sm:$0x88] %v395
        %404 = vst [vmem:[#allocation2 + $0x18] sm:$0xff] %v398
        %405 = vst [vmem:[#allocation2 + $0x20] sm:$0x77] %v399
        %v406 = vld [vmem:[%s2] sm:$0x3]
        %v408 = vlaneseq
        %v409 = vshrl.u32 %v408, 7
        %v410 = vsub.s32 0, %v409
        %v411 = vrot.slane %v406, %v410
        %v412 = vlaneseq
        %v413 = vshrl.u32 %v412, 7
        %v414 = vsub.s32 1, %v413
        %v415 = vrot.slane %v406, %v414
        %v418 = vld [vmem:[#allocation2] sm:$0xff]
        %v419 = vld [vmem:[#allocation2 + $0x8] sm:$0xff]
        %v420 = vld [vmem:[#allocation2 + $0x10] sm:$0xff]
        %v421 = vld [vmem:[#allocation2 + $0x18] sm:$0xff]
        %v422 = vld [vmem:[#allocation2 + $0x20] sm:$0x33]
        %v423 = vld [vmem:[#allocation6] sm:$0xff]
        %v424 = vld [vmem:[#allocation6 + $0x8] sm:$0xff]
        %v425 = vld [vmem:[#allocation6 + $0x10] sm:$0xff]
        %v426 = vld [vmem:[#allocation6 + $0x18] sm:$0xff]
        %v427 = vld [vmem:[#allocation6 + $0x20] sm:$0xff]
        %v428 = vld [vmem:[#allocation6 + $0x28] sm:$0xff]
        %v429 = vld [vmem:[#allocation6 + $0x30] sm:$0xff]
        %v430 = vld [vmem:[#allocation6 + $0x38] sm:$0xff]
        %v431 = vld [vmem:[#allocation6 + $0x40] sm:$0xff]
        %v432 = vld [vmem:[#allocation6 + $0x48] sm:$0xff]
        %v433 = vld [vmem:[#allocation6 + $0x50] sm:$0xff]
        %v434 = vld [vmem:[#allocation6 + $0x58] sm:$0xff]
        %v435 = vld [vmem:[#allocation6 + $0x60] sm:$0xff]
        %v436 = vld [vmem:[#allocation6 + $0x68] sm:$0xff]
        %v437 = vld [vmem:[#allocation6 + $0x70] sm:$0xff]
        %v438 = vld [vmem:[#allocation6 + $0x78] sm:$0xff]
        %v439 = vld [vmem:[#allocation6 + $0x80] sm:$0xff]
        %v440 = vld [vmem:[#allocation6 + $0x88] sm:$0xff]
        %v441 = vld [vmem:[#allocation6 + $0x90] sm:$0xff]
        %v442 = vld [vmem:[#allocation6 + $0x98] sm:$0xff]
        %v443 = vld [vmem:[#allocation6 + $0xa0] sm:$0xff]
        %v444 = vld [vmem:[#allocation6 + $0xa8] sm:$0xff]
        %v445 = vld [vmem:[#allocation6 + $0xb0] sm:$0xff]
        %v446 = vld [vmem:[#allocation6 + $0xb8] sm:$0xff]
        %v447 = vld [vmem:[#allocation6 + $0xc0] sm:$0xff]
        %v448 = vld [vmem:[#allocation6 + $0xc8] sm:$0xff]
        %v449 = vld [vmem:[#allocation6 + $0xd0] sm:$0xff]
        %v450 = vld [vmem:[#allocation6 + $0xd8] sm:$0xff]
        %v451 = vld [vmem:[#allocation6 + $0xe0] sm:$0xff]
        %v452 = vld [vmem:[#allocation6 + $0xe8] sm:$0xff]
        %v453 = vld [vmem:[#allocation6 + $0xf0] sm:$0xff]
        %v454 = vld [vmem:[#allocation6 + $0xf8] sm:$0xff]
        %v460 = vunpack.c.l.b16 %v418
        %v461 = vunpack.c.h.b16 %v418
        %v462 = vunpack.c.l.b16 %v419
        %v463 = vunpack.c.h.b16 %v419
        %v464 = vunpack.c.l.b16 %v420
        %v465 = vunpack.c.h.b16 %v420
        %v466 = vunpack.c.l.b16 %v421
        %v467 = vunpack.c.h.b16 %v421
        %v468 = vunpack.c.l.b16 %v422
        %v469 = vunpack.c.h.b16 %v422
        %v470 = vpack.c.b16 %v462, %v460
        %v471 = vpack.c.b16 %v463, %v461
        %v472 = vpack.c.b16 %v466, %v464
        %v473 = vpack.c.b16 %v467, %v465
        %v474 = vpack.c.b16 %v468, %v468
        %v475 = vpack.c.b16 %v469, %v469
        %v514 = vunpack.c.l.b16 %v423
        %v515 = vunpack.c.h.b16 %v423
        %v516 = vunpack.c.l.b16 %v424
        %v517 = vunpack.c.h.b16 %v424
        %v518 = vunpack.c.l.b16 %v425
        %v519 = vunpack.c.h.b16 %v425
        %v520 = vunpack.c.l.b16 %v426
        %v521 = vunpack.c.h.b16 %v426
        %v522 = vunpack.c.l.b16 %v427
        %v523 = vunpack.c.h.b16 %v427
        %v524 = vunpack.c.l.b16 %v428
        %v525 = vunpack.c.h.b16 %v428
        %v526 = vunpack.c.l.b16 %v429
        %v527 = vunpack.c.h.b16 %v429
        %v528 = vunpack.c.l.b16 %v430
        %v529 = vunpack.c.h.b16 %v430
        %v530 = vunpack.c.l.b16 %v431
        %v531 = vunpack.c.h.b16 %v431
        %v532 = vunpack.c.l.b16 %v432
        %v533 = vunpack.c.h.b16 %v432
        %v534 = vunpack.c.l.b16 %v433
        %v535 = vunpack.c.h.b16 %v433
        %v536 = vunpack.c.l.b16 %v434
        %v537 = vunpack.c.h.b16 %v434
        %v538 = vunpack.c.l.b16 %v435
        %v539 = vunpack.c.h.b16 %v435
        %v540 = vunpack.c.l.b16 %v436
        %v541 = vunpack.c.h.b16 %v436
        %v542 = vunpack.c.l.b16 %v437
        %v543 = vunpack.c.h.b16 %v437
        %v544 = vunpack.c.l.b16 %v438
        %v545 = vunpack.c.h.b16 %v438
        %v546 = vunpack.c.l.b16 %v439
        %v547 = vunpack.c.h.b16 %v439
        %v548 = vunpack.c.l.b16 %v440
        %v549 = vunpack.c.h.b16 %v440
        %v550 = vunpack.c.l.b16 %v441
        %v551 = vunpack.c.h.b16 %v441
        %v552 = vunpack.c.l.b16 %v442
        %v553 = vunpack.c.h.b16 %v442
        %v554 = vunpack.c.l.b16 %v443
        %v555 = vunpack.c.h.b16 %v443
        %v556 = vunpack.c.l.b16 %v444
        %v557 = vunpack.c.h.b16 %v444
        %v558 = vunpack.c.l.b16 %v445
        %v559 = vunpack.c.h.b16 %v445
        %v560 = vunpack.c.l.b16 %v446
        %v561 = vunpack.c.h.b16 %v446
        %v562 = vunpack.c.l.b16 %v447
        %v563 = vunpack.c.h.b16 %v447
        %v564 = vunpack.c.l.b16 %v448
        %v565 = vunpack.c.h.b16 %v448
        %v566 = vunpack.c.l.b16 %v449
        %v567 = vunpack.c.h.b16 %v449
        %v568 = vunpack.c.l.b16 %v450
        %v569 = vunpack.c.h.b16 %v450
        %v570 = vunpack.c.l.b16 %v451
        %v571 = vunpack.c.h.b16 %v451
        %v572 = vunpack.c.l.b16 %v452
        %v573 = vunpack.c.h.b16 %v452
        %v574 = vunpack.c.l.b16 %v453
        %v575 = vunpack.c.h.b16 %v453
        %v576 = vunpack.c.l.b16 %v454
        %v577 = vunpack.c.h.b16 %v454
        %v578 = vpack.c.b16 %v516, %v514
        %v579 = vpack.c.b16 %v517, %v515
        %v580 = vpack.c.b16 %v520, %v518
        %v581 = vpack.c.b16 %v521, %v519
        %v582 = vpack.c.b16 %v524, %v522
        %v583 = vpack.c.b16 %v525, %v523
        %v584 = vpack.c.b16 %v528, %v526
        %v585 = vpack.c.b16 %v529, %v527
        %v586 = vpack.c.b16 %v532, %v530
        %v587 = vpack.c.b16 %v533, %v531
        %v588 = vpack.c.b16 %v536, %v534
        %v589 = vpack.c.b16 %v537, %v535
        %v590 = vpack.c.b16 %v540, %v538
        %v591 = vpack.c.b16 %v541, %v539
        %v592 = vpack.c.b16 %v544, %v542
        %v593 = vpack.c.b16 %v545, %v543
        %v594 = vpack.c.b16 %v548, %v546
        %v595 = vpack.c.b16 %v549, %v547
        %v596 = vpack.c.b16 %v552, %v550
        %v597 = vpack.c.b16 %v553, %v551
        %v598 = vpack.c.b16 %v556, %v554
        %v599 = vpack.c.b16 %v557, %v555
        %v600 = vpack.c.b16 %v560, %v558
        %v601 = vpack.c.b16 %v561, %v559
        %v602 = vpack.c.b16 %v564, %v562
        %v603 = vpack.c.b16 %v565, %v563
        %v604 = vpack.c.b16 %v568, %v566
        %v605 = vpack.c.b16 %v569, %v567
        %v606 = vpack.c.b16 %v572, %v570
        %v607 = vpack.c.b16 %v573, %v571
        %v608 = vpack.c.b16 %v576, %v574
        %v609 = vpack.c.b16 %v577, %v575
        %642 = vmatprep.subr.bf16.mxu0 %v579
        %643 = vmatpush1.bf16.msra.mxu0 %v578
        %644 = vmatprep.subr.bf16.mxu0 %v581
        %645 = vmatpush1.bf16.msra.mxu0 %v580
        %646 = vmatprep.subr.bf16.mxu0 %v583
        %647 = vmatpush1.bf16.msra.mxu0 %v582
        %648 = vmatprep.subr.bf16.mxu0 %v585
        %649 = vmatpush1.bf16.msra.mxu0 %v584
        %650 = vmatprep.subr.bf16.mxu0 %v587
        %651 = vmatpush1.bf16.msra.mxu0 %v586
        %652 = vmatprep.subr.bf16.mxu0 %v589
        %653 = vmatpush1.bf16.msra.mxu0 %v588
        %654 = vmatprep.subr.bf16.mxu0 %v591
        %655 = vmatpush1.bf16.msra.mxu0 %v590
        %656 = vmatprep.subr.bf16.mxu0 %v593
        %657 = vmatpush1.bf16.msra.mxu0 %v592
        %658 = vmatprep.subr.bf16.mxu0 %v595
        %659 = vmatpush1.bf16.msra.mxu0 %v594
        %660 = vmatprep.subr.bf16.mxu0 %v597
        %661 = vmatpush1.bf16.msra.mxu0 %v596
        %662 = vmatprep.subr.bf16.mxu0 %v599
        %663 = vmatpush1.bf16.msra.mxu0 %v598
        %664 = vmatprep.subr.bf16.mxu0 %v601
        %665 = vmatpush1.bf16.msra.mxu0 %v600
        %666 = vmatprep.subr.bf16.mxu0 %v603
        %667 = vmatpush1.bf16.msra.mxu0 %v602
        %668 = vmatprep.subr.bf16.mxu0 %v605
        %669 = vmatpush1.bf16.msra.mxu0 %v604
        %670 = vmatprep.subr.bf16.mxu0 %v607
        %671 = vmatpush1.bf16.msra.mxu0 %v606
        %672 = vmatprep.subr.bf16.mxu0 %v609
        %673 = vmatpush1.bf16.msra.mxu0 %v608
        %674 = vmatprep.mubr.bf16.mxu0 %v471
        %675 = vmatmul.mubr.bf16.gmra.mrb[0].mxu0 %v470
        %v676 = vpop.f32.mrb[0].mxu0
        %v677 = vadd.f32 0.0, %v676
        %v678 = vpop.f32.mrb[0].mxu0
        %v679 = vadd.f32 0.0, %v678
        %v680 = vpop.f32.mrb[0].mxu0
        %v681 = vadd.f32 0.0, %v680
        %v682 = vpop.f32.mrb[0].mxu0
        %v683 = vadd.f32 0.0, %v682
        %684 = vmatprep.mubr.bf16.mxu0 %v473
        %685 = vmatmul.mubr.bf16.gmra.mrb[0].mxu0 %v472
        %v686 = vpop.f32.mrb[0].mxu0
        %v687 = vadd.f32 0.0, %v686
        %v688 = vpop.f32.mrb[0].mxu0
        %v689 = vadd.f32 0.0, %v688
        %v690 = vpop.f32.mrb[0].mxu0
        %v691 = vadd.f32 0.0, %v690
        %v692 = vpop.f32.mrb[0].mxu0
        %v693 = vadd.f32 0.0, %v692
        %694 = vmatprep.mubr.bf16.mxu0 %v475
        %695 = vmatmul.mubr.bf16.gmra.mrb[0].mxu0 %v474
        %v696 = vpop.f32.mrb[0].mxu0
        %v697 = vadd.f32 0.0, %v696
        %v698 = vpop.f32.mrb[0].mxu0
        %v699 = vadd.f32 0.0, %v698
        %v700 = vpop.f32.mrb[0].mxu0
        %v701 = vpop.f32.mrb[0].mxu0
        %702 = vdwg.mxu0
        %v703 = vadd.f32 %v411, %v677
        %v704 = vadd.f32 %v415, %v679
        %v705 = vadd.f32 %v411, %v681
        %v706 = vadd.f32 %v415, %v683
        %v707 = vadd.f32 %v411, %v687
        %v708 = vadd.f32 %v415, %v689
        %v709 = vadd.f32 %v411, %v691
        %v710 = vadd.f32 %v415, %v693
        %v711 = vadd.f32 %v411, %v697
        %v712 = vadd.f32 %v415, %v699
        %v713 = vld [vmem:[#allocation2 + $0x20] sm:$0x77]
        %s714 = scalar_lea.vmem [#allocation6], 256
        %v715 = vld [vmem:[%s714] sm:$0xff]
        %v716 = vld [vmem:[%s714 + $0x8] sm:$0xff]
        %v717 = vld [vmem:[%s714 + $0x10] sm:$0xff]
        %v718 = vld [vmem:[%s714 + $0x18] sm:$0xff]
        %v719 = vld [vmem:[%s714 + $0x20] sm:$0xff]
        %v720 = vld [vmem:[%s714 + $0x28] sm:$0xff]
        %v721 = vld [vmem:[%s714 + $0x30] sm:$0xff]
        %v722 = vld [vmem:[%s714 + $0x38] sm:$0xff]
        %v723 = vld [vmem:[%s714 + $0x40] sm:$0xff]
        %v724 = vld [vmem:[%s714 + $0x48] sm:$0xff]
        %v725 = vld [vmem:[%s714 + $0x50] sm:$0xff]
        %v726 = vld [vmem:[%s714 + $0x58] sm:$0xff]
        %v727 = vld [vmem:[%s714 + $0x60] sm:$0xff]
        %v728 = vld [vmem:[%s714 + $0x68] sm:$0xff]
        %v729 = vld [vmem:[%s714 + $0x70] sm:$0xff]
        %v730 = vld [vmem:[%s714 + $0x78] sm:$0xff]
        %v731 = vld [vmem:[%s714 + $0x80] sm:$0xff]
        %v732 = vld [vmem:[%s714 + $0x88] sm:$0xff]
        %v733 = vld [vmem:[%s714 + $0x90] sm:$0xff]
        %v734 = vld [vmem:[%s714 + $0x98] sm:$0xff]
        %v735 = vld [vmem:[%s714 + $0xa0] sm:$0xff]
        %v736 = vld [vmem:[%s714 + $0xa8] sm:$0xff]
        %v737 = vld [vmem:[%s714 + $0xb0] sm:$0xff]
        %v738 = vld [vmem:[%s714 + $0xb8] sm:$0xff]
        %v739 = vld [vmem:[%s714 + $0xc0] sm:$0xff]
        %v740 = vld [vmem:[%s714 + $0xc8] sm:$0xff]
        %v741 = vld [vmem:[%s714 + $0xd0] sm:$0xff]
        %v742 = vld [vmem:[%s714 + $0xd8] sm:$0xff]
        %v743 = vld [vmem:[%s714 + $0xe0] sm:$0xff]
        %v744 = vld [vmem:[%s714 + $0xe8] sm:$0xff]
        %v745 = vld [vmem:[%s714 + $0xf0] sm:$0xff]
        %v746 = vld [vmem:[%s714 + $0xf8] sm:$0xff]
        %v748 = vunpack.c.l.b16 %v713
        %v749 = vunpack.c.h.b16 %v713
        %v750 = vpack.c.b16 %v748, %v748
        %v751 = vpack.c.b16 %v749, %v749
        %vm752 = vsmask.f32 7424
        %v754 = vshrl.u32 %v470, 16
        %v756 = vshll.u32 %v470, 16
        %v758 = vrot.slane %v756, 1
        %v759 = vor.u32 %v754, %v758
        %v761 = vshll.u32 %v472, 16
        %v763 = vrot.slane %v761, 1
        %v764 = vsel %vm752, %v759, %v763
        %v766 = vshrl.u32 %v471, 16
        %v768 = vshll.u32 %v471, 16
        %v770 = vrot.slane %v768, 1
        %v771 = vor.u32 %v766, %v770
        %v773 = vshll.u32 %v473, 16
        %v775 = vrot.slane %v773, 1
        %v776 = vsel %vm752, %v771, %v775
        %v777 = vshrl.u32 %v472, 16
        %v779 = vor.u32 %v777, %v763
        %v781 = vshll.u32 %v750, 16
        %v783 = vrot.slane %v781, 1
        %v784 = vsel %vm752, %v779, %v783
        %v785 = vshrl.u32 %v473, 16
        %v787 = vor.u32 %v785, %v775
        %v789 = vshll.u32 %v751, 16
        %v791 = vrot.slane %v789, 1
        %v792 = vsel %vm752, %v787, %v791
        %v793 = vshrl.u32 %v750, 16
        %v795 = vor.u32 %v793, %v783
        %v796 = vshrl.u32 %v751, 16
        %v798 = vor.u32 %v796, %v791
        %v837 = vunpack.c.l.b16 %v715
        %v838 = vunpack.c.h.b16 %v715
        %v839 = vunpack.c.l.b16 %v716
        %v840 = vunpack.c.h.b16 %v716
        %v841 = vunpack.c.l.b16 %v717
        %v842 = vunpack.c.h.b16 %v717
        %v843 = vunpack.c.l.b16 %v718
        %v844 = vunpack.c.h.b16 %v718
        %v845 = vunpack.c.l.b16 %v719
        %v846 = vunpack.c.h.b16 %v719
        %v847 = vunpack.c.l.b16 %v720
        %v848 = vunpack.c.h.b16 %v720
        %v849 = vunpack.c.l.b16 %v721
        %v850 = vunpack.c.h.b16 %v721
        %v851 = vunpack.c.l.b16 %v722
        %v852 = vunpack.c.h.b16 %v722
        %v853 = vunpack.c.l.b16 %v723
        %v854 = vunpack.c.h.b16 %v723
        %v855 = vunpack.c.l.b16 %v724
        %v856 = vunpack.c.h.b16 %v724
        %v857 = vunpack.c.l.b16 %v725
        %v858 = vunpack.c.h.b16 %v725
        %v859 = vunpack.c.l.b16 %v726
        %v860 = vunpack.c.h.b16 %v726
        %v861 = vunpack.c.l.b16 %v727
        %v862 = vunpack.c.h.b16 %v727
        %v863 = vunpack.c.l.b16 %v728
        %v864 = vunpack.c.h.b16 %v728
        %v865 = vunpack.c.l.b16 %v729
        %v866 = vunpack.c.h.b16 %v729
        %v867 = vunpack.c.l.b16 %v730
        %v868 = vunpack.c.h.b16 %v730
        %v869 = vunpack.c.l.b16 %v731
        %v870 = vunpack.c.h.b16 %v731
        %v871 = vunpack.c.l.b16 %v732
        %v872 = vunpack.c.h.b16 %v732
        %v873 = vunpack.c.l.b16 %v733
        %v874 = vunpack.c.h.b16 %v733
        %v875 = vunpack.c.l.b16 %v734
        %v876 = vunpack.c.h.b16 %v734
        %v877 = vunpack.c.l.b16 %v735
        %v878 = vunpack.c.h.b16 %v735
        %v879 = vunpack.c.l.b16 %v736
        %v880 = vunpack.c.h.b16 %v736
        %v881 = vunpack.c.l.b16 %v737
        %v882 = vunpack.c.h.b16 %v737
        %v883 = vunpack.c.l.b16 %v738
        %v884 = vunpack.c.h.b16 %v738
        %v885 = vunpack.c.l.b16 %v739
        %v886 = vunpack.c.h.b16 %v739
        %v887 = vunpack.c.l.b16 %v740
        %v888 = vunpack.c.h.b16 %v740
        %v889 = vunpack.c.l.b16 %v741
        %v890 = vunpack.c.h.b16 %v741
        %v891 = vunpack.c.l.b16 %v742
        %v892 = vunpack.c.h.b16 %v742
        %v893 = vunpack.c.l.b16 %v743
        %v894 = vunpack.c.h.b16 %v743
        %v895 = vunpack.c.l.b16 %v744
        %v896 = vunpack.c.h.b16 %v744
        %v897 = vunpack.c.l.b16 %v745
        %v898 = vunpack.c.h.b16 %v745
        %v899 = vunpack.c.l.b16 %v746
        %v900 = vunpack.c.h.b16 %v746
        %v901 = vpack.c.b16 %v839, %v837
        %v902 = vpack.c.b16 %v840, %v838
        %v903 = vpack.c.b16 %v843, %v841
        %v904 = vpack.c.b16 %v844, %v842
        %v905 = vpack.c.b16 %v847, %v845
        %v906 = vpack.c.b16 %v848, %v846
        %v907 = vpack.c.b16 %v851, %v849
        %v908 = vpack.c.b16 %v852, %v850
        %v909 = vpack.c.b16 %v855, %v853
        %v910 = vpack.c.b16 %v856, %v854
        %v911 = vpack.c.b16 %v859, %v857
        %v912 = vpack.c.b16 %v860, %v858
        %v913 = vpack.c.b16 %v863, %v861
        %v914 = vpack.c.b16 %v864, %v862
        %v915 = vpack.c.b16 %v867, %v865
        %v916 = vpack.c.b16 %v868, %v866
        %v917 = vpack.c.b16 %v871, %v869
        %v918 = vpack.c.b16 %v872, %v870
        %v919 = vpack.c.b16 %v875, %v873
        %v920 = vpack.c.b16 %v876, %v874
        %v921 = vpack.c.b16 %v879, %v877
        %v922 = vpack.c.b16 %v880, %v878
        %v923 = vpack.c.b16 %v883, %v881
        %v924 = vpack.c.b16 %v884, %v882
        %v925 = vpack.c.b16 %v887, %v885
        %v926 = vpack.c.b16 %v888, %v886
        %v927 = vpack.c.b16 %v891, %v889
        %v928 = vpack.c.b16 %v892, %v890
        %v929 = vpack.c.b16 %v895, %v893
        %v930 = vpack.c.b16 %v896, %v894
        %v931 = vpack.c.b16 %v899, %v897
        %v932 = vpack.c.b16 %v900, %v898
        %965 = vmatprep.subr.bf16.mxu0 %v902
        %966 = vmatpush1.bf16.msra.mxu0 %v901
        %967 = vmatprep.subr.bf16.mxu0 %v904
        %968 = vmatpush1.bf16.msra.mxu0 %v903
        %969 = vmatprep.subr.bf16.mxu0 %v906
        %970 = vmatpush1.bf16.msra.mxu0 %v905
        %971 = vmatprep.subr.bf16.mxu0 %v908
        %972 = vmatpush1.bf16.msra.mxu0 %v907
        %973 = vmatprep.subr.bf16.mxu0 %v910
        %974 = vmatpush1.bf16.msra.mxu0 %v909
        %975 = vmatprep.subr.bf16.mxu0 %v912
        %976 = vmatpush1.bf16.msra.mxu0 %v911
        %977 = vmatprep.subr.bf16.mxu0 %v914
        %978 = vmatpush1.bf16.msra.mxu0 %v913
        %979 = vmatprep.subr.bf16.mxu0 %v916
        %980 = vmatpush1.bf16.msra.mxu0 %v915
        %981 = vmatprep.subr.bf16.mxu0 %v918
        %982 = vmatpush1.bf16.msra.mxu0 %v917
        %983 = vmatprep.subr.bf16.mxu0 %v920
        %984 = vmatpush1.bf16.msra.mxu0 %v919
        %985 = vmatprep.subr.bf16.mxu0 %v922
        %986 = vmatpush1.bf16.msra.mxu0 %v921
        %987 = vmatprep.subr.bf16.mxu0 %v924
        %988 = vmatpush1.bf16.msra.mxu0 %v923
        %989 = vmatprep.subr.bf16.mxu0 %v926
        %990 = vmatpush1.bf16.msra.mxu0 %v925
        %991 = vmatprep.subr.bf16.mxu0 %v928
        %992 = vmatpush1.bf16.msra.mxu0 %v927
        %993 = vmatprep.subr.bf16.mxu0 %v930
        %994 = vmatpush1.bf16.msra.mxu0 %v929
        %995 = vmatprep.subr.bf16.mxu0 %v932
        %996 = vmatpush1.bf16.msra.mxu0 %v931
        %997 = vmatprep.mubr.bf16.mxu0 %v776
        %998 = vmatmul.mubr.bf16.gmra.mrb[0].mxu0 %v764
        %v999 = vpop.f32.mrb[0].mxu0
        %v1000 = vadd.f32 0.0, %v999
        %v1001 = vpop.f32.mrb[0].mxu0
        %v1002 = vadd.f32 0.0, %v1001
        %v1003 = vpop.f32.mrb[0].mxu0
        %v1004 = vadd.f32 0.0, %v1003
        %v1005 = vpop.f32.mrb[0].mxu0
        %v1006 = vadd.f32 0.0, %v1005
        %1007 = vmatprep.mubr.bf16.mxu0 %v792
        %1008 = vmatmul.mubr.bf16.gmra.mrb[0].mxu0 %v784
        %v1009 = vpop.f32.mrb[0].mxu0
        %v1010 = vadd.f32 0.0, %v1009
        %v1011 = vpop.f32.mrb[0].mxu0
        %v1012 = vadd.f32 0.0, %v1011
        %v1013 = vpop.f32.mrb[0].mxu0
        %v1014 = vadd.f32 0.0, %v1013
        %v1015 = vpop.f32.mrb[0].mxu0
        %v1016 = vadd.f32 0.0, %v1015
        %1017 = vmatprep.mubr.bf16.mxu0 %v798
        %1018 = vmatmul.mubr.bf16.gmra.mrb[0].mxu0 %v795
        %v1019 = vpop.f32.mrb[0].mxu0
        %v1020 = vadd.f32 0.0, %v1019
        %v1021 = vpop.f32.mrb[0].mxu0
        %v1022 = vadd.f32 0.0, %v1021
        %v1023 = vpop.f32.mrb[0].mxu0
        %v1024 = vpop.f32.mrb[0].mxu0
        %1025 = vdwg.mxu0
        %v1026 = vadd.f32 %v703, %v1000
        %v1027 = vadd.f32 %v704, %v1002
        %v1028 = vadd.f32 %v705, %v1004
        %v1029 = vadd.f32 %v706, %v1006
        %v1030 = vadd.f32 %v707, %v1010
        %v1031 = vadd.f32 %v708, %v1012
        %v1032 = vadd.f32 %v709, %v1014
        %v1033 = vadd.f32 %v710, %v1016
        %v1034 = vadd.f32 %v711, %v1020
        %v1035 = vadd.f32 %v712, %v1022
        %v1036 = vld [vmem:[#allocation2] sm:$0xee]
        %s1037 = scalar_lea.vmem [#allocation6], 512
        %v1038 = vld [vmem:[%s1037] sm:$0xff]
        %v1039 = vld [vmem:[%s1037 + $0x8] sm:$0xff]
        %v1040 = vld [vmem:[%s1037 + $0x10] sm:$0xff]
        %v1041 = vld [vmem:[%s1037 + $0x18] sm:$0xff]
        %v1042 = vld [vmem:[%s1037 + $0x20] sm:$0xff]
        %v1043 = vld [vmem:[%s1037 + $0x28] sm:$0xff]
        %v1044 = vld [vmem:[%s1037 + $0x30] sm:$0xff]
        %v1045 = vld [vmem:[%s1037 + $0x38] sm:$0xff]
        %v1046 = vld [vmem:[%s1037 + $0x40] sm:$0xff]
        %v1047 = vld [vmem:[%s1037 + $0x48] sm:$0xff]
        %v1048 = vld [vmem:[%s1037 + $0x50] sm:$0xff]
        %v1049 = vld [vmem:[%s1037 + $0x58] sm:$0xff]
        %v1050 = vld [vmem:[%s1037 + $0x60] sm:$0xff]
        %v1051 = vld [vmem:[%s1037 + $0x68] sm:$0xff]
        %v1052 = vld [vmem:[%s1037 + $0x70] sm:$0xff]
        %v1053 = vld [vmem:[%s1037 + $0x78] sm:$0xff]
        %v1054 = vld [vmem:[%s1037 + $0x80] sm:$0xff]
        %v1055 = vld [vmem:[%s1037 + $0x88] sm:$0xff]
        %v1056 = vld [vmem:[%s1037 + $0x90] sm:$0xff]
        %v1057 = vld [vmem:[%s1037 + $0x98] sm:$0xff]
        %v1058 = vld [vmem:[%s1037 + $0xa0] sm:$0xff]
        %v1059 = vld [vmem:[%s1037 + $0xa8] sm:$0xff]
        %v1060 = vld [vmem:[%s1037 + $0xb0] sm:$0xff]
        %v1061 = vld [vmem:[%s1037 + $0xb8] sm:$0xff]
        %v1062 = vld [vmem:[%s1037 + $0xc0] sm:$0xff]
        %v1063 = vld [vmem:[%s1037 + $0xc8] sm:$0xff]
        %v1064 = vld [vmem:[%s1037 + $0xd0] sm:$0xff]
        %v1065 = vld [vmem:[%s1037 + $0xd8] sm:$0xff]
        %v1066 = vld [vmem:[%s1037 + $0xe0] sm:$0xff]
        %v1067 = vld [vmem:[%s1037 + $0xe8] sm:$0xff]
        %v1068 = vld [vmem:[%s1037 + $0xf0] sm:$0xff]
        %v1069 = vld [vmem:[%s1037 + $0xf8] sm:$0xff]
        %v1071 = vunpack.c.l.b16 %v1036
        %v1072 = vunpack.c.h.b16 %v1036
        %v1073 = vpack.c.b16 %v462, %v1071
        %v1074 = vpack.c.b16 %v463, %v1072
        %vm1075 = vcmask 1046528
        %v1076 = vrot.slane %v1073, 1
        %v1077 = vrot.slane %v472, 1
        %v1078 = vsel %vm1075, %v1076, %v1077
        %v1079 = vrot.slane %v1074, 1
        %v1080 = vrot.slane %v473, 1
        %v1081 = vsel %vm1075, %v1079, %v1080
        %v1082 = vrot.slane %v750, 1
        %v1083 = vsel %vm1075, %v1077, %v1082
        %v1084 = vrot.slane %v751, 1
        %v1085 = vsel %vm1075, %v1080, %v1084
        %v1124 = vunpack.c.l.b16 %v1038
        %v1125 = vunpack.c.h.b16 %v1038
        %v1126 = vunpack.c.l.b16 %v1039
        %v1127 = vunpack.c.h.b16 %v1039
        %v1128 = vunpack.c.l.b16 %v1040
        %v1129 = vunpack.c.h.b16 %v1040
        %v1130 = vunpack.c.l.b16 %v1041
        %v1131 = vunpack.c.h.b16 %v1041
        %v1132 = vunpack.c.l.b16 %v1042
        %v1133 = vunpack.c.h.b16 %v1042
        %v1134 = vunpack.c.l.b16 %v1043
        %v1135 = vunpack.c.h.b16 %v1043
        %v1136 = vunpack.c.l.b16 %v1044
        %v1137 = vunpack.c.h.b16 %v1044
        %v1138 = vunpack.c.l.b16 %v1045
        %v1139 = vunpack.c.h.b16 %v1045
        %v1140 = vunpack.c.l.b16 %v1046
        %v1141 = vunpack.c.h.b16 %v1046
        %v1142 = vunpack.c.l.b16 %v1047
        %v1143 = vunpack.c.h.b16 %v1047
        %v1144 = vunpack.c.l.b16 %v1048
        %v1145 = vunpack.c.h.b16 %v1048
        %v1146 = vunpack.c.l.b16 %v1049
        %v1147 = vunpack.c.h.b16 %v1049
        %v1148 = vunpack.c.l.b16 %v1050
        %v1149 = vunpack.c.h.b16 %v1050
        %v1150 = vunpack.c.l.b16 %v1051
        %v1151 = vunpack.c.h.b16 %v1051
        %v1152 = vunpack.c.l.b16 %v1052
        %v1153 = vunpack.c.h.b16 %v1052
        %v1154 = vunpack.c.l.b16 %v1053
        %v1155 = vunpack.c.h.b16 %v1053
        %v1156 = vunpack.c.l.b16 %v1054
        %v1157 = vunpack.c.h.b16 %v1054
        %v1158 = vunpack.c.l.b16 %v1055
        %v1159 = vunpack.c.h.b16 %v1055
        %v1160 = vunpack.c.l.b16 %v1056
        %v1161 = vunpack.c.h.b16 %v1056
        %v1162 = vunpack.c.l.b16 %v1057
        %v1163 = vunpack.c.h.b16 %v1057
        %v1164 = vunpack.c.l.b16 %v1058
        %v1165 = vunpack.c.h.b16 %v1058
        %v1166 = vunpack.c.l.b16 %v1059
        %v1167 = vunpack.c.h.b16 %v1059
        %v1168 = vunpack.c.l.b16 %v1060
        %v1169 = vunpack.c.h.b16 %v1060
        %v1170 = vunpack.c.l.b16 %v1061
        %v1171 = vunpack.c.h.b16 %v1061
        %v1172 = vunpack.c.l.b16 %v1062
        %v1173 = vunpack.c.h.b16 %v1062
        %v1174 = vunpack.c.l.b16 %v1063
        %v1175 = vunpack.c.h.b16 %v1063
        %v1176 = vunpack.c.l.b16 %v1064
        %v1177 = vunpack.c.h.b16 %v1064
        %v1178 = vunpack.c.l.b16 %v1065
        %v1179 = vunpack.c.h.b16 %v1065
        %v1180 = vunpack.c.l.b16 %v1066
        %v1181 = vunpack.c.h.b16 %v1066
        %v1182 = vunpack.c.l.b16 %v1067
        %v1183 = vunpack.c.h.b16 %v1067
        %v1184 = vunpack.c.l.b16 %v1068
        %v1185 = vunpack.c.h.b16 %v1068
        %v1186 = vunpack.c.l.b16 %v1069
        %v1187 = vunpack.c.h.b16 %v1069
        %v1188 = vpack.c.b16 %v1126, %v1124
        %v1189 = vpack.c.b16 %v1127, %v1125
        %v1190 = vpack.c.b16 %v1130, %v1128
        %v1191 = vpack.c.b16 %v1131, %v1129
        %v1192 = vpack.c.b16 %v1134, %v1132
        %v1193 = vpack.c.b16 %v1135, %v1133
        %v1194 = vpack.c.b16 %v1138, %v1136
        %v1195 = vpack.c.b16 %v1139, %v1137
        %v1196 = vpack.c.b16 %v1142, %v1140
        %v1197 = vpack.c.b16 %v1143, %v1141
        %v1198 = vpack.c.b16 %v1146, %v1144
        %v1199 = vpack.c.b16 %v1147, %v1145
        %v1200 = vpack.c.b16 %v1150, %v1148
        %v1201 = vpack.c.b16 %v1151, %v1149
        %v1202 = vpack.c.b16 %v1154, %v1152
        %v1203 = vpack.c.b16 %v1155, %v1153
        %v1204 = vpack.c.b16 %v1158, %v1156
        %v1205 = vpack.c.b16 %v1159, %v1157
        %v1206 = vpack.c.b16 %v1162, %v1160
        %v1207 = vpack.c.b16 %v1163, %v1161
        %v1208 = vpack.c.b16 %v1166, %v1164
        %v1209 = vpack.c.b16 %v1167, %v1165
        %v1210 = vpack.c.b16 %v1170, %v1168
        %v1211 = vpack.c.b16 %v1171, %v1169
        %v1212 = vpack.c.b16 %v1174, %v1172
        %v1213 = vpack.c.b16 %v1175, %v1173
        %v1214 = vpack.c.b16 %v1178, %v1176
        %v1215 = vpack.c.b16 %v1179, %v1177
        %v1216 = vpack.c.b16 %v1182, %v1180
        %v1217 = vpack.c.b16 %v1183, %v1181
        %v1218 = vpack.c.b16 %v1186, %v1184
        %v1219 = vpack.c.b16 %v1187, %v1185
        %1252 = vmatprep.subr.bf16.mxu0 %v1189
        %1253 = vmatpush1.bf16.msra.mxu0 %v1188
        %1254 = vmatprep.subr.bf16.mxu0 %v1191
        %1255 = vmatpush1.bf16.msra.mxu0 %v1190
        %1256 = vmatprep.subr.bf16.mxu0 %v1193
        %1257 = vmatpush1.bf16.msra.mxu0 %v1192
        %1258 = vmatprep.subr.bf16.mxu0 %v1195
        %1259 = vmatpush1.bf16.msra.mxu0 %v1194
        %1260 = vmatprep.subr.bf16.mxu0 %v1197
        %1261 = vmatpush1.bf16.msra.mxu0 %v1196
        %1262 = vmatprep.subr.bf16.mxu0 %v1199
        %1263 = vmatpush1.bf16.msra.mxu0 %v1198
        %1264 = vmatprep.subr.bf16.mxu0 %v1201
        %1265 = vmatpush1.bf16.msra.mxu0 %v1200
        %1266 = vmatprep.subr.bf16.mxu0 %v1203
        %1267 = vmatpush1.bf16.msra.mxu0 %v1202
        %1268 = vmatprep.subr.bf16.mxu0 %v1205
        %1269 = vmatpush1.bf16.msra.mxu0 %v1204
        %1270 = vmatprep.subr.bf16.mxu0 %v1207
        %1271 = vmatpush1.bf16.msra.mxu0 %v1206
        %1272 = vmatprep.subr.bf16.mxu0 %v1209
        %1273 = vmatpush1.bf16.msra.mxu0 %v1208
        %1274 = vmatprep.subr.bf16.mxu0 %v1211
        %1275 = vmatpush1.bf16.msra.mxu0 %v1210
        %1276 = vmatprep.subr.bf16.mxu0 %v1213
        %1277 = vmatpush1.bf16.msra.mxu0 %v1212
        %1278 = vmatprep.subr.bf16.mxu0 %v1215
        %1279 = vmatpush1.bf16.msra.mxu0 %v1214
        %1280 = vmatprep.subr.bf16.mxu0 %v1217
        %1281 = vmatpush1.bf16.msra.mxu0 %v1216
        %1282 = vmatprep.subr.bf16.mxu0 %v1219
        %1283 = vmatpush1.bf16.msra.mxu0 %v1218
        %1284 = vmatprep.mubr.bf16.mxu0 %v1081
        %1285 = vmatmul.mubr.bf16.gmra.mrb[0].mxu0 %v1078
        %v1286 = vpop.f32.mrb[0].mxu0
        %v1287 = vadd.f32 0.0, %v1286
        %v1288 = vpop.f32.mrb[0].mxu0
        %v1289 = vadd.f32 0.0, %v1288
        %v1290 = vpop.f32.mrb[0].mxu0
        %v1291 = vadd.f32 0.0, %v1290
        %v1292 = vpop.f32.mrb[0].mxu0
        %v1293 = vadd.f32 0.0, %v1292
        %1294 = vmatprep.mubr.bf16.mxu0 %v1085
        %1295 = vmatmul.mubr.bf16.gmra.mrb[0].mxu0 %v1083
        %v1296 = vpop.f32.mrb[0].mxu0
        %v1297 = vadd.f32 0.0, %v1296
        %v1298 = vpop.f32.mrb[0].mxu0
        %v1299 = vadd.f32 0.0, %v1298
        %v1300 = vpop.f32.mrb[0].mxu0
        %v1301 = vadd.f32 0.0, %v1300
        %v1302 = vpop.f32.mrb[0].mxu0
        %v1303 = vadd.f32 0.0, %v1302
        %1304 = vmatprep.mubr.bf16.mxu0 %v1084
        %1305 = vmatmul.mubr.bf16.gmra.mrb[0].mxu0 %v1082
        %v1306 = vpop.f32.mrb[0].mxu0
        %v1307 = vadd.f32 0.0, %v1306
        %v1308 = vpop.f32.mrb[0].mxu0
        %v1309 = vadd.f32 0.0, %v1308
        %v1310 = vpop.f32.mrb[0].mxu0
        %v1311 = vpop.f32.mrb[0].mxu0
        %1312 = vdwg.mxu0
        %v1313 = vadd.f32 %v1026, %v1287
        %v1314 = vadd.f32 %v1027, %v1289
        %v1315 = vadd.f32 %v1028, %v1291
        %v1316 = vadd.f32 %v1029, %v1293
        %v1317 = vadd.f32 %v1030, %v1297
        %v1318 = vadd.f32 %v1031, %v1299
        %v1319 = vadd.f32 %v1032, %v1301
        %v1320 = vadd.f32 %v1033, %v1303
        %v1321 = vadd.f32 %v1034, %v1307
        %v1322 = vadd.f32 %v1035, %v1309
        %v1323 = vld [vmem:[#allocation2 + $0x20] sm:$0xff]
        %s1324 = scalar_lea.vmem [#allocation6], 768
        %v1325 = vld [vmem:[%s1324] sm:$0xff]
        %v1326 = vld [vmem:[%s1324 + $0x8] sm:$0xff]
        %v1327 = vld [vmem:[%s1324 + $0x10] sm:$0xff]
        %v1328 = vld [vmem:[%s1324 + $0x18] sm:$0xff]
        %v1329 = vld [vmem:[%s1324 + $0x20] sm:$0xff]
        %v1330 = vld [vmem:[%s1324 + $0x28] sm:$0xff]
        %v1331 = vld [vmem:[%s1324 + $0x30] sm:$0xff]
        %v1332 = vld [vmem:[%s1324 + $0x38] sm:$0xff]
        %v1333 = vld [vmem:[%s1324 + $0x40] sm:$0xff]
        %v1334 = vld [vmem:[%s1324 + $0x48] sm:$0xff]
        %v1335 = vld [vmem:[%s1324 + $0x50] sm:$0xff]
        %v1336 = vld [vmem:[%s1324 + $0x58] sm:$0xff]
        %v1337 = vld [vmem:[%s1324 + $0x60] sm:$0xff]
        %v1338 = vld [vmem:[%s1324 + $0x68] sm:$0xff]
        %v1339 = vld [vmem:[%s1324 + $0x70] sm:$0xff]
        %v1340 = vld [vmem:[%s1324 + $0x78] sm:$0xff]
        %v1341 = vld [vmem:[%s1324 + $0x80] sm:$0xff]
        %v1342 = vld [vmem:[%s1324 + $0x88] sm:$0xff]
        %v1343 = vld [vmem:[%s1324 + $0x90] sm:$0xff]
        %v1344 = vld [vmem:[%s1324 + $0x98] sm:$0xff]
        %v1345 = vld [vmem:[%s1324 + $0xa0] sm:$0xff]
        %v1346 = vld [vmem:[%s1324 + $0xa8] sm:$0xff]
        %v1347 = vld [vmem:[%s1324 + $0xb0] sm:$0xff]
        %v1348 = vld [vmem:[%s1324 + $0xb8] sm:$0xff]
        %v1349 = vld [vmem:[%s1324 + $0xc0] sm:$0xff]
        %v1350 = vld [vmem:[%s1324 + $0xc8] sm:$0xff]
        %v1351 = vld [vmem:[%s1324 + $0xd0] sm:$0xff]
        %v1352 = vld [vmem:[%s1324 + $0xd8] sm:$0xff]
        %v1353 = vld [vmem:[%s1324 + $0xe0] sm:$0xff]
        %v1354 = vld [vmem:[%s1324 + $0xe8] sm:$0xff]
        %v1355 = vld [vmem:[%s1324 + $0xf0] sm:$0xff]
        %v1356 = vld [vmem:[%s1324 + $0xf8] sm:$0xff]
        %v1358 = vunpack.c.l.b16 %v1323
        %v1359 = vunpack.c.h.b16 %v1323
        %v1360 = vpack.c.b16 %v1358, %v1358
        %v1361 = vpack.c.b16 %v1359, %v1359
        %vm1362 = vsmask.f32 6400
        %v1364 = vshrl.u32 %v1073, 16
        %v1366 = vrot.slane %v1364, 1
        %v1367 = vshll.u32 %v1073, 16
        %v1369 = vrot.slane %v1367, 2
        %v1370 = vor.u32 %v1366, %v1369
        %v1371 = vrot.slane %v777, 1
        %v1372 = vrot.slane %v761, 2
        %v1373 = vor.u32 %v1371, %v1372
        %v1374 = vsel %vm1362, %v1370, %v1373
        %v1376 = vshrl.u32 %v1074, 16
        %v1378 = vrot.slane %v1376, 1
        %v1379 = vshll.u32 %v1074, 16
        %v1381 = vrot.slane %v1379, 2
        %v1382 = vor.u32 %v1378, %v1381
        %v1383 = vrot.slane %v785, 1
        %v1384 = vrot.slane %v773, 2
        %v1385 = vor.u32 %v1383, %v1384
        %v1386 = vsel %vm1362, %v1382, %v1385
        %v1388 = vshrl.u32 %v1360, 16
        %v1390 = vrot.slane %v1388, 1
        %v1391 = vshll.u32 %v1360, 16
        %v1393 = vrot.slane %v1391, 2
        %v1394 = vor.u32 %v1390, %v1393
        %v1395 = vsel %vm1362, %v1373, %v1394
        %v1397 = vshrl.u32 %v1361, 16
        %v1399 = vrot.slane %v1397, 1
        %v1400 = vshll.u32 %v1361, 16
        %v1402 = vrot.slane %v1400, 2
        %v1403 = vor.u32 %v1399, %v1402
        %v1404 = vsel %vm1362, %v1385, %v1403
        %v1443 = vunpack.c.l.b16 %v1325
        %v1444 = vunpack.c.h.b16 %v1325
        %v1445 = vunpack.c.l.b16 %v1326
        %v1446 = vunpack.c.h.b16 %v1326
        %v1447 = vunpack.c.l.b16 %v1327
        %v1448 = vunpack.c.h.b16 %v1327
        %v1449 = vunpack.c.l.b16 %v1328
        %v1450 = vunpack.c.h.b16 %v1328
        %v1451 = vunpack.c.l.b16 %v1329
        %v1452 = vunpack.c.h.b16 %v1329
        %v1453 = vunpack.c.l.b16 %v1330
        %v1454 = vunpack.c.h.b16 %v1330
        %v1455 = vunpack.c.l.b16 %v1331
        %v1456 = vunpack.c.h.b16 %v1331
        %v1457 = vunpack.c.l.b16 %v1332
        %v1458 = vunpack.c.h.b16 %v1332
        %v1459 = vunpack.c.l.b16 %v1333
        %v1460 = vunpack.c.h.b16 %v1333
        %v1461 = vunpack.c.l.b16 %v1334
        %v1462 = vunpack.c.h.b16 %v1334
        %v1463 = vunpack.c.l.b16 %v1335
        %v1464 = vunpack.c.h.b16 %v1335
        %v1465 = vunpack.c.l.b16 %v1336
        %v1466 = vunpack.c.h.b16 %v1336
        %v1467 = vunpack.c.l.b16 %v1337
        %v1468 = vunpack.c.h.b16 %v1337
        %v1469 = vunpack.c.l.b16 %v1338
        %v1470 = vunpack.c.h.b16 %v1338
        %v1471 = vunpack.c.l.b16 %v1339
        %v1472 = vunpack.c.h.b16 %v1339
        %v1473 = vunpack.c.l.b16 %v1340
        %v1474 = vunpack.c.h.b16 %v1340
        %v1475 = vunpack.c.l.b16 %v1341
        %v1476 = vunpack.c.h.b16 %v1341
        %v1477 = vunpack.c.l.b16 %v1342
        %v1478 = vunpack.c.h.b16 %v1342
        %v1479 = vunpack.c.l.b16 %v1343
        %v1480 = vunpack.c.h.b16 %v1343
        %v1481 = vunpack.c.l.b16 %v1344
        %v1482 = vunpack.c.h.b16 %v1344
        %v1483 = vunpack.c.l.b16 %v1345
        %v1484 = vunpack.c.h.b16 %v1345
        %v1485 = vunpack.c.l.b16 %v1346
        %v1486 = vunpack.c.h.b16 %v1346
        %v1487 = vunpack.c.l.b16 %v1347
        %v1488 = vunpack.c.h.b16 %v1347
        %v1489 = vunpack.c.l.b16 %v1348
        %v1490 = vunpack.c.h.b16 %v1348
        %v1491 = vunpack.c.l.b16 %v1349
        %v1492 = vunpack.c.h.b16 %v1349
        %v1493 = vunpack.c.l.b16 %v1350
        %v1494 = vunpack.c.h.b16 %v1350
        %v1495 = vunpack.c.l.b16 %v1351
        %v1496 = vunpack.c.h.b16 %v1351
        %v1497 = vunpack.c.l.b16 %v1352
        %v1498 = vunpack.c.h.b16 %v1352
        %v1499 = vunpack.c.l.b16 %v1353
        %v1500 = vunpack.c.h.b16 %v1353
        %v1501 = vunpack.c.l.b16 %v1354
        %v1502 = vunpack.c.h.b16 %v1354
        %v1503 = vunpack.c.l.b16 %v1355
        %v1504 = vunpack.c.h.b16 %v1355
        %v1505 = vunpack.c.l.b16 %v1356
        %v1506 = vunpack.c.h.b16 %v1356
        %v1507 = vpack.c.b16 %v1445, %v1443
        %v1508 = vpack.c.b16 %v1446, %v1444
        %v1509 = vpack.c.b16 %v1449, %v1447
        %v1510 = vpack.c.b16 %v1450, %v1448
        %v1511 = vpack.c.b16 %v1453, %v1451
        %v1512 = vpack.c.b16 %v1454, %v1452
        %v1513 = vpack.c.b16 %v1457, %v1455
        %v1514 = vpack.c.b16 %v1458, %v1456
        %v1515 = vpack.c.b16 %v1461, %v1459
        %v1516 = vpack.c.b16 %v1462, %v1460
        %v1517 = vpack.c.b16 %v1465, %v1463
        %v1518 = vpack.c.b16 %v1466, %v1464
        %v1519 = vpack.c.b16 %v1469, %v1467
        %v1520 = vpack.c.b16 %v1470, %v1468
        %v1521 = vpack.c.b16 %v1473, %v1471
        %v1522 = vpack.c.b16 %v1474, %v1472
        %v1523 = vpack.c.b16 %v1477, %v1475
        %v1524 = vpack.c.b16 %v1478, %v1476
        %v1525 = vpack.c.b16 %v1481, %v1479
        %v1526 = vpack.c.b16 %v1482, %v1480
        %v1527 = vpack.c.b16 %v1485, %v1483
        %v1528 = vpack.c.b16 %v1486, %v1484
        %v1529 = vpack.c.b16 %v1489, %v1487
        %v1530 = vpack.c.b16 %v1490, %v1488
        %v1531 = vpack.c.b16 %v1493, %v1491
        %v1532 = vpack.c.b16 %v1494, %v1492
        %v1533 = vpack.c.b16 %v1497, %v1495
        %v1534 = vpack.c.b16 %v1498, %v1496
        %v1535 = vpack.c.b16 %v1501, %v1499
        %v1536 = vpack.c.b16 %v1502, %v1500
        %v1537 = vpack.c.b16 %v1505, %v1503
        %v1538 = vpack.c.b16 %v1506, %v1504
        %1571 = vmatprep.subr.bf16.mxu0 %v1508
        %1572 = vmatpush1.bf16.msra.mxu0 %v1507
        %1573 = vmatprep.subr.bf16.mxu0 %v1510
        %1574 = vmatpush1.bf16.msra.mxu0 %v1509
        %1575 = vmatprep.subr.bf16.mxu0 %v1512
        %1576 = vmatpush1.bf16.msra.mxu0 %v1511
        %1577 = vmatprep.subr.bf16.mxu0 %v1514
        %1578 = vmatpush1.bf16.msra.mxu0 %v1513
        %1579 = vmatprep.subr.bf16.mxu0 %v1516
        %1580 = vmatpush1.bf16.msra.mxu0 %v1515
        %1581 = vmatprep.subr.bf16.mxu0 %v1518
        %1582 = vmatpush1.bf16.msra.mxu0 %v1517
        %1583 = vmatprep.subr.bf16.mxu0 %v1520
        %1584 = vmatpush1.bf16.msra.mxu0 %v1519
        %1585 = vmatprep.subr.bf16.mxu0 %v1522
        %1586 = vmatpush1.bf16.msra.mxu0 %v1521
        %1587 = vmatprep.subr.bf16.mxu0 %v1524
        %1588 = vmatpush1.bf16.msra.mxu0 %v1523
        %1589 = vmatprep.subr.bf16.mxu0 %v1526
        %1590 = vmatpush1.bf16.msra.mxu0 %v1525
        %1591 = vmatprep.subr.bf16.mxu0 %v1528
        %1592 = vmatpush1.bf16.msra.mxu0 %v1527
        %1593 = vmatprep.subr.bf16.mxu0 %v1530
        %1594 = vmatpush1.bf16.msra.mxu0 %v1529
        %1595 = vmatprep.subr.bf16.mxu0 %v1532
        %1596 = vmatpush1.bf16.msra.mxu0 %v1531
        %1597 = vmatprep.subr.bf16.mxu0 %v1534
        %1598 = vmatpush1.bf16.msra.mxu0 %v1533
        %1599 = vmatprep.subr.bf16.mxu0 %v1536
        %1600 = vmatpush1.bf16.msra.mxu0 %v1535
        %1601 = vmatprep.subr.bf16.mxu0 %v1538
        %1602 = vmatpush1.bf16.msra.mxu0 %v1537
        %1603 = vmatprep.mubr.bf16.mxu0 %v1386
        %1604 = vmatmul.mubr.bf16.gmra.mrb[0].mxu0 %v1374
        %v1605 = vpop.f32.mrb[0].mxu0
        %v1606 = vadd.f32 0.0, %v1605
        %v1607 = vpop.f32.mrb[0].mxu0
        %v1608 = vadd.f32 0.0, %v1607
        %v1609 = vpop.f32.mrb[0].mxu0
        %v1610 = vadd.f32 0.0, %v1609
        %v1611 = vpop.f32.mrb[0].mxu0
        %v1612 = vadd.f32 0.0, %v1611
        %1613 = vmatprep.mubr.bf16.mxu0 %v1404
        %1614 = vmatmul.mubr.bf16.gmra.mrb[0].mxu0 %v1395
        %v1615 = vpop.f32.mrb[0].mxu0
        %v1616 = vadd.f32 0.0, %v1615
        %v1617 = vpop.f32.mrb[0].mxu0
        %v1618 = vadd.f32 0.0, %v1617
        %v1619 = vpop.f32.mrb[0].mxu0
        %v1620 = vadd.f32 0.0, %v1619
        %v1621 = vpop.f32.mrb[0].mxu0
        %v1622 = vadd.f32 0.0, %v1621
        %1623 = vmatprep.mubr.bf16.mxu0 %v1403
        %1624 = vmatmul.mubr.bf16.gmra.mrb[0].mxu0 %v1394
        %v1625 = vpop.f32.mrb[0].mxu0
        %v1626 = vadd.f32 0.0, %v1625
        %v1627 = vpop.f32.mrb[0].mxu0
        %v1628 = vadd.f32 0.0, %v1627
        %v1629 = vpop.f32.mrb[0].mxu0
        %v1630 = vpop.f32.mrb[0].mxu0
        %1631 = vdwg.mxu0
        %v1632 = vadd.f32 %v1313, %v1606
        %v1633 = vadd.f32 %v1314, %v1608
        %v1634 = vadd.f32 %v1315, %v1610
        %v1635 = vadd.f32 %v1316, %v1612
        %v1636 = vadd.f32 %v1317, %v1616
        %v1637 = vadd.f32 %v1318, %v1618
        %v1638 = vadd.f32 %v1319, %v1620
        %v1639 = vadd.f32 %v1320, %v1622
        %v1640 = vadd.f32 %v1321, %v1626
        %v1641 = vadd.f32 %v1322, %v1628
        %v1642 = vld [vmem:[#allocation2] sm:$0xcc]
        %s1643 = scalar_lea.vmem [#allocation6], 1024
        %v1644 = vld [vmem:[%s1643] sm:$0xff]
        %v1645 = vld [vmem:[%s1643 + $0x8] sm:$0xff]
        %v1646 = vld [vmem:[%s1643 + $0x10] sm:$0xff]
        %v1647 = vld [vmem:[%s1643 + $0x18] sm:$0xff]
        %v1648 = vld [vmem:[%s1643 + $0x20] sm:$0xff]
        %v1649 = vld [vmem:[%s1643 + $0x28] sm:$0xff]
        %v1650 = vld [vmem:[%s1643 + $0x30] sm:$0xff]
        %v1651 = vld [vmem:[%s1643 + $0x38] sm:$0xff]
        %v1652 = vld [vmem:[%s1643 + $0x40] sm:$0xff]
        %v1653 = vld [vmem:[%s1643 + $0x48] sm:$0xff]
        %v1654 = vld [vmem:[%s1643 + $0x50] sm:$0xff]
        %v1655 = vld [vmem:[%s1643 + $0x58] sm:$0xff]
        %v1656 = vld [vmem:[%s1643 + $0x60] sm:$0xff]
        %v1657 = vld [vmem:[%s1643 + $0x68] sm:$0xff]
        %v1658 = vld [vmem:[%s1643 + $0x70] sm:$0xff]
        %v1659 = vld [vmem:[%s1643 + $0x78] sm:$0xff]
        %v1660 = vld [vmem:[%s1643 + $0x80] sm:$0xff]
        %v1661 = vld [vmem:[%s1643 + $0x88] sm:$0xff]
        %v1662 = vld [vmem:[%s1643 + $0x90] sm:$0xff]
        %v1663 = vld [vmem:[%s1643 + $0x98] sm:$0xff]
        %v1664 = vld [vmem:[%s1643 + $0xa0] sm:$0xff]
        %v1665 = vld [vmem:[%s1643 + $0xa8] sm:$0xff]
        %v1666 = vld [vmem:[%s1643 + $0xb0] sm:$0xff]
        %v1667 = vld [vmem:[%s1643 + $0xb8] sm:$0xff]
        %v1668 = vld [vmem:[%s1643 + $0xc0] sm:$0xff]
        %v1669 = vld [vmem:[%s1643 + $0xc8] sm:$0xff]
        %v1670 = vld [vmem:[%s1643 + $0xd0] sm:$0xff]
        %v1671 = vld [vmem:[%s1643 + $0xd8] sm:$0xff]
        %v1672 = vld [vmem:[%s1643 + $0xe0] sm:$0xff]
        %v1673 = vld [vmem:[%s1643 + $0xe8] sm:$0xff]
        %v1674 = vld [vmem:[%s1643 + $0xf0] sm:$0xff]
        %v1675 = vld [vmem:[%s1643 + $0xf8] sm:$0xff]
        %v1677 = vunpack.c.l.b16 %v1642
        %v1678 = vunpack.c.h.b16 %v1642
        %v1679 = vpack.c.b16 %v462, %v1677
        %v1680 = vpack.c.b16 %v463, %v1678
        %vm1681 = vcmask 1045504
        %v1682 = vrot.slane %v1679, 2
        %v1683 = vrot.slane %v472, 2
        %v1684 = vsel %vm1681, %v1682, %v1683
        %v1685 = vrot.slane %v1680, 2
        %v1686 = vrot.slane %v473, 2
        %v1687 = vsel %vm1681, %v1685, %v1686
        %v1688 = vrot.slane %v1360, 2
        %v1689 = vsel %vm1681, %v1683, %v1688
        %v1690 = vrot.slane %v1361, 2
        %v1691 = vsel %vm1681, %v1686, %v1690
        %v1730 = vunpack.c.l.b16 %v1644
        %v1731 = vunpack.c.h.b16 %v1644
        %v1732 = vunpack.c.l.b16 %v1645
        %v1733 = vunpack.c.h.b16 %v1645
        %v1734 = vunpack.c.l.b16 %v1646
        %v1735 = vunpack.c.h.b16 %v1646
        %v1736 = vunpack.c.l.b16 %v1647
        %v1737 = vunpack.c.h.b16 %v1647
        %v1738 = vunpack.c.l.b16 %v1648
        %v1739 = vunpack.c.h.b16 %v1648
        %v1740 = vunpack.c.l.b16 %v1649
        %v1741 = vunpack.c.h.b16 %v1649
        %v1742 = vunpack.c.l.b16 %v1650
        %v1743 = vunpack.c.h.b16 %v1650
        %v1744 = vunpack.c.l.b16 %v1651
        %v1745 = vunpack.c.h.b16 %v1651
        %v1746 = vunpack.c.l.b16 %v1652
        %v1747 = vunpack.c.h.b16 %v1652
        %v1748 = vunpack.c.l.b16 %v1653
        %v1749 = vunpack.c.h.b16 %v1653
        %v1750 = vunpack.c.l.b16 %v1654
        %v1751 = vunpack.c.h.b16 %v1654
        %v1752 = vunpack.c.l.b16 %v1655
        %v1753 = vunpack.c.h.b16 %v1655
        %v1754 = vunpack.c.l.b16 %v1656
        %v1755 = vunpack.c.h.b16 %v1656
        %v1756 = vunpack.c.l.b16 %v1657
        %v1757 = vunpack.c.h.b16 %v1657
        %v1758 = vunpack.c.l.b16 %v1658
        %v1759 = vunpack.c.h.b16 %v1658
        %v1760 = vunpack.c.l.b16 %v1659
        %v1761 = vunpack.c.h.b16 %v1659
        %v1762 = vunpack.c.l.b16 %v1660
        %v1763 = vunpack.c.h.b16 %v1660
        %v1764 = vunpack.c.l.b16 %v1661
        %v1765 = vunpack.c.h.b16 %v1661
        %v1766 = vunpack.c.l.b16 %v1662
        %v1767 = vunpack.c.h.b16 %v1662
        %v1768 = vunpack.c.l.b16 %v1663
        %v1769 = vunpack.c.h.b16 %v1663
        %v1770 = vunpack.c.l.b16 %v1664
        %v1771 = vunpack.c.h.b16 %v1664
        %v1772 = vunpack.c.l.b16 %v1665
        %v1773 = vunpack.c.h.b16 %v1665
        %v1774 = vunpack.c.l.b16 %v1666
        %v1775 = vunpack.c.h.b16 %v1666
        %v1776 = vunpack.c.l.b16 %v1667
        %v1777 = vunpack.c.h.b16 %v1667
        %v1778 = vunpack.c.l.b16 %v1668
        %v1779 = vunpack.c.h.b16 %v1668
        %v1780 = vunpack.c.l.b16 %v1669
        %v1781 = vunpack.c.h.b16 %v1669
        %v1782 = vunpack.c.l.b16 %v1670
        %v1783 = vunpack.c.h.b16 %v1670
        %v1784 = vunpack.c.l.b16 %v1671
        %v1785 = vunpack.c.h.b16 %v1671
        %v1786 = vunpack.c.l.b16 %v1672
        %v1787 = vunpack.c.h.b16 %v1672
        %v1788 = vunpack.c.l.b16 %v1673
        %v1789 = vunpack.c.h.b16 %v1673
        %v1790 = vunpack.c.l.b16 %v1674
        %v1791 = vunpack.c.h.b16 %v1674
        %v1792 = vunpack.c.l.b16 %v1675
        %v1793 = vunpack.c.h.b16 %v1675
        %v1794 = vpack.c.b16 %v1732, %v1730
        %v1795 = vpack.c.b16 %v1733, %v1731
        %v1796 = vpack.c.b16 %v1736, %v1734
        %v1797 = vpack.c.b16 %v1737, %v1735
        %v1798 = vpack.c.b16 %v1740, %v1738
        %v1799 = vpack.c.b16 %v1741, %v1739
        %v1800 = vpack.c.b16 %v1744, %v1742
        %v1801 = vpack.c.b16 %v1745, %v1743
        %v1802 = vpack.c.b16 %v1748, %v1746
        %v1803 = vpack.c.b16 %v1749, %v1747
        %v1804 = vpack.c.b16 %v1752, %v1750
        %v1805 = vpack.c.b16 %v1753, %v1751
        %v1806 = vpack.c.b16 %v1756, %v1754
        %v1807 = vpack.c.b16 %v1757, %v1755
        %v1808 = vpack.c.b16 %v1760, %v1758
        %v1809 = vpack.c.b16 %v1761, %v1759
        %v1810 = vpack.c.b16 %v1764, %v1762
        %v1811 = vpack.c.b16 %v1765, %v1763
        %v1812 = vpack.c.b16 %v1768, %v1766
        %v1813 = vpack.c.b16 %v1769, %v1767
        %v1814 = vpack.c.b16 %v1772, %v1770
        %v1815 = vpack.c.b16 %v1773, %v1771
        %v1816 = vpack.c.b16 %v1776, %v1774
        %v1817 = vpack.c.b16 %v1777, %v1775
        %v1818 = vpack.c.b16 %v1780, %v1778
        %v1819 = vpack.c.b16 %v1781, %v1779
        %v1820 = vpack.c.b16 %v1784, %v1782
        %v1821 = vpack.c.b16 %v1785, %v1783
        %v1822 = vpack.c.b16 %v1788, %v1786
        %v1823 = vpack.c.b16 %v1789, %v1787
        %v1824 = vpack.c.b16 %v1792, %v1790
        %v1825 = vpack.c.b16 %v1793, %v1791
        %1858 = vmatprep.subr.bf16.mxu0 %v1795
        %1859 = vmatpush1.bf16.msra.mxu0 %v1794
        %1860 = vmatprep.subr.bf16.mxu0 %v1797
        %1861 = vmatpush1.bf16.msra.mxu0 %v1796
        %1862 = vmatprep.subr.bf16.mxu0 %v1799
        %1863 = vmatpush1.bf16.msra.mxu0 %v1798
        %1864 = vmatprep.subr.bf16.mxu0 %v1801
        %1865 = vmatpush1.bf16.msra.mxu0 %v1800
        %1866 = vmatprep.subr.bf16.mxu0 %v1803
        %1867 = vmatpush1.bf16.msra.mxu0 %v1802
        %1868 = vmatprep.subr.bf16.mxu0 %v1805
        %1869 = vmatpush1.bf16.msra.mxu0 %v1804
        %1870 = vmatprep.subr.bf16.mxu0 %v1807
        %1871 = vmatpush1.bf16.msra.mxu0 %v1806
        %1872 = vmatprep.subr.bf16.mxu0 %v1809
        %1873 = vmatpush1.bf16.msra.mxu0 %v1808
        %1874 = vmatprep.subr.bf16.mxu0 %v1811
        %1875 = vmatpush1.bf16.msra.mxu0 %v1810
        %1876 = vmatprep.subr.bf16.mxu0 %v1813
        %1877 = vmatpush1.bf16.msra.mxu0 %v1812
        %1878 = vmatprep.subr.bf16.mxu0 %v1815
        %1879 = vmatpush1.bf16.msra.mxu0 %v1814
        %1880 = vmatprep.subr.bf16.mxu0 %v1817
        %1881 = vmatpush1.bf16.msra.mxu0 %v1816
        %1882 = vmatprep.subr.bf16.mxu0 %v1819
        %1883 = vmatpush1.bf16.msra.mxu0 %v1818
        %1884 = vmatprep.subr.bf16.mxu0 %v1821
        %1885 = vmatpush1.bf16.msra.mxu0 %v1820
        %1886 = vmatprep.subr.bf16.mxu0 %v1823
        %1887 = vmatpush1.bf16.msra.mxu0 %v1822
        %1888 = vmatprep.subr.bf16.mxu0 %v1825
        %1889 = vmatpush1.bf16.msra.mxu0 %v1824
        %1890 = vmatprep.mubr.bf16.mxu0 %v1687
        %1891 = vmatmul.mubr.bf16.gmra.mrb[0].mxu0 %v1684
        %v1892 = vpop.f32.mrb[0].mxu0
        %v1893 = vadd.f32 0.0, %v1892
        %v1894 = vpop.f32.mrb[0].mxu0
        %v1895 = vadd.f32 0.0, %v1894
        %v1896 = vpop.f32.mrb[0].mxu0
        %v1897 = vadd.f32 0.0, %v1896
        %v1898 = vpop.f32.mrb[0].mxu0
        %v1899 = vadd.f32 0.0, %v1898
        %1900 = vmatprep.mubr.bf16.mxu0 %v1691
        %1901 = vmatmul.mubr.bf16.gmra.mrb[0].mxu0 %v1689
        %v1902 = vpop.f32.mrb[0].mxu0
        %v1903 = vadd.f32 0.0, %v1902
        %v1904 = vpop.f32.mrb[0].mxu0
        %v1905 = vadd.f32 0.0, %v1904
        %v1906 = vpop.f32.mrb[0].mxu0
        %v1907 = vadd.f32 0.0, %v1906
        %v1908 = vpop.f32.mrb[0].mxu0
        %v1909 = vadd.f32 0.0, %v1908
        %1910 = vmatprep.mubr.bf16.mxu0 %v1690
        %1911 = vmatmul.mubr.bf16.gmra.mrb[0].mxu0 %v1688
        %v1912 = vpop.f32.mrb[0].mxu0
        %v1913 = vadd.f32 0.0, %v1912
        %v1914 = vpop.f32.mrb[0].mxu0
        %v1915 = vadd.f32 0.0, %v1914
        %v1916 = vpop.f32.mrb[0].mxu0
        %v1917 = vpop.f32.mrb[0].mxu0
        %1918 = vdwg.mxu0
        %v1919 = vadd.f32 %v1632, %v1893
        %v1920 = vadd.f32 %v1633, %v1895
        %v1921 = vadd.f32 %v1634, %v1897
        %v1922 = vadd.f32 %v1635, %v1899
        %v1923 = vadd.f32 %v1636, %v1903
        %v1924 = vadd.f32 %v1637, %v1905
        %v1925 = vadd.f32 %v1638, %v1907
        %v1926 = vadd.f32 %v1639, %v1909
        %v1927 = vadd.f32 %v1640, %v1913
        %v1928 = vadd.f32 %v1641, %v1915
        %v1929 = vpack.c.bf16 %v1921, %v1919
        %v1930 = vpack.c.bf16 %v1922, %v1920
        %v1933 = vunpack.c.l.b16 %v1929
        %v1934 = vunpack.c.l.b16 %v1930
        %v1935 = vunpack.c.h.b16 %v1929
        %v1936 = vunpack.c.h.b16 %v1930
        %v1937 = vpack.c.b16 %v1934, %v1933
        %v1938 = vpack.c.b16 %v1936, %v1935
        %v1939 = vrot.slane %v1937, 7
        %v1940 = vrot.slane %v1939, 4
        %v1941 = vrot.slane %v1938, 7
        %v1942 = vsel %vm365, %v1940, %v1941
        %v1943 = vrot.slane %v1941, 4
        %1947 = vst [vmem:[#allocation2] sm:$0xee] %v1939
        %1948 = vst [vmem:[#allocation2 + $0x8] sm:$0xff] %v1942
        %1949 = vst [vmem:[#allocation2 + $0x10] sm:$0x11] %v1943
        %v1950 = vpack.c.bf16 %v1925, %v1923
        %v1951 = vpack.c.bf16 %v1926, %v1924
        %v1952 = vpack.c.bf16 %v1927, %v1927
        %v1953 = vpack.c.bf16 %v1928, %v1928
        %v1958 = vunpack.c.l.b16 %v1950
        %v1959 = vunpack.c.l.b16 %v1951
        %v1960 = vunpack.c.h.b16 %v1950
        %v1961 = vunpack.c.h.b16 %v1951
        %v1962 = vunpack.c.l.b16 %v1952
        %v1963 = vunpack.c.l.b16 %v1953
        %v1964 = vpack.c.b16 %v1959, %v1958
        %v1965 = vpack.c.b16 %v1961, %v1960
        %v1966 = vpack.c.b16 %v1963, %v1962
        %v1967 = vrot.slane %v1964, 7
        %v1968 = vrot.slane %v1967, 4
        %v1969 = vrot.slane %v1965, 7
        %v1970 = vsel %vm365, %v1968, %v1969
        %v1971 = vrot.slane %v1969, 4
        %v1972 = vrot.slane %v1966, 7
        %v1973 = vsel %vm365, %v1971, %v1972
        %1977 = vst [vmem:[#allocation2 + $0x10] sm:$0x88] %v1967
        %1978 = vst [vmem:[#allocation2 + $0x18] sm:$0xff] %v1970
        %1979 = vst [vmem:[#allocation2 + $0x20] sm:$0x77] %v1973
        %v1980 = vld [vmem:[%s4] sm:$0x3]
        %v1982 = vlaneseq
        %v1983 = vshrl.u32 %v1982, 7
        %v1984 = vsub.s32 0, %v1983
        %v1985 = vrot.slane %v1980, %v1984
        %v1986 = vlaneseq
        %v1987 = vshrl.u32 %v1986, 7
        %v1988 = vsub.s32 1, %v1987
        %v1989 = vrot.slane %v1980, %v1988
        %v1992 = vld [vmem:[#allocation2] sm:$0xff]
        %v1993 = vld [vmem:[#allocation2 + $0x8] sm:$0xff]
        %v1994 = vld [vmem:[#allocation2 + $0x10] sm:$0xff]
        %v1995 = vld [vmem:[#allocation2 + $0x18] sm:$0xff]
        %v1996 = vld [vmem:[#allocation2 + $0x20] sm:$0x77]
        %v1997 = vld [vmem:[#allocation8] sm:$0xff]
        %v1998 = vld [vmem:[#allocation8 + $0x8] sm:$0xff]
        %v1999 = vld [vmem:[#allocation8 + $0x10] sm:$0xff]
        %v2000 = vld [vmem:[#allocation8 + $0x18] sm:$0xff]
        %v2001 = vld [vmem:[#allocation8 + $0x20] sm:$0xff]
        %v2002 = vld [vmem:[#allocation8 + $0x28] sm:$0xff]
        %v2003 = vld [vmem:[#allocation8 + $0x30] sm:$0xff]
        %v2004 = vld [vmem:[#allocation8 + $0x38] sm:$0xff]
        %v2005 = vld [vmem:[#allocation8 + $0x40] sm:$0xff]
        %v2006 = vld [vmem:[#allocation8 + $0x48] sm:$0xff]
        %v2007 = vld [vmem:[#allocation8 + $0x50] sm:$0xff]
        %v2008 = vld [vmem:[#allocation8 + $0x58] sm:$0xff]
        %v2009 = vld [vmem:[#allocation8 + $0x60] sm:$0xff]
        %v2010 = vld [vmem:[#allocation8 + $0x68] sm:$0xff]
        %v2011 = vld [vmem:[#allocation8 + $0x70] sm:$0xff]
        %v2012 = vld [vmem:[#allocation8 + $0x78] sm:$0xff]
        %v2013 = vld [vmem:[#allocation8 + $0x80] sm:$0xff]
        %v2014 = vld [vmem:[#allocation8 + $0x88] sm:$0xff]
        %v2015 = vld [vmem:[#allocation8 + $0x90] sm:$0xff]
        %v2016 = vld [vmem:[#allocation8 + $0x98] sm:$0xff]
        %v2017 = vld [vmem:[#allocation8 + $0xa0] sm:$0xff]
        %v2018 = vld [vmem:[#allocation8 + $0xa8] sm:$0xff]
        %v2019 = vld [vmem:[#allocation8 + $0xb0] sm:$0xff]
        %v2020 = vld [vmem:[#allocation8 + $0xb8] sm:$0xff]
        %v2021 = vld [vmem:[#allocation8 + $0xc0] sm:$0xff]
        %v2022 = vld [vmem:[#allocation8 + $0xc8] sm:$0xff]
        %v2023 = vld [vmem:[#allocation8 + $0xd0] sm:$0xff]
        %v2024 = vld [vmem:[#allocation8 + $0xd8] sm:$0xff]
        %v2025 = vld [vmem:[#allocation8 + $0xe0] sm:$0xff]
        %v2026 = vld [vmem:[#allocation8 + $0xe8] sm:$0xff]
        %v2027 = vld [vmem:[#allocation8 + $0xf0] sm:$0xff]
        %v2028 = vld [vmem:[#allocation8 + $0xf8] sm:$0xff]
        %v2034 = vunpack.c.l.b16 %v1992
        %v2035 = vunpack.c.h.b16 %v1992
        %v2036 = vunpack.c.l.b16 %v1993
        %v2037 = vunpack.c.h.b16 %v1993
        %v2038 = vunpack.c.l.b16 %v1994
        %v2039 = vunpack.c.h.b16 %v1994
        %v2040 = vunpack.c.l.b16 %v1995
        %v2041 = vunpack.c.h.b16 %v1995
        %v2042 = vunpack.c.l.b16 %v1996
        %v2043 = vunpack.c.h.b16 %v1996
        %v2044 = vpack.c.b16 %v2036, %v2034
        %v2045 = vpack.c.b16 %v2037, %v2035
        %v2046 = vpack.c.b16 %v2040, %v2038
        %v2047 = vpack.c.b16 %v2041, %v2039
        %v2048 = vpack.c.b16 %v2042, %v2042
        %v2049 = vpack.c.b16 %v2043, %v2043
        %v2051 = vshrl.u32 %v2044, 16
        %v2053 = vshll.u32 %v2044, 16
        %v2055 = vrot.slane %v2053, 1
        %v2056 = vor.u32 %v2051, %v2055
        %v2058 = vshll.u32 %v2046, 16
        %v2060 = vrot.slane %v2058, 1
        %v2061 = vsel %vm752, %v2056, %v2060
        %v2063 = vshrl.u32 %v2045, 16
        %v2065 = vshll.u32 %v2045, 16
        %v2067 = vrot.slane %v2065, 1
        %v2068 = vor.u32 %v2063, %v2067
        %v2070 = vshll.u32 %v2047, 16
        %v2072 = vrot.slane %v2070, 1
        %v2073 = vsel %vm752, %v2068, %v2072
        %v2074 = vshrl.u32 %v2046, 16
        %v2076 = vor.u32 %v2074, %v2060
        %v2078 = vshll.u32 %v2048, 16
        %v2080 = vrot.slane %v2078, 1
        %v2081 = vsel %vm752, %v2076, %v2080
        %v2082 = vshrl.u32 %v2047, 16
        %v2084 = vor.u32 %v2082, %v2072
        %v2086 = vshll.u32 %v2049, 16
        %v2088 = vrot.slane %v2086, 1
        %v2089 = vsel %vm752, %v2084, %v2088
        %v2090 = vshrl.u32 %v2048, 16
        %v2092 = vor.u32 %v2090, %v2080
        %v2093 = vshrl.u32 %v2049, 16
        %v2095 = vor.u32 %v2093, %v2088
        %v2134 = vunpack.c.l.b16 %v1997
        %v2135 = vunpack.c.h.b16 %v1997
        %v2136 = vunpack.c.l.b16 %v1998
        %v2137 = vunpack.c.h.b16 %v1998
        %v2138 = vunpack.c.l.b16 %v1999
        %v2139 = vunpack.c.h.b16 %v1999
        %v2140 = vunpack.c.l.b16 %v2000
        %v2141 = vunpack.c.h.b16 %v2000
        %v2142 = vunpack.c.l.b16 %v2001
        %v2143 = vunpack.c.h.b16 %v2001
        %v2144 = vunpack.c.l.b16 %v2002
        %v2145 = vunpack.c.h.b16 %v2002
        %v2146 = vunpack.c.l.b16 %v2003
        %v2147 = vunpack.c.h.b16 %v2003
        %v2148 = vunpack.c.l.b16 %v2004
        %v2149 = vunpack.c.h.b16 %v2004
        %v2150 = vunpack.c.l.b16 %v2005
        %v2151 = vunpack.c.h.b16 %v2005
        %v2152 = vunpack.c.l.b16 %v2006
        %v2153 = vunpack.c.h.b16 %v2006
        %v2154 = vunpack.c.l.b16 %v2007
        %v2155 = vunpack.c.h.b16 %v2007
        %v2156 = vunpack.c.l.b16 %v2008
        %v2157 = vunpack.c.h.b16 %v2008
        %v2158 = vunpack.c.l.b16 %v2009
        %v2159 = vunpack.c.h.b16 %v2009
        %v2160 = vunpack.c.l.b16 %v2010
        %v2161 = vunpack.c.h.b16 %v2010
        %v2162 = vunpack.c.l.b16 %v2011
        %v2163 = vunpack.c.h.b16 %v2011
        %v2164 = vunpack.c.l.b16 %v2012
        %v2165 = vunpack.c.h.b16 %v2012
        %v2166 = vunpack.c.l.b16 %v2013
        %v2167 = vunpack.c.h.b16 %v2013
        %v2168 = vunpack.c.l.b16 %v2014
        %v2169 = vunpack.c.h.b16 %v2014
        %v2170 = vunpack.c.l.b16 %v2015
        %v2171 = vunpack.c.h.b16 %v2015
        %v2172 = vunpack.c.l.b16 %v2016
        %v2173 = vunpack.c.h.b16 %v2016
        %v2174 = vunpack.c.l.b16 %v2017
        %v2175 = vunpack.c.h.b16 %v2017
        %v2176 = vunpack.c.l.b16 %v2018
        %v2177 = vunpack.c.h.b16 %v2018
        %v2178 = vunpack.c.l.b16 %v2019
        %v2179 = vunpack.c.h.b16 %v2019
        %v2180 = vunpack.c.l.b16 %v2020
        %v2181 = vunpack.c.h.b16 %v2020
        %v2182 = vunpack.c.l.b16 %v2021
        %v2183 = vunpack.c.h.b16 %v2021
        %v2184 = vunpack.c.l.b16 %v2022
        %v2185 = vunpack.c.h.b16 %v2022
        %v2186 = vunpack.c.l.b16 %v2023
        %v2187 = vunpack.c.h.b16 %v2023
        %v2188 = vunpack.c.l.b16 %v2024
        %v2189 = vunpack.c.h.b16 %v2024
        %v2190 = vunpack.c.l.b16 %v2025
        %v2191 = vunpack.c.h.b16 %v2025
        %v2192 = vunpack.c.l.b16 %v2026
        %v2193 = vunpack.c.h.b16 %v2026
        %v2194 = vunpack.c.l.b16 %v2027
        %v2195 = vunpack.c.h.b16 %v2027
        %v2196 = vunpack.c.l.b16 %v2028
        %v2197 = vunpack.c.h.b16 %v2028
        %v2198 = vpack.c.b16 %v2136, %v2134
        %v2199 = vpack.c.b16 %v2137, %v2135
        %v2200 = vpack.c.b16 %v2140, %v2138
        %v2201 = vpack.c.b16 %v2141, %v2139
        %v2202 = vpack.c.b16 %v2144, %v2142
        %v2203 = vpack.c.b16 %v2145, %v2143
        %v2204 = vpack.c.b16 %v2148, %v2146
        %v2205 = vpack.c.b16 %v2149, %v2147
        %v2206 = vpack.c.b16 %v2152, %v2150
        %v2207 = vpack.c.b16 %v2153, %v2151
        %v2208 = vpack.c.b16 %v2156, %v2154
        %v2209 = vpack.c.b16 %v2157, %v2155
        %v2210 = vpack.c.b16 %v2160, %v2158
        %v2211 = vpack.c.b16 %v2161, %v2159
        %v2212 = vpack.c.b16 %v2164, %v2162
        %v2213 = vpack.c.b16 %v2165, %v2163
        %v2214 = vpack.c.b16 %v2168, %v2166
        %v2215 = vpack.c.b16 %v2169, %v2167
        %v2216 = vpack.c.b16 %v2172, %v2170
        %v2217 = vpack.c.b16 %v2173, %v2171
        %v2218 = vpack.c.b16 %v2176, %v2174
        %v2219 = vpack.c.b16 %v2177, %v2175
        %v2220 = vpack.c.b16 %v2180, %v2178
        %v2221 = vpack.c.b16 %v2181, %v2179
        %v2222 = vpack.c.b16 %v2184, %v2182
        %v2223 = vpack.c.b16 %v2185, %v2183
        %v2224 = vpack.c.b16 %v2188, %v2186
        %v2225 = vpack.c.b16 %v2189, %v2187
        %v2226 = vpack.c.b16 %v2192, %v2190
        %v2227 = vpack.c.b16 %v2193, %v2191
        %v2228 = vpack.c.b16 %v2196, %v2194
        %v2229 = vpack.c.b16 %v2197, %v2195
        %2262 = vmatprep.subr.bf16.mxu0 %v2199
        %2263 = vmatpush1.bf16.msra.mxu0 %v2198
        %2264 = vmatprep.subr.bf16.mxu0 %v2201
        %2265 = vmatpush1.bf16.msra.mxu0 %v2200
        %2266 = vmatprep.subr.bf16.mxu0 %v2203
        %2267 = vmatpush1.bf16.msra.mxu0 %v2202
        %2268 = vmatprep.subr.bf16.mxu0 %v2205
        %2269 = vmatpush1.bf16.msra.mxu0 %v2204
        %2270 = vmatprep.subr.bf16.mxu0 %v2207
        %2271 = vmatpush1.bf16.msra.mxu0 %v2206
        %2272 = vmatprep.subr.bf16.mxu0 %v2209
        %2273 = vmatpush1.bf16.msra.mxu0 %v2208
        %2274 = vmatprep.subr.bf16.mxu0 %v2211
        %2275 = vmatpush1.bf16.msra.mxu0 %v2210
        %2276 = vmatprep.subr.bf16.mxu0 %v2213
        %2277 = vmatpush1.bf16.msra.mxu0 %v2212
        %2278 = vmatprep.subr.bf16.mxu0 %v2215
        %2279 = vmatpush1.bf16.msra.mxu0 %v2214
        %2280 = vmatprep.subr.bf16.mxu0 %v2217
        %2281 = vmatpush1.bf16.msra.mxu0 %v2216
        %2282 = vmatprep.subr.bf16.mxu0 %v2219
        %2283 = vmatpush1.bf16.msra.mxu0 %v2218
        %2284 = vmatprep.subr.bf16.mxu0 %v2221
        %2285 = vmatpush1.bf16.msra.mxu0 %v2220
        %2286 = vmatprep.subr.bf16.mxu0 %v2223
        %2287 = vmatpush1.bf16.msra.mxu0 %v2222
        %2288 = vmatprep.subr.bf16.mxu0 %v2225
        %2289 = vmatpush1.bf16.msra.mxu0 %v2224
        %2290 = vmatprep.subr.bf16.mxu0 %v2227
        %2291 = vmatpush1.bf16.msra.mxu0 %v2226
        %2292 = vmatprep.subr.bf16.mxu0 %v2229
        %2293 = vmatpush1.bf16.msra.mxu0 %v2228
        %2294 = vmatprep.mubr.bf16.mxu0 %v2073
        %2295 = vmatmul.mubr.bf16.gmra.mrb[0].mxu0 %v2061
        %v2296 = vpop.f32.mrb[0].mxu0
        %v2297 = vadd.f32 0.0, %v2296
        %v2298 = vpop.f32.mrb[0].mxu0
        %v2299 = vadd.f32 0.0, %v2298
        %v2300 = vpop.f32.mrb[0].mxu0
        %v2301 = vadd.f32 0.0, %v2300
        %v2302 = vpop.f32.mrb[0].mxu0
        %v2303 = vadd.f32 0.0, %v2302
        %2304 = vmatprep.mubr.bf16.mxu0 %v2089
        %2305 = vmatmul.mubr.bf16.gmra.mrb[0].mxu0 %v2081
        %v2306 = vpop.f32.mrb[0].mxu0
        %v2307 = vadd.f32 0.0, %v2306
        %v2308 = vpop.f32.mrb[0].mxu0
        %v2309 = vadd.f32 0.0, %v2308
        %v2310 = vpop.f32.mrb[0].mxu0
        %v2311 = vadd.f32 0.0, %v2310
        %v2312 = vpop.f32.mrb[0].mxu0
        %v2313 = vadd.f32 0.0, %v2312
        %2314 = vmatprep.mubr.bf16.mxu0 %v2095
        %2315 = vmatmul.mubr.bf16.gmra.mrb[0].mxu0 %v2092
        %v2316 = vpop.f32.mrb[0].mxu0
        %v2317 = vadd.f32 0.0, %v2316
        %v2318 = vpop.f32.mrb[0].mxu0
        %v2319 = vadd.f32 0.0, %v2318
        %v2320 = vpop.f32.mrb[0].mxu0
        %v2321 = vpop.f32.mrb[0].mxu0
        %2322 = vdwg.mxu0
        %v2323 = vadd.f32 %v1985, %v2297
        %v2324 = vadd.f32 %v1989, %v2299
        %v2325 = vadd.f32 %v1985, %v2301
        %v2326 = vadd.f32 %v1989, %v2303
        %v2327 = vadd.f32 %v1985, %v2307
        %v2328 = vadd.f32 %v1989, %v2309
        %v2329 = vadd.f32 %v1985, %v2311
        %v2330 = vadd.f32 %v1989, %v2313
        %v2331 = vadd.f32 %v1985, %v2317
        %v2332 = vadd.f32 %v1989, %v2319
        %v2333 = vld [vmem:[#allocation2] sm:$0xee]
        %s2334 = scalar_lea.vmem [#allocation8], 256
        %v2335 = vld [vmem:[%s2334] sm:$0xff]
        %v2336 = vld [vmem:[%s2334 + $0x8] sm:$0xff]
        %v2337 = vld [vmem:[%s2334 + $0x10] sm:$0xff]
        %v2338 = vld [vmem:[%s2334 + $0x18] sm:$0xff]
        %v2339 = vld [vmem:[%s2334 + $0x20] sm:$0xff]
        %v2340 = vld [vmem:[%s2334 + $0x28] sm:$0xff]
        %v2341 = vld [vmem:[%s2334 + $0x30] sm:$0xff]
        %v2342 = vld [vmem:[%s2334 + $0x38] sm:$0xff]
        %v2343 = vld [vmem:[%s2334 + $0x40] sm:$0xff]
        %v2344 = vld [vmem:[%s2334 + $0x48] sm:$0xff]
        %v2345 = vld [vmem:[%s2334 + $0x50] sm:$0xff]
        %v2346 = vld [vmem:[%s2334 + $0x58] sm:$0xff]
        %v2347 = vld [vmem:[%s2334 + $0x60] sm:$0xff]
        %v2348 = vld [vmem:[%s2334 + $0x68] sm:$0xff]
        %v2349 = vld [vmem:[%s2334 + $0x70] sm:$0xff]
        %v2350 = vld [vmem:[%s2334 + $0x78] sm:$0xff]
        %v2351 = vld [vmem:[%s2334 + $0x80] sm:$0xff]
        %v2352 = vld [vmem:[%s2334 + $0x88] sm:$0xff]
        %v2353 = vld [vmem:[%s2334 + $0x90] sm:$0xff]
        %v2354 = vld [vmem:[%s2334 + $0x98] sm:$0xff]
        %v2355 = vld [vmem:[%s2334 + $0xa0] sm:$0xff]
        %v2356 = vld [vmem:[%s2334 + $0xa8] sm:$0xff]
        %v2357 = vld [vmem:[%s2334 + $0xb0] sm:$0xff]
        %v2358 = vld [vmem:[%s2334 + $0xb8] sm:$0xff]
        %v2359 = vld [vmem:[%s2334 + $0xc0] sm:$0xff]
        %v2360 = vld [vmem:[%s2334 + $0xc8] sm:$0xff]
        %v2361 = vld [vmem:[%s2334 + $0xd0] sm:$0xff]
        %v2362 = vld [vmem:[%s2334 + $0xd8] sm:$0xff]
        %v2363 = vld [vmem:[%s2334 + $0xe0] sm:$0xff]
        %v2364 = vld [vmem:[%s2334 + $0xe8] sm:$0xff]
        %v2365 = vld [vmem:[%s2334 + $0xf0] sm:$0xff]
        %v2366 = vld [vmem:[%s2334 + $0xf8] sm:$0xff]
        %v2368 = vunpack.c.l.b16 %v2333
        %v2369 = vunpack.c.h.b16 %v2333
        %v2370 = vpack.c.b16 %v2036, %v2368
        %v2371 = vpack.c.b16 %v2037, %v2369
        %v2372 = vrot.slane %v2370, 1
        %v2373 = vrot.slane %v2046, 1
        %v2374 = vsel %vm1075, %v2372, %v2373
        %v2375 = vrot.slane %v2371, 1
        %v2376 = vrot.slane %v2047, 1
        %v2377 = vsel %vm1075, %v2375, %v2376
        %v2378 = vrot.slane %v2048, 1
        %v2379 = vsel %vm1075, %v2373, %v2378
        %v2380 = vrot.slane %v2049, 1
        %v2381 = vsel %vm1075, %v2376, %v2380
        %v2420 = vunpack.c.l.b16 %v2335
        %v2421 = vunpack.c.h.b16 %v2335
        %v2422 = vunpack.c.l.b16 %v2336
        %v2423 = vunpack.c.h.b16 %v2336
        %v2424 = vunpack.c.l.b16 %v2337
        %v2425 = vunpack.c.h.b16 %v2337
        %v2426 = vunpack.c.l.b16 %v2338
        %v2427 = vunpack.c.h.b16 %v2338
        %v2428 = vunpack.c.l.b16 %v2339
        %v2429 = vunpack.c.h.b16 %v2339
        %v2430 = vunpack.c.l.b16 %v2340
        %v2431 = vunpack.c.h.b16 %v2340
        %v2432 = vunpack.c.l.b16 %v2341
        %v2433 = vunpack.c.h.b16 %v2341
        %v2434 = vunpack.c.l.b16 %v2342
        %v2435 = vunpack.c.h.b16 %v2342
        %v2436 = vunpack.c.l.b16 %v2343
        %v2437 = vunpack.c.h.b16 %v2343
        %v2438 = vunpack.c.l.b16 %v2344
        %v2439 = vunpack.c.h.b16 %v2344
        %v2440 = vunpack.c.l.b16 %v2345
        %v2441 = vunpack.c.h.b16 %v2345
        %v2442 = vunpack.c.l.b16 %v2346
        %v2443 = vunpack.c.h.b16 %v2346
        %v2444 = vunpack.c.l.b16 %v2347
        %v2445 = vunpack.c.h.b16 %v2347
        %v2446 = vunpack.c.l.b16 %v2348
        %v2447 = vunpack.c.h.b16 %v2348
        %v2448 = vunpack.c.l.b16 %v2349
        %v2449 = vunpack.c.h.b16 %v2349
        %v2450 = vunpack.c.l.b16 %v2350
        %v2451 = vunpack.c.h.b16 %v2350
        %v2452 = vunpack.c.l.b16 %v2351
        %v2453 = vunpack.c.h.b16 %v2351
        %v2454 = vunpack.c.l.b16 %v2352
        %v2455 = vunpack.c.h.b16 %v2352
        %v2456 = vunpack.c.l.b16 %v2353
        %v2457 = vunpack.c.h.b16 %v2353
        %v2458 = vunpack.c.l.b16 %v2354
        %v2459 = vunpack.c.h.b16 %v2354
        %v2460 = vunpack.c.l.b16 %v2355
        %v2461 = vunpack.c.h.b16 %v2355
        %v2462 = vunpack.c.l.b16 %v2356
        %v2463 = vunpack.c.h.b16 %v2356
        %v2464 = vunpack.c.l.b16 %v2357
        %v2465 = vunpack.c.h.b16 %v2357
        %v2466 = vunpack.c.l.b16 %v2358
        %v2467 = vunpack.c.h.b16 %v2358
        %v2468 = vunpack.c.l.b16 %v2359
        %v2469 = vunpack.c.h.b16 %v2359
        %v2470 = vunpack.c.l.b16 %v2360
        %v2471 = vunpack.c.h.b16 %v2360
        %v2472 = vunpack.c.l.b16 %v2361
        %v2473 = vunpack.c.h.b16 %v2361
        %v2474 = vunpack.c.l.b16 %v2362
        %v2475 = vunpack.c.h.b16 %v2362
        %v2476 = vunpack.c.l.b16 %v2363
        %v2477 = vunpack.c.h.b16 %v2363
        %v2478 = vunpack.c.l.b16 %v2364
        %v2479 = vunpack.c.h.b16 %v2364
        %v2480 = vunpack.c.l.b16 %v2365
        %v2481 = vunpack.c.h.b16 %v2365
        %v2482 = vunpack.c.l.b16 %v2366
        %v2483 = vunpack.c.h.b16 %v2366
        %v2484 = vpack.c.b16 %v2422, %v2420
        %v2485 = vpack.c.b16 %v2423, %v2421
        %v2486 = vpack.c.b16 %v2426, %v2424
        %v2487 = vpack.c.b16 %v2427, %v2425
        %v2488 = vpack.c.b16 %v2430, %v2428
        %v2489 = vpack.c.b16 %v2431, %v2429
        %v2490 = vpack.c.b16 %v2434, %v2432
        %v2491 = vpack.c.b16 %v2435, %v2433
        %v2492 = vpack.c.b16 %v2438, %v2436
        %v2493 = vpack.c.b16 %v2439, %v2437
        %v2494 = vpack.c.b16 %v2442, %v2440
        %v2495 = vpack.c.b16 %v2443, %v2441
        %v2496 = vpack.c.b16 %v2446, %v2444
        %v2497 = vpack.c.b16 %v2447, %v2445
        %v2498 = vpack.c.b16 %v2450, %v2448
        %v2499 = vpack.c.b16 %v2451, %v2449
        %v2500 = vpack.c.b16 %v2454, %v2452
        %v2501 = vpack.c.b16 %v2455, %v2453
        %v2502 = vpack.c.b16 %v2458, %v2456
        %v2503 = vpack.c.b16 %v2459, %v2457
        %v2504 = vpack.c.b16 %v2462, %v2460
        %v2505 = vpack.c.b16 %v2463, %v2461
        %v2506 = vpack.c.b16 %v2466, %v2464
        %v2507 = vpack.c.b16 %v2467, %v2465
        %v2508 = vpack.c.b16 %v2470, %v2468
        %v2509 = vpack.c.b16 %v2471, %v2469
        %v2510 = vpack.c.b16 %v2474, %v2472
        %v2511 = vpack.c.b16 %v2475, %v2473
        %v2512 = vpack.c.b16 %v2478, %v2476
        %v2513 = vpack.c.b16 %v2479, %v2477
        %v2514 = vpack.c.b16 %v2482, %v2480
        %v2515 = vpack.c.b16 %v2483, %v2481
        %2548 = vmatprep.subr.bf16.mxu0 %v2485
        %2549 = vmatpush1.bf16.msra.mxu0 %v2484
        %2550 = vmatprep.subr.bf16.mxu0 %v2487
        %2551 = vmatpush1.bf16.msra.mxu0 %v2486
        %2552 = vmatprep.subr.bf16.mxu0 %v2489
        %2553 = vmatpush1.bf16.msra.mxu0 %v2488
        %2554 = vmatprep.subr.bf16.mxu0 %v2491
        %2555 = vmatpush1.bf16.msra.mxu0 %v2490
        %2556 = vmatprep.subr.bf16.mxu0 %v2493
        %2557 = vmatpush1.bf16.msra.mxu0 %v2492
        %2558 = vmatprep.subr.bf16.mxu0 %v2495
        %2559 = vmatpush1.bf16.msra.mxu0 %v2494
        %2560 = vmatprep.subr.bf16.mxu0 %v2497
        %2561 = vmatpush1.bf16.msra.mxu0 %v2496
        %2562 = vmatprep.subr.bf16.mxu0 %v2499
        %2563 = vmatpush1.bf16.msra.mxu0 %v2498
        %2564 = vmatprep.subr.bf16.mxu0 %v2501
        %2565 = vmatpush1.bf16.msra.mxu0 %v2500
        %2566 = vmatprep.subr.bf16.mxu0 %v2503
        %2567 = vmatpush1.bf16.msra.mxu0 %v2502
        %2568 = vmatprep.subr.bf16.mxu0 %v2505
        %2569 = vmatpush1.bf16.msra.mxu0 %v2504
        %2570 = vmatprep.subr.bf16.mxu0 %v2507
        %2571 = vmatpush1.bf16.msra.mxu0 %v2506
        %2572 = vmatprep.subr.bf16.mxu0 %v2509
        %2573 = vmatpush1.bf16.msra.mxu0 %v2508
        %2574 = vmatprep.subr.bf16.mxu0 %v2511
        %2575 = vmatpush1.bf16.msra.mxu0 %v2510
        %2576 = vmatprep.subr.bf16.mxu0 %v2513
        %2577 = vmatpush1.bf16.msra.mxu0 %v2512
        %2578 = vmatprep.subr.bf16.mxu0 %v2515
        %2579 = vmatpush1.bf16.msra.mxu0 %v2514
        %2580 = vmatprep.mubr.bf16.mxu0 %v2377
        %2581 = vmatmul.mubr.bf16.gmra.mrb[0].mxu0 %v2374
        %v2582 = vpop.f32.mrb[0].mxu0
        %v2583 = vadd.f32 0.0, %v2582
        %v2584 = vpop.f32.mrb[0].mxu0
        %v2585 = vadd.f32 0.0, %v2584
        %v2586 = vpop.f32.mrb[0].mxu0
        %v2587 = vadd.f32 0.0, %v2586
        %v2588 = vpop.f32.mrb[0].mxu0
        %v2589 = vadd.f32 0.0, %v2588
        %2590 = vmatprep.mubr.bf16.mxu0 %v2381
        %2591 = vmatmul.mubr.bf16.gmra.mrb[0].mxu0 %v2379
        %v2592 = vpop.f32.mrb[0].mxu0
        %v2593 = vadd.f32 0.0, %v2592
        %v2594 = vpop.f32.mrb[0].mxu0
        %v2595 = vadd.f32 0.0, %v2594
        %v2596 = vpop.f32.mrb[0].mxu0
        %v2597 = vadd.f32 0.0, %v2596
        %v2598 = vpop.f32.mrb[0].mxu0
        %v2599 = vadd.f32 0.0, %v2598
        %2600 = vmatprep.mubr.bf16.mxu0 %v2380
        %2601 = vmatmul.mubr.bf16.gmra.mrb[0].mxu0 %v2378
        %v2602 = vpop.f32.mrb[0].mxu0
        %v2603 = vadd.f32 0.0, %v2602
        %v2604 = vpop.f32.mrb[0].mxu0
        %v2605 = vadd.f32 0.0, %v2604
        %v2606 = vpop.f32.mrb[0].mxu0
        %v2607 = vpop.f32.mrb[0].mxu0
        %2608 = vdwg.mxu0
        %v2609 = vadd.f32 %v2323, %v2583
        %v2610 = vadd.f32 %v2324, %v2585
        %v2611 = vadd.f32 %v2325, %v2587
        %v2612 = vadd.f32 %v2326, %v2589
        %v2613 = vadd.f32 %v2327, %v2593
        %v2614 = vadd.f32 %v2328, %v2595
        %v2615 = vadd.f32 %v2329, %v2597
        %v2616 = vadd.f32 %v2330, %v2599
        %v2617 = vadd.f32 %v2331, %v2603
        %v2618 = vadd.f32 %v2332, %v2605
        %v2619 = vld [vmem:[#allocation2 + $0x20] sm:$0xff]
        %s2620 = scalar_lea.vmem [#allocation8], 512
        %v2621 = vld [vmem:[%s2620] sm:$0xff]
        %v2622 = vld [vmem:[%s2620 + $0x8] sm:$0xff]
        %v2623 = vld [vmem:[%s2620 + $0x10] sm:$0xff]
        %v2624 = vld [vmem:[%s2620 + $0x18] sm:$0xff]
        %v2625 = vld [vmem:[%s2620 + $0x20] sm:$0xff]
        %v2626 = vld [vmem:[%s2620 + $0x28] sm:$0xff]
        %v2627 = vld [vmem:[%s2620 + $0x30] sm:$0xff]
        %v2628 = vld [vmem:[%s2620 + $0x38] sm:$0xff]
        %v2629 = vld [vmem:[%s2620 + $0x40] sm:$0xff]
        %v2630 = vld [vmem:[%s2620 + $0x48] sm:$0xff]
        %v2631 = vld [vmem:[%s2620 + $0x50] sm:$0xff]
        %v2632 = vld [vmem:[%s2620 + $0x58] sm:$0xff]
        %v2633 = vld [vmem:[%s2620 + $0x60] sm:$0xff]
        %v2634 = vld [vmem:[%s2620 + $0x68] sm:$0xff]
        %v2635 = vld [vmem:[%s2620 + $0x70] sm:$0xff]
        %v2636 = vld [vmem:[%s2620 + $0x78] sm:$0xff]
        %v2637 = vld [vmem:[%s2620 + $0x80] sm:$0xff]
        %v2638 = vld [vmem:[%s2620 + $0x88] sm:$0xff]
        %v2639 = vld [vmem:[%s2620 + $0x90] sm:$0xff]
        %v2640 = vld [vmem:[%s2620 + $0x98] sm:$0xff]
        %v2641 = vld [vmem:[%s2620 + $0xa0] sm:$0xff]
        %v2642 = vld [vmem:[%s2620 + $0xa8] sm:$0xff]
        %v2643 = vld [vmem:[%s2620 + $0xb0] sm:$0xff]
        %v2644 = vld [vmem:[%s2620 + $0xb8] sm:$0xff]
        %v2645 = vld [vmem:[%s2620 + $0xc0] sm:$0xff]
        %v2646 = vld [vmem:[%s2620 + $0xc8] sm:$0xff]
        %v2647 = vld [vmem:[%s2620 + $0xd0] sm:$0xff]
        %v2648 = vld [vmem:[%s2620 + $0xd8] sm:$0xff]
        %v2649 = vld [vmem:[%s2620 + $0xe0] sm:$0xff]
        %v2650 = vld [vmem:[%s2620 + $0xe8] sm:$0xff]
        %v2651 = vld [vmem:[%s2620 + $0xf0] sm:$0xff]
        %v2652 = vld [vmem:[%s2620 + $0xf8] sm:$0xff]
        %v2654 = vunpack.c.l.b16 %v2619
        %v2655 = vunpack.c.h.b16 %v2619
        %v2656 = vpack.c.b16 %v2654, %v2654
        %v2657 = vpack.c.b16 %v2655, %v2655
        %v2659 = vshrl.u32 %v2370, 16
        %v2661 = vrot.slane %v2659, 1
        %v2662 = vshll.u32 %v2370, 16
        %v2664 = vrot.slane %v2662, 2
        %v2665 = vor.u32 %v2661, %v2664
        %v2666 = vrot.slane %v2074, 1
        %v2667 = vrot.slane %v2058, 2
        %v2668 = vor.u32 %v2666, %v2667
        %v2669 = vsel %vm1362, %v2665, %v2668
        %v2671 = vshrl.u32 %v2371, 16
        %v2673 = vrot.slane %v2671, 1
        %v2674 = vshll.u32 %v2371, 16
        %v2676 = vrot.slane %v2674, 2
        %v2677 = vor.u32 %v2673, %v2676
        %v2678 = vrot.slane %v2082, 1
        %v2679 = vrot.slane %v2070, 2
        %v2680 = vor.u32 %v2678, %v2679
        %v2681 = vsel %vm1362, %v2677, %v2680
        %v2683 = vshrl.u32 %v2656, 16
        %v2685 = vrot.slane %v2683, 1
        %v2686 = vshll.u32 %v2656, 16
        %v2688 = vrot.slane %v2686, 2
        %v2689 = vor.u32 %v2685, %v2688
        %v2690 = vsel %vm1362, %v2668, %v2689
        %v2692 = vshrl.u32 %v2657, 16
        %v2694 = vrot.slane %v2692, 1
        %v2695 = vshll.u32 %v2657, 16
        %v2697 = vrot.slane %v2695, 2
        %v2698 = vor.u32 %v2694, %v2697
        %v2699 = vsel %vm1362, %v2680, %v2698
        %v2738 = vunpack.c.l.b16 %v2621
        %v2739 = vunpack.c.h.b16 %v2621
        %v2740 = vunpack.c.l.b16 %v2622
        %v2741 = vunpack.c.h.b16 %v2622
        %v2742 = vunpack.c.l.b16 %v2623
        %v2743 = vunpack.c.h.b16 %v2623
        %v2744 = vunpack.c.l.b16 %v2624
        %v2745 = vunpack.c.h.b16 %v2624
        %v2746 = vunpack.c.l.b16 %v2625
        %v2747 = vunpack.c.h.b16 %v2625
        %v2748 = vunpack.c.l.b16 %v2626
        %v2749 = vunpack.c.h.b16 %v2626
        %v2750 = vunpack.c.l.b16 %v2627
        %v2751 = vunpack.c.h.b16 %v2627
        %v2752 = vunpack.c.l.b16 %v2628
        %v2753 = vunpack.c.h.b16 %v2628
        %v2754 = vunpack.c.l.b16 %v2629
        %v2755 = vunpack.c.h.b16 %v2629
        %v2756 = vunpack.c.l.b16 %v2630
        %v2757 = vunpack.c.h.b16 %v2630
        %v2758 = vunpack.c.l.b16 %v2631
        %v2759 = vunpack.c.h.b16 %v2631
        %v2760 = vunpack.c.l.b16 %v2632
        %v2761 = vunpack.c.h.b16 %v2632
        %v2762 = vunpack.c.l.b16 %v2633
        %v2763 = vunpack.c.h.b16 %v2633
        %v2764 = vunpack.c.l.b16 %v2634
        %v2765 = vunpack.c.h.b16 %v2634
        %v2766 = vunpack.c.l.b16 %v2635
        %v2767 = vunpack.c.h.b16 %v2635
        %v2768 = vunpack.c.l.b16 %v2636
        %v2769 = vunpack.c.h.b16 %v2636
        %v2770 = vunpack.c.l.b16 %v2637
        %v2771 = vunpack.c.h.b16 %v2637
        %v2772 = vunpack.c.l.b16 %v2638
        %v2773 = vunpack.c.h.b16 %v2638
        %v2774 = vunpack.c.l.b16 %v2639
        %v2775 = vunpack.c.h.b16 %v2639
        %v2776 = vunpack.c.l.b16 %v2640
        %v2777 = vunpack.c.h.b16 %v2640
        %v2778 = vunpack.c.l.b16 %v2641
        %v2779 = vunpack.c.h.b16 %v2641
        %v2780 = vunpack.c.l.b16 %v2642
        %v2781 = vunpack.c.h.b16 %v2642
        %v2782 = vunpack.c.l.b16 %v2643
        %v2783 = vunpack.c.h.b16 %v2643
        %v2784 = vunpack.c.l.b16 %v2644
        %v2785 = vunpack.c.h.b16 %v2644
        %v2786 = vunpack.c.l.b16 %v2645
        %v2787 = vunpack.c.h.b16 %v2645
        %v2788 = vunpack.c.l.b16 %v2646
        %v2789 = vunpack.c.h.b16 %v2646
        %v2790 = vunpack.c.l.b16 %v2647
        %v2791 = vunpack.c.h.b16 %v2647
        %v2792 = vunpack.c.l.b16 %v2648
        %v2793 = vunpack.c.h.b16 %v2648
        %v2794 = vunpack.c.l.b16 %v2649
        %v2795 = vunpack.c.h.b16 %v2649
        %v2796 = vunpack.c.l.b16 %v2650
        %v2797 = vunpack.c.h.b16 %v2650
        %v2798 = vunpack.c.l.b16 %v2651
        %v2799 = vunpack.c.h.b16 %v2651
        %v2800 = vunpack.c.l.b16 %v2652
        %v2801 = vunpack.c.h.b16 %v2652
        %v2802 = vpack.c.b16 %v2740, %v2738
        %v2803 = vpack.c.b16 %v2741, %v2739
        %v2804 = vpack.c.b16 %v2744, %v2742
        %v2805 = vpack.c.b16 %v2745, %v2743
        %v2806 = vpack.c.b16 %v2748, %v2746
        %v2807 = vpack.c.b16 %v2749, %v2747
        %v2808 = vpack.c.b16 %v2752, %v2750
        %v2809 = vpack.c.b16 %v2753, %v2751
        %v2810 = vpack.c.b16 %v2756, %v2754
        %v2811 = vpack.c.b16 %v2757, %v2755
        %v2812 = vpack.c.b16 %v2760, %v2758
        %v2813 = vpack.c.b16 %v2761, %v2759
        %v2814 = vpack.c.b16 %v2764, %v2762
        %v2815 = vpack.c.b16 %v2765, %v2763
        %v2816 = vpack.c.b16 %v2768, %v2766
        %v2817 = vpack.c.b16 %v2769, %v2767
        %v2818 = vpack.c.b16 %v2772, %v2770
        %v2819 = vpack.c.b16 %v2773, %v2771
        %v2820 = vpack.c.b16 %v2776, %v2774
        %v2821 = vpack.c.b16 %v2777, %v2775
        %v2822 = vpack.c.b16 %v2780, %v2778
        %v2823 = vpack.c.b16 %v2781, %v2779
        %v2824 = vpack.c.b16 %v2784, %v2782
        %v2825 = vpack.c.b16 %v2785, %v2783
        %v2826 = vpack.c.b16 %v2788, %v2786
        %v2827 = vpack.c.b16 %v2789, %v2787
        %v2828 = vpack.c.b16 %v2792, %v2790
        %v2829 = vpack.c.b16 %v2793, %v2791
        %v2830 = vpack.c.b16 %v2796, %v2794
        %v2831 = vpack.c.b16 %v2797, %v2795
        %v2832 = vpack.c.b16 %v2800, %v2798
        %v2833 = vpack.c.b16 %v2801, %v2799
        %2866 = vmatprep.subr.bf16.mxu0 %v2803
        %2867 = vmatpush1.bf16.msra.mxu0 %v2802
        %2868 = vmatprep.subr.bf16.mxu0 %v2805
        %2869 = vmatpush1.bf16.msra.mxu0 %v2804
        %2870 = vmatprep.subr.bf16.mxu0 %v2807
        %2871 = vmatpush1.bf16.msra.mxu0 %v2806
        %2872 = vmatprep.subr.bf16.mxu0 %v2809
        %2873 = vmatpush1.bf16.msra.mxu0 %v2808
        %2874 = vmatprep.subr.bf16.mxu0 %v2811
        %2875 = vmatpush1.bf16.msra.mxu0 %v2810
        %2876 = vmatprep.subr.bf16.mxu0 %v2813
        %2877 = vmatpush1.bf16.msra.mxu0 %v2812
        %2878 = vmatprep.subr.bf16.mxu0 %v2815
        %2879 = vmatpush1.bf16.msra.mxu0 %v2814
        %2880 = vmatprep.subr.bf16.mxu0 %v2817
        %2881 = vmatpush1.bf16.msra.mxu0 %v2816
        %2882 = vmatprep.subr.bf16.mxu0 %v2819
        %2883 = vmatpush1.bf16.msra.mxu0 %v2818
        %2884 = vmatprep.subr.bf16.mxu0 %v2821
        %2885 = vmatpush1.bf16.msra.mxu0 %v2820
        %2886 = vmatprep.subr.bf16.mxu0 %v2823
        %2887 = vmatpush1.bf16.msra.mxu0 %v2822
        %2888 = vmatprep.subr.bf16.mxu0 %v2825
        %2889 = vmatpush1.bf16.msra.mxu0 %v2824
        %2890 = vmatprep.subr.bf16.mxu0 %v2827
        %2891 = vmatpush1.bf16.msra.mxu0 %v2826
        %2892 = vmatprep.subr.bf16.mxu0 %v2829
        %2893 = vmatpush1.bf16.msra.mxu0 %v2828
        %2894 = vmatprep.subr.bf16.mxu0 %v2831
        %2895 = vmatpush1.bf16.msra.mxu0 %v2830
        %2896 = vmatprep.subr.bf16.mxu0 %v2833
        %2897 = vmatpush1.bf16.msra.mxu0 %v2832
        %2898 = vmatprep.mubr.bf16.mxu0 %v2681
        %2899 = vmatmul.mubr.bf16.gmra.mrb[0].mxu0 %v2669
        %v2900 = vpop.f32.mrb[0].mxu0
        %v2901 = vadd.f32 0.0, %v2900
        %v2902 = vpop.f32.mrb[0].mxu0
        %v2903 = vadd.f32 0.0, %v2902
        %v2904 = vpop.f32.mrb[0].mxu0
        %v2905 = vadd.f32 0.0, %v2904
        %v2906 = vpop.f32.mrb[0].mxu0
        %v2907 = vadd.f32 0.0, %v2906
        %2908 = vmatprep.mubr.bf16.mxu0 %v2699
        %2909 = vmatmul.mubr.bf16.gmra.mrb[0].mxu0 %v2690
        %v2910 = vpop.f32.mrb[0].mxu0
        %v2911 = vadd.f32 0.0, %v2910
        %v2912 = vpop.f32.mrb[0].mxu0
        %v2913 = vadd.f32 0.0, %v2912
        %v2914 = vpop.f32.mrb[0].mxu0
        %v2915 = vadd.f32 0.0, %v2914
        %v2916 = vpop.f32.mrb[0].mxu0
        %v2917 = vadd.f32 0.0, %v2916
        %2918 = vmatprep.mubr.bf16.mxu0 %v2698
        %2919 = vmatmul.mubr.bf16.gmra.mrb[0].mxu0 %v2689
        %v2920 = vpop.f32.mrb[0].mxu0
        %v2921 = vadd.f32 0.0, %v2920
        %v2922 = vpop.f32.mrb[0].mxu0
        %v2923 = vadd.f32 0.0, %v2922
        %v2924 = vpop.f32.mrb[0].mxu0
        %v2925 = vpop.f32.mrb[0].mxu0
        %2926 = vdwg.mxu0
        %v2927 = vadd.f32 %v2609, %v2901
        %v2928 = vadd.f32 %v2610, %v2903
        %v2929 = vadd.f32 %v2611, %v2905
        %v2930 = vadd.f32 %v2612, %v2907
        %v2931 = vadd.f32 %v2613, %v2911
        %v2932 = vadd.f32 %v2614, %v2913
        %v2933 = vadd.f32 %v2615, %v2915
        %v2934 = vadd.f32 %v2616, %v2917
        %v2935 = vadd.f32 %v2617, %v2921
        %v2936 = vadd.f32 %v2618, %v2923
        %v2937 = vmax.f32 %v2927, 0.0
        %v2938 = vmax.f32 %v2928, 0.0
        %v2939 = vmax.f32 %v2929, 0.0
        %v2940 = vmax.f32 %v2930, 0.0
        %v2941 = vmax.f32 %v2931, 0.0
        %v2942 = vmax.f32 %v2932, 0.0
        %v2943 = vmax.f32 %v2933, 0.0
        %v2944 = vmax.f32 %v2934, 0.0
        %v2945 = vmax.f32 %v2935, 0.0
        %v2946 = vmax.f32 %v2936, 0.0
        %v2947 = vpack.c.bf16 %v2939, %v2937
        %v2948 = vpack.c.bf16 %v2940, %v2938
        %v2951 = vunpack.c.l.b16 %v2947
        %v2952 = vunpack.c.l.b16 %v2948
        %v2953 = vunpack.c.h.b16 %v2947
        %v2954 = vunpack.c.h.b16 %v2948
        %v2955 = vpack.c.b16 %v2952, %v2951
        %v2956 = vpack.c.b16 %v2954, %v2953
        %v2957 = vrot.slane %v2955, 7
        %v2958 = vrot.slane %v2957, 4
        %v2959 = vrot.slane %v2956, 7
        %v2960 = vsel %vm365, %v2958, %v2959
        %v2961 = vrot.slane %v2959, 4
        %2965 = vst [vmem:[#allocation2] sm:$0xee] %v2957
        %2966 = vst [vmem:[#allocation2 + $0x8] sm:$0xff] %v2960
        %2967 = vst [vmem:[#allocation2 + $0x10] sm:$0x11] %v2961
        %v2968 = vpack.c.bf16 %v2943, %v2941
        %v2969 = vpack.c.bf16 %v2944, %v2942
        %v2970 = vpack.c.bf16 %v2945, %v2945
        %v2971 = vpack.c.bf16 %v2946, %v2946
        %v2976 = vunpack.c.l.b16 %v2968
        %v2977 = vunpack.c.l.b16 %v2969
        %v2978 = vunpack.c.h.b16 %v2968
        %v2979 = vunpack.c.h.b16 %v2969
        %v2980 = vunpack.c.l.b16 %v2970
        %v2981 = vunpack.c.l.b16 %v2971
        %v2982 = vpack.c.b16 %v2977, %v2976
        %v2983 = vpack.c.b16 %v2979, %v2978
        %v2984 = vpack.c.b16 %v2981, %v2980
        %v2985 = vrot.slane %v2982, 7
        %v2986 = vrot.slane %v2985, 4
        %v2987 = vrot.slane %v2983, 7
        %v2988 = vsel %vm365, %v2986, %v2987
        %v2989 = vrot.slane %v2987, 4
        %v2990 = vrot.slane %v2984, 7
        %v2991 = vsel %vm365, %v2989, %v2990
        %2995 = vst [vmem:[#allocation2 + $0x10] sm:$0x88] %v2985
        %2996 = vst [vmem:[#allocation2 + $0x18] sm:$0xff] %v2988
        %2997 = vst [vmem:[#allocation2 + $0x20] sm:$0x77] %v2991
        %v2998 = vld [vmem:[%s6] sm:$0x1]
        %v3000 = vlaneseq
        %v3001 = vshrl.u32 %v3000, 7
        %v3002 = vsub.s32 0, %v3001
        %v3003 = vrot.slane %v2998, %v3002
        %v3005 = vld [vmem:[#allocation2] sm:$0xff]
        %v3006 = vld [vmem:[#allocation2 + $0x8] sm:$0xff]
        %v3007 = vld [vmem:[#allocation2 + $0x10] sm:$0xff]
        %v3008 = vld [vmem:[#allocation2 + $0x18] sm:$0xff]
        %v3009 = vld [vmem:[#allocation2 + $0x20] sm:$0x77]
        %v3010 = vld [vmem:[#allocation9] sm:$0xf]
        %v3011 = vld [vmem:[#allocation9 + $0x4] sm:$0xf]
        %v3012 = vld [vmem:[#allocation9 + $0x8] sm:$0xf]
        %v3013 = vld [vmem:[#allocation9 + $0xc] sm:$0xf]
        %v3014 = vld [vmem:[#allocation9 + $0x10] sm:$0xf]
        %v3015 = vld [vmem:[#allocation9 + $0x14] sm:$0xf]
        %v3016 = vld [vmem:[#allocation9 + $0x18] sm:$0xf]
        %v3017 = vld [vmem:[#allocation9 + $0x1c] sm:$0xf]
        %v3018 = vld [vmem:[#allocation9 + $0x20] sm:$0xf]
        %v3019 = vld [vmem:[#allocation9 + $0x24] sm:$0xf]
        %v3020 = vld [vmem:[#allocation9 + $0x28] sm:$0xf]
        %v3021 = vld [vmem:[#allocation9 + $0x2c] sm:$0xf]
        %v3022 = vld [vmem:[#allocation9 + $0x30] sm:$0xf]
        %v3023 = vld [vmem:[#allocation9 + $0x34] sm:$0xf]
        %v3024 = vld [vmem:[#allocation9 + $0x38] sm:$0xf]
        %v3025 = vld [vmem:[#allocation9 + $0x3c] sm:$0xf]
        %v3026 = vld [vmem:[#allocation9 + $0x40] sm:$0xf]
        %v3027 = vld [vmem:[#allocation9 + $0x44] sm:$0xf]
        %v3028 = vld [vmem:[#allocation9 + $0x48] sm:$0xf]
        %v3029 = vld [vmem:[#allocation9 + $0x4c] sm:$0xf]
        %v3030 = vld [vmem:[#allocation9 + $0x50] sm:$0xf]
        %v3031 = vld [vmem:[#allocation9 + $0x54] sm:$0xf]
        %v3032 = vld [vmem:[#allocation9 + $0x58] sm:$0xf]
        %v3033 = vld [vmem:[#allocation9 + $0x5c] sm:$0xf]
        %v3034 = vld [vmem:[#allocation9 + $0x60] sm:$0xf]
        %v3035 = vld [vmem:[#allocation9 + $0x64] sm:$0xf]
        %v3036 = vld [vmem:[#allocation9 + $0x68] sm:$0xf]
        %v3037 = vld [vmem:[#allocation9 + $0x6c] sm:$0xf]
        %v3038 = vld [vmem:[#allocation9 + $0x70] sm:$0xf]
        %v3039 = vld [vmem:[#allocation9 + $0x74] sm:$0xf]
        %v3040 = vld [vmem:[#allocation9 + $0x78] sm:$0xf]
        %v3041 = vld [vmem:[#allocation9 + $0x7c] sm:$0xf]
        %v3047 = vunpack.c.l.b16 %v3005
        %v3048 = vunpack.c.h.b16 %v3005
        %v3049 = vunpack.c.l.b16 %v3006
        %v3050 = vunpack.c.h.b16 %v3006
        %v3051 = vunpack.c.l.b16 %v3007
        %v3052 = vunpack.c.h.b16 %v3007
        %v3053 = vunpack.c.l.b16 %v3008
        %v3054 = vunpack.c.h.b16 %v3008
        %v3055 = vunpack.c.l.b16 %v3009
        %v3056 = vunpack.c.h.b16 %v3009
        %v3057 = vpack.c.b16 %v3049, %v3047
        %v3058 = vpack.c.b16 %v3050, %v3048
        %v3059 = vpack.c.b16 %v3053, %v3051
        %v3060 = vpack.c.b16 %v3054, %v3052
        %v3061 = vpack.c.b16 %v3055, %v3055
        %v3062 = vpack.c.b16 %v3056, %v3056
        %v3064 = vshrl.u32 %v3057, 16
        %v3066 = vshll.u32 %v3057, 16
        %v3068 = vrot.slane %v3066, 1
        %v3069 = vor.u32 %v3064, %v3068
        %v3071 = vshll.u32 %v3059, 16
        %v3073 = vrot.slane %v3071, 1
        %v3074 = vsel %vm752, %v3069, %v3073
        %v3076 = vshrl.u32 %v3058, 16
        %v3078 = vshll.u32 %v3058, 16
        %v3080 = vrot.slane %v3078, 1
        %v3081 = vor.u32 %v3076, %v3080
        %v3083 = vshll.u32 %v3060, 16
        %v3085 = vrot.slane %v3083, 1
        %v3086 = vsel %vm752, %v3081, %v3085
        %v3087 = vshrl.u32 %v3059, 16
        %v3089 = vor.u32 %v3087, %v3073
        %v3091 = vshll.u32 %v3061, 16
        %v3093 = vrot.slane %v3091, 1
        %v3094 = vsel %vm752, %v3089, %v3093
        %v3095 = vshrl.u32 %v3060, 16
        %v3097 = vor.u32 %v3095, %v3085
        %v3099 = vshll.u32 %v3062, 16
        %v3101 = vrot.slane %v3099, 1
        %v3102 = vsel %vm752, %v3097, %v3101
        %v3103 = vshrl.u32 %v3061, 16
        %v3105 = vor.u32 %v3103, %v3093
        %v3106 = vshrl.u32 %v3062, 16
        %v3108 = vor.u32 %v3106, %v3101
        %v3147 = vunpack.c.l.b16 %v3010
        %v3148 = vunpack.c.l.b16 %v3011
        %v3149 = vunpack.c.l.b16 %v3012
        %v3150 = vunpack.c.l.b16 %v3013
        %v3151 = vunpack.c.l.b16 %v3014
        %v3152 = vunpack.c.l.b16 %v3015
        %v3153 = vunpack.c.l.b16 %v3016
        %v3154 = vunpack.c.l.b16 %v3017
        %v3155 = vunpack.c.l.b16 %v3018
        %v3156 = vunpack.c.l.b16 %v3019
        %v3157 = vunpack.c.l.b16 %v3020
        %v3158 = vunpack.c.l.b16 %v3021
        %v3159 = vunpack.c.l.b16 %v3022
        %v3160 = vunpack.c.l.b16 %v3023
        %v3161 = vunpack.c.l.b16 %v3024
        %v3162 = vunpack.c.l.b16 %v3025
        %v3163 = vunpack.c.l.b16 %v3026
        %v3164 = vunpack.c.l.b16 %v3027
        %v3165 = vunpack.c.l.b16 %v3028
        %v3166 = vunpack.c.l.b16 %v3029
        %v3167 = vunpack.c.l.b16 %v3030
        %v3168 = vunpack.c.l.b16 %v3031
        %v3169 = vunpack.c.l.b16 %v3032
        %v3170 = vunpack.c.l.b16 %v3033
        %v3171 = vunpack.c.l.b16 %v3034
        %v3172 = vunpack.c.l.b16 %v3035
        %v3173 = vunpack.c.l.b16 %v3036
        %v3174 = vunpack.c.l.b16 %v3037
        %v3175 = vunpack.c.l.b16 %v3038
        %v3176 = vunpack.c.l.b16 %v3039
        %v3177 = vunpack.c.l.b16 %v3040
        %v3178 = vunpack.c.l.b16 %v3041
        %v3179 = vpack.c.b16 %v3148, %v3147
        %v3180 = vpack.c.b16 %v3150, %v3149
        %v3181 = vpack.c.b16 %v3152, %v3151
        %v3182 = vpack.c.b16 %v3154, %v3153
        %v3183 = vpack.c.b16 %v3156, %v3155
        %v3184 = vpack.c.b16 %v3158, %v3157
        %v3185 = vpack.c.b16 %v3160, %v3159
        %v3186 = vpack.c.b16 %v3162, %v3161
        %v3187 = vpack.c.b16 %v3164, %v3163
        %v3188 = vpack.c.b16 %v3166, %v3165
        %v3189 = vpack.c.b16 %v3168, %v3167
        %v3190 = vpack.c.b16 %v3170, %v3169
        %v3191 = vpack.c.b16 %v3172, %v3171
        %v3192 = vpack.c.b16 %v3174, %v3173
        %v3193 = vpack.c.b16 %v3176, %v3175
        %v3194 = vpack.c.b16 %v3178, %v3177
        %3211 = vmatprep.subr.bf16.mxu0 0
        %3212 = vmatpush1.bf16.msra.mxu0 %v3179
        %3213 = vmatprep.subr.bf16.mxu0 0
        %3214 = vmatpush1.bf16.msra.mxu0 %v3180
        %3215 = vmatprep.subr.bf16.mxu0 0
        %3216 = vmatpush1.bf16.msra.mxu0 %v3181
        %3217 = vmatprep.subr.bf16.mxu0 0
        %3218 = vmatpush1.bf16.msra.mxu0 %v3182
        %3219 = vmatprep.subr.bf16.mxu0 0
        %3220 = vmatpush1.bf16.msra.mxu0 %v3183
        %3221 = vmatprep.subr.bf16.mxu0 0
        %3222 = vmatpush1.bf16.msra.mxu0 %v3184
        %3223 = vmatprep.subr.bf16.mxu0 0
        %3224 = vmatpush1.bf16.msra.mxu0 %v3185
        %3225 = vmatprep.subr.bf16.mxu0 0
        %3226 = vmatpush1.bf16.msra.mxu0 %v3186
        %3227 = vmatprep.subr.bf16.mxu0 0
        %3228 = vmatpush1.bf16.msra.mxu0 %v3187
        %3229 = vmatprep.subr.bf16.mxu0 0
        %3230 = vmatpush1.bf16.msra.mxu0 %v3188
        %3231 = vmatprep.subr.bf16.mxu0 0
        %3232 = vmatpush1.bf16.msra.mxu0 %v3189
        %3233 = vmatprep.subr.bf16.mxu0 0
        %3234 = vmatpush1.bf16.msra.mxu0 %v3190
        %3235 = vmatprep.subr.bf16.mxu0 0
        %3236 = vmatpush1.bf16.msra.mxu0 %v3191
        %3237 = vmatprep.subr.bf16.mxu0 0
        %3238 = vmatpush1.bf16.msra.mxu0 %v3192
        %3239 = vmatprep.subr.bf16.mxu0 0
        %3240 = vmatpush1.bf16.msra.mxu0 %v3193
        %3241 = vmatprep.subr.bf16.mxu0 0
        %3242 = vmatpush1.bf16.msra.mxu0 %v3194
        %3243 = vmatprep.mubr.bf16.mxu0 %v3086
        %3244 = vmatmul.mubr.bf16.gmra.mrb[0].mxu0 %v3074
        %v3245 = vpop.f32.mrb[0].mxu0
        %v3246 = vadd.f32 0.0, %v3245
        %v3247 = vpop.f32.mrb[0].mxu0
        %v3248 = vpop.f32.mrb[0].mxu0
        %v3249 = vadd.f32 0.0, %v3248
        %v3250 = vpop.f32.mrb[0].mxu0
        %3251 = vmatprep.mubr.bf16.mxu0 %v3102
        %3252 = vmatmul.mubr.bf16.gmra.mrb[0].mxu0 %v3094
        %v3253 = vpop.f32.mrb[0].mxu0
        %v3254 = vadd.f32 0.0, %v3253
        %v3255 = vpop.f32.mrb[0].mxu0
        %v3256 = vpop.f32.mrb[0].mxu0
        %v3257 = vadd.f32 0.0, %v3256
        %v3258 = vpop.f32.mrb[0].mxu0
        %3259 = vmatprep.mubr.bf16.mxu0 %v3108
        %3260 = vmatmul.mubr.bf16.gmra.mrb[0].mxu0 %v3105
        %v3261 = vpop.f32.mrb[0].mxu0
        %v3262 = vadd.f32 0.0, %v3261
        %v3263 = vpop.f32.mrb[0].mxu0
        %v3264 = vpop.f32.mrb[0].mxu0
        %v3265 = vpop.f32.mrb[0].mxu0
        %3266 = vdwg.mxu0
        %v3267 = vadd.f32 %v3003, %v3246
        %v3268 = vadd.f32 %v3003, %v3249
        %v3269 = vadd.f32 %v3003, %v3254
        %v3270 = vadd.f32 %v3003, %v3257
        %v3271 = vadd.f32 %v3003, %v3262
        %v3272 = vld [vmem:[#allocation2] sm:$0xee]
        %s3273 = scalar_lea.vmem [#allocation9], 128
        %v3274 = vld [vmem:[%s3273] sm:$0xf]
        %v3275 = vld [vmem:[%s3273 + $0x4] sm:$0xf]
        %v3276 = vld [vmem:[%s3273 + $0x8] sm:$0xf]
        %v3277 = vld [vmem:[%s3273 + $0xc] sm:$0xf]
        %v3278 = vld [vmem:[%s3273 + $0x10] sm:$0xf]
        %v3279 = vld [vmem:[%s3273 + $0x14] sm:$0xf]
        %v3280 = vld [vmem:[%s3273 + $0x18] sm:$0xf]
        %v3281 = vld [vmem:[%s3273 + $0x1c] sm:$0xf]
        %v3282 = vld [vmem:[%s3273 + $0x20] sm:$0xf]
        %v3283 = vld [vmem:[%s3273 + $0x24] sm:$0xf]
        %v3284 = vld [vmem:[%s3273 + $0x28] sm:$0xf]
        %v3285 = vld [vmem:[%s3273 + $0x2c] sm:$0xf]
        %v3286 = vld [vmem:[%s3273 + $0x30] sm:$0xf]
        %v3287 = vld [vmem:[%s3273 + $0x34] sm:$0xf]
        %v3288 = vld [vmem:[%s3273 + $0x38] sm:$0xf]
        %v3289 = vld [vmem:[%s3273 + $0x3c] sm:$0xf]
        %v3290 = vld [vmem:[%s3273 + $0x40] sm:$0xf]
        %v3291 = vld [vmem:[%s3273 + $0x44] sm:$0xf]
        %v3292 = vld [vmem:[%s3273 + $0x48] sm:$0xf]
        %v3293 = vld [vmem:[%s3273 + $0x4c] sm:$0xf]
        %v3294 = vld [vmem:[%s3273 + $0x50] sm:$0xf]
        %v3295 = vld [vmem:[%s3273 + $0x54] sm:$0xf]
        %v3296 = vld [vmem:[%s3273 + $0x58] sm:$0xf]
        %v3297 = vld [vmem:[%s3273 + $0x5c] sm:$0xf]
        %v3298 = vld [vmem:[%s3273 + $0x60] sm:$0xf]
        %v3299 = vld [vmem:[%s3273 + $0x64] sm:$0xf]
        %v3300 = vld [vmem:[%s3273 + $0x68] sm:$0xf]
        %v3301 = vld [vmem:[%s3273 + $0x6c] sm:$0xf]
        %v3302 = vld [vmem:[%s3273 + $0x70] sm:$0xf]
        %v3303 = vld [vmem:[%s3273 + $0x74] sm:$0xf]
        %v3304 = vld [vmem:[%s3273 + $0x78] sm:$0xf]
        %v3305 = vld [vmem:[%s3273 + $0x7c] sm:$0xf]
        %v3307 = vunpack.c.l.b16 %v3272
        %v3308 = vunpack.c.h.b16 %v3272
        %v3309 = vpack.c.b16 %v3049, %v3307
        %v3310 = vpack.c.b16 %v3050, %v3308
        %v3311 = vrot.slane %v3309, 1
        %v3312 = vrot.slane %v3059, 1
        %v3313 = vsel %vm1075, %v3311, %v3312
        %v3314 = vrot.slane %v3310, 1
        %v3315 = vrot.slane %v3060, 1
        %v3316 = vsel %vm1075, %v3314, %v3315
        %v3317 = vrot.slane %v3061, 1
        %v3318 = vsel %vm1075, %v3312, %v3317
        %v3319 = vrot.slane %v3062, 1
        %v3320 = vsel %vm1075, %v3315, %v3319
        %v3359 = vunpack.c.l.b16 %v3274
        %v3360 = vunpack.c.l.b16 %v3275
        %v3361 = vunpack.c.l.b16 %v3276
        %v3362 = vunpack.c.l.b16 %v3277
        %v3363 = vunpack.c.l.b16 %v3278
        %v3364 = vunpack.c.l.b16 %v3279
        %v3365 = vunpack.c.l.b16 %v3280
        %v3366 = vunpack.c.l.b16 %v3281
        %v3367 = vunpack.c.l.b16 %v3282
        %v3368 = vunpack.c.l.b16 %v3283
        %v3369 = vunpack.c.l.b16 %v3284
        %v3370 = vunpack.c.l.b16 %v3285
        %v3371 = vunpack.c.l.b16 %v3286
        %v3372 = vunpack.c.l.b16 %v3287
        %v3373 = vunpack.c.l.b16 %v3288
        %v3374 = vunpack.c.l.b16 %v3289
        %v3375 = vunpack.c.l.b16 %v3290
        %v3376 = vunpack.c.l.b16 %v3291
        %v3377 = vunpack.c.l.b16 %v3292
        %v3378 = vunpack.c.l.b16 %v3293
        %v3379 = vunpack.c.l.b16 %v3294
        %v3380 = vunpack.c.l.b16 %v3295
        %v3381 = vunpack.c.l.b16 %v3296
        %v3382 = vunpack.c.l.b16 %v3297
        %v3383 = vunpack.c.l.b16 %v3298
        %v3384 = vunpack.c.l.b16 %v3299
        %v3385 = vunpack.c.l.b16 %v3300
        %v3386 = vunpack.c.l.b16 %v3301
        %v3387 = vunpack.c.l.b16 %v3302
        %v3388 = vunpack.c.l.b16 %v3303
        %v3389 = vunpack.c.l.b16 %v3304
        %v3390 = vunpack.c.l.b16 %v3305
        %v3391 = vpack.c.b16 %v3360, %v3359
        %v3392 = vpack.c.b16 %v3362, %v3361
        %v3393 = vpack.c.b16 %v3364, %v3363
        %v3394 = vpack.c.b16 %v3366, %v3365
        %v3395 = vpack.c.b16 %v3368, %v3367
        %v3396 = vpack.c.b16 %v3370, %v3369
        %v3397 = vpack.c.b16 %v3372, %v3371
        %v3398 = vpack.c.b16 %v3374, %v3373
        %v3399 = vpack.c.b16 %v3376, %v3375
        %v3400 = vpack.c.b16 %v3378, %v3377
        %v3401 = vpack.c.b16 %v3380, %v3379
        %v3402 = vpack.c.b16 %v3382, %v3381
        %v3403 = vpack.c.b16 %v3384, %v3383
        %v3404 = vpack.c.b16 %v3386, %v3385
        %v3405 = vpack.c.b16 %v3388, %v3387
        %v3406 = vpack.c.b16 %v3390, %v3389
        %3423 = vmatprep.subr.bf16.mxu0 0
        %3424 = vmatpush1.bf16.msra.mxu0 %v3391
        %3425 = vmatprep.subr.bf16.mxu0 0
        %3426 = vmatpush1.bf16.msra.mxu0 %v3392
        %3427 = vmatprep.subr.bf16.mxu0 0
        %3428 = vmatpush1.bf16.msra.mxu0 %v3393
        %3429 = vmatprep.subr.bf16.mxu0 0
        %3430 = vmatpush1.bf16.msra.mxu0 %v3394
        %3431 = vmatprep.subr.bf16.mxu0 0
        %3432 = vmatpush1.bf16.msra.mxu0 %v3395
        %3433 = vmatprep.subr.bf16.mxu0 0
        %3434 = vmatpush1.bf16.msra.mxu0 %v3396
        %3435 = vmatprep.subr.bf16.mxu0 0
        %3436 = vmatpush1.bf16.msra.mxu0 %v3397
        %3437 = vmatprep.subr.bf16.mxu0 0
        %3438 = vmatpush1.bf16.msra.mxu0 %v3398
        %3439 = vmatprep.subr.bf16.mxu0 0
        %3440 = vmatpush1.bf16.msra.mxu0 %v3399
        %3441 = vmatprep.subr.bf16.mxu0 0
        %3442 = vmatpush1.bf16.msra.mxu0 %v3400
        %3443 = vmatprep.subr.bf16.mxu0 0
        %3444 = vmatpush1.bf16.msra.mxu0 %v3401
        %3445 = vmatprep.subr.bf16.mxu0 0
        %3446 = vmatpush1.bf16.msra.mxu0 %v3402
        %3447 = vmatprep.subr.bf16.mxu0 0
        %3448 = vmatpush1.bf16.msra.mxu0 %v3403
        %3449 = vmatprep.subr.bf16.mxu0 0
        %3450 = vmatpush1.bf16.msra.mxu0 %v3404
        %3451 = vmatprep.subr.bf16.mxu0 0
        %3452 = vmatpush1.bf16.msra.mxu0 %v3405
        %3453 = vmatprep.subr.bf16.mxu0 0
        %3454 = vmatpush1.bf16.msra.mxu0 %v3406
        %3455 = vmatprep.mubr.bf16.mxu0 %v3316
        %3456 = vmatmul.mubr.bf16.gmra.mrb[0].mxu0 %v3313
        %v3457 = vpop.f32.mrb[0].mxu0
        %v3458 = vadd.f32 0.0, %v3457
        %v3459 = vpop.f32.mrb[0].mxu0
        %v3460 = vpop.f32.mrb[0].mxu0
        %v3461 = vadd.f32 0.0, %v3460
        %v3462 = vpop.f32.mrb[0].mxu0
        %3463 = vmatprep.mubr.bf16.mxu0 %v3320
        %3464 = vmatmul.mubr.bf16.gmra.mrb[0].mxu0 %v3318
        %v3465 = vpop.f32.mrb[0].mxu0
        %v3466 = vadd.f32 0.0, %v3465
        %v3467 = vpop.f32.mrb[0].mxu0
        %v3468 = vpop.f32.mrb[0].mxu0
        %v3469 = vadd.f32 0.0, %v3468
        %v3470 = vpop.f32.mrb[0].mxu0
        %3471 = vmatprep.mubr.bf16.mxu0 %v3319
        %3472 = vmatmul.mubr.bf16.gmra.mrb[0].mxu0 %v3317
        %v3473 = vpop.f32.mrb[0].mxu0
        %v3474 = vadd.f32 0.0, %v3473
        %v3475 = vpop.f32.mrb[0].mxu0
        %v3476 = vpop.f32.mrb[0].mxu0
        %v3477 = vpop.f32.mrb[0].mxu0
        %3478 = vdwg.mxu0
        %v3479 = vadd.f32 %v3267, %v3458
        %v3480 = vadd.f32 %v3268, %v3461
        %v3481 = vadd.f32 %v3269, %v3466
        %v3482 = vadd.f32 %v3270, %v3469
        %v3483 = vadd.f32 %v3271, %v3474
        %v3484 = vld [vmem:[#allocation2 + $0x20] sm:$0xff]
        %s3485 = scalar_lea.vmem [#allocation9], 256
        %v3486 = vld [vmem:[%s3485] sm:$0xf]
        %v3487 = vld [vmem:[%s3485 + $0x4] sm:$0xf]
        %v3488 = vld [vmem:[%s3485 + $0x8] sm:$0xf]
        %v3489 = vld [vmem:[%s3485 + $0xc] sm:$0xf]
        %v3490 = vld [vmem:[%s3485 + $0x10] sm:$0xf]
        %v3491 = vld [vmem:[%s3485 + $0x14] sm:$0xf]
        %v3492 = vld [vmem:[%s3485 + $0x18] sm:$0xf]
        %v3493 = vld [vmem:[%s3485 + $0x1c] sm:$0xf]
        %v3494 = vld [vmem:[%s3485 + $0x20] sm:$0xf]
        %v3495 = vld [vmem:[%s3485 + $0x24] sm:$0xf]
        %v3496 = vld [vmem:[%s3485 + $0x28] sm:$0xf]
        %v3497 = vld [vmem:[%s3485 + $0x2c] sm:$0xf]
        %v3498 = vld [vmem:[%s3485 + $0x30] sm:$0xf]
        %v3499 = vld [vmem:[%s3485 + $0x34] sm:$0xf]
        %v3500 = vld [vmem:[%s3485 + $0x38] sm:$0xf]
        %v3501 = vld [vmem:[%s3485 + $0x3c] sm:$0xf]
        %v3502 = vld [vmem:[%s3485 + $0x40] sm:$0xf]
        %v3503 = vld [vmem:[%s3485 + $0x44] sm:$0xf]
        %v3504 = vld [vmem:[%s3485 + $0x48] sm:$0xf]
        %v3505 = vld [vmem:[%s3485 + $0x4c] sm:$0xf]
        %v3506 = vld [vmem:[%s3485 + $0x50] sm:$0xf]
        %v3507 = vld [vmem:[%s3485 + $0x54] sm:$0xf]
        %v3508 = vld [vmem:[%s3485 + $0x58] sm:$0xf]
        %v3509 = vld [vmem:[%s3485 + $0x5c] sm:$0xf]
        %v3510 = vld [vmem:[%s3485 + $0x60] sm:$0xf]
        %v3511 = vld [vmem:[%s3485 + $0x64] sm:$0xf]
        %v3512 = vld [vmem:[%s3485 + $0x68] sm:$0xf]
        %v3513 = vld [vmem:[%s3485 + $0x6c] sm:$0xf]
        %v3514 = vld [vmem:[%s3485 + $0x70] sm:$0xf]
        %v3515 = vld [vmem:[%s3485 + $0x74] sm:$0xf]
        %v3516 = vld [vmem:[%s3485 + $0x78] sm:$0xf]
        %v3517 = vld [vmem:[%s3485 + $0x7c] sm:$0xf]
        %v3519 = vunpack.c.l.b16 %v3484
        %v3520 = vunpack.c.h.b16 %v3484
        %v3521 = vpack.c.b16 %v3519, %v3519
        %v3522 = vpack.c.b16 %v3520, %v3520
        %v3524 = vshrl.u32 %v3309, 16
        %v3526 = vrot.slane %v3524, 1
        %v3527 = vshll.u32 %v3309, 16
        %v3529 = vrot.slane %v3527, 2
        %v3530 = vor.u32 %v3526, %v3529
        %v3531 = vrot.slane %v3087, 1
        %v3532 = vrot.slane %v3071, 2
        %v3533 = vor.u32 %v3531, %v3532
        %v3534 = vsel %vm1362, %v3530, %v3533
        %v3536 = vshrl.u32 %v3310, 16
        %v3538 = vrot.slane %v3536, 1
        %v3539 = vshll.u32 %v3310, 16
        %v3541 = vrot.slane %v3539, 2
        %v3542 = vor.u32 %v3538, %v3541
        %v3543 = vrot.slane %v3095, 1
        %v3544 = vrot.slane %v3083, 2
        %v3545 = vor.u32 %v3543, %v3544
        %v3546 = vsel %vm1362, %v3542, %v3545
        %v3548 = vshrl.u32 %v3521, 16
        %v3550 = vrot.slane %v3548, 1
        %v3551 = vshll.u32 %v3521, 16
        %v3553 = vrot.slane %v3551, 2
        %v3554 = vor.u32 %v3550, %v3553
        %v3555 = vsel %vm1362, %v3533, %v3554
        %v3557 = vshrl.u32 %v3522, 16
        %v3559 = vrot.slane %v3557, 1
        %v3560 = vshll.u32 %v3522, 16
        %v3562 = vrot.slane %v3560, 2
        %v3563 = vor.u32 %v3559, %v3562
        %v3564 = vsel %vm1362, %v3545, %v3563
        %v3603 = vunpack.c.l.b16 %v3486
        %v3604 = vunpack.c.l.b16 %v3487
        %v3605 = vunpack.c.l.b16 %v3488
        %v3606 = vunpack.c.l.b16 %v3489
        %v3607 = vunpack.c.l.b16 %v3490
        %v3608 = vunpack.c.l.b16 %v3491
        %v3609 = vunpack.c.l.b16 %v3492
        %v3610 = vunpack.c.l.b16 %v3493
        %v3611 = vunpack.c.l.b16 %v3494
        %v3612 = vunpack.c.l.b16 %v3495
        %v3613 = vunpack.c.l.b16 %v3496
        %v3614 = vunpack.c.l.b16 %v3497
        %v3615 = vunpack.c.l.b16 %v3498
        %v3616 = vunpack.c.l.b16 %v3499
        %v3617 = vunpack.c.l.b16 %v3500
        %v3618 = vunpack.c.l.b16 %v3501
        %v3619 = vunpack.c.l.b16 %v3502
        %v3620 = vunpack.c.l.b16 %v3503
        %v3621 = vunpack.c.l.b16 %v3504
        %v3622 = vunpack.c.l.b16 %v3505
        %v3623 = vunpack.c.l.b16 %v3506
        %v3624 = vunpack.c.l.b16 %v3507
        %v3625 = vunpack.c.l.b16 %v3508
        %v3626 = vunpack.c.l.b16 %v3509
        %v3627 = vunpack.c.l.b16 %v3510
        %v3628 = vunpack.c.l.b16 %v3511
        %v3629 = vunpack.c.l.b16 %v3512
        %v3630 = vunpack.c.l.b16 %v3513
        %v3631 = vunpack.c.l.b16 %v3514
        %v3632 = vunpack.c.l.b16 %v3515
        %v3633 = vunpack.c.l.b16 %v3516
        %v3634 = vunpack.c.l.b16 %v3517
        %v3635 = vpack.c.b16 %v3604, %v3603
        %v3636 = vpack.c.b16 %v3606, %v3605
        %v3637 = vpack.c.b16 %v3608, %v3607
        %v3638 = vpack.c.b16 %v3610, %v3609
        %v3639 = vpack.c.b16 %v3612, %v3611
        %v3640 = vpack.c.b16 %v3614, %v3613
        %v3641 = vpack.c.b16 %v3616, %v3615
        %v3642 = vpack.c.b16 %v3618, %v3617
        %v3643 = vpack.c.b16 %v3620, %v3619
        %v3644 = vpack.c.b16 %v3622, %v3621
        %v3645 = vpack.c.b16 %v3624, %v3623
        %v3646 = vpack.c.b16 %v3626, %v3625
        %v3647 = vpack.c.b16 %v3628, %v3627
        %v3648 = vpack.c.b16 %v3630, %v3629
        %v3649 = vpack.c.b16 %v3632, %v3631
        %v3650 = vpack.c.b16 %v3634, %v3633
        %3667 = vmatprep.subr.bf16.mxu0 0
        %3668 = vmatpush1.bf16.msra.mxu0 %v3635
        %3669 = vmatprep.subr.bf16.mxu0 0
        %3670 = vmatpush1.bf16.msra.mxu0 %v3636
        %3671 = vmatprep.subr.bf16.mxu0 0
        %3672 = vmatpush1.bf16.msra.mxu0 %v3637
        %3673 = vmatprep.subr.bf16.mxu0 0
        %3674 = vmatpush1.bf16.msra.mxu0 %v3638
        %3675 = vmatprep.subr.bf16.mxu0 0
        %3676 = vmatpush1.bf16.msra.mxu0 %v3639
        %3677 = vmatprep.subr.bf16.mxu0 0
        %3678 = vmatpush1.bf16.msra.mxu0 %v3640
        %3679 = vmatprep.subr.bf16.mxu0 0
        %3680 = vmatpush1.bf16.msra.mxu0 %v3641
        %3681 = vmatprep.subr.bf16.mxu0 0
        %3682 = vmatpush1.bf16.msra.mxu0 %v3642
        %3683 = vmatprep.subr.bf16.mxu0 0
        %3684 = vmatpush1.bf16.msra.mxu0 %v3643
        %3685 = vmatprep.subr.bf16.mxu0 0
        %3686 = vmatpush1.bf16.msra.mxu0 %v3644
        %3687 = vmatprep.subr.bf16.mxu0 0
        %3688 = vmatpush1.bf16.msra.mxu0 %v3645
        %3689 = vmatprep.subr.bf16.mxu0 0
        %3690 = vmatpush1.bf16.msra.mxu0 %v3646
        %3691 = vmatprep.subr.bf16.mxu0 0
        %3692 = vmatpush1.bf16.msra.mxu0 %v3647
        %3693 = vmatprep.subr.bf16.mxu0 0
        %3694 = vmatpush1.bf16.msra.mxu0 %v3648
        %3695 = vmatprep.subr.bf16.mxu0 0
        %3696 = vmatpush1.bf16.msra.mxu0 %v3649
        %3697 = vmatprep.subr.bf16.mxu0 0
        %3698 = vmatpush1.bf16.msra.mxu0 %v3650
        %3699 = vmatprep.mubr.bf16.mxu0 %v3546
        %3700 = vmatmul.mubr.bf16.gmra.mrb[0].mxu0 %v3534
        %v3701 = vpop.f32.mrb[0].mxu0
        %v3702 = vadd.f32 0.0, %v3701
        %v3703 = vpop.f32.mrb[0].mxu0
        %v3704 = vpop.f32.mrb[0].mxu0
        %v3705 = vadd.f32 0.0, %v3704
        %v3706 = vpop.f32.mrb[0].mxu0
        %3707 = vmatprep.mubr.bf16.mxu0 %v3564
        %3708 = vmatmul.mubr.bf16.gmra.mrb[0].mxu0 %v3555
        %v3709 = vpop.f32.mrb[0].mxu0
        %v3710 = vadd.f32 0.0, %v3709
        %v3711 = vpop.f32.mrb[0].mxu0
        %v3712 = vpop.f32.mrb[0].mxu0
        %v3713 = vadd.f32 0.0, %v3712
        %v3714 = vpop.f32.mrb[0].mxu0
        %3715 = vmatprep.mubr.bf16.mxu0 %v3563
        %3716 = vmatmul.mubr.bf16.gmra.mrb[0].mxu0 %v3554
        %v3717 = vpop.f32.mrb[0].mxu0
        %v3718 = vadd.f32 0.0, %v3717
        %v3719 = vpop.f32.mrb[0].mxu0
        %v3720 = vpop.f32.mrb[0].mxu0
        %v3721 = vpop.f32.mrb[0].mxu0
        %3722 = vdwg.mxu0
        %v3723 = vadd.f32 %v3479, %v3702
        %v3724 = vadd.f32 %v3480, %v3705
        %v3725 = vadd.f32 %v3481, %v3710
        %v3726 = vadd.f32 %v3482, %v3713
        %v3727 = vadd.f32 %v3483, %v3718
        %3728 = vst [vmem:[%s341] sm:$0xff] %v3723
        %3729 = vst [vmem:[%s341 + $0x8] sm:$0xff] %v3724
        %s3730 = scalar_lea.vmem %s341, 16 [#allocation11]
        %3731 = vst [vmem:[%s3730 - $0x4] sm:$0xf0] %v3725
        %3732 = vst [vmem:[%s3730 + $0x4] sm:$0xff] %v3726
        %3733 = vst [vmem:[%s3730 + $0xc] sm:$0xf] %v3727
        %s3734 = sand.u32 %s186, 1
        %s3735 = scalar_lea.sflag [#allocation5], %s3734
        %s3736 = sand.u32 %s186, 1
        %s3737 = smul.addr %s3736, 32
        %s3738 = scalar_lea.vmem [#allocation11], %s3737
        // Predicated region
        $region65: #{tpu_custom_call.1} parent=47 // pred_check
          %p3739 = pneg %p196
        $region66: #{tpu_custom_call.1} parent=47 // pred_check_branch
          %3741 = sbr.rel (%p3739) target = $region68
        $region67: #{tpu_custom_call.1} parent=47 // pred_region
          %s3742 = smul.u32 2, %s26
          %s3744 = ssub.s32 512, 512
          %3745 = vsyncadd %s3735, %s3744
          %s3746 = smul.addr %s3742, 2
          %s3747 = smul.addr %s3746, 128
          %s3748 = scalar_lea.hbm %s7, %s3747
          %s3749 = sshll.u32 %s3738, 4
          %s3750 = int_to_ptr.vmem [resolvable:$true] %s3749
          %3755 = dma.vmem_to_hbm [thread:$0]  %s3750, 512, %s3748, %s3735, 128, 128, 8
        $region68: #{tpu_custom_call.1} parent=47 // pred_fallthru
          _
      $region48: #{tpu_custom_call.1} parent=5 // pred_fallthru
        _
      %p3756 = scmp.le.s32.totalorder 2, %s21
      // Predicated region
      $region69: #{tpu_custom_call.1} parent=5 // pred_check
        %p3757 = pneg %p3756
      $region70: #{tpu_custom_call.1} parent=5 // pred_check_branch
        %3759 = sbr.rel (%p3757) target = $region72
      $region71: #{tpu_custom_call.1} parent=5 // pred_region
        %s3760 = ssub.s32 %s21, 2
        // Predicated region
        $region73: #{tpu_custom_call.1} parent=71 // pred_check
          %p3761 = pneg %p202
        $region74: #{tpu_custom_call.1} parent=71 // pred_check_branch
          %3763 = sbr.rel (%p3761) target = $region76
        $region75: #{tpu_custom_call.1} parent=71 // pred_region
          %s3764 = sand.u32 %s187, 1
          %s3765 = scalar_lea.sflag [#allocation5], %s3764
          %s3766 = sand.u32 %s187, 1
          %s3767 = smul.addr %s3766, 32
          %s3768 = scalar_lea.vmem [#allocation11], %s3767
          %3769 = dma.done %s3765, 512
        $region76: #{tpu_custom_call.1} parent=71 // pred_fallthru
          _
      $region72: #{tpu_custom_call.1} parent=5 // pred_fallthru
        _
    $region6: #{tpu_custom_call.1} parent=1 // loop_footer
      %s25 = sadd.s32 1, %s21
    $region7: #{tpu_custom_call.1} parent=1 // loop_footer_branch
      %20 = sbr.rel target = $region3
    $region8: #{tpu_custom_call.1} parent=1 // loop_exit
      _
    %3770 = vsyncpa [#allocation4], 1
    %s3771 = scalar_lea.sflag [#allocation4], 1
    %3772 = vsyncpa %s3771, 1
    %3773 = vsyncpa [#allocation7], 1
    %3774 = vsyncpa [#allocation10], 1
    %3775 = vsyncpa [#allocation5], 1
    %s3776 = scalar_lea.sflag [#allocation5], 1
    %3777 = vsyncpa %s3776, 1

// kernel: tpu_custom_call.1
$region0: #{tpu_custom_call.1}
  #allocation0 [shape = 'u32[]', space=smem, size = 0x4, offset = 0x4, fixed_abs, tag = 'smem constant byte address 0x4 - core index']
  #allocation1 [shape = 'u32[144,128]{1,0:T(1,128)}', space=vmem, size = 0x12000, scoped, tag = 'internal scratch']
  #allocation2 [shape = 'bf16[40,256]{1,0:T(8,128)(2,1)}', space=vmem, size = 0x5000, scoped, tag = 'scratch operand']
  %s0 = inlined_call_operand.hbm [shape: f32[4,16,256], index: 0, kind: input, shape index: {}]
  %s1 = inlined_call_operand.hbm [shape: bf16[5,256,256], index: 1, kind: input, shape index: {}]
  %s2 = inlined_call_operand.vmem [shape: f32[1,256], index: 2, kind: input, shape index: {}]
  %s3 = inlined_call_operand.hbm [shape: bf16[3,256,256], index: 3, kind: input, shape index: {}]
  %s4 = inlined_call_operand.vmem [shape: f32[1,256], index: 4, kind: input, shape index: {}]
  %s5 = inlined_call_operand.hbm [shape: bf16[3,256,128], index: 5, kind: input, shape index: {}]
  %s6 = inlined_call_operand.vmem [shape: f32[1,128], index: 6, kind: input, shape index: {}]
  %s7 = inlined_call_operand.hbm [shape: f32[4,16,128], index: 7, kind: output, shape index: {}]
  %s8 = sld [smem:[#allocation0]]
  $region77: #{tpu_custom_call.1} parent=0
    _
  %s10 = ssub.s32 1, %s8
  %s11 = scalar_select 0, %s10, %s8
  $region1: #{tpu_custom_call.1} parent=0
    #allocation3 [shape = 'u8[65536]{0}', space=vmem, size = 0x10000, scoped, tag = 'input window, operand 0']
    #allocation4 [shape = 's32[2]{0}', space=sflag, size = 0x8, scoped, tag = 'scoped memory for tpu_custom_call.1']
    #allocation5 [shape = 's32[2]{0}', space=sflag, size = 0x8, scoped, tag = 'scoped memory for tpu_custom_call.1']
    #allocation6 [shape = 'u8[655360]{0}', space=vmem, size = 0xa0000, scoped, tag = 'input window, operand 1, single buffered']
    #allocation7 [shape = 's32[1]{0}', space=sflag, size = 0x4, scoped, tag = 'scoped memory for tpu_custom_call.1']
    #allocation8 [shape = 'u8[393216]{0}', space=vmem, size = 0x60000, scoped, tag = 'input window, operand 3, single buffered']
    #allocation9 [shape = 'u8[196608]{0}', space=vmem, size = 0x30000, scoped, tag = 'input window, operand 5, single buffered']
    #allocation10 [shape = 's32[1]{0}', space=sflag, size = 0x4, scoped, tag = 'scoped memory for tpu_custom_call.1']
    #allocation11 [shape = 'u8[32768]{0}', space=vmem, size = 0x8000, scoped, tag = 'output window, operand 0']
    %12 = vsyncpa [#allocation4], 0
    %s13 = scalar_lea.sflag [#allocation4], 1
    %14 = vsyncpa %s13, 0
    %15 = vsyncpa [#allocation7], 0
    %16 = vsyncpa [#allocation10], 0
    %17 = vsyncpa [#allocation5], 0
    %s18 = scalar_lea.sflag [#allocation5], 1
    %19 = vsyncpa %s18, 0
    loop: start=0, step=1, limit=4
    $region2: #{tpu_custom_call.1} parent=1 // loop_pre_header
      _
    $region3: #{tpu_custom_call.1} parent=1 // loop_header
      %s21 = sphi 0, %s25
      %p22 = scmp.ge.s32.totalorder %s21, 4
      %s31 = sphi 0, %s33
      %s34 = sphi 0, %s31
      %s35 = sphi 0, %s34
      %s51 = sphi 0, %s35
      %s55 = sphi 0, %s55
      %s57 = sphi 0, %s55
      %s58 = sphi 0, %s57
      %s72 = sphi 0, %s58
      %s76 = sphi 0, %s76
      %s78 = sphi 0, %s76
      %s79 = sphi 0, %s78
      %s93 = sphi 0, %s79
      %s97 = sphi 0, %s97
      %s99 = sphi 0, %s97
      %s100 = sphi 0, %s99
      %s114 = sphi 0, %s100
      %s118 = sphi 0, %s118
      %s120 = sphi 0, %s118
      %s121 = sphi 0, %s120
      %s135 = sphi 0, %s121
      %s139 = sphi 0, %s139
      %s141 = sphi 0, %s139
      %s142 = sphi 0, %s141
      %s156 = sphi 0, %s142
      %s160 = sphi 0, %s160
      %s162 = sphi 0, %s160
      %s163 = sphi 0, %s162
      %s177 = sphi 0, %s163
      %s183 = sphi 0, %s185
      %s186 = sphi 0, %s183
      %s187 = sphi 0, %s186
      %s203 = sphi 0, %s187
    $region4: #{tpu_custom_call.1} parent=1 // loop_header_branch
      %24 = sbr.rel (%p22) target = $region8
    $region5: #{tpu_custom_call.1} parent=1 // loop_body
      %s26 = ssub.s32 %s21, 1
      %s27 = ssub.s32 %s21, 2
      %s28 = sadd.s32 %s21, 1
      %s29 = ssub.s32 %s21, %s28
      %p30 = scmp.eq.s32.totalorder %s29, 0
      %s32 = sadd.s32 %s31, 1
      %s33 = scalar_select %p30, %s31, %s32
      %p36 = pneg %p30
      %p37 = scmp.eq.s32.totalorder %s21, 1
      %p38 = por %p36, %p37
      %p39 = scmp.ne.s32.totalorder %s31, %s34
      %p40 = scmp.eq.s32.totalorder %s21, 0
      %p41 = por %p39, %p40
      %p42 = scmp.ne.s32.totalorder %s31, %s34
      %p43 = scmp.eq.s32.totalorder %s26, 1
      %p44 = por %p42, %p43
      %p45 = scmp.ne.s32.totalorder %s34, %s35
      %p46 = scmp.eq.s32.totalorder %s26, 0
      %p47 = por %p45, %p46
      %p48 = scmp.ne.s32.totalorder %s34, %s35
      %p49 = scmp.eq.s32.totalorder %s27, 1
      %p50 = por %p48, %p49
      %p52 = scmp.ne.s32.totalorder %s35, %s51
      %p53 = scmp.eq.s32.totalorder %s27, 0
      %p54 = por %p52, %p53
      %s56 = sadd.s32 %s55, 1
      %p59 = scmp.eq.s32.totalorder %s21, 1
      %p60 = scmp.ne.s32.totalorder %s55, %s57
      %p61 = scmp.eq.s32.totalorder %s21, 0
      %p62 = por %p60, %p61
      %p63 = scmp.ne.s32.totalorder %s55, %s57
      %p64 = scmp.eq.s32.totalorder %s26, 1
      %p65 = por %p63, %p64
      %p66 = scmp.ne.s32.totalorder %s57, %s58
      %p67 = scmp.eq.s32.totalorder %s26, 0
      %p68 = por %p66, %p67
      %p69 = scmp.ne.s32.totalorder %s57, %s58
      %p70 = scmp.eq.s32.totalorder %s27, 1
      %p71 = por %p69, %p70
      %p73 = scmp.ne.s32.totalorder %s58, %s72
      %p74 = scmp.eq.s32.totalorder %s27, 0
      %p75 = por %p73, %p74
      %s77 = sadd.s32 %s76, 1
      %p80 = scmp.eq.s32.totalorder %s21, 1
      %p81 = scmp.ne.s32.totalorder %s76, %s78
      %p82 = scmp.eq.s32.totalorder %s21, 0
      %p83 = por %p81, %p82
      %p84 = scmp.ne.s32.totalorder %s76, %s78
      %p85 = scmp.eq.s32.totalorder %s26, 1
      %p86 = por %p84, %p85
      %p87 = scmp.ne.s32.totalorder %s78, %s79
      %p88 = scmp.eq.s32.totalorder %s26, 0
      %p89 = por %p87, %p88
      %p90 = scmp.ne.s32.totalorder %s78, %s79
      %p91 = scmp.eq.s32.totalorder %s27, 1
      %p92 = por %p90, %p91
      %p94 = scmp.ne.s32.totalorder %s79, %s93
      %p95 = scmp.eq.s32.totalorder %s27, 0
      %p96 = por %p94, %p95
      %s98 = sadd.s32 %s97, 1
      %p101 = scmp.eq.s32.totalorder %s21, 1
      %p102 = scmp.ne.s32.totalorder %s97, %s99
      %p103 = scmp.eq.s32.totalorder %s21, 0
      %p104 = por %p102, %p103
      %p105 = scmp.ne.s32.totalorder %s97, %s99
      %p106 = scmp.eq.s32.totalorder %s26, 1
      %p107 = por %p105, %p106
      %p108 = scmp.ne.s32.totalorder %s99, %s100
      %p109 = scmp.eq.s32.totalorder %s26, 0
      %p110 = por %p108, %p109
      %p111 = scmp.ne.s32.totalorder %s99, %s100
      %p112 = scmp.eq.s32.totalorder %s27, 1
      %p113 = por %p111, %p112
      %p115 = scmp.ne.s32.totalorder %s100, %s114
      %p116 = scmp.eq.s32.totalorder %s27, 0
      %p117 = por %p115, %p116
      %s119 = sadd.s32 %s118, 1
      %p122 = scmp.eq.s32.totalorder %s21, 1
      %p123 = scmp.ne.s32.totalorder %s118, %s120
      %p124 = scmp.eq.s32.totalorder %s21, 0
      %p125 = por %p123, %p124
      %p126 = scmp.ne.s32.totalorder %s118, %s120
      %p127 = scmp.eq.s32.totalorder %s26, 1
      %p128 = por %p126, %p127
      %p129 = scmp.ne.s32.totalorder %s120, %s121
      %p130 = scmp.eq.s32.totalorder %s26, 0
      %p131 = por %p129, %p130
      %p132 = scmp.ne.s32.totalorder %s120, %s121
      %p133 = scmp.eq.s32.totalorder %s27, 1
      %p134 = por %p132, %p133
      %p136 = scmp.ne.s32.totalorder %s121, %s135
      %p137 = scmp.eq.s32.totalorder %s27, 0
      %p138 = por %p136, %p137
      %s140 = sadd.s32 %s139, 1
      %p143 = scmp.eq.s32.totalorder %s21, 1
      %p144 = scmp.ne.s32.totalorder %s139, %s141
      %p145 = scmp.eq.s32.totalorder %s21, 0
      %p146 = por %p144, %p145
      %p147 = scmp.ne.s32.totalorder %s139, %s141
      %p148 = scmp.eq.s32.totalorder %s26, 1
      %p149 = por %p147, %p148
      %p150 = scmp.ne.s32.totalorder %s141, %s142
      %p151 = scmp.eq.s32.totalorder %s26, 0
      %p152 = por %p150, %p151
      %p153 = scmp.ne.s32.totalorder %s141, %s142
      %p154 = scmp.eq.s32.totalorder %s27, 1
      %p155 = por %p153, %p154
      %p157 = scmp.ne.s32.totalorder %s142, %s156
      %p158 = scmp.eq.s32.totalorder %s27, 0
      %p159 = por %p157, %p158
      %s161 = sadd.s32 %s160, 1
      %p164 = scmp.eq.s32.totalorder %s21, 1
      %p165 = scmp.ne.s32.totalorder %s160, %s162
      %p166 = scmp.eq.s32.totalorder %s21, 0
      %p167 = por %p165, %p166
      %p168 = scmp.ne.s32.totalorder %s160, %s162
      %p169 = scmp.eq.s32.totalorder %s26, 1
      %p170 = por %p168, %p169
      %p171 = scmp.ne.s32.totalorder %s162, %s163
      %p172 = scmp.eq.s32.totalorder %s26, 0
      %p173 = por %p171, %p172
      %p174 = scmp.ne.s32.totalorder %s162, %s163
      %p175 = scmp.eq.s32.totalorder %s27, 1
      %p176 = por %p174, %p175
      %p178 = scmp.ne.s32.totalorder %s163, %s177
      %p179 = scmp.eq.s32.totalorder %s27, 0
      %p180 = por %p178, %p179
      %s181 = ssub.s32 %s21, %s28
      %p182 = scmp.eq.s32.totalorder %s181, 0
      %s184 = sadd.s32 %s183, 1
      %s185 = scalar_select %p182, %s183, %s184
      %p188 = pneg %p182
      %p189 = scmp.eq.s32.totalorder %s21, 1
      %p190 = por %p188, %p189
      %p191 = scmp.ne.s32.totalorder %s183, %s186
      %p192 = scmp.eq.s32.totalorder %s21, 0
      %p193 = por %p191, %p192
      %p194 = scmp.ne.s32.totalorder %s183, %s186
      %p195 = scmp.eq.s32.totalorder %s26, 1
      %p196 = por %p194, %p195
      %p197 = scmp.ne.s32.totalorder %s186, %s187
      %p198 = scmp.eq.s32.totalorder %s26, 0
      %p199 = por %p197, %p198
      %p200 = scmp.ne.s32.totalorder %s186, %s187
      %p201 = scmp.eq.s32.totalorder %s27, 1
      %p202 = por %p200, %p201
      %p204 = scmp.ne.s32.totalorder %s187, %s203
      %p205 = scmp.eq.s32.totalorder %s27, 0
      %p206 = por %p204, %p205
      %p207 = scmp.le.s32.totalorder 1, %s21
      %p208 = scmp.lt.s32.totalorder %s21, 3
      %p209 = pnand %p207, %p208
      %p210 = pneg %p209
      // Predicated region
      $region9: #{tpu_custom_call.1} parent=5 // pred_check
        _
      $region10: #{tpu_custom_call.1} parent=5 // pred_check_branch
        %212 = sbr.rel (%p209) target = $region12
      $region11: #{tpu_custom_call.1} parent=5 // pred_region
        %s213 = ssub.s32 %s21, 1
        // Predicated region
        $region13: #{tpu_custom_call.1} parent=11 // pred_check
          %p214 = pneg %p68
        $region14: #{tpu_custom_call.1} parent=11 // pred_check_branch
          %216 = sbr.rel (%p214) target = $region16
        $region15: #{tpu_custom_call.1} parent=11 // pred_region
          %s218 = ssub.s32 20480, 20480
          %219 = vsyncadd [#allocation7], %s218
          %s220 = sshll.u32 [#allocation6], 4
          %s221 = int_to_ptr.vmem [resolvable:$true] %s220
          %226 = dma.hbm_to_vmem [thread:$0]  %s1, 20480, %s221, [#allocation7], 128, 128, 8
        $region16: #{tpu_custom_call.1} parent=11 // pred_fallthru
          _
        // Predicated region
        $region17: #{tpu_custom_call.1} parent=11 // pred_check
          %p227 = pneg %p89
        $region18: #{tpu_custom_call.1} parent=11 // pred_check_branch
          %229 = sbr.rel (%p227) target = $region20
        $region19: #{tpu_custom_call.1} parent=11 // pred_region
          _
        $region20: #{tpu_custom_call.1} parent=11 // pred_fallthru
          _
        // Predicated region
        $region21: #{tpu_custom_call.1} parent=11 // pred_check
          %p230 = pneg %p110
        $region22: #{tpu_custom_call.1} parent=11 // pred_check_branch
          %232 = sbr.rel (%p230) target = $region24
        $region23: #{tpu_custom_call.1} parent=11 // pred_region
          %s234 = ssub.s32 12288, 12288
          %235 = vsyncadd [#allocation7], %s234
          %s236 = sshll.u32 [#allocation8], 4
          %s237 = int_to_ptr.vmem [resolvable:$true] %s236
          %242 = dma.hbm_to_vmem [thread:$0]  %s3, 12288, %s237, [#allocation7], 128, 128, 8
        $region24: #{tpu_custom_call.1} parent=11 // pred_fallthru
          _
        // Predicated region
        $region25: #{tpu_custom_call.1} parent=11 // pred_check
          %p243 = pneg %p131
        $region26: #{tpu_custom_call.1} parent=11 // pred_check_branch
          %245 = sbr.rel (%p243) target = $region28
        $region27: #{tpu_custom_call.1} parent=11 // pred_region
          _
        $region28: #{tpu_custom_call.1} parent=11 // pred_fallthru
          _
        // Predicated region
        $region29: #{tpu_custom_call.1} parent=11 // pred_check
          %p246 = pneg %p152
        $region30: #{tpu_custom_call.1} parent=11 // pred_check_branch
          %248 = sbr.rel (%p246) target = $region32
        $region31: #{tpu_custom_call.1} parent=11 // pred_region
          %s250 = ssub.s32 6144, 6144
          %251 = vsyncadd [#allocation10], %s250
          %s252 = sshll.u32 [#allocation9], 4
          %s253 = int_to_ptr.vmem [resolvable:$true] %s252
          %258 = dma.hbm_to_vmem [thread:$0]  %s5, 6144, %s253, [#allocation10], 64, 64, 4
        $region32: #{tpu_custom_call.1} parent=11 // pred_fallthru
          _
        // Predicated region
        $region33: #{tpu_custom_call.1} parent=11 // pred_check
          %p259 = pneg %p173
        $region34: #{tpu_custom_call.1} parent=11 // pred_check_branch
          %261 = sbr.rel (%p259) target = $region36
        $region35: #{tpu_custom_call.1} parent=11 // pred_region
          _
        $region36: #{tpu_custom_call.1} parent=11 // pred_fallthru
          _
      $region12: #{tpu_custom_call.1} parent=5 // pred_fallthru
        _
      %p262 = scmp.lt.s32.totalorder %s21, 2
      // Predicated region
      $region37: #{tpu_custom_call.1} parent=5 // pred_check
        %p263 = pneg %p262
      $region38: #{tpu_custom_call.1} parent=5 // pred_check_branch
        %265 = sbr.rel (%p263) target = $region40
      $region39: #{tpu_custom_call.1} parent=5 // pred_region
        // Predicated region
        $region41: #{tpu_custom_call.1} parent=39 // pred_check
          %p266 = pneg %p41
        $region42: #{tpu_custom_call.1} parent=39 // pred_check_branch
          %268 = sbr.rel (%p266) target = $region44
        $region43: #{tpu_custom_call.1} parent=39 // pred_region
          %s269 = sand.u32 %s31, 1
          %s270 = scalar_lea.sflag [#allocation4], %s269
          %s271 = sand.u32 %s31, 1
          %s272 = smul.addr %s271, 64
          %s273 = scalar_lea.vmem [#allocation3], %s272
          %s274 = smul.u32 2, %s21
          %s276 = ssub.s32 1024, 1024
          %277 = vsyncadd %s270, %s276
          %s278 = smul.addr %s274, 4
          %s279 = smul.addr %s278, 128
          %s280 = scalar_lea.hbm %s0, %s279
          %s281 = sshll.u32 %s273, 4
          %s282 = int_to_ptr.vmem [resolvable:$true] %s281
          %287 = dma.hbm_to_vmem [thread:$0]  %s280, 1024, %s282, %s270, 256, 256, 16
        $region44: #{tpu_custom_call.1} parent=39 // pred_fallthru
          _
      $region40: #{tpu_custom_call.1} parent=5 // pred_fallthru
        _
      %p288 = scmp.le.s32.totalorder 1, %s21
      %p289 = scmp.lt.s32.totalorder %s21, 3
      %p290 = pnand %p288, %p289
      %p291 = pneg %p290
      // Predicated region
      $region45: #{tpu_custom_call.1} parent=5 // pred_check
        _
      $region46: #{tpu_custom_call.1} parent=5 // pred_check_branch
        %293 = sbr.rel (%p290) target = $region48
      $region47: #{tpu_custom_call.1} parent=5 // pred_region
        %s294 = ssub.s32 %s21, 1
        %s295 = sand.u32 %s34, 1
        %s296 = scalar_lea.sflag [#allocation4], %s295
        %s297 = sand.u32 %s34, 1
        %s298 = smul.addr %s297, 64
        %s299 = scalar_lea.vmem [#allocation3], %s298
        // Predicated region
        $region49: #{tpu_custom_call.1} parent=47 // pred_check
          %p300 = pneg %p47
        $region50: #{tpu_custom_call.1} parent=47 // pred_check_branch
          %302 = sbr.rel (%p300) target = $region52
        $region51: #{tpu_custom_call.1} parent=47 // pred_region
          %303 = dma.done %s296, 1024
        $region52: #{tpu_custom_call.1} parent=47 // pred_fallthru
          _
        // Predicated region
        $region53: #{tpu_custom_call.1} parent=47 // pred_check
          %p304 = pneg %p68
        $region54: #{tpu_custom_call.1} parent=47 // pred_check_branch
          %306 = sbr.rel (%p304) target = $region56
        $region55: #{tpu_custom_call.1} parent=47 // pred_region
          %307 = dma.done [#allocation7], 20480
        $region56: #{tpu_custom_call.1} parent=47 // pred_fallthru
          _
        // Predicated region
        $region57: #{tpu_custom_call.1} parent=47 // pred_check
          %p308 = pneg %p110
        $region58: #{tpu_custom_call.1} parent=47 // pred_check_branch
          %310 = sbr.rel (%p308) target = $region60
        $region59: #{tpu_custom_call.1} parent=47 // pred_region
          %311 = dma.done [#allocation7], 12288
        $region60: #{tpu_custom_call.1} parent=47 // pred_fallthru
          _
        // Predicated region
        $region61: #{tpu_custom_call.1} parent=47 // pred_check
          %p312 = pneg %p152
        $region62: #{tpu_custom_call.1} parent=47 // pred_check_branch
          %314 = sbr.rel (%p312) target = $region64
        $region63: #{tpu_custom_call.1} parent=47 // pred_region
          %315 = dma.done [#allocation10], 6144
        $region64: #{tpu_custom_call.1} parent=47 // pred_fallthru
          _
        %s316 = sand.u32 %s34, 1
        %s317 = scalar_lea.sflag [#allocation4], %s316
        %s318 = sand.u32 %s34, 1
        %s319 = smul.addr %s318, 64
        %s320 = scalar_lea.vmem [#allocation3], %s319
        %p321 = pneg %p47
        %p322 = pneg %p44
        %p323 = pneg %p68
        %p324 = pneg %p65
        %p325 = pneg %p89
        %p326 = pneg %p86
        %p327 = pneg %p110
        %p328 = pneg %p107
        %p329 = pneg %p131
        %p330 = pneg %p128
        %p331 = pneg %p152
        %p332 = pneg %p149
        %p333 = pneg %p173
        %p334 = pneg %p170
        %p335 = pneg %p199
        %p336 = pneg %p196
        %s337 = sand.u32 %s186, 1
        %s338 = scalar_lea.sflag [#allocation5], %s337
        %s339 = sand.u32 %s186, 1
        %s340 = smul.addr %s339, 32
        %s341 = scalar_lea.vmem [#allocation11], %s340
        %s342 = smul.u32 2, %s26
        %s343 = smul.u32 2, %s26
        %345 = vst [vmem:[#allocation2] sm:$0x11] 0
        %346 = vst [vmem:[#allocation2 + $0x10] sm:$0x22] 0
        %347 = vst [vmem:[#allocation2 + $0x10] sm:$0x44] 0
        %348 = vst [vmem:[#allocation2 + $0x20] sm:$0x88] 0
        %v349 = vld [vmem:[%s299] sm:$0xff]
        %v350 = vld [vmem:[%s299 + $0x8] sm:$0xff]
        %v351 = vld [vmem:[%s299 + $0x10] sm:$0xff]
        %v352 = vld [vmem:[%s299 + $0x18] sm:$0xff]
        %v353 = vpack.c.bf16 %v351, %v349
        %v354 = vpack.c.bf16 %v352, %v350
        %v357 = vunpack.c.l.b16 %v353
        %v358 = vunpack.c.l.b16 %v354
        %v359 = vunpack.c.h.b16 %v353
        %v360 = vunpack.c.h.b16 %v354
        %v361 = vpack.c.b16 %v358, %v357
        %v362 = vpack.c.b16 %v360, %v359
        %vm363 = vcmask 1040384
        %vm364 = vcmask 1044484
        %vm365 = vmor %vm363, %vm364
        %v366 = vrot.slane %v361, 7
        %v367 = vrot.slane %v366, 4
        %v368 = vrot.slane %v362, 7
        %v369 = vsel %vm365, %v367, %v368
        %v370 = vrot.slane %v368, 4
        %374 = vst [vmem:[#allocation2] sm:$0xee] %v366
        %375 = vst [vmem:[#allocation2 + $0x8] sm:$0xff] %v369
        %376 = vst [vmem:[#allocation2 + $0x10] sm:$0x11] %v370
        %s377 = scalar_lea.vmem %s299, 32 [#allocation3]
        %v378 = vld [vmem:[%s377] sm:$0xff]
        %v379 = vld [vmem:[%s377 + $0x8] sm:$0xff]
        %v380 = vld [vmem:[%s377 + $0x10] sm:$0xff]
        %v381 = vld [vmem:[%s377 + $0x18] sm:$0xff]
        %v382 = vpack.c.bf16 %v380, %v378
        %v383 = vpack.c.bf16 %v381, %v379
        %v386 = vunpack.c.l.b16 %v382
        %v387 = vunpack.c.l.b16 %v383
        %v388 = vunpack.c.h.b16 %v382
        %v389 = vunpack.c.h.b16 %v383
        %v390 = vpack.c.b16 %v387, %v386
        %v391 = vpack.c.b16 %v389, %v388
        %vm392 = vcmask 1042432
        %vm393 = vcmask 1046532
        %vm394 = vmor %vm392, %vm393
        %v395 = vrot.slane %v390, 5
        %v396 = vrot.slane %v395, 4
        %v397 = vrot.slane %v391, 5
        %v398 = vsel %vm394, %v396, %v397
        %v399 = vrot.slane %v397, 4
        %403 = vst [vmem:[#allocation2 + $0x10] sm:$0x88] %v395
        %404 = vst [vmem:[#allocation2 + $0x18] sm:$0xff] %v398
        %405 = vst [vmem:[#allocation2 + $0x20] sm:$0x77] %v399
        %v406 = vld [vmem:[%s2] sm:$0x3]
        %v408 = vlaneseq
        %v409 = vshrl.u32 %v408, 7
        %v410 = vsub.s32 0, %v409
        %v411 = vrot.slane %v406, %v410
        %v412 = vlaneseq
        %v413 = vshrl.u32 %v412, 7
        %v414 = vsub.s32 1, %v413
        %v415 = vrot.slane %v406, %v414
        %v418 = vld [vmem:[#allocation2] sm:$0xff]
        %v419 = vld [vmem:[#allocation2 + $0x8] sm:$0xff]
        %v420 = vld [vmem:[#allocation2 + $0x10] sm:$0xff]
        %v421 = vld [vmem:[#allocation2 + $0x18] sm:$0xff]
        %v422 = vld [vmem:[#allocation2 + $0x20] sm:$0x33]
        %v423 = vld [vmem:[#allocation6] sm:$0xff]
        %v424 = vld [vmem:[#allocation6 + $0x8] sm:$0xff]
        %v425 = vld [vmem:[#allocation6 + $0x10] sm:$0xff]
        %v426 = vld [vmem:[#allocation6 + $0x18] sm:$0xff]
        %v427 = vld [vmem:[#allocation6 + $0x20] sm:$0xff]
        %v428 = vld [vmem:[#allocation6 + $0x28] sm:$0xff]
        %v429 = vld [vmem:[#allocation6 + $0x30] sm:$0xff]
        %v430 = vld [vmem:[#allocation6 + $0x38] sm:$0xff]
        %v431 = vld [vmem:[#allocation6 + $0x40] sm:$0xff]
        %v432 = vld [vmem:[#allocation6 + $0x48] sm:$0xff]
        %v433 = vld [vmem:[#allocation6 + $0x50] sm:$0xff]
        %v434 = vld [vmem:[#allocation6 + $0x58] sm:$0xff]
        %v435 = vld [vmem:[#allocation6 + $0x60] sm:$0xff]
        %v436 = vld [vmem:[#allocation6 + $0x68] sm:$0xff]
        %v437 = vld [vmem:[#allocation6 + $0x70] sm:$0xff]
        %v438 = vld [vmem:[#allocation6 + $0x78] sm:$0xff]
        %v439 = vld [vmem:[#allocation6 + $0x80] sm:$0xff]
        %v440 = vld [vmem:[#allocation6 + $0x88] sm:$0xff]
        %v441 = vld [vmem:[#allocation6 + $0x90] sm:$0xff]
        %v442 = vld [vmem:[#allocation6 + $0x98] sm:$0xff]
        %v443 = vld [vmem:[#allocation6 + $0xa0] sm:$0xff]
        %v444 = vld [vmem:[#allocation6 + $0xa8] sm:$0xff]
        %v445 = vld [vmem:[#allocation6 + $0xb0] sm:$0xff]
        %v446 = vld [vmem:[#allocation6 + $0xb8] sm:$0xff]
        %v447 = vld [vmem:[#allocation6 + $0xc0] sm:$0xff]
        %v448 = vld [vmem:[#allocation6 + $0xc8] sm:$0xff]
        %v449 = vld [vmem:[#allocation6 + $0xd0] sm:$0xff]
        %v450 = vld [vmem:[#allocation6 + $0xd8] sm:$0xff]
        %v451 = vld [vmem:[#allocation6 + $0xe0] sm:$0xff]
        %v452 = vld [vmem:[#allocation6 + $0xe8] sm:$0xff]
        %v453 = vld [vmem:[#allocation6 + $0xf0] sm:$0xff]
        %v454 = vld [vmem:[#allocation6 + $0xf8] sm:$0xff]
        %v460 = vunpack.c.l.b16 %v418
        %v461 = vunpack.c.h.b16 %v418
        %v462 = vunpack.c.l.b16 %v419
        %v463 = vunpack.c.h.b16 %v419
        %v464 = vunpack.c.l.b16 %v420
        %v465 = vunpack.c.h.b16 %v420
        %v466 = vunpack.c.l.b16 %v421
        %v467 = vunpack.c.h.b16 %v421
        %v468 = vunpack.c.l.b16 %v422
        %v469 = vunpack.c.h.b16 %v422
        %v470 = vpack.c.b16 %v462, %v460
        %v471 = vpack.c.b16 %v463, %v461
        %v472 = vpack.c.b16 %v466, %v464
        %v473 = vpack.c.b16 %v467, %v465
        %v474 = vpack.c.b16 %v468, %v468
        %v475 = vpack.c.b16 %v469, %v469
        %v514 = vunpack.c.l.b16 %v423
        %v515 = vunpack.c.h.b16 %v423
        %v516 = vunpack.c.l.b16 %v424
        %v517 = vunpack.c.h.b16 %v424
        %v518 = vunpack.c.l.b16 %v425
        %v519 = vunpack.c.h.b16 %v425
        %v520 = vunpack.c.l.b16 %v426
        %v521 = vunpack.c.h.b16 %v426
        %v522 = vunpack.c.l.b16 %v427
        %v523 = vunpack.c.h.b16 %v427
        %v524 = vunpack.c.l.b16 %v428
        %v525 = vunpack.c.h.b16 %v428
        %v526 = vunpack.c.l.b16 %v429
        %v527 = vunpack.c.h.b16 %v429
        %v528 = vunpack.c.l.b16 %v430
        %v529 = vunpack.c.h.b16 %v430
        %v530 = vunpack.c.l.b16 %v431
        %v531 = vunpack.c.h.b16 %v431
        %v532 = vunpack.c.l.b16 %v432
        %v533 = vunpack.c.h.b16 %v432
        %v534 = vunpack.c.l.b16 %v433
        %v535 = vunpack.c.h.b16 %v433
        %v536 = vunpack.c.l.b16 %v434
        %v537 = vunpack.c.h.b16 %v434
        %v538 = vunpack.c.l.b16 %v435
        %v539 = vunpack.c.h.b16 %v435
        %v540 = vunpack.c.l.b16 %v436
        %v541 = vunpack.c.h.b16 %v436
        %v542 = vunpack.c.l.b16 %v437
        %v543 = vunpack.c.h.b16 %v437
        %v544 = vunpack.c.l.b16 %v438
        %v545 = vunpack.c.h.b16 %v438
        %v546 = vunpack.c.l.b16 %v439
        %v547 = vunpack.c.h.b16 %v439
        %v548 = vunpack.c.l.b16 %v440
        %v549 = vunpack.c.h.b16 %v440
        %v550 = vunpack.c.l.b16 %v441
        %v551 = vunpack.c.h.b16 %v441
        %v552 = vunpack.c.l.b16 %v442
        %v553 = vunpack.c.h.b16 %v442
        %v554 = vunpack.c.l.b16 %v443
        %v555 = vunpack.c.h.b16 %v443
        %v556 = vunpack.c.l.b16 %v444
        %v557 = vunpack.c.h.b16 %v444
        %v558 = vunpack.c.l.b16 %v445
        %v559 = vunpack.c.h.b16 %v445
        %v560 = vunpack.c.l.b16 %v446
        %v561 = vunpack.c.h.b16 %v446
        %v562 = vunpack.c.l.b16 %v447
        %v563 = vunpack.c.h.b16 %v447
        %v564 = vunpack.c.l.b16 %v448
        %v565 = vunpack.c.h.b16 %v448
        %v566 = vunpack.c.l.b16 %v449
        %v567 = vunpack.c.h.b16 %v449
        %v568 = vunpack.c.l.b16 %v450
        %v569 = vunpack.c.h.b16 %v450
        %v570 = vunpack.c.l.b16 %v451
        %v571 = vunpack.c.h.b16 %v451
        %v572 = vunpack.c.l.b16 %v452
        %v573 = vunpack.c.h.b16 %v452
        %v574 = vunpack.c.l.b16 %v453
        %v575 = vunpack.c.h.b16 %v453
        %v576 = vunpack.c.l.b16 %v454
        %v577 = vunpack.c.h.b16 %v454
        %v578 = vpack.c.b16 %v516, %v514
        %v579 = vpack.c.b16 %v517, %v515
        %v580 = vpack.c.b16 %v520, %v518
        %v581 = vpack.c.b16 %v521, %v519
        %v582 = vpack.c.b16 %v524, %v522
        %v583 = vpack.c.b16 %v525, %v523
        %v584 = vpack.c.b16 %v528, %v526
        %v585 = vpack.c.b16 %v529, %v527
        %v586 = vpack.c.b16 %v532, %v530
        %v587 = vpack.c.b16 %v533, %v531
        %v588 = vpack.c.b16 %v536, %v534
        %v589 = vpack.c.b16 %v537, %v535
        %v590 = vpack.c.b16 %v540, %v538
        %v591 = vpack.c.b16 %v541, %v539
        %v592 = vpack.c.b16 %v544, %v542
        %v593 = vpack.c.b16 %v545, %v543
        %v594 = vpack.c.b16 %v548, %v546
        %v595 = vpack.c.b16 %v549, %v547
        %v596 = vpack.c.b16 %v552, %v550
        %v597 = vpack.c.b16 %v553, %v551
        %v598 = vpack.c.b16 %v556, %v554
        %v599 = vpack.c.b16 %v557, %v555
        %v600 = vpack.c.b16 %v560, %v558
        %v601 = vpack.c.b16 %v561, %v559
        %v602 = vpack.c.b16 %v564, %v562
        %v603 = vpack.c.b16 %v565, %v563
        %v604 = vpack.c.b16 %v568, %v566
        %v605 = vpack.c.b16 %v569, %v567
        %v606 = vpack.c.b16 %v572, %v570
        %v607 = vpack.c.b16 %v573, %v571
        %v608 = vpack.c.b16 %v576, %v574
        %v609 = vpack.c.b16 %v577, %v575
        %642 = vmatprep.subr.bf16.mxu0 %v579
        %643 = vmatpush1.bf16.msra.mxu0 %v578
        %644 = vmatprep.subr.bf16.mxu0 %v581
        %645 = vmatpush1.bf16.msra.mxu0 %v580
        %646 = vmatprep.subr.bf16.mxu0 %v583
        %647 = vmatpush1.bf16.msra.mxu0 %v582
        %648 = vmatprep.subr.bf16.mxu0 %v585
        %649 = vmatpush1.bf16.msra.mxu0 %v584
        %650 = vmatprep.subr.bf16.mxu0 %v587
        %651 = vmatpush1.bf16.msra.mxu0 %v586
        %652 = vmatprep.subr.bf16.mxu0 %v589
        %653 = vmatpush1.bf16.msra.mxu0 %v588
        %654 = vmatprep.subr.bf16.mxu0 %v591
        %655 = vmatpush1.bf16.msra.mxu0 %v590
        %656 = vmatprep.subr.bf16.mxu0 %v593
        %657 = vmatpush1.bf16.msra.mxu0 %v592
        %658 = vmatprep.subr.bf16.mxu0 %v595
        %659 = vmatpush1.bf16.msra.mxu0 %v594
        %660 = vmatprep.subr.bf16.mxu0 %v597
        %661 = vmatpush1.bf16.msra.mxu0 %v596
        %662 = vmatprep.subr.bf16.mxu0 %v599
        %663 = vmatpush1.bf16.msra.mxu0 %v598
        %664 = vmatprep.subr.bf16.mxu0 %v601
        %665 = vmatpush1.bf16.msra.mxu0 %v600
        %666 = vmatprep.subr.bf16.mxu0 %v603
        %667 = vmatpush1.bf16.msra.mxu0 %v602
        %668 = vmatprep.subr.bf16.mxu0 %v605
        %669 = vmatpush1.bf16.msra.mxu0 %v604
        %670 = vmatprep.subr.bf16.mxu0 %v607
        %671 = vmatpush1.bf16.msra.mxu0 %v606
        %672 = vmatprep.subr.bf16.mxu0 %v609
        %673 = vmatpush1.bf16.msra.mxu0 %v608
        %674 = vmatprep.mubr.bf16.mxu0 %v471
        %675 = vmatmul.mubr.bf16.gmra.mrb[0].mxu0 %v470
        %v676 = vpop.f32.mrb[0].mxu0
        %v677 = vadd.f32 0.0, %v676
        %v678 = vpop.f32.mrb[0].mxu0
        %v679 = vadd.f32 0.0, %v678
        %v680 = vpop.f32.mrb[0].mxu0
        %v681 = vadd.f32 0.0, %v680
        %v682 = vpop.f32.mrb[0].mxu0
        %v683 = vadd.f32 0.0, %v682
        %684 = vmatprep.mubr.bf16.mxu0 %v473
        %685 = vmatmul.mubr.bf16.gmra.mrb[0].mxu0 %v472
        %v686 = vpop.f32.mrb[0].mxu0
        %v687 = vadd.f32 0.0, %v686
        %v688 = vpop.f32.mrb[0].mxu0
        %v689 = vadd.f32 0.0, %v688
        %v690 = vpop.f32.mrb[0].mxu0
        %v691 = vadd.f32 0.0, %v690
        %v692 = vpop.f32.mrb[0].mxu0
        %v693 = vadd.f32 0.0, %v692
        %694 = vmatprep.mubr.bf16.mxu0 %v475
        %695 = vmatmul.mubr.bf16.gmra.mrb[0].mxu0 %v474
        %v696 = vpop.f32.mrb[0].mxu0
        %v697 = vadd.f32 0.0, %v696
        %v698 = vpop.f32.mrb[0].mxu0
        %v699 = vadd.f32 0.0, %v698
        %v700 = vpop.f32.mrb[0].mxu0
        %v701 = vpop.f32.mrb[0].mxu0
        %702 = vdwg.mxu0
        %v703 = vadd.f32 %v411, %v677
        %v704 = vadd.f32 %v415, %v679
        %v705 = vadd.f32 %v411, %v681
        %v706 = vadd.f32 %v415, %v683
        %v707 = vadd.f32 %v411, %v687
        %v708 = vadd.f32 %v415, %v689
        %v709 = vadd.f32 %v411, %v691
        %v710 = vadd.f32 %v415, %v693
        %v711 = vadd.f32 %v411, %v697
        %v712 = vadd.f32 %v415, %v699
        %v713 = vld [vmem:[#allocation2 + $0x20] sm:$0x77]
        %s714 = scalar_lea.vmem [#allocation6], 256
        %v715 = vld [vmem:[%s714] sm:$0xff]
        %v716 = vld [vmem:[%s714 + $0x8] sm:$0xff]
        %v717 = vld [vmem:[%s714 + $0x10] sm:$0xff]
        %v718 = vld [vmem:[%s714 + $0x18] sm:$0xff]
        %v719 = vld [vmem:[%s714 + $0x20] sm:$0xff]
        %v720 = vld [vmem:[%s714 + $0x28] sm:$0xff]
        %v721 = vld [vmem:[%s714 + $0x30] sm:$0xff]
        %v722 = vld [vmem:[%s714 + $0x38] sm:$0xff]
        %v723 = vld [vmem:[%s714 + $0x40] sm:$0xff]
        %v724 = vld [vmem:[%s714 + $0x48] sm:$0xff]
        %v725 = vld [vmem:[%s714 + $0x50] sm:$0xff]
        %v726 = vld [vmem:[%s714 + $0x58] sm:$0xff]
        %v727 = vld [vmem:[%s714 + $0x60] sm:$0xff]
        %v728 = vld [vmem:[%s714 + $0x68] sm:$0xff]
        %v729 = vld [vmem:[%s714 + $0x70] sm:$0xff]
        %v730 = vld [vmem:[%s714 + $0x78] sm:$0xff]
        %v731 = vld [vmem:[%s714 + $0x80] sm:$0xff]
        %v732 = vld [vmem:[%s714 + $0x88] sm:$0xff]
        %v733 = vld [vmem:[%s714 + $0x90] sm:$0xff]
        %v734 = vld [vmem:[%s714 + $0x98] sm:$0xff]
        %v735 = vld [vmem:[%s714 + $0xa0] sm:$0xff]
        %v736 = vld [vmem:[%s714 + $0xa8] sm:$0xff]
        %v737 = vld [vmem:[%s714 + $0xb0] sm:$0xff]
        %v738 = vld [vmem:[%s714 + $0xb8] sm:$0xff]
        %v739 = vld [vmem:[%s714 + $0xc0] sm:$0xff]
        %v740 = vld [vmem:[%s714 + $0xc8] sm:$0xff]
        %v741 = vld [vmem:[%s714 + $0xd0] sm:$0xff]
        %v742 = vld [vmem:[%s714 + $0xd8] sm:$0xff]
        %v743 = vld [vmem:[%s714 + $0xe0] sm:$0xff]
        %v744 = vld [vmem:[%s714 + $0xe8] sm:$0xff]
        %v745 = vld [vmem:[%s714 + $0xf0] sm:$0xff]
        %v746 = vld [vmem:[%s714 + $0xf8] sm:$0xff]
        %v748 = vunpack.c.l.b16 %v713
        %v749 = vunpack.c.h.b16 %v713
        %v750 = vpack.c.b16 %v748, %v748
        %v751 = vpack.c.b16 %v749, %v749
        %vm752 = vsmask.f32 7424
        %v754 = vshrl.u32 %v470, 16
        %v756 = vshll.u32 %v470, 16
        %v758 = vrot.slane %v756, 1
        %v759 = vor.u32 %v754, %v758
        %v761 = vshll.u32 %v472, 16
        %v763 = vrot.slane %v761, 1
        %v764 = vsel %vm752, %v759, %v763
        %v766 = vshrl.u32 %v471, 16
        %v768 = vshll.u32 %v471, 16
        %v770 = vrot.slane %v768, 1
        %v771 = vor.u32 %v766, %v770
        %v773 = vshll.u32 %v473, 16
        %v775 = vrot.slane %v773, 1
        %v776 = vsel %vm752, %v771, %v775
        %v777 = vshrl.u32 %v472, 16
        %v779 = vor.u32 %v777, %v763
        %v781 = vshll.u32 %v750, 16
        %v783 = vrot.slane %v781, 1
        %v784 = vsel %vm752, %v779, %v783
        %v785 = vshrl.u32 %v473, 16
        %v787 = vor.u32 %v785, %v775
        %v789 = vshll.u32 %v751, 16
        %v791 = vrot.slane %v789, 1
        %v792 = vsel %vm752, %v787, %v791
        %v793 = vshrl.u32 %v750, 16
        %v795 = vor.u32 %v793, %v783
        %v796 = vshrl.u32 %v751, 16
        %v798 = vor.u32 %v796, %v791
        %v837 = vunpack.c.l.b16 %v715
        %v838 = vunpack.c.h.b16 %v715
        %v839 = vunpack.c.l.b16 %v716
        %v840 = vunpack.c.h.b16 %v716
        %v841 = vunpack.c.l.b16 %v717
        %v842 = vunpack.c.h.b16 %v717
        %v843 = vunpack.c.l.b16 %v718
        %v844 = vunpack.c.h.b16 %v718
        %v845 = vunpack.c.l.b16 %v719
        %v846 = vunpack.c.h.b16 %v719
        %v847 = vunpack.c.l.b16 %v720
        %v848 = vunpack.c.h.b16 %v720
        %v849 = vunpack.c.l.b16 %v721
        %v850 = vunpack.c.h.b16 %v721
        %v851 = vunpack.c.l.b16 %v722
        %v852 = vunpack.c.h.b16 %v722
        %v853 = vunpack.c.l.b16 %v723
        %v854 = vunpack.c.h.b16 %v723
        %v855 = vunpack.c.l.b16 %v724
        %v856 = vunpack.c.h.b16 %v724
        %v857 = vunpack.c.l.b16 %v725
        %v858 = vunpack.c.h.b16 %v725
        %v859 = vunpack.c.l.b16 %v726
        %v860 = vunpack.c.h.b16 %v726
        %v861 = vunpack.c.l.b16 %v727
        %v862 = vunpack.c.h.b16 %v727
        %v863 = vunpack.c.l.b16 %v728
        %v864 = vunpack.c.h.b16 %v728
        %v865 = vunpack.c.l.b16 %v729
        %v866 = vunpack.c.h.b16 %v729
        %v867 = vunpack.c.l.b16 %v730
        %v868 = vunpack.c.h.b16 %v730
        %v869 = vunpack.c.l.b16 %v731
        %v870 = vunpack.c.h.b16 %v731
        %v871 = vunpack.c.l.b16 %v732
        %v872 = vunpack.c.h.b16 %v732
        %v873 = vunpack.c.l.b16 %v733
        %v874 = vunpack.c.h.b16 %v733
        %v875 = vunpack.c.l.b16 %v734
        %v876 = vunpack.c.h.b16 %v734
        %v877 = vunpack.c.l.b16 %v735
        %v878 = vunpack.c.h.b16 %v735
        %v879 = vunpack.c.l.b16 %v736
        %v880 = vunpack.c.h.b16 %v736
        %v881 = vunpack.c.l.b16 %v737
        %v882 = vunpack.c.h.b16 %v737
        %v883 = vunpack.c.l.b16 %v738
        %v884 = vunpack.c.h.b16 %v738
        %v885 = vunpack.c.l.b16 %v739
        %v886 = vunpack.c.h.b16 %v739
        %v887 = vunpack.c.l.b16 %v740
        %v888 = vunpack.c.h.b16 %v740
        %v889 = vunpack.c.l.b16 %v741
        %v890 = vunpack.c.h.b16 %v741
        %v891 = vunpack.c.l.b16 %v742
        %v892 = vunpack.c.h.b16 %v742
        %v893 = vunpack.c.l.b16 %v743
        %v894 = vunpack.c.h.b16 %v743
        %v895 = vunpack.c.l.b16 %v744
        %v896 = vunpack.c.h.b16 %v744
        %v897 = vunpack.c.l.b16 %v745
        %v898 = vunpack.c.h.b16 %v745
        %v899 = vunpack.c.l.b16 %v746
        %v900 = vunpack.c.h.b16 %v746
        %v901 = vpack.c.b16 %v839, %v837
        %v902 = vpack.c.b16 %v840, %v838
        %v903 = vpack.c.b16 %v843, %v841
        %v904 = vpack.c.b16 %v844, %v842
        %v905 = vpack.c.b16 %v847, %v845
        %v906 = vpack.c.b16 %v848, %v846
        %v907 = vpack.c.b16 %v851, %v849
        %v908 = vpack.c.b16 %v852, %v850
        %v909 = vpack.c.b16 %v855, %v853
        %v910 = vpack.c.b16 %v856, %v854
        %v911 = vpack.c.b16 %v859, %v857
        %v912 = vpack.c.b16 %v860, %v858
        %v913 = vpack.c.b16 %v863, %v861
        %v914 = vpack.c.b16 %v864, %v862
        %v915 = vpack.c.b16 %v867, %v865
        %v916 = vpack.c.b16 %v868, %v866
        %v917 = vpack.c.b16 %v871, %v869
        %v918 = vpack.c.b16 %v872, %v870
        %v919 = vpack.c.b16 %v875, %v873
        %v920 = vpack.c.b16 %v876, %v874
        %v921 = vpack.c.b16 %v879, %v877
        %v922 = vpack.c.b16 %v880, %v878
        %v923 = vpack.c.b16 %v883, %v881
        %v924 = vpack.c.b16 %v884, %v882
        %v925 = vpack.c.b16 %v887, %v885
        %v926 = vpack.c.b16 %v888, %v886
        %v927 = vpack.c.b16 %v891, %v889
        %v928 = vpack.c.b16 %v892, %v890
        %v929 = vpack.c.b16 %v895, %v893
        %v930 = vpack.c.b16 %v896, %v894
        %v931 = vpack.c.b16 %v899, %v897
        %v932 = vpack.c.b16 %v900, %v898
        %965 = vmatprep.subr.bf16.mxu0 %v902
        %966 = vmatpush1.bf16.msra.mxu0 %v901
        %967 = vmatprep.subr.bf16.mxu0 %v904
        %968 = vmatpush1.bf16.msra.mxu0 %v903
        %969 = vmatprep.subr.bf16.mxu0 %v906
        %970 = vmatpush1.bf16.msra.mxu0 %v905
        %971 = vmatprep.subr.bf16.mxu0 %v908
        %972 = vmatpush1.bf16.msra.mxu0 %v907
        %973 = vmatprep.subr.bf16.mxu0 %v910
        %974 = vmatpush1.bf16.msra.mxu0 %v909
        %975 = vmatprep.subr.bf16.mxu0 %v912
        %976 = vmatpush1.bf16.msra.mxu0 %v911
        %977 = vmatprep.subr.bf16.mxu0 %v914
        %978 = vmatpush1.bf16.msra.mxu0 %v913
        %979 = vmatprep.subr.bf16.mxu0 %v916
        %980 = vmatpush1.bf16.msra.mxu0 %v915
        %981 = vmatprep.subr.bf16.mxu0 %v918
        %982 = vmatpush1.bf16.msra.mxu0 %v917
        %983 = vmatprep.subr.bf16.mxu0 %v920
        %984 = vmatpush1.bf16.msra.mxu0 %v919
        %985 = vmatprep.subr.bf16.mxu0 %v922
        %986 = vmatpush1.bf16.msra.mxu0 %v921
        %987 = vmatprep.subr.bf16.mxu0 %v924
        %988 = vmatpush1.bf16.msra.mxu0 %v923
        %989 = vmatprep.subr.bf16.mxu0 %v926
        %990 = vmatpush1.bf16.msra.mxu0 %v925
        %991 = vmatprep.subr.bf16.mxu0 %v928
        %992 = vmatpush1.bf16.msra.mxu0 %v927
        %993 = vmatprep.subr.bf16.mxu0 %v930
        %994 = vmatpush1.bf16.msra.mxu0 %v929
        %995 = vmatprep.subr.bf16.mxu0 %v932
        %996 = vmatpush1.bf16.msra.mxu0 %v931
        %997 = vmatprep.mubr.bf16.mxu0 %v776
        %998 = vmatmul.mubr.bf16.gmra.mrb[0].mxu0 %v764
        %v999 = vpop.f32.mrb[0].mxu0
        %v1000 = vadd.f32 0.0, %v999
        %v1001 = vpop.f32.mrb[0].mxu0
        %v1002 = vadd.f32 0.0, %v1001
        %v1003 = vpop.f32.mrb[0].mxu0
        %v1004 = vadd.f32 0.0, %v1003
        %v1005 = vpop.f32.mrb[0].mxu0
        %v1006 = vadd.f32 0.0, %v1005
        %1007 = vmatprep.mubr.bf16.mxu0 %v792
        %1008 = vmatmul.mubr.bf16.gmra.mrb[0].mxu0 %v784
        %v1009 = vpop.f32.mrb[0].mxu0
        %v1010 = vadd.f32 0.0, %v1009
        %v1011 = vpop.f32.mrb[0].mxu0
        %v1012 = vadd.f32 0.0, %v1011
        %v1013 = vpop.f32.mrb[0].mxu0
        %v1014 = vadd.f32 0.0, %v1013
        %v1015 = vpop.f32.mrb[0].mxu0
        %v1016 = vadd.f32 0.0, %v1015
        %1017 = vmatprep.mubr.bf16.mxu0 %v798
        %1018 = vmatmul.mubr.bf16.gmra.mrb[0].mxu0 %v795
        %v1019 = vpop.f32.mrb[0].mxu0
        %v1020 = vadd.f32 0.0, %v1019
        %v1021 = vpop.f32.mrb[0].mxu0
        %v1022 = vadd.f32 0.0, %v1021
        %v1023 = vpop.f32.mrb[0].mxu0
        %v1024 = vpop.f32.mrb[0].mxu0
        %1025 = vdwg.mxu0
        %v1026 = vadd.f32 %v703, %v1000
        %v1027 = vadd.f32 %v704, %v1002
        %v1028 = vadd.f32 %v705, %v1004
        %v1029 = vadd.f32 %v706, %v1006
        %v1030 = vadd.f32 %v707, %v1010
        %v1031 = vadd.f32 %v708, %v1012
        %v1032 = vadd.f32 %v709, %v1014
        %v1033 = vadd.f32 %v710, %v1016
        %v1034 = vadd.f32 %v711, %v1020
        %v1035 = vadd.f32 %v712, %v1022
        %v1036 = vld [vmem:[#allocation2] sm:$0xee]
        %s1037 = scalar_lea.vmem [#allocation6], 512
        %v1038 = vld [vmem:[%s1037] sm:$0xff]
        %v1039 = vld [vmem:[%s1037 + $0x8] sm:$0xff]
        %v1040 = vld [vmem:[%s1037 + $0x10] sm:$0xff]
        %v1041 = vld [vmem:[%s1037 + $0x18] sm:$0xff]
        %v1042 = vld [vmem:[%s1037 + $0x20] sm:$0xff]
        %v1043 = vld [vmem:[%s1037 + $0x28] sm:$0xff]
        %v1044 = vld [vmem:[%s1037 + $0x30] sm:$0xff]
        %v1045 = vld [vmem:[%s1037 + $0x38] sm:$0xff]
        %v1046 = vld [vmem:[%s1037 + $0x40] sm:$0xff]
        %v1047 = vld [vmem:[%s1037 + $0x48] sm:$0xff]
        %v1048 = vld [vmem:[%s1037 + $0x50] sm:$0xff]
        %v1049 = vld [vmem:[%s1037 + $0x58] sm:$0xff]
        %v1050 = vld [vmem:[%s1037 + $0x60] sm:$0xff]
        %v1051 = vld [vmem:[%s1037 + $0x68] sm:$0xff]
        %v1052 = vld [vmem:[%s1037 + $0x70] sm:$0xff]
        %v1053 = vld [vmem:[%s1037 + $0x78] sm:$0xff]
        %v1054 = vld [vmem:[%s1037 + $0x80] sm:$0xff]
        %v1055 = vld [vmem:[%s1037 + $0x88] sm:$0xff]
        %v1056 = vld [vmem:[%s1037 + $0x90] sm:$0xff]
        %v1057 = vld [vmem:[%s1037 + $0x98] sm:$0xff]
        %v1058 = vld [vmem:[%s1037 + $0xa0] sm:$0xff]
        %v1059 = vld [vmem:[%s1037 + $0xa8] sm:$0xff]
        %v1060 = vld [vmem:[%s1037 + $0xb0] sm:$0xff]
        %v1061 = vld [vmem:[%s1037 + $0xb8] sm:$0xff]
        %v1062 = vld [vmem:[%s1037 + $0xc0] sm:$0xff]
        %v1063 = vld [vmem:[%s1037 + $0xc8] sm:$0xff]
        %v1064 = vld [vmem:[%s1037 + $0xd0] sm:$0xff]
        %v1065 = vld [vmem:[%s1037 + $0xd8] sm:$0xff]
        %v1066 = vld [vmem:[%s1037 + $0xe0] sm:$0xff]
        %v1067 = vld [vmem:[%s1037 + $0xe8] sm:$0xff]
        %v1068 = vld [vmem:[%s1037 + $0xf0] sm:$0xff]
        %v1069 = vld [vmem:[%s1037 + $0xf8] sm:$0xff]
        %v1071 = vunpack.c.l.b16 %v1036
        %v1072 = vunpack.c.h.b16 %v1036
        %v1073 = vpack.c.b16 %v462, %v1071
        %v1074 = vpack.c.b16 %v463, %v1072
        %vm1075 = vcmask 1046528
        %v1076 = vrot.slane %v1073, 1
        %v1077 = vrot.slane %v472, 1
        %v1078 = vsel %vm1075, %v1076, %v1077
        %v1079 = vrot.slane %v1074, 1
        %v1080 = vrot.slane %v473, 1
        %v1081 = vsel %vm1075, %v1079, %v1080
        %v1082 = vrot.slane %v750, 1
        %v1083 = vsel %vm1075, %v1077, %v1082
        %v1084 = vrot.slane %v751, 1
        %v1085 = vsel %vm1075, %v1080, %v1084
        %v1124 = vunpack.c.l.b16 %v1038
        %v1125 = vunpack.c.h.b16 %v1038
        %v1126 = vunpack.c.l.b16 %v1039
        %v1127 = vunpack.c.h.b16 %v1039
        %v1128 = vunpack.c.l.b16 %v1040
        %v1129 = vunpack.c.h.b16 %v1040
        %v1130 = vunpack.c.l.b16 %v1041
        %v1131 = vunpack.c.h.b16 %v1041
        %v1132 = vunpack.c.l.b16 %v1042
        %v1133 = vunpack.c.h.b16 %v1042
        %v1134 = vunpack.c.l.b16 %v1043
        %v1135 = vunpack.c.h.b16 %v1043
        %v1136 = vunpack.c.l.b16 %v1044
        %v1137 = vunpack.c.h.b16 %v1044
        %v1138 = vunpack.c.l.b16 %v1045
        %v1139 = vunpack.c.h.b16 %v1045
        %v1140 = vunpack.c.l.b16 %v1046
        %v1141 = vunpack.c.h.b16 %v1046
        %v1142 = vunpack.c.l.b16 %v1047
        %v1143 = vunpack.c.h.b16 %v1047
        %v1144 = vunpack.c.l.b16 %v1048
        %v1145 = vunpack.c.h.b16 %v1048
        %v1146 = vunpack.c.l.b16 %v1049
        %v1147 = vunpack.c.h.b16 %v1049
        %v1148 = vunpack.c.l.b16 %v1050
        %v1149 = vunpack.c.h.b16 %v1050
        %v1150 = vunpack.c.l.b16 %v1051
        %v1151 = vunpack.c.h.b16 %v1051
        %v1152 = vunpack.c.l.b16 %v1052
        %v1153 = vunpack.c.h.b16 %v1052
        %v1154 = vunpack.c.l.b16 %v1053
        %v1155 = vunpack.c.h.b16 %v1053
        %v1156 = vunpack.c.l.b16 %v1054
        %v1157 = vunpack.c.h.b16 %v1054
        %v1158 = vunpack.c.l.b16 %v1055
        %v1159 = vunpack.c.h.b16 %v1055
        %v1160 = vunpack.c.l.b16 %v1056
        %v1161 = vunpack.c.h.b16 %v1056
        %v1162 = vunpack.c.l.b16 %v1057
        %v1163 = vunpack.c.h.b16 %v1057
        %v1164 = vunpack.c.l.b16 %v1058
        %v1165 = vunpack.c.h.b16 %v1058
        %v1166 = vunpack.c.l.b16 %v1059
        %v1167 = vunpack.c.h.b16 %v1059
        %v1168 = vunpack.c.l.b16 %v1060
        %v1169 = vunpack.c.h.b16 %v1060
        %v1170 = vunpack.c.l.b16 %v1061
        %v1171 = vunpack.c.h.b16 %v1061
        %v1172 = vunpack.c.l.b16 %v1062
        %v1173 = vunpack.c.h.b16 %v1062
        %v1174 = vunpack.c.l.b16 %v1063
        %v1175 = vunpack.c.h.b16 %v1063
        %v1176 = vunpack.c.l.b16 %v1064
        %v1177 = vunpack.c.h.b16 %v1064
        %v1178 = vunpack.c.l.b16 %v1065
        %v1179 = vunpack.c.h.b16 %v1065
        %v1180 = vunpack.c.l.b16 %v1066
        %v1181 = vunpack.c.h.b16 %v1066
        %v1182 = vunpack.c.l.b16 %v1067
        %v1183 = vunpack.c.h.b16 %v1067
        %v1184 = vunpack.c.l.b16 %v1068
        %v1185 = vunpack.c.h.b16 %v1068
        %v1186 = vunpack.c.l.b16 %v1069
        %v1187 = vunpack.c.h.b16 %v1069
        %v1188 = vpack.c.b16 %v1126, %v1124
        %v1189 = vpack.c.b16 %v1127, %v1125
        %v1190 = vpack.c.b16 %v1130, %v1128
        %v1191 = vpack.c.b16 %v1131, %v1129
        %v1192 = vpack.c.b16 %v1134, %v1132
        %v1193 = vpack.c.b16 %v1135, %v1133
        %v1194 = vpack.c.b16 %v1138, %v1136
        %v1195 = vpack.c.b16 %v1139, %v1137
        %v1196 = vpack.c.b16 %v1142, %v1140
        %v1197 = vpack.c.b16 %v1143, %v1141
        %v1198 = vpack.c.b16 %v1146, %v1144
        %v1199 = vpack.c.b16 %v1147, %v1145
        %v1200 = vpack.c.b16 %v1150, %v1148
        %v1201 = vpack.c.b16 %v1151, %v1149
        %v1202 = vpack.c.b16 %v1154, %v1152
        %v1203 = vpack.c.b16 %v1155, %v1153
        %v1204 = vpack.c.b16 %v1158, %v1156
        %v1205 = vpack.c.b16 %v1159, %v1157
        %v1206 = vpack.c.b16 %v1162, %v1160
        %v1207 = vpack.c.b16 %v1163, %v1161
        %v1208 = vpack.c.b16 %v1166, %v1164
        %v1209 = vpack.c.b16 %v1167, %v1165
        %v1210 = vpack.c.b16 %v1170, %v1168
        %v1211 = vpack.c.b16 %v1171, %v1169
        %v1212 = vpack.c.b16 %v1174, %v1172
        %v1213 = vpack.c.b16 %v1175, %v1173
        %v1214 = vpack.c.b16 %v1178, %v1176
        %v1215 = vpack.c.b16 %v1179, %v1177
        %v1216 = vpack.c.b16 %v1182, %v1180
        %v1217 = vpack.c.b16 %v1183, %v1181
        %v1218 = vpack.c.b16 %v1186, %v1184
        %v1219 = vpack.c.b16 %v1187, %v1185
        %1252 = vmatprep.subr.bf16.mxu0 %v1189
        %1253 = vmatpush1.bf16.msra.mxu0 %v1188
        %1254 = vmatprep.subr.bf16.mxu0 %v1191
        %1255 = vmatpush1.bf16.msra.mxu0 %v1190
        %1256 = vmatprep.subr.bf16.mxu0 %v1193
        %1257 = vmatpush1.bf16.msra.mxu0 %v1192
        %1258 = vmatprep.subr.bf16.mxu0 %v1195
        %1259 = vmatpush1.bf16.msra.mxu0 %v1194
        %1260 = vmatprep.subr.bf16.mxu0 %v1197
        %1261 = vmatpush1.bf16.msra.mxu0 %v1196
        %1262 = vmatprep.subr.bf16.mxu0 %v1199
        %1263 = vmatpush1.bf16.msra.mxu0 %v1198
        %1264 = vmatprep.subr.bf16.mxu0 %v1201
        %1265 = vmatpush1.bf16.msra.mxu0 %v1200
        %1266 = vmatprep.subr.bf16.mxu0 %v1203
        %1267 = vmatpush1.bf16.msra.mxu0 %v1202
        %1268 = vmatprep.subr.bf16.mxu0 %v1205
        %1269 = vmatpush1.bf16.msra.mxu0 %v1204
        %1270 = vmatprep.subr.bf16.mxu0 %v1207
        %1271 = vmatpush1.bf16.msra.mxu0 %v1206
        %1272 = vmatprep.subr.bf16.mxu0 %v1209
        %1273 = vmatpush1.bf16.msra.mxu0 %v1208
        %1274 = vmatprep.subr.bf16.mxu0 %v1211
        %1275 = vmatpush1.bf16.msra.mxu0 %v1210
        %1276 = vmatprep.subr.bf16.mxu0 %v1213
        %1277 = vmatpush1.bf16.msra.mxu0 %v1212
        %1278 = vmatprep.subr.bf16.mxu0 %v1215
        %1279 = vmatpush1.bf16.msra.mxu0 %v1214
        %1280 = vmatprep.subr.bf16.mxu0 %v1217
        %1281 = vmatpush1.bf16.msra.mxu0 %v1216
        %1282 = vmatprep.subr.bf16.mxu0 %v1219
        %1283 = vmatpush1.bf16.msra.mxu0 %v1218
        %1284 = vmatprep.mubr.bf16.mxu0 %v1081
        %1285 = vmatmul.mubr.bf16.gmra.mrb[0].mxu0 %v1078
        %v1286 = vpop.f32.mrb[0].mxu0
        %v1287 = vadd.f32 0.0, %v1286
        %v1288 = vpop.f32.mrb[0].mxu0
        %v1289 = vadd.f32 0.0, %v1288
        %v1290 = vpop.f32.mrb[0].mxu0
        %v1291 = vadd.f32 0.0, %v1290
        %v1292 = vpop.f32.mrb[0].mxu0
        %v1293 = vadd.f32 0.0, %v1292
        %1294 = vmatprep.mubr.bf16.mxu0 %v1085
        %1295 = vmatmul.mubr.bf16.gmra.mrb[0].mxu0 %v1083
        %v1296 = vpop.f32.mrb[0].mxu0
        %v1297 = vadd.f32 0.0, %v1296
        %v1298 = vpop.f32.mrb[0].mxu0
        %v1299 = vadd.f32 0.0, %v1298
        %v1300 = vpop.f32.mrb[0].mxu0
        %v1301 = vadd.f32 0.0, %v1300
        %v1302 = vpop.f32.mrb[0].mxu0
        %v1303 = vadd.f32 0.0, %v1302
        %1304 = vmatprep.mubr.bf16.mxu0 %v1084
        %1305 = vmatmul.mubr.bf16.gmra.mrb[0].mxu0 %v1082
        %v1306 = vpop.f32.mrb[0].mxu0
        %v1307 = vadd.f32 0.0, %v1306
        %v1308 = vpop.f32.mrb[0].mxu0
        %v1309 = vadd.f32 0.0, %v1308
        %v1310 = vpop.f32.mrb[0].mxu0
        %v1311 = vpop.f32.mrb[0].mxu0
        %1312 = vdwg.mxu0
        %v1313 = vadd.f32 %v1026, %v1287
        %v1314 = vadd.f32 %v1027, %v1289
        %v1315 = vadd.f32 %v1028, %v1291
        %v1316 = vadd.f32 %v1029, %v1293
        %v1317 = vadd.f32 %v1030, %v1297
        %v1318 = vadd.f32 %v1031, %v1299
        %v1319 = vadd.f32 %v1032, %v1301
        %v1320 = vadd.f32 %v1033, %v1303
        %v1321 = vadd.f32 %v1034, %v1307
        %v1322 = vadd.f32 %v1035, %v1309
        %v1323 = vld [vmem:[#allocation2 + $0x20] sm:$0xff]
        %s1324 = scalar_lea.vmem [#allocation6], 768
        %v1325 = vld [vmem:[%s1324] sm:$0xff]
        %v1326 = vld [vmem:[%s1324 + $0x8] sm:$0xff]
        %v1327 = vld [vmem:[%s1324 + $0x10] sm:$0xff]
        %v1328 = vld [vmem:[%s1324 + $0x18] sm:$0xff]
        %v1329 = vld [vmem:[%s1324 + $0x20] sm:$0xff]
        %v1330 = vld [vmem:[%s1324 + $0x28] sm:$0xff]
        %v1331 = vld [vmem:[%s1324 + $0x30] sm:$0xff]
        %v1332 = vld [vmem:[%s1324 + $0x38] sm:$0xff]
        %v1333 = vld [vmem:[%s1324 + $0x40] sm:$0xff]
        %v1334 = vld [vmem:[%s1324 + $0x48] sm:$0xff]
        %v1335 = vld [vmem:[%s1324 + $0x50] sm:$0xff]
        %v1336 = vld [vmem:[%s1324 + $0x58] sm:$0xff]
        %v1337 = vld [vmem:[%s1324 + $0x60] sm:$0xff]
        %v1338 = vld [vmem:[%s1324 + $0x68] sm:$0xff]
        %v1339 = vld [vmem:[%s1324 + $0x70] sm:$0xff]
        %v1340 = vld [vmem:[%s1324 + $0x78] sm:$0xff]
        %v1341 = vld [vmem:[%s1324 + $0x80] sm:$0xff]
        %v1342 = vld [vmem:[%s1324 + $0x88] sm:$0xff]
        %v1343 = vld [vmem:[%s1324 + $0x90] sm:$0xff]
        %v1344 = vld [vmem:[%s1324 + $0x98] sm:$0xff]
        %v1345 = vld [vmem:[%s1324 + $0xa0] sm:$0xff]
        %v1346 = vld [vmem:[%s1324 + $0xa8] sm:$0xff]
        %v1347 = vld [vmem:[%s1324 + $0xb0] sm:$0xff]
        %v1348 = vld [vmem:[%s1324 + $0xb8] sm:$0xff]
        %v1349 = vld [vmem:[%s1324 + $0xc0] sm:$0xff]
        %v1350 = vld [vmem:[%s1324 + $0xc8] sm:$0xff]
        %v1351 = vld [vmem:[%s1324 + $0xd0] sm:$0xff]
        %v1352 = vld [vmem:[%s1324 + $0xd8] sm:$0xff]
        %v1353 = vld [vmem:[%s1324 + $0xe0] sm:$0xff]
        %v1354 = vld [vmem:[%s1324 + $0xe8] sm:$0xff]
        %v1355 = vld [vmem:[%s1324 + $0xf0] sm:$0xff]
        %v1356 = vld [vmem:[%s1324 + $0xf8] sm:$0xff]
        %v1358 = vunpack.c.l.b16 %v1323
        %v1359 = vunpack.c.h.b16 %v1323
        %v1360 = vpack.c.b16 %v1358, %v1358
        %v1361 = vpack.c.b16 %v1359, %v1359
        %vm1362 = vsmask.f32 6400
        %v1364 = vshrl.u32 %v1073, 16
        %v1366 = vrot.slane %v1364, 1
        %v1367 = vshll.u32 %v1073, 16
        %v1369 = vrot.slane %v1367, 2
        %v1370 = vor.u32 %v1366, %v1369
        %v1371 = vrot.slane %v777, 1
        %v1372 = vrot.slane %v761, 2
        %v1373 = vor.u32 %v1371, %v1372
        %v1374 = vsel %vm1362, %v1370, %v1373
        %v1376 = vshrl.u32 %v1074, 16
        %v1378 = vrot.slane %v1376, 1
        %v1379 = vshll.u32 %v1074, 16
        %v1381 = vrot.slane %v1379, 2
        %v1382 = vor.u32 %v1378, %v1381
        %v1383 = vrot.slane %v785, 1
        %v1384 = vrot.slane %v773, 2
        %v1385 = vor.u32 %v1383, %v1384
        %v1386 = vsel %vm1362, %v1382, %v1385
        %v1388 = vshrl.u32 %v1360, 16
        %v1390 = vrot.slane %v1388, 1
        %v1391 = vshll.u32 %v1360, 16
        %v1393 = vrot.slane %v1391, 2
        %v1394 = vor.u32 %v1390, %v1393
        %v1395 = vsel %vm1362, %v1373, %v1394
        %v1397 = vshrl.u32 %v1361, 16
        %v1399 = vrot.slane %v1397, 1
        %v1400 = vshll.u32 %v1361, 16
        %v1402 = vrot.slane %v1400, 2
        %v1403 = vor.u32 %v1399, %v1402
        %v1404 = vsel %vm1362, %v1385, %v1403
        %v1443 = vunpack.c.l.b16 %v1325
        %v1444 = vunpack.c.h.b16 %v1325
        %v1445 = vunpack.c.l.b16 %v1326
        %v1446 = vunpack.c.h.b16 %v1326
        %v1447 = vunpack.c.l.b16 %v1327
        %v1448 = vunpack.c.h.b16 %v1327
        %v1449 = vunpack.c.l.b16 %v1328
        %v1450 = vunpack.c.h.b16 %v1328
        %v1451 = vunpack.c.l.b16 %v1329
        %v1452 = vunpack.c.h.b16 %v1329
        %v1453 = vunpack.c.l.b16 %v1330
        %v1454 = vunpack.c.h.b16 %v1330
        %v1455 = vunpack.c.l.b16 %v1331
        %v1456 = vunpack.c.h.b16 %v1331
        %v1457 = vunpack.c.l.b16 %v1332
        %v1458 = vunpack.c.h.b16 %v1332
        %v1459 = vunpack.c.l.b16 %v1333
        %v1460 = vunpack.c.h.b16 %v1333
        %v1461 = vunpack.c.l.b16 %v1334
        %v1462 = vunpack.c.h.b16 %v1334
        %v1463 = vunpack.c.l.b16 %v1335
        %v1464 = vunpack.c.h.b16 %v1335
        %v1465 = vunpack.c.l.b16 %v1336
        %v1466 = vunpack.c.h.b16 %v1336
        %v1467 = vunpack.c.l.b16 %v1337
        %v1468 = vunpack.c.h.b16 %v1337
        %v1469 = vunpack.c.l.b16 %v1338
        %v1470 = vunpack.c.h.b16 %v1338
        %v1471 = vunpack.c.l.b16 %v1339
        %v1472 = vunpack.c.h.b16 %v1339
        %v1473 = vunpack.c.l.b16 %v1340
        %v1474 = vunpack.c.h.b16 %v1340
        %v1475 = vunpack.c.l.b16 %v1341
        %v1476 = vunpack.c.h.b16 %v1341
        %v1477 = vunpack.c.l.b16 %v1342
        %v1478 = vunpack.c.h.b16 %v1342
        %v1479 = vunpack.c.l.b16 %v1343
        %v1480 = vunpack.c.h.b16 %v1343
        %v1481 = vunpack.c.l.b16 %v1344
        %v1482 = vunpack.c.h.b16 %v1344
        %v1483 = vunpack.c.l.b16 %v1345
        %v1484 = vunpack.c.h.b16 %v1345
        %v1485 = vunpack.c.l.b16 %v1346
        %v1486 = vunpack.c.h.b16 %v1346
        %v1487 = vunpack.c.l.b16 %v1347
        %v1488 = vunpack.c.h.b16 %v1347
        %v1489 = vunpack.c.l.b16 %v1348
        %v1490 = vunpack.c.h.b16 %v1348
        %v1491 = vunpack.c.l.b16 %v1349
        %v1492 = vunpack.c.h.b16 %v1349
        %v1493 = vunpack.c.l.b16 %v1350
        %v1494 = vunpack.c.h.b16 %v1350
        %v1495 = vunpack.c.l.b16 %v1351
        %v1496 = vunpack.c.h.b16 %v1351
        %v1497 = vunpack.c.l.b16 %v1352
        %v1498 = vunpack.c.h.b16 %v1352
        %v1499 = vunpack.c.l.b16 %v1353
        %v1500 = vunpack.c.h.b16 %v1353
        %v1501 = vunpack.c.l.b16 %v1354
        %v1502 = vunpack.c.h.b16 %v1354
        %v1503 = vunpack.c.l.b16 %v1355
        %v1504 = vunpack.c.h.b16 %v1355
        %v1505 = vunpack.c.l.b16 %v1356
        %v1506 = vunpack.c.h.b16 %v1356
        %v1507 = vpack.c.b16 %v1445, %v1443
        %v1508 = vpack.c.b16 %v1446, %v1444
        %v1509 = vpack.c.b16 %v1449, %v1447
        %v1510 = vpack.c.b16 %v1450, %v1448
        %v1511 = vpack.c.b16 %v1453, %v1451
        %v1512 = vpack.c.b16 %v1454, %v1452
        %v1513 = vpack.c.b16 %v1457, %v1455
        %v1514 = vpack.c.b16 %v1458, %v1456
        %v1515 = vpack.c.b16 %v1461, %v1459
        %v1516 = vpack.c.b16 %v1462, %v1460
        %v1517 = vpack.c.b16 %v1465, %v1463
        %v1518 = vpack.c.b16 %v1466, %v1464
        %v1519 = vpack.c.b16 %v1469, %v1467
        %v1520 = vpack.c.b16 %v1470, %v1468
        %v1521 = vpack.c.b16 %v1473, %v1471
        %v1522 = vpack.c.b16 %v1474, %v1472
        %v1523 = vpack.c.b16 %v1477, %v1475
        %v1524 = vpack.c.b16 %v1478, %v1476
        %v1525 = vpack.c.b16 %v1481, %v1479
        %v1526 = vpack.c.b16 %v1482, %v1480
        %v1527 = vpack.c.b16 %v1485, %v1483
        %v1528 = vpack.c.b16 %v1486, %v1484
        %v1529 = vpack.c.b16 %v1489, %v1487
        %v1530 = vpack.c.b16 %v1490, %v1488
        %v1531 = vpack.c.b16 %v1493, %v1491
        %v1532 = vpack.c.b16 %v1494, %v1492
        %v1533 = vpack.c.b16 %v1497, %v1495
        %v1534 = vpack.c.b16 %v1498, %v1496
        %v1535 = vpack.c.b16 %v1501, %v1499
        %v1536 = vpack.c.b16 %v1502, %v1500
        %v1537 = vpack.c.b16 %v1505, %v1503
        %v1538 = vpack.c.b16 %v1506, %v1504
        %1571 = vmatprep.subr.bf16.mxu0 %v1508
        %1572 = vmatpush1.bf16.msra.mxu0 %v1507
        %1573 = vmatprep.subr.bf16.mxu0 %v1510
        %1574 = vmatpush1.bf16.msra.mxu0 %v1509
        %1575 = vmatprep.subr.bf16.mxu0 %v1512
        %1576 = vmatpush1.bf16.msra.mxu0 %v1511
        %1577 = vmatprep.subr.bf16.mxu0 %v1514
        %1578 = vmatpush1.bf16.msra.mxu0 %v1513
        %1579 = vmatprep.subr.bf16.mxu0 %v1516
        %1580 = vmatpush1.bf16.msra.mxu0 %v1515
        %1581 = vmatprep.subr.bf16.mxu0 %v1518
        %1582 = vmatpush1.bf16.msra.mxu0 %v1517
        %1583 = vmatprep.subr.bf16.mxu0 %v1520
        %1584 = vmatpush1.bf16.msra.mxu0 %v1519
        %1585 = vmatprep.subr.bf16.mxu0 %v1522
        %1586 = vmatpush1.bf16.msra.mxu0 %v1521
        %1587 = vmatprep.subr.bf16.mxu0 %v1524
        %1588 = vmatpush1.bf16.msra.mxu0 %v1523
        %1589 = vmatprep.subr.bf16.mxu0 %v1526
        %1590 = vmatpush1.bf16.msra.mxu0 %v1525
        %1591 = vmatprep.subr.bf16.mxu0 %v1528
        %1592 = vmatpush1.bf16.msra.mxu0 %v1527
        %1593 = vmatprep.subr.bf16.mxu0 %v1530
        %1594 = vmatpush1.bf16.msra.mxu0 %v1529
        %1595 = vmatprep.subr.bf16.mxu0 %v1532
        %1596 = vmatpush1.bf16.msra.mxu0 %v1531
        %1597 = vmatprep.subr.bf16.mxu0 %v1534
        %1598 = vmatpush1.bf16.msra.mxu0 %v1533
        %1599 = vmatprep.subr.bf16.mxu0 %v1536
        %1600 = vmatpush1.bf16.msra.mxu0 %v1535
        %1601 = vmatprep.subr.bf16.mxu0 %v1538
        %1602 = vmatpush1.bf16.msra.mxu0 %v1537
        %1603 = vmatprep.mubr.bf16.mxu0 %v1386
        %1604 = vmatmul.mubr.bf16.gmra.mrb[0].mxu0 %v1374
        %v1605 = vpop.f32.mrb[0].mxu0
        %v1606 = vadd.f32 0.0, %v1605
        %v1607 = vpop.f32.mrb[0].mxu0
        %v1608 = vadd.f32 0.0, %v1607
        %v1609 = vpop.f32.mrb[0].mxu0
        %v1610 = vadd.f32 0.0, %v1609
        %v1611 = vpop.f32.mrb[0].mxu0
        %v1612 = vadd.f32 0.0, %v1611
        %1613 = vmatprep.mubr.bf16.mxu0 %v1404
        %1614 = vmatmul.mubr.bf16.gmra.mrb[0].mxu0 %v1395
        %v1615 = vpop.f32.mrb[0].mxu0
        %v1616 = vadd.f32 0.0, %v1615
        %v1617 = vpop.f32.mrb[0].mxu0
        %v1618 = vadd.f32 0.0, %v1617
        %v1619 = vpop.f32.mrb[0].mxu0
        %v1620 = vadd.f32 0.0, %v1619
        %v1621 = vpop.f32.mrb[0].mxu0
        %v1622 = vadd.f32 0.0, %v1621
        %1623 = vmatprep.mubr.bf16.mxu0 %v1403
        %1624 = vmatmul.mubr.bf16.gmra.mrb[0].mxu0 %v1394
        %v1625 = vpop.f32.mrb[0].mxu0
        %v1626 = vadd.f32 0.0, %v1625
        %v1627 = vpop.f32.mrb[0].mxu0
        %v1628 = vadd.f32 0.0, %v1627
        %v1629 = vpop.f32.mrb[0].mxu0
        %v1630 = vpop.f32.mrb[0].mxu0
        %1631 = vdwg.mxu0
        %v1632 = vadd.f32 %v1313, %v1606
        %v1633 = vadd.f32 %v1314, %v1608
        %v1634 = vadd.f32 %v1315, %v1610
        %v1635 = vadd.f32 %v1316, %v1612
        %v1636 = vadd.f32 %v1317, %v1616
        %v1637 = vadd.f32 %v1318, %v1618
        %v1638 = vadd.f32 %v1319, %v1620
        %v1639 = vadd.f32 %v1320, %v1622
        %v1640 = vadd.f32 %v1321, %v1626
        %v1641 = vadd.f32 %v1322, %v1628
        %v1642 = vld [vmem:[#allocation2] sm:$0xcc]
        %s1643 = scalar_lea.vmem [#allocation6], 1024
        %v1644 = vld [vmem:[%s1643] sm:$0xff]
        %v1645 = vld [vmem:[%s1643 + $0x8] sm:$0xff]
        %v1646 = vld [vmem:[%s1643 + $0x10] sm:$0xff]
        %v1647 = vld [vmem:[%s1643 + $0x18] sm:$0xff]
        %v1648 = vld [vmem:[%s1643 + $0x20] sm:$0xff]
        %v1649 = vld [vmem:[%s1643 + $0x28] sm:$0xff]
        %v1650 = vld [vmem:[%s1643 + $0x30] sm:$0xff]
        %v1651 = vld [vmem:[%s1643 + $0x38] sm:$0xff]
        %v1652 = vld [vmem:[%s1643 + $0x40] sm:$0xff]
        %v1653 = vld [vmem:[%s1643 + $0x48] sm:$0xff]
        %v1654 = vld [vmem:[%s1643 + $0x50] sm:$0xff]
        %v1655 = vld [vmem:[%s1643 + $0x58] sm:$0xff]
        %v1656 = vld [vmem:[%s1643 + $0x60] sm:$0xff]
        %v1657 = vld [vmem:[%s1643 + $0x68] sm:$0xff]
        %v1658 = vld [vmem:[%s1643 + $0x70] sm:$0xff]
        %v1659 = vld [vmem:[%s1643 + $0x78] sm:$0xff]
        %v1660 = vld [vmem:[%s1643 + $0x80] sm:$0xff]
        %v1661 = vld [vmem:[%s1643 + $0x88] sm:$0xff]
        %v1662 = vld [vmem:[%s1643 + $0x90] sm:$0xff]
        %v1663 = vld [vmem:[%s1643 + $0x98] sm:$0xff]
        %v1664 = vld [vmem:[%s1643 + $0xa0] sm:$0xff]
        %v1665 = vld [vmem:[%s1643 + $0xa8] sm:$0xff]
        %v1666 = vld [vmem:[%s1643 + $0xb0] sm:$0xff]
        %v1667 = vld [vmem:[%s1643 + $0xb8] sm:$0xff]
        %v1668 = vld [vmem:[%s1643 + $0xc0] sm:$0xff]
        %v1669 = vld [vmem:[%s1643 + $0xc8] sm:$0xff]
        %v1670 = vld [vmem:[%s1643 + $0xd0] sm:$0xff]
        %v1671 = vld [vmem:[%s1643 + $0xd8] sm:$0xff]
        %v1672 = vld [vmem:[%s1643 + $0xe0] sm:$0xff]
        %v1673 = vld [vmem:[%s1643 + $0xe8] sm:$0xff]
        %v1674 = vld [vmem:[%s1643 + $0xf0] sm:$0xff]
        %v1675 = vld [vmem:[%s1643 + $0xf8] sm:$0xff]
        %v1677 = vunpack.c.l.b16 %v1642
        %v1678 = vunpack.c.h.b16 %v1642
        %v1679 = vpack.c.b16 %v462, %v1677
        %v1680 = vpack.c.b16 %v463, %v1678
        %vm1681 = vcmask 1045504
        %v1682 = vrot.slane %v1679, 2
        %v1683 = vrot.slane %v472, 2
        %v1684 = vsel %vm1681, %v1682, %v1683
        %v1685 = vrot.slane %v1680, 2
        %v1686 = vrot.slane %v473, 2
        %v1687 = vsel %vm1681, %v1685, %v1686
        %v1688 = vrot.slane %v1360, 2
        %v1689 = vsel %vm1681, %v1683, %v1688
        %v1690 = vrot.slane %v1361, 2
        %v1691 = vsel %vm1681, %v1686, %v1690
        %v1730 = vunpack.c.l.b16 %v1644
        %v1731 = vunpack.c.h.b16 %v1644
        %v1732 = vunpack.c.l.b16 %v1645
        %v1733 = vunpack.c.h.b16 %v1645
        %v1734 = vunpack.c.l.b16 %v1646
        %v1735 = vunpack.c.h.b16 %v1646
        %v1736 = vunpack.c.l.b16 %v1647
        %v1737 = vunpack.c.h.b16 %v1647
        %v1738 = vunpack.c.l.b16 %v1648
        %v1739 = vunpack.c.h.b16 %v1648
        %v1740 = vunpack.c.l.b16 %v1649
        %v1741 = vunpack.c.h.b16 %v1649
        %v1742 = vunpack.c.l.b16 %v1650
        %v1743 = vunpack.c.h.b16 %v1650
        %v1744 = vunpack.c.l.b16 %v1651
        %v1745 = vunpack.c.h.b16 %v1651
        %v1746 = vunpack.c.l.b16 %v1652
        %v1747 = vunpack.c.h.b16 %v1652
        %v1748 = vunpack.c.l.b16 %v1653
        %v1749 = vunpack.c.h.b16 %v1653
        %v1750 = vunpack.c.l.b16 %v1654
        %v1751 = vunpack.c.h.b16 %v1654
        %v1752 = vunpack.c.l.b16 %v1655
        %v1753 = vunpack.c.h.b16 %v1655
        %v1754 = vunpack.c.l.b16 %v1656
        %v1755 = vunpack.c.h.b16 %v1656
        %v1756 = vunpack.c.l.b16 %v1657
        %v1757 = vunpack.c.h.b16 %v1657
        %v1758 = vunpack.c.l.b16 %v1658
        %v1759 = vunpack.c.h.b16 %v1658
        %v1760 = vunpack.c.l.b16 %v1659
        %v1761 = vunpack.c.h.b16 %v1659
        %v1762 = vunpack.c.l.b16 %v1660
        %v1763 = vunpack.c.h.b16 %v1660
        %v1764 = vunpack.c.l.b16 %v1661
        %v1765 = vunpack.c.h.b16 %v1661
        %v1766 = vunpack.c.l.b16 %v1662
        %v1767 = vunpack.c.h.b16 %v1662
        %v1768 = vunpack.c.l.b16 %v1663
        %v1769 = vunpack.c.h.b16 %v1663
        %v1770 = vunpack.c.l.b16 %v1664
        %v1771 = vunpack.c.h.b16 %v1664
        %v1772 = vunpack.c.l.b16 %v1665
        %v1773 = vunpack.c.h.b16 %v1665
        %v1774 = vunpack.c.l.b16 %v1666
        %v1775 = vunpack.c.h.b16 %v1666
        %v1776 = vunpack.c.l.b16 %v1667
        %v1777 = vunpack.c.h.b16 %v1667
        %v1778 = vunpack.c.l.b16 %v1668
        %v1779 = vunpack.c.h.b16 %v1668
        %v1780 = vunpack.c.l.b16 %v1669
        %v1781 = vunpack.c.h.b16 %v1669
        %v1782 = vunpack.c.l.b16 %v1670
        %v1783 = vunpack.c.h.b16 %v1670
        %v1784 = vunpack.c.l.b16 %v1671
        %v1785 = vunpack.c.h.b16 %v1671
        %v1786 = vunpack.c.l.b16 %v1672
        %v1787 = vunpack.c.h.b16 %v1672
        %v1788 = vunpack.c.l.b16 %v1673
        %v1789 = vunpack.c.h.b16 %v1673
        %v1790 = vunpack.c.l.b16 %v1674
        %v1791 = vunpack.c.h.b16 %v1674
        %v1792 = vunpack.c.l.b16 %v1675
        %v1793 = vunpack.c.h.b16 %v1675
        %v1794 = vpack.c.b16 %v1732, %v1730
        %v1795 = vpack.c.b16 %v1733, %v1731
        %v1796 = vpack.c.b16 %v1736, %v1734
        %v1797 = vpack.c.b16 %v1737, %v1735
        %v1798 = vpack.c.b16 %v1740, %v1738
        %v1799 = vpack.c.b16 %v1741, %v1739
        %v1800 = vpack.c.b16 %v1744, %v1742
        %v1801 = vpack.c.b16 %v1745, %v1743
        %v1802 = vpack.c.b16 %v1748, %v1746
        %v1803 = vpack.c.b16 %v1749, %v1747
        %v1804 = vpack.c.b16 %v1752, %v1750
        %v1805 = vpack.c.b16 %v1753, %v1751
        %v1806 = vpack.c.b16 %v1756, %v1754
        %v1807 = vpack.c.b16 %v1757, %v1755
        %v1808 = vpack.c.b16 %v1760, %v1758
        %v1809 = vpack.c.b16 %v1761, %v1759
        %v1810 = vpack.c.b16 %v1764, %v1762
        %v1811 = vpack.c.b16 %v1765, %v1763
        %v1812 = vpack.c.b16 %v1768, %v1766
        %v1813 = vpack.c.b16 %v1769, %v1767
        %v1814 = vpack.c.b16 %v1772, %v1770
        %v1815 = vpack.c.b16 %v1773, %v1771
        %v1816 = vpack.c.b16 %v1776, %v1774
        %v1817 = vpack.c.b16 %v1777, %v1775
        %v1818 = vpack.c.b16 %v1780, %v1778
        %v1819 = vpack.c.b16 %v1781, %v1779
        %v1820 = vpack.c.b16 %v1784, %v1782
        %v1821 = vpack.c.b16 %v1785, %v1783
        %v1822 = vpack.c.b16 %v1788, %v1786
        %v1823 = vpack.c.b16 %v1789, %v1787
        %v1824 = vpack.c.b16 %v1792, %v1790
        %v1825 = vpack.c.b16 %v1793, %v1791
        %1858 = vmatprep.subr.bf16.mxu0 %v1795
        %1859 = vmatpush1.bf16.msra.mxu0 %v1794
        %1860 = vmatprep.subr.bf16.mxu0 %v1797
        %1861 = vmatpush1.bf16.msra.mxu0 %v1796
        %1862 = vmatprep.subr.bf16.mxu0 %v1799
        %1863 = vmatpush1.bf16.msra.mxu0 %v1798
        %1864 = vmatprep.subr.bf16.mxu0 %v1801
        %1865 = vmatpush1.bf16.msra.mxu0 %v1800
        %1866 = vmatprep.subr.bf16.mxu0 %v1803
        %1867 = vmatpush1.bf16.msra.mxu0 %v1802
        %1868 = vmatprep.subr.bf16.mxu0 %v1805
        %1869 = vmatpush1.bf16.msra.mxu0 %v1804
        %1870 = vmatprep.subr.bf16.mxu0 %v1807
        %1871 = vmatpush1.bf16.msra.mxu0 %v1806
        %1872 = vmatprep.subr.bf16.mxu0 %v1809
        %1873 = vmatpush1.bf16.msra.mxu0 %v1808
        %1874 = vmatprep.subr.bf16.mxu0 %v1811
        %1875 = vmatpush1.bf16.msra.mxu0 %v1810
        %1876 = vmatprep.subr.bf16.mxu0 %v1813
        %1877 = vmatpush1.bf16.msra.mxu0 %v1812
        %1878 = vmatprep.subr.bf16.mxu0 %v1815
        %1879 = vmatpush1.bf16.msra.mxu0 %v1814
        %1880 = vmatprep.subr.bf16.mxu0 %v1817
        %1881 = vmatpush1.bf16.msra.mxu0 %v1816
        %1882 = vmatprep.subr.bf16.mxu0 %v1819
        %1883 = vmatpush1.bf16.msra.mxu0 %v1818
        %1884 = vmatprep.subr.bf16.mxu0 %v1821
        %1885 = vmatpush1.bf16.msra.mxu0 %v1820
        %1886 = vmatprep.subr.bf16.mxu0 %v1823
        %1887 = vmatpush1.bf16.msra.mxu0 %v1822
        %1888 = vmatprep.subr.bf16.mxu0 %v1825
        %1889 = vmatpush1.bf16.msra.mxu0 %v1824
        %1890 = vmatprep.mubr.bf16.mxu0 %v1687
        %1891 = vmatmul.mubr.bf16.gmra.mrb[0].mxu0 %v1684
        %v1892 = vpop.f32.mrb[0].mxu0
        %v1893 = vadd.f32 0.0, %v1892
        %v1894 = vpop.f32.mrb[0].mxu0
        %v1895 = vadd.f32 0.0, %v1894
        %v1896 = vpop.f32.mrb[0].mxu0
        %v1897 = vadd.f32 0.0, %v1896
        %v1898 = vpop.f32.mrb[0].mxu0
        %v1899 = vadd.f32 0.0, %v1898
        %1900 = vmatprep.mubr.bf16.mxu0 %v1691
        %1901 = vmatmul.mubr.bf16.gmra.mrb[0].mxu0 %v1689
        %v1902 = vpop.f32.mrb[0].mxu0
        %v1903 = vadd.f32 0.0, %v1902
        %v1904 = vpop.f32.mrb[0].mxu0
        %v1905 = vadd.f32 0.0, %v1904
        %v1906 = vpop.f32.mrb[0].mxu0
        %v1907 = vadd.f32 0.0, %v1906
        %v1908 = vpop.f32.mrb[0].mxu0
        %v1909 = vadd.f32 0.0, %v1908
        %1910 = vmatprep.mubr.bf16.mxu0 %v1690
        %1911 = vmatmul.mubr.bf16.gmra.mrb[0].mxu0 %v1688
        %v1912 = vpop.f32.mrb[0].mxu0
        %v1913 = vadd.f32 0.0, %v1912
        %v1914 = vpop.f32.mrb[0].mxu0
        %v1915 = vadd.f32 0.0, %v1914
        %v1916 = vpop.f32.mrb[0].mxu0
        %v1917 = vpop.f32.mrb[0].mxu0
        %1918 = vdwg.mxu0
        %v1919 = vadd.f32 %v1632, %v1893
        %v1920 = vadd.f32 %v1633, %v1895
        %v1921 = vadd.f32 %v1634, %v1897
        %v1922 = vadd.f32 %v1635, %v1899
        %v1923 = vadd.f32 %v1636, %v1903
        %v1924 = vadd.f32 %v1637, %v1905
        %v1925 = vadd.f32 %v1638, %v1907
        %v1926 = vadd.f32 %v1639, %v1909
        %v1927 = vadd.f32 %v1640, %v1913
        %v1928 = vadd.f32 %v1641, %v1915
        %v1929 = vpack.c.bf16 %v1921, %v1919
        %v1930 = vpack.c.bf16 %v1922, %v1920
        %v1933 = vunpack.c.l.b16 %v1929
        %v1934 = vunpack.c.l.b16 %v1930
        %v1935 = vunpack.c.h.b16 %v1929
        %v1936 = vunpack.c.h.b16 %v1930
        %v1937 = vpack.c.b16 %v1934, %v1933
        %v1938 = vpack.c.b16 %v1936, %v1935
        %v1939 = vrot.slane %v1937, 7
        %v1940 = vrot.slane %v1939, 4
        %v1941 = vrot.slane %v1938, 7
        %v1942 = vsel %vm365, %v1940, %v1941
        %v1943 = vrot.slane %v1941, 4
        %1947 = vst [vmem:[#allocation2] sm:$0xee] %v1939
        %1948 = vst [vmem:[#allocation2 + $0x8] sm:$0xff] %v1942
        %1949 = vst [vmem:[#allocation2 + $0x10] sm:$0x11] %v1943
        %v1950 = vpack.c.bf16 %v1925, %v1923
        %v1951 = vpack.c.bf16 %v1926, %v1924
        %v1952 = vpack.c.bf16 %v1927, %v1927
        %v1953 = vpack.c.bf16 %v1928, %v1928
        %v1958 = vunpack.c.l.b16 %v1950
        %v1959 = vunpack.c.l.b16 %v1951
        %v1960 = vunpack.c.h.b16 %v1950
        %v1961 = vunpack.c.h.b16 %v1951
        %v1962 = vunpack.c.l.b16 %v1952
        %v1963 = vunpack.c.l.b16 %v1953
        %v1964 = vpack.c.b16 %v1959, %v1958
        %v1965 = vpack.c.b16 %v1961, %v1960
        %v1966 = vpack.c.b16 %v1963, %v1962
        %v1967 = vrot.slane %v1964, 7
        %v1968 = vrot.slane %v1967, 4
        %v1969 = vrot.slane %v1965, 7
        %v1970 = vsel %vm365, %v1968, %v1969
        %v1971 = vrot.slane %v1969, 4
        %v1972 = vrot.slane %v1966, 7
        %v1973 = vsel %vm365, %v1971, %v1972
        %1977 = vst [vmem:[#allocation2 + $0x10] sm:$0x88] %v1967
        %1978 = vst [vmem:[#allocation2 + $0x18] sm:$0xff] %v1970
        %1979 = vst [vmem:[#allocation2 + $0x20] sm:$0x77] %v1973
        %v1980 = vld [vmem:[%s4] sm:$0x3]
        %v1982 = vlaneseq
        %v1983 = vshrl.u32 %v1982, 7
        %v1984 = vsub.s32 0, %v1983
        %v1985 = vrot.slane %v1980, %v1984
        %v1986 = vlaneseq
        %v1987 = vshrl.u32 %v1986, 7
        %v1988 = vsub.s32 1, %v1987
        %v1989 = vrot.slane %v1980, %v1988
        %v1992 = vld [vmem:[#allocation2] sm:$0xff]
        %v1993 = vld [vmem:[#allocation2 + $0x8] sm:$0xff]
        %v1994 = vld [vmem:[#allocation2 + $0x10] sm:$0xff]
        %v1995 = vld [vmem:[#allocation2 + $0x18] sm:$0xff]
        %v1996 = vld [vmem:[#allocation2 + $0x20] sm:$0x77]
        %v1997 = vld [vmem:[#allocation8] sm:$0xff]
        %v1998 = vld [vmem:[#allocation8 + $0x8] sm:$0xff]
        %v1999 = vld [vmem:[#allocation8 + $0x10] sm:$0xff]
        %v2000 = vld [vmem:[#allocation8 + $0x18] sm:$0xff]
        %v2001 = vld [vmem:[#allocation8 + $0x20] sm:$0xff]
        %v2002 = vld [vmem:[#allocation8 + $0x28] sm:$0xff]
        %v2003 = vld [vmem:[#allocation8 + $0x30] sm:$0xff]
        %v2004 = vld [vmem:[#allocation8 + $0x38] sm:$0xff]
        %v2005 = vld [vmem:[#allocation8 + $0x40] sm:$0xff]
        %v2006 = vld [vmem:[#allocation8 + $0x48] sm:$0xff]
        %v2007 = vld [vmem:[#allocation8 + $0x50] sm:$0xff]
        %v2008 = vld [vmem:[#allocation8 + $0x58] sm:$0xff]
        %v2009 = vld [vmem:[#allocation8 + $0x60] sm:$0xff]
        %v2010 = vld [vmem:[#allocation8 + $0x68] sm:$0xff]
        %v2011 = vld [vmem:[#allocation8 + $0x70] sm:$0xff]
        %v2012 = vld [vmem:[#allocation8 + $0x78] sm:$0xff]
        %v2013 = vld [vmem:[#allocation8 + $0x80] sm:$0xff]
        %v2014 = vld [vmem:[#allocation8 + $0x88] sm:$0xff]
        %v2015 = vld [vmem:[#allocation8 + $0x90] sm:$0xff]
        %v2016 = vld [vmem:[#allocation8 + $0x98] sm:$0xff]
        %v2017 = vld [vmem:[#allocation8 + $0xa0] sm:$0xff]
        %v2018 = vld [vmem:[#allocation8 + $0xa8] sm:$0xff]
        %v2019 = vld [vmem:[#allocation8 + $0xb0] sm:$0xff]
        %v2020 = vld [vmem:[#allocation8 + $0xb8] sm:$0xff]
        %v2021 = vld [vmem:[#allocation8 + $0xc0] sm:$0xff]
        %v2022 = vld [vmem:[#allocation8 + $0xc8] sm:$0xff]
        %v2023 = vld [vmem:[#allocation8 + $0xd0] sm:$0xff]
        %v2024 = vld [vmem:[#allocation8 + $0xd8] sm:$0xff]
        %v2025 = vld [vmem:[#allocation8 + $0xe0] sm:$0xff]
        %v2026 = vld [vmem:[#allocation8 + $0xe8] sm:$0xff]
        %v2027 = vld [vmem:[#allocation8 + $0xf0] sm:$0xff]
        %v2028 = vld [vmem:[#allocation8 + $0xf8] sm:$0xff]
        %v2034 = vunpack.c.l.b16 %v1992
        %v2035 = vunpack.c.h.b16 %v1992
        %v2036 = vunpack.c.l.b16 %v1993
        %v2037 = vunpack.c.h.b16 %v1993
        %v2038 = vunpack.c.l.b16 %v1994
        %v2039 = vunpack.c.h.b16 %v1994
        %v2040 = vunpack.c.l.b16 %v1995
        %v2041 = vunpack.c.h.b16 %v1995
        %v2042 = vunpack.c.l.b16 %v1996
        %v2043 = vunpack.c.h.b16 %v1996
        %v2044 = vpack.c.b16 %v2036, %v2034
        %v2045 = vpack.c.b16 %v2037, %v2035
        %v2046 = vpack.c.b16 %v2040, %v2038
        %v2047 = vpack.c.b16 %v2041, %v2039
        %v2048 = vpack.c.b16 %v2042, %v2042
        %v2049 = vpack.c.b16 %v2043, %v2043
        %v2051 = vshrl.u32 %v2044, 16
        %v2053 = vshll.u32 %v2044, 16
        %v2055 = vrot.slane %v2053, 1
        %v2056 = vor.u32 %v2051, %v2055
        %v2058 = vshll.u32 %v2046, 16
        %v2060 = vrot.slane %v2058, 1
        %v2061 = vsel %vm752, %v2056, %v2060
        %v2063 = vshrl.u32 %v2045, 16
        %v2065 = vshll.u32 %v2045, 16
        %v2067 = vrot.slane %v2065, 1
        %v2068 = vor.u32 %v2063, %v2067
        %v2070 = vshll.u32 %v2047, 16
        %v2072 = vrot.slane %v2070, 1
        %v2073 = vsel %vm752, %v2068, %v2072
        %v2074 = vshrl.u32 %v2046, 16
        %v2076 = vor.u32 %v2074, %v2060
        %v2078 = vshll.u32 %v2048, 16
        %v2080 = vrot.slane %v2078, 1
        %v2081 = vsel %vm752, %v2076, %v2080
        %v2082 = vshrl.u32 %v2047, 16
        %v2084 = vor.u32 %v2082, %v2072
        %v2086 = vshll.u32 %v2049, 16
        %v2088 = vrot.slane %v2086, 1
        %v2089 = vsel %vm752, %v2084, %v2088
        %v2090 = vshrl.u32 %v2048, 16
        %v2092 = vor.u32 %v2090, %v2080
        %v2093 = vshrl.u32 %v2049, 16
        %v2095 = vor.u32 %v2093, %v2088
        %v2134 = vunpack.c.l.b16 %v1997
        %v2135 = vunpack.c.h.b16 %v1997
        %v2136 = vunpack.c.l.b16 %v1998
        %v2137 = vunpack.c.h.b16 %v1998
        %v2138 = vunpack.c.l.b16 %v1999
        %v2139 = vunpack.c.h.b16 %v1999
        %v2140 = vunpack.c.l.b16 %v2000
        %v2141 = vunpack.c.h.b16 %v2000
        %v2142 = vunpack.c.l.b16 %v2001
        %v2143 = vunpack.c.h.b16 %v2001
        %v2144 = vunpack.c.l.b16 %v2002
        %v2145 = vunpack.c.h.b16 %v2002
        %v2146 = vunpack.c.l.b16 %v2003
        %v2147 = vunpack.c.h.b16 %v2003
        %v2148 = vunpack.c.l.b16 %v2004
        %v2149 = vunpack.c.h.b16 %v2004
        %v2150 = vunpack.c.l.b16 %v2005
        %v2151 = vunpack.c.h.b16 %v2005
        %v2152 = vunpack.c.l.b16 %v2006
        %v2153 = vunpack.c.h.b16 %v2006
        %v2154 = vunpack.c.l.b16 %v2007
        %v2155 = vunpack.c.h.b16 %v2007
        %v2156 = vunpack.c.l.b16 %v2008
        %v2157 = vunpack.c.h.b16 %v2008
        %v2158 = vunpack.c.l.b16 %v2009
        %v2159 = vunpack.c.h.b16 %v2009
        %v2160 = vunpack.c.l.b16 %v2010
        %v2161 = vunpack.c.h.b16 %v2010
        %v2162 = vunpack.c.l.b16 %v2011
        %v2163 = vunpack.c.h.b16 %v2011
        %v2164 = vunpack.c.l.b16 %v2012
        %v2165 = vunpack.c.h.b16 %v2012
        %v2166 = vunpack.c.l.b16 %v2013
        %v2167 = vunpack.c.h.b16 %v2013
        %v2168 = vunpack.c.l.b16 %v2014
        %v2169 = vunpack.c.h.b16 %v2014
        %v2170 = vunpack.c.l.b16 %v2015
        %v2171 = vunpack.c.h.b16 %v2015
        %v2172 = vunpack.c.l.b16 %v2016
        %v2173 = vunpack.c.h.b16 %v2016
        %v2174 = vunpack.c.l.b16 %v2017
        %v2175 = vunpack.c.h.b16 %v2017
        %v2176 = vunpack.c.l.b16 %v2018
        %v2177 = vunpack.c.h.b16 %v2018
        %v2178 = vunpack.c.l.b16 %v2019
        %v2179 = vunpack.c.h.b16 %v2019
        %v2180 = vunpack.c.l.b16 %v2020
        %v2181 = vunpack.c.h.b16 %v2020
        %v2182 = vunpack.c.l.b16 %v2021
        %v2183 = vunpack.c.h.b16 %v2021
        %v2184 = vunpack.c.l.b16 %v2022
        %v2185 = vunpack.c.h.b16 %v2022
        %v2186 = vunpack.c.l.b16 %v2023
        %v2187 = vunpack.c.h.b16 %v2023
        %v2188 = vunpack.c.l.b16 %v2024
        %v2189 = vunpack.c.h.b16 %v2024
        %v2190 = vunpack.c.l.b16 %v2025
        %v2191 = vunpack.c.h.b16 %v2025
        %v2192 = vunpack.c.l.b16 %v2026
        %v2193 = vunpack.c.h.b16 %v2026
        %v2194 = vunpack.c.l.b16 %v2027
        %v2195 = vunpack.c.h.b16 %v2027
        %v2196 = vunpack.c.l.b16 %v2028
        %v2197 = vunpack.c.h.b16 %v2028
        %v2198 = vpack.c.b16 %v2136, %v2134
        %v2199 = vpack.c.b16 %v2137, %v2135
        %v2200 = vpack.c.b16 %v2140, %v2138
        %v2201 = vpack.c.b16 %v2141, %v2139
        %v2202 = vpack.c.b16 %v2144, %v2142
        %v2203 = vpack.c.b16 %v2145, %v2143
        %v2204 = vpack.c.b16 %v2148, %v2146
        %v2205 = vpack.c.b16 %v2149, %v2147
        %v2206 = vpack.c.b16 %v2152, %v2150
        %v2207 = vpack.c.b16 %v2153, %v2151
        %v2208 = vpack.c.b16 %v2156, %v2154
        %v2209 = vpack.c.b16 %v2157, %v2155
        %v2210 = vpack.c.b16 %v2160, %v2158
        %v2211 = vpack.c.b16 %v2161, %v2159
        %v2212 = vpack.c.b16 %v2164, %v2162
        %v2213 = vpack.c.b16 %v2165, %v2163
        %v2214 = vpack.c.b16 %v2168, %v2166
        %v2215 = vpack.c.b16 %v2169, %v2167
        %v2216 = vpack.c.b16 %v2172, %v2170
        %v2217 = vpack.c.b16 %v2173, %v2171
        %v2218 = vpack.c.b16 %v2176, %v2174
        %v2219 = vpack.c.b16 %v2177, %v2175
        %v2220 = vpack.c.b16 %v2180, %v2178
        %v2221 = vpack.c.b16 %v2181, %v2179
        %v2222 = vpack.c.b16 %v2184, %v2182
        %v2223 = vpack.c.b16 %v2185, %v2183
        %v2224 = vpack.c.b16 %v2188, %v2186
        %v2225 = vpack.c.b16 %v2189, %v2187
        %v2226 = vpack.c.b16 %v2192, %v2190
        %v2227 = vpack.c.b16 %v2193, %v2191
        %v2228 = vpack.c.b16 %v2196, %v2194
        %v2229 = vpack.c.b16 %v2197, %v2195
        %2262 = vmatprep.subr.bf16.mxu0 %v2199
        %2263 = vmatpush1.bf16.msra.mxu0 %v2198
        %2264 = vmatprep.subr.bf16.mxu0 %v2201
        %2265 = vmatpush1.bf16.msra.mxu0 %v2200
        %2266 = vmatprep.subr.bf16.mxu0 %v2203
        %2267 = vmatpush1.bf16.msra.mxu0 %v2202
        %2268 = vmatprep.subr.bf16.mxu0 %v2205
        %2269 = vmatpush1.bf16.msra.mxu0 %v2204
        %2270 = vmatprep.subr.bf16.mxu0 %v2207
        %2271 = vmatpush1.bf16.msra.mxu0 %v2206
        %2272 = vmatprep.subr.bf16.mxu0 %v2209
        %2273 = vmatpush1.bf16.msra.mxu0 %v2208
        %2274 = vmatprep.subr.bf16.mxu0 %v2211
        %2275 = vmatpush1.bf16.msra.mxu0 %v2210
        %2276 = vmatprep.subr.bf16.mxu0 %v2213
        %2277 = vmatpush1.bf16.msra.mxu0 %v2212
        %2278 = vmatprep.subr.bf16.mxu0 %v2215
        %2279 = vmatpush1.bf16.msra.mxu0 %v2214
        %2280 = vmatprep.subr.bf16.mxu0 %v2217
        %2281 = vmatpush1.bf16.msra.mxu0 %v2216
        %2282 = vmatprep.subr.bf16.mxu0 %v2219
        %2283 = vmatpush1.bf16.msra.mxu0 %v2218
        %2284 = vmatprep.subr.bf16.mxu0 %v2221
        %2285 = vmatpush1.bf16.msra.mxu0 %v2220
        %2286 = vmatprep.subr.bf16.mxu0 %v2223
        %2287 = vmatpush1.bf16.msra.mxu0 %v2222
        %2288 = vmatprep.subr.bf16.mxu0 %v2225
        %2289 = vmatpush1.bf16.msra.mxu0 %v2224
        %2290 = vmatprep.subr.bf16.mxu0 %v2227
        %2291 = vmatpush1.bf16.msra.mxu0 %v2226
        %2292 = vmatprep.subr.bf16.mxu0 %v2229
        %2293 = vmatpush1.bf16.msra.mxu0 %v2228
        %2294 = vmatprep.mubr.bf16.mxu0 %v2073
        %2295 = vmatmul.mubr.bf16.gmra.mrb[0].mxu0 %v2061
        %v2296 = vpop.f32.mrb[0].mxu0
        %v2297 = vadd.f32 0.0, %v2296
        %v2298 = vpop.f32.mrb[0].mxu0
        %v2299 = vadd.f32 0.0, %v2298
        %v2300 = vpop.f32.mrb[0].mxu0
        %v2301 = vadd.f32 0.0, %v2300
        %v2302 = vpop.f32.mrb[0].mxu0
        %v2303 = vadd.f32 0.0, %v2302
        %2304 = vmatprep.mubr.bf16.mxu0 %v2089
        %2305 = vmatmul.mubr.bf16.gmra.mrb[0].mxu0 %v2081
        %v2306 = vpop.f32.mrb[0].mxu0
        %v2307 = vadd.f32 0.0, %v2306
        %v2308 = vpop.f32.mrb[0].mxu0
        %v2309 = vadd.f32 0.0, %v2308
        %v2310 = vpop.f32.mrb[0].mxu0
        %v2311 = vadd.f32 0.0, %v2310
        %v2312 = vpop.f32.mrb[0].mxu0
        %v2313 = vadd.f32 0.0, %v2312
        %2314 = vmatprep.mubr.bf16.mxu0 %v2095
        %2315 = vmatmul.mubr.bf16.gmra.mrb[0].mxu0 %v2092
        %v2316 = vpop.f32.mrb[0].mxu0
        %v2317 = vadd.f32 0.0, %v2316
        %v2318 = vpop.f32.mrb[0].mxu0
        %v2319 = vadd.f32 0.0, %v2318
        %v2320 = vpop.f32.mrb[0].mxu0
        %v2321 = vpop.f32.mrb[0].mxu0
        %2322 = vdwg.mxu0
        %v2323 = vadd.f32 %v1985, %v2297
        %v2324 = vadd.f32 %v1989, %v2299
        %v2325 = vadd.f32 %v1985, %v2301
        %v2326 = vadd.f32 %v1989, %v2303
        %v2327 = vadd.f32 %v1985, %v2307
        %v2328 = vadd.f32 %v1989, %v2309
        %v2329 = vadd.f32 %v1985, %v2311
        %v2330 = vadd.f32 %v1989, %v2313
        %v2331 = vadd.f32 %v1985, %v2317
        %v2332 = vadd.f32 %v1989, %v2319
        %v2333 = vld [vmem:[#allocation2] sm:$0xee]
        %s2334 = scalar_lea.vmem [#allocation8], 256
        %v2335 = vld [vmem:[%s2334] sm:$0xff]
        %v2336 = vld [vmem:[%s2334 + $0x8] sm:$0xff]
        %v2337 = vld [vmem:[%s2334 + $0x10] sm:$0xff]
        %v2338 = vld [vmem:[%s2334 + $0x18] sm:$0xff]
        %v2339 = vld [vmem:[%s2334 + $0x20] sm:$0xff]
        %v2340 = vld [vmem:[%s2334 + $0x28] sm:$0xff]
        %v2341 = vld [vmem:[%s2334 + $0x30] sm:$0xff]
        %v2342 = vld [vmem:[%s2334 + $0x38] sm:$0xff]
        %v2343 = vld [vmem:[%s2334 + $0x40] sm:$0xff]
        %v2344 = vld [vmem:[%s2334 + $0x48] sm:$0xff]
        %v2345 = vld [vmem:[%s2334 + $0x50] sm:$0xff]
        %v2346 = vld [vmem:[%s2334 + $0x58] sm:$0xff]
        %v2347 = vld [vmem:[%s2334 + $0x60] sm:$0xff]
        %v2348 = vld [vmem:[%s2334 + $0x68] sm:$0xff]
        %v2349 = vld [vmem:[%s2334 + $0x70] sm:$0xff]
        %v2350 = vld [vmem:[%s2334 + $0x78] sm:$0xff]
        %v2351 = vld [vmem:[%s2334 + $0x80] sm:$0xff]
        %v2352 = vld [vmem:[%s2334 + $0x88] sm:$0xff]
        %v2353 = vld [vmem:[%s2334 + $0x90] sm:$0xff]
        %v2354 = vld [vmem:[%s2334 + $0x98] sm:$0xff]
        %v2355 = vld [vmem:[%s2334 + $0xa0] sm:$0xff]
        %v2356 = vld [vmem:[%s2334 + $0xa8] sm:$0xff]
        %v2357 = vld [vmem:[%s2334 + $0xb0] sm:$0xff]
        %v2358 = vld [vmem:[%s2334 + $0xb8] sm:$0xff]
        %v2359 = vld [vmem:[%s2334 + $0xc0] sm:$0xff]
        %v2360 = vld [vmem:[%s2334 + $0xc8] sm:$0xff]
        %v2361 = vld [vmem:[%s2334 + $0xd0] sm:$0xff]
        %v2362 = vld [vmem:[%s2334 + $0xd8] sm:$0xff]
        %v2363 = vld [vmem:[%s2334 + $0xe0] sm:$0xff]
        %v2364 = vld [vmem:[%s2334 + $0xe8] sm:$0xff]
        %v2365 = vld [vmem:[%s2334 + $0xf0] sm:$0xff]
        %v2366 = vld [vmem:[%s2334 + $0xf8] sm:$0xff]
        %v2368 = vunpack.c.l.b16 %v2333
        %v2369 = vunpack.c.h.b16 %v2333
        %v2370 = vpack.c.b16 %v2036, %v2368
        %v2371 = vpack.c.b16 %v2037, %v2369
        %v2372 = vrot.slane %v2370, 1
        %v2373 = vrot.slane %v2046, 1
        %v2374 = vsel %vm1075, %v2372, %v2373
        %v2375 = vrot.slane %v2371, 1
        %v2376 = vrot.slane %v2047, 1
        %v2377 = vsel %vm1075, %v2375, %v2376
        %v2378 = vrot.slane %v2048, 1
        %v2379 = vsel %vm1075, %v2373, %v2378
        %v2380 = vrot.slane %v2049, 1
        %v2381 = vsel %vm1075, %v2376, %v2380
        %v2420 = vunpack.c.l.b16 %v2335
        %v2421 = vunpack.c.h.b16 %v2335
        %v2422 = vunpack.c.l.b16 %v2336
        %v2423 = vunpack.c.h.b16 %v2336
        %v2424 = vunpack.c.l.b16 %v2337
        %v2425 = vunpack.c.h.b16 %v2337
        %v2426 = vunpack.c.l.b16 %v2338
        %v2427 = vunpack.c.h.b16 %v2338
        %v2428 = vunpack.c.l.b16 %v2339
        %v2429 = vunpack.c.h.b16 %v2339
        %v2430 = vunpack.c.l.b16 %v2340
        %v2431 = vunpack.c.h.b16 %v2340
        %v2432 = vunpack.c.l.b16 %v2341
        %v2433 = vunpack.c.h.b16 %v2341
        %v2434 = vunpack.c.l.b16 %v2342
        %v2435 = vunpack.c.h.b16 %v2342
        %v2436 = vunpack.c.l.b16 %v2343
        %v2437 = vunpack.c.h.b16 %v2343
        %v2438 = vunpack.c.l.b16 %v2344
        %v2439 = vunpack.c.h.b16 %v2344
        %v2440 = vunpack.c.l.b16 %v2345
        %v2441 = vunpack.c.h.b16 %v2345
        %v2442 = vunpack.c.l.b16 %v2346
        %v2443 = vunpack.c.h.b16 %v2346
        %v2444 = vunpack.c.l.b16 %v2347
        %v2445 = vunpack.c.h.b16 %v2347
        %v2446 = vunpack.c.l.b16 %v2348
        %v2447 = vunpack.c.h.b16 %v2348
        %v2448 = vunpack.c.l.b16 %v2349
        %v2449 = vunpack.c.h.b16 %v2349
        %v2450 = vunpack.c.l.b16 %v2350
        %v2451 = vunpack.c.h.b16 %v2350
        %v2452 = vunpack.c.l.b16 %v2351
        %v2453 = vunpack.c.h.b16 %v2351
        %v2454 = vunpack.c.l.b16 %v2352
        %v2455 = vunpack.c.h.b16 %v2352
        %v2456 = vunpack.c.l.b16 %v2353
        %v2457 = vunpack.c.h.b16 %v2353
        %v2458 = vunpack.c.l.b16 %v2354
        %v2459 = vunpack.c.h.b16 %v2354
        %v2460 = vunpack.c.l.b16 %v2355
        %v2461 = vunpack.c.h.b16 %v2355
        %v2462 = vunpack.c.l.b16 %v2356
        %v2463 = vunpack.c.h.b16 %v2356
        %v2464 = vunpack.c.l.b16 %v2357
        %v2465 = vunpack.c.h.b16 %v2357
        %v2466 = vunpack.c.l.b16 %v2358
        %v2467 = vunpack.c.h.b16 %v2358
        %v2468 = vunpack.c.l.b16 %v2359
        %v2469 = vunpack.c.h.b16 %v2359
        %v2470 = vunpack.c.l.b16 %v2360
        %v2471 = vunpack.c.h.b16 %v2360
        %v2472 = vunpack.c.l.b16 %v2361
        %v2473 = vunpack.c.h.b16 %v2361
        %v2474 = vunpack.c.l.b16 %v2362
        %v2475 = vunpack.c.h.b16 %v2362
        %v2476 = vunpack.c.l.b16 %v2363
        %v2477 = vunpack.c.h.b16 %v2363
        %v2478 = vunpack.c.l.b16 %v2364
        %v2479 = vunpack.c.h.b16 %v2364
        %v2480 = vunpack.c.l.b16 %v2365
        %v2481 = vunpack.c.h.b16 %v2365
        %v2482 = vunpack.c.l.b16 %v2366
        %v2483 = vunpack.c.h.b16 %v2366
        %v2484 = vpack.c.b16 %v2422, %v2420
        %v2485 = vpack.c.b16 %v2423, %v2421
        %v2486 = vpack.c.b16 %v2426, %v2424
        %v2487 = vpack.c.b16 %v2427, %v2425
        %v2488 = vpack.c.b16 %v2430, %v2428
        %v2489 = vpack.c.b16 %v2431, %v2429
        %v2490 = vpack.c.b16 %v2434, %v2432
        %v2491 = vpack.c.b16 %v2435, %v2433
        %v2492 = vpack.c.b16 %v2438, %v2436
        %v2493 = vpack.c.b16 %v2439, %v2437
        %v2494 = vpack.c.b16 %v2442, %v2440
        %v2495 = vpack.c.b16 %v2443, %v2441
        %v2496 = vpack.c.b16 %v2446, %v2444
        %v2497 = vpack.c.b16 %v2447, %v2445
        %v2498 = vpack.c.b16 %v2450, %v2448
        %v2499 = vpack.c.b16 %v2451, %v2449
        %v2500 = vpack.c.b16 %v2454, %v2452
        %v2501 = vpack.c.b16 %v2455, %v2453
        %v2502 = vpack.c.b16 %v2458, %v2456
        %v2503 = vpack.c.b16 %v2459, %v2457
        %v2504 = vpack.c.b16 %v2462, %v2460
        %v2505 = vpack.c.b16 %v2463, %v2461
        %v2506 = vpack.c.b16 %v2466, %v2464
        %v2507 = vpack.c.b16 %v2467, %v2465
        %v2508 = vpack.c.b16 %v2470, %v2468
        %v2509 = vpack.c.b16 %v2471, %v2469
        %v2510 = vpack.c.b16 %v2474, %v2472
        %v2511 = vpack.c.b16 %v2475, %v2473
        %v2512 = vpack.c.b16 %v2478, %v2476
        %v2513 = vpack.c.b16 %v2479, %v2477
        %v2514 = vpack.c.b16 %v2482, %v2480
        %v2515 = vpack.c.b16 %v2483, %v2481
        %2548 = vmatprep.subr.bf16.mxu0 %v2485
        %2549 = vmatpush1.bf16.msra.mxu0 %v2484
        %2550 = vmatprep.subr.bf16.mxu0 %v2487
        %2551 = vmatpush1.bf16.msra.mxu0 %v2486
        %2552 = vmatprep.subr.bf16.mxu0 %v2489
        %2553 = vmatpush1.bf16.msra.mxu0 %v2488
        %2554 = vmatprep.subr.bf16.mxu0 %v2491
        %2555 = vmatpush1.bf16.msra.mxu0 %v2490
        %2556 = vmatprep.subr.bf16.mxu0 %v2493
        %2557 = vmatpush1.bf16.msra.mxu0 %v2492
        %2558 = vmatprep.subr.bf16.mxu0 %v2495
        %2559 = vmatpush1.bf16.msra.mxu0 %v2494
        %2560 = vmatprep.subr.bf16.mxu0 %v2497
        %2561 = vmatpush1.bf16.msra.mxu0 %v2496
        %2562 = vmatprep.subr.bf16.mxu0 %v2499
        %2563 = vmatpush1.bf16.msra.mxu0 %v2498
        %2564 = vmatprep.subr.bf16.mxu0 %v2501
        %2565 = vmatpush1.bf16.msra.mxu0 %v2500
        %2566 = vmatprep.subr.bf16.mxu0 %v2503
        %2567 = vmatpush1.bf16.msra.mxu0 %v2502
        %2568 = vmatprep.subr.bf16.mxu0 %v2505
        %2569 = vmatpush1.bf16.msra.mxu0 %v2504
        %2570 = vmatprep.subr.bf16.mxu0 %v2507
        %2571 = vmatpush1.bf16.msra.mxu0 %v2506
        %2572 = vmatprep.subr.bf16.mxu0 %v2509
        %2573 = vmatpush1.bf16.msra.mxu0 %v2508
        %2574 = vmatprep.subr.bf16.mxu0 %v2511
        %2575 = vmatpush1.bf16.msra.mxu0 %v2510
        %2576 = vmatprep.subr.bf16.mxu0 %v2513
        %2577 = vmatpush1.bf16.msra.mxu0 %v2512
        %2578 = vmatprep.subr.bf16.mxu0 %v2515
        %2579 = vmatpush1.bf16.msra.mxu0 %v2514
        %2580 = vmatprep.mubr.bf16.mxu0 %v2377
        %2581 = vmatmul.mubr.bf16.gmra.mrb[0].mxu0 %v2374
        %v2582 = vpop.f32.mrb[0].mxu0
        %v2583 = vadd.f32 0.0, %v2582
        %v2584 = vpop.f32.mrb[0].mxu0
        %v2585 = vadd.f32 0.0, %v2584
        %v2586 = vpop.f32.mrb[0].mxu0
        %v2587 = vadd.f32 0.0, %v2586
        %v2588 = vpop.f32.mrb[0].mxu0
        %v2589 = vadd.f32 0.0, %v2588
        %2590 = vmatprep.mubr.bf16.mxu0 %v2381
        %2591 = vmatmul.mubr.bf16.gmra.mrb[0].mxu0 %v2379
        %v2592 = vpop.f32.mrb[0].mxu0
        %v2593 = vadd.f32 0.0, %v2592
        %v2594 = vpop.f32.mrb[0].mxu0
        %v2595 = vadd.f32 0.0, %v2594
        %v2596 = vpop.f32.mrb[0].mxu0
        %v2597 = vadd.f32 0.0, %v2596
        %v2598 = vpop.f32.mrb[0].mxu0
        %v2599 = vadd.f32 0.0, %v2598
        %2600 = vmatprep.mubr.bf16.mxu0 %v2380
        %2601 = vmatmul.mubr.bf16.gmra.mrb[0].mxu0 %v2378
        %v2602 = vpop.f32.mrb[0].mxu0
        %v2603 = vadd.f32 0.0, %v2602
        %v2604 = vpop.f32.mrb[0].mxu0
        %v2605 = vadd.f32 0.0, %v2604
        %v2606 = vpop.f32.mrb[0].mxu0
        %v2607 = vpop.f32.mrb[0].mxu0
        %2608 = vdwg.mxu0
        %v2609 = vadd.f32 %v2323, %v2583
        %v2610 = vadd.f32 %v2324, %v2585
        %v2611 = vadd.f32 %v2325, %v2587
        %v2612 = vadd.f32 %v2326, %v2589
        %v2613 = vadd.f32 %v2327, %v2593
        %v2614 = vadd.f32 %v2328, %v2595
        %v2615 = vadd.f32 %v2329, %v2597
        %v2616 = vadd.f32 %v2330, %v2599
        %v2617 = vadd.f32 %v2331, %v2603
        %v2618 = vadd.f32 %v2332, %v2605
        %v2619 = vld [vmem:[#allocation2 + $0x20] sm:$0xff]
        %s2620 = scalar_lea.vmem [#allocation8], 512
        %v2621 = vld [vmem:[%s2620] sm:$0xff]
        %v2622 = vld [vmem:[%s2620 + $0x8] sm:$0xff]
        %v2623 = vld [vmem:[%s2620 + $0x10] sm:$0xff]
        %v2624 = vld [vmem:[%s2620 + $0x18] sm:$0xff]
        %v2625 = vld [vmem:[%s2620 + $0x20] sm:$0xff]
        %v2626 = vld [vmem:[%s2620 + $0x28] sm:$0xff]
        %v2627 = vld [vmem:[%s2620 + $0x30] sm:$0xff]
        %v2628 = vld [vmem:[%s2620 + $0x38] sm:$0xff]
        %v2629 = vld [vmem:[%s2620 + $0x40] sm:$0xff]
        %v2630 = vld [vmem:[%s2620 + $0x48] sm:$0xff]
        %v2631 = vld [vmem:[%s2620 + $0x50] sm:$0xff]
        %v2632 = vld [vmem:[%s2620 + $0x58] sm:$0xff]
        %v2633 = vld [vmem:[%s2620 + $0x60] sm:$0xff]
        %v2634 = vld [vmem:[%s2620 + $0x68] sm:$0xff]
        %v2635 = vld [vmem:[%s2620 + $0x70] sm:$0xff]
        %v2636 = vld [vmem:[%s2620 + $0x78] sm:$0xff]
        %v2637 = vld [vmem:[%s2620 + $0x80] sm:$0xff]
        %v2638 = vld [vmem:[%s2620 + $0x88] sm:$0xff]
        %v2639 = vld [vmem:[%s2620 + $0x90] sm:$0xff]
        %v2640 = vld [vmem:[%s2620 + $0x98] sm:$0xff]
        %v2641 = vld [vmem:[%s2620 + $0xa0] sm:$0xff]
        %v2642 = vld [vmem:[%s2620 + $0xa8] sm:$0xff]
        %v2643 = vld [vmem:[%s2620 + $0xb0] sm:$0xff]
        %v2644 = vld [vmem:[%s2620 + $0xb8] sm:$0xff]
        %v2645 = vld [vmem:[%s2620 + $0xc0] sm:$0xff]
        %v2646 = vld [vmem:[%s2620 + $0xc8] sm:$0xff]
        %v2647 = vld [vmem:[%s2620 + $0xd0] sm:$0xff]
        %v2648 = vld [vmem:[%s2620 + $0xd8] sm:$0xff]
        %v2649 = vld [vmem:[%s2620 + $0xe0] sm:$0xff]
        %v2650 = vld [vmem:[%s2620 + $0xe8] sm:$0xff]
        %v2651 = vld [vmem:[%s2620 + $0xf0] sm:$0xff]
        %v2652 = vld [vmem:[%s2620 + $0xf8] sm:$0xff]
        %v2654 = vunpack.c.l.b16 %v2619
        %v2655 = vunpack.c.h.b16 %v2619
        %v2656 = vpack.c.b16 %v2654, %v2654
        %v2657 = vpack.c.b16 %v2655, %v2655
        %v2659 = vshrl.u32 %v2370, 16
        %v2661 = vrot.slane %v2659, 1
        %v2662 = vshll.u32 %v2370, 16
        %v2664 = vrot.slane %v2662, 2
        %v2665 = vor.u32 %v2661, %v2664
        %v2666 = vrot.slane %v2074, 1
        %v2667 = vrot.slane %v2058, 2
        %v2668 = vor.u32 %v2666, %v2667
        %v2669 = vsel %vm1362, %v2665, %v2668
        %v2671 = vshrl.u32 %v2371, 16
        %v2673 = vrot.slane %v2671, 1
        %v2674 = vshll.u32 %v2371, 16
        %v2676 = vrot.slane %v2674, 2
        %v2677 = vor.u32 %v2673, %v2676
        %v2678 = vrot.slane %v2082, 1
        %v2679 = vrot.slane %v2070, 2
        %v2680 = vor.u32 %v2678, %v2679
        %v2681 = vsel %vm1362, %v2677, %v2680
        %v2683 = vshrl.u32 %v2656, 16
        %v2685 = vrot.slane %v2683, 1
        %v2686 = vshll.u32 %v2656, 16
        %v2688 = vrot.slane %v2686, 2
        %v2689 = vor.u32 %v2685, %v2688
        %v2690 = vsel %vm1362, %v2668, %v2689
        %v2692 = vshrl.u32 %v2657, 16
        %v2694 = vrot.slane %v2692, 1
        %v2695 = vshll.u32 %v2657, 16
        %v2697 = vrot.slane %v2695, 2
        %v2698 = vor.u32 %v2694, %v2697
        %v2699 = vsel %vm1362, %v2680, %v2698
        %v2738 = vunpack.c.l.b16 %v2621
        %v2739 = vunpack.c.h.b16 %v2621
        %v2740 = vunpack.c.l.b16 %v2622
        %v2741 = vunpack.c.h.b16 %v2622
        %v2742 = vunpack.c.l.b16 %v2623
        %v2743 = vunpack.c.h.b16 %v2623
        %v2744 = vunpack.c.l.b16 %v2624
        %v2745 = vunpack.c.h.b16 %v2624
        %v2746 = vunpack.c.l.b16 %v2625
        %v2747 = vunpack.c.h.b16 %v2625
        %v2748 = vunpack.c.l.b16 %v2626
        %v2749 = vunpack.c.h.b16 %v2626
        %v2750 = vunpack.c.l.b16 %v2627
        %v2751 = vunpack.c.h.b16 %v2627
        %v2752 = vunpack.c.l.b16 %v2628
        %v2753 = vunpack.c.h.b16 %v2628
        %v2754 = vunpack.c.l.b16 %v2629
        %v2755 = vunpack.c.h.b16 %v2629
        %v2756 = vunpack.c.l.b16 %v2630
        %v2757 = vunpack.c.h.b16 %v2630
        %v2758 = vunpack.c.l.b16 %v2631
        %v2759 = vunpack.c.h.b16 %v2631
        %v2760 = vunpack.c.l.b16 %v2632
        %v2761 = vunpack.c.h.b16 %v2632
        %v2762 = vunpack.c.l.b16 %v2633
        %v2763 = vunpack.c.h.b16 %v2633
        %v2764 = vunpack.c.l.b16 %v2634
        %v2765 = vunpack.c.h.b16 %v2634
        %v2766 = vunpack.c.l.b16 %v2635
        %v2767 = vunpack.c.h.b16 %v2635
        %v2768 = vunpack.c.l.b16 %v2636
        %v2769 = vunpack.c.h.b16 %v2636
        %v2770 = vunpack.c.l.b16 %v2637
        %v2771 = vunpack.c.h.b16 %v2637
        %v2772 = vunpack.c.l.b16 %v2638
        %v2773 = vunpack.c.h.b16 %v2638
        %v2774 = vunpack.c.l.b16 %v2639
        %v2775 = vunpack.c.h.b16 %v2639
        %v2776 = vunpack.c.l.b16 %v2640
        %v2777 = vunpack.c.h.b16 %v2640
        %v2778 = vunpack.c.l.b16 %v2641
        %v2779 = vunpack.c.h.b16 %v2641
        %v2780 = vunpack.c.l.b16 %v2642
        %v2781 = vunpack.c.h.b16 %v2642
        %v2782 = vunpack.c.l.b16 %v2643
        %v2783 = vunpack.c.h.b16 %v2643
        %v2784 = vunpack.c.l.b16 %v2644
        %v2785 = vunpack.c.h.b16 %v2644
        %v2786 = vunpack.c.l.b16 %v2645
        %v2787 = vunpack.c.h.b16 %v2645
        %v2788 = vunpack.c.l.b16 %v2646
        %v2789 = vunpack.c.h.b16 %v2646
        %v2790 = vunpack.c.l.b16 %v2647
        %v2791 = vunpack.c.h.b16 %v2647
        %v2792 = vunpack.c.l.b16 %v2648
        %v2793 = vunpack.c.h.b16 %v2648
        %v2794 = vunpack.c.l.b16 %v2649
        %v2795 = vunpack.c.h.b16 %v2649
        %v2796 = vunpack.c.l.b16 %v2650
        %v2797 = vunpack.c.h.b16 %v2650
        %v2798 = vunpack.c.l.b16 %v2651
        %v2799 = vunpack.c.h.b16 %v2651
        %v2800 = vunpack.c.l.b16 %v2652
        %v2801 = vunpack.c.h.b16 %v2652
        %v2802 = vpack.c.b16 %v2740, %v2738
        %v2803 = vpack.c.b16 %v2741, %v2739
        %v2804 = vpack.c.b16 %v2744, %v2742
        %v2805 = vpack.c.b16 %v2745, %v2743
        %v2806 = vpack.c.b16 %v2748, %v2746
        %v2807 = vpack.c.b16 %v2749, %v2747
        %v2808 = vpack.c.b16 %v2752, %v2750
        %v2809 = vpack.c.b16 %v2753, %v2751
        %v2810 = vpack.c.b16 %v2756, %v2754
        %v2811 = vpack.c.b16 %v2757, %v2755
        %v2812 = vpack.c.b16 %v2760, %v2758
        %v2813 = vpack.c.b16 %v2761, %v2759
        %v2814 = vpack.c.b16 %v2764, %v2762
        %v2815 = vpack.c.b16 %v2765, %v2763
        %v2816 = vpack.c.b16 %v2768, %v2766
        %v2817 = vpack.c.b16 %v2769, %v2767
        %v2818 = vpack.c.b16 %v2772, %v2770
        %v2819 = vpack.c.b16 %v2773, %v2771
        %v2820 = vpack.c.b16 %v2776, %v2774
        %v2821 = vpack.c.b16 %v2777, %v2775
        %v2822 = vpack.c.b16 %v2780, %v2778
        %v2823 = vpack.c.b16 %v2781, %v2779
        %v2824 = vpack.c.b16 %v2784, %v2782
        %v2825 = vpack.c.b16 %v2785, %v2783
        %v2826 = vpack.c.b16 %v2788, %v2786
        %v2827 = vpack.c.b16 %v2789, %v2787
        %v2828 = vpack.c.b16 %v2792, %v2790
        %v2829 = vpack.c.b16 %v2793, %v2791
        %v2830 = vpack.c.b16 %v2796, %v2794
        %v2831 = vpack.c.b16 %v2797, %v2795
        %v2832 = vpack.c.b16 %v2800, %v2798
        %v2833 = vpack.c.b16 %v2801, %v2799
        %2866 = vmatprep.subr.bf16.mxu0 %v2803
        %2867 = vmatpush1.bf16.msra.mxu0 %v2802
        %2868 = vmatprep.subr.bf16.mxu0 %v2805
        %2869 = vmatpush1.bf16.msra.mxu0 %v2804
        %2870 = vmatprep.subr.bf16.mxu0 %v2807
        %2871 = vmatpush1.bf16.msra.mxu0 %v2806
        %2872 = vmatprep.subr.bf16.mxu0 %v2809
        %2873 = vmatpush1.bf16.msra.mxu0 %v2808
        %2874 = vmatprep.subr.bf16.mxu0 %v2811
        %2875 = vmatpush1.bf16.msra.mxu0 %v2810
        %2876 = vmatprep.subr.bf16.mxu0 %v2813
        %2877 = vmatpush1.bf16.msra.mxu0 %v2812
        %2878 = vmatprep.subr.bf16.mxu0 %v2815
        %2879 = vmatpush1.bf16.msra.mxu0 %v2814
        %2880 = vmatprep.subr.bf16.mxu0 %v2817
        %2881 = vmatpush1.bf16.msra.mxu0 %v2816
        %2882 = vmatprep.subr.bf16.mxu0 %v2819
        %2883 = vmatpush1.bf16.msra.mxu0 %v2818
        %2884 = vmatprep.subr.bf16.mxu0 %v2821
        %2885 = vmatpush1.bf16.msra.mxu0 %v2820
        %2886 = vmatprep.subr.bf16.mxu0 %v2823
        %2887 = vmatpush1.bf16.msra.mxu0 %v2822
        %2888 = vmatprep.subr.bf16.mxu0 %v2825
        %2889 = vmatpush1.bf16.msra.mxu0 %v2824
        %2890 = vmatprep.subr.bf16.mxu0 %v2827
        %2891 = vmatpush1.bf16.msra.mxu0 %v2826
        %2892 = vmatprep.subr.bf16.mxu0 %v2829
        %2893 = vmatpush1.bf16.msra.mxu0 %v2828
        %2894 = vmatprep.subr.bf16.mxu0 %v2831
        %2895 = vmatpush1.bf16.msra.mxu0 %v2830
        %2896 = vmatprep.subr.bf16.mxu0 %v2833
        %2897 = vmatpush1.bf16.msra.mxu0 %v2832
        %2898 = vmatprep.mubr.bf16.mxu0 %v2681
        %2899 = vmatmul.mubr.bf16.gmra.mrb[0].mxu0 %v2669
        %v2900 = vpop.f32.mrb[0].mxu0
        %v2901 = vadd.f32 0.0, %v2900
        %v2902 = vpop.f32.mrb[0].mxu0
        %v2903 = vadd.f32 0.0, %v2902
        %v2904 = vpop.f32.mrb[0].mxu0
        %v2905 = vadd.f32 0.0, %v2904
        %v2906 = vpop.f32.mrb[0].mxu0
        %v2907 = vadd.f32 0.0, %v2906
        %2908 = vmatprep.mubr.bf16.mxu0 %v2699
        %2909 = vmatmul.mubr.bf16.gmra.mrb[0].mxu0 %v2690
        %v2910 = vpop.f32.mrb[0].mxu0
        %v2911 = vadd.f32 0.0, %v2910
        %v2912 = vpop.f32.mrb[0].mxu0
        %v2913 = vadd.f32 0.0, %v2912
        %v2914 = vpop.f32.mrb[0].mxu0
        %v2915 = vadd.f32 0.0, %v2914
        %v2916 = vpop.f32.mrb[0].mxu0
        %v2917 = vadd.f32 0.0, %v2916
        %2918 = vmatprep.mubr.bf16.mxu0 %v2698
        %2919 = vmatmul.mubr.bf16.gmra.mrb[0].mxu0 %v2689
        %v2920 = vpop.f32.mrb[0].mxu0
        %v2921 = vadd.f32 0.0, %v2920
        %v2922 = vpop.f32.mrb[0].mxu0
        %v2923 = vadd.f32 0.0, %v2922
        %v2924 = vpop.f32.mrb[0].mxu0
        %v2925 = vpop.f32.mrb[0].mxu0
        %2926 = vdwg.mxu0
        %v2927 = vadd.f32 %v2609, %v2901
        %v2928 = vadd.f32 %v2610, %v2903
        %v2929 = vadd.f32 %v2611, %v2905
        %v2930 = vadd.f32 %v2612, %v2907
        %v2931 = vadd.f32 %v2613, %v2911
        %v2932 = vadd.f32 %v2614, %v2913
        %v2933 = vadd.f32 %v2615, %v2915
        %v2934 = vadd.f32 %v2616, %v2917
        %v2935 = vadd.f32 %v2617, %v2921
        %v2936 = vadd.f32 %v2618, %v2923
        %v2937 = vmax.f32 %v2927, 0.0
        %v2938 = vmax.f32 %v2928, 0.0
        %v2939 = vmax.f32 %v2929, 0.0
        %v2940 = vmax.f32 %v2930, 0.0
        %v2941 = vmax.f32 %v2931, 0.0
        %v2942 = vmax.f32 %v2932, 0.0
        %v2943 = vmax.f32 %v2933, 0.0
        %v2944 = vmax.f32 %v2934, 0.0
        %v2945 = vmax.f32 %v2935, 0.0
        %v2946 = vmax.f32 %v2936, 0.0
        %v2947 = vpack.c.bf16 %v2939, %v2937
        %v2948 = vpack.c.bf16 %v2940, %v2938
        %v2951 = vunpack.c.l.b16 %v2947
        %v2952 = vunpack.c.l.b16 %v2948
        %v2953 = vunpack.c.h.b16 %v2947
        %v2954 = vunpack.c.h.b16 %v2948
        %v2955 = vpack.c.b16 %v2952, %v2951
        %v2956 = vpack.c.b16 %v2954, %v2953
        %v2957 = vrot.slane %v2955, 7
        %v2958 = vrot.slane %v2957, 4
        %v2959 = vrot.slane %v2956, 7
        %v2960 = vsel %vm365, %v2958, %v2959
        %v2961 = vrot.slane %v2959, 4
        %2965 = vst [vmem:[#allocation2] sm:$0xee] %v2957
        %2966 = vst [vmem:[#allocation2 + $0x8] sm:$0xff] %v2960
        %2967 = vst [vmem:[#allocation2 + $0x10] sm:$0x11] %v2961
        %v2968 = vpack.c.bf16 %v2943, %v2941
        %v2969 = vpack.c.bf16 %v2944, %v2942
        %v2970 = vpack.c.bf16 %v2945, %v2945
        %v2971 = vpack.c.bf16 %v2946, %v2946
        %v2976 = vunpack.c.l.b16 %v2968
        %v2977 = vunpack.c.l.b16 %v2969
        %v2978 = vunpack.c.h.b16 %v2968
        %v2979 = vunpack.c.h.b16 %v2969
        %v2980 = vunpack.c.l.b16 %v2970
        %v2981 = vunpack.c.l.b16 %v2971
        %v2982 = vpack.c.b16 %v2977, %v2976
        %v2983 = vpack.c.b16 %v2979, %v2978
        %v2984 = vpack.c.b16 %v2981, %v2980
        %v2985 = vrot.slane %v2982, 7
        %v2986 = vrot.slane %v2985, 4
        %v2987 = vrot.slane %v2983, 7
        %v2988 = vsel %vm365, %v2986, %v2987
        %v2989 = vrot.slane %v2987, 4
        %v2990 = vrot.slane %v2984, 7
        %v2991 = vsel %vm365, %v2989, %v2990
        %2995 = vst [vmem:[#allocation2 + $0x10] sm:$0x88] %v2985
        %2996 = vst [vmem:[#allocation2 + $0x18] sm:$0xff] %v2988
        %2997 = vst [vmem:[#allocation2 + $0x20] sm:$0x77] %v2991
        %v2998 = vld [vmem:[%s6] sm:$0x1]
        %v3000 = vlaneseq
        %v3001 = vshrl.u32 %v3000, 7
        %v3002 = vsub.s32 0, %v3001
        %v3003 = vrot.slane %v2998, %v3002
        %v3005 = vld [vmem:[#allocation2] sm:$0xff]
        %v3006 = vld [vmem:[#allocation2 + $0x8] sm:$0xff]
        %v3007 = vld [vmem:[#allocation2 + $0x10] sm:$0xff]
        %v3008 = vld [vmem:[#allocation2 + $0x18] sm:$0xff]
        %v3009 = vld [vmem:[#allocation2 + $0x20] sm:$0x77]
        %v3010 = vld [vmem:[#allocation9] sm:$0xf]
        %v3011 = vld [vmem:[#allocation9 + $0x4] sm:$0xf]
        %v3012 = vld [vmem:[#allocation9 + $0x8] sm:$0xf]
        %v3013 = vld [vmem:[#allocation9 + $0xc] sm:$0xf]
        %v3014 = vld [vmem:[#allocation9 + $0x10] sm:$0xf]
        %v3015 = vld [vmem:[#allocation9 + $0x14] sm:$0xf]
        %v3016 = vld [vmem:[#allocation9 + $0x18] sm:$0xf]
        %v3017 = vld [vmem:[#allocation9 + $0x1c] sm:$0xf]
        %v3018 = vld [vmem:[#allocation9 + $0x20] sm:$0xf]
        %v3019 = vld [vmem:[#allocation9 + $0x24] sm:$0xf]
        %v3020 = vld [vmem:[#allocation9 + $0x28] sm:$0xf]
        %v3021 = vld [vmem:[#allocation9 + $0x2c] sm:$0xf]
        %v3022 = vld [vmem:[#allocation9 + $0x30] sm:$0xf]
        %v3023 = vld [vmem:[#allocation9 + $0x34] sm:$0xf]
        %v3024 = vld [vmem:[#allocation9 + $0x38] sm:$0xf]
        %v3025 = vld [vmem:[#allocation9 + $0x3c] sm:$0xf]
        %v3026 = vld [vmem:[#allocation9 + $0x40] sm:$0xf]
        %v3027 = vld [vmem:[#allocation9 + $0x44] sm:$0xf]
        %v3028 = vld [vmem:[#allocation9 + $0x48] sm:$0xf]
        %v3029 = vld [vmem:[#allocation9 + $0x4c] sm:$0xf]
        %v3030 = vld [vmem:[#allocation9 + $0x50] sm:$0xf]
        %v3031 = vld [vmem:[#allocation9 + $0x54] sm:$0xf]
        %v3032 = vld [vmem:[#allocation9 + $0x58] sm:$0xf]
        %v3033 = vld [vmem:[#allocation9 + $0x5c] sm:$0xf]
        %v3034 = vld [vmem:[#allocation9 + $0x60] sm:$0xf]
        %v3035 = vld [vmem:[#allocation9 + $0x64] sm:$0xf]
        %v3036 = vld [vmem:[#allocation9 + $0x68] sm:$0xf]
        %v3037 = vld [vmem:[#allocation9 + $0x6c] sm:$0xf]
        %v3038 = vld [vmem:[#allocation9 + $0x70] sm:$0xf]
        %v3039 = vld [vmem:[#allocation9 + $0x74] sm:$0xf]
        %v3040 = vld [vmem:[#allocation9 + $0x78] sm:$0xf]
        %v3041 = vld [vmem:[#allocation9 + $0x7c] sm:$0xf]
        %v3047 = vunpack.c.l.b16 %v3005
        %v3048 = vunpack.c.h.b16 %v3005
        %v3049 = vunpack.c.l.b16 %v3006
        %v3050 = vunpack.c.h.b16 %v3006
        %v3051 = vunpack.c.l.b16 %v3007
        %v3052 = vunpack.c.h.b16 %v3007
        %v3053 = vunpack.c.l.b16 %v3008
        %v3054 = vunpack.c.h.b16 %v3008
        %v3055 = vunpack.c.l.b16 %v3009
        %v3056 = vunpack.c.h.b16 %v3009
        %v3057 = vpack.c.b16 %v3049, %v3047
        %v3058 = vpack.c.b16 %v3050, %v3048
        %v3059 = vpack.c.b16 %v3053, %v3051
        %v3060 = vpack.c.b16 %v3054, %v3052
        %v3061 = vpack.c.b16 %v3055, %v3055
        %v3062 = vpack.c.b16 %v3056, %v3056
        %v3064 = vshrl.u32 %v3057, 16
        %v3066 = vshll.u32 %v3057, 16
        %v3068 = vrot.slane %v3066, 1
        %v3069 = vor.u32 %v3064, %v3068
        %v3071 = vshll.u32 %v3059, 16
        %v3073 = vrot.slane %v3071, 1
        %v3074 = vsel %vm752, %v3069, %v3073
        %v3076 = vshrl.u32 %v3058, 16
        %v3078 = vshll.u32 %v3058, 16
        %v3080 = vrot.slane %v3078, 1
        %v3081 = vor.u32 %v3076, %v3080
        %v3083 = vshll.u32 %v3060, 16
        %v3085 = vrot.slane %v3083, 1
        %v3086 = vsel %vm752, %v3081, %v3085
        %v3087 = vshrl.u32 %v3059, 16
        %v3089 = vor.u32 %v3087, %v3073
        %v3091 = vshll.u32 %v3061, 16
        %v3093 = vrot.slane %v3091, 1
        %v3094 = vsel %vm752, %v3089, %v3093
        %v3095 = vshrl.u32 %v3060, 16
        %v3097 = vor.u32 %v3095, %v3085
        %v3099 = vshll.u32 %v3062, 16
        %v3101 = vrot.slane %v3099, 1
        %v3102 = vsel %vm752, %v3097, %v3101
        %v3103 = vshrl.u32 %v3061, 16
        %v3105 = vor.u32 %v3103, %v3093
        %v3106 = vshrl.u32 %v3062, 16
        %v3108 = vor.u32 %v3106, %v3101
        %v3147 = vunpack.c.l.b16 %v3010
        %v3148 = vunpack.c.l.b16 %v3011
        %v3149 = vunpack.c.l.b16 %v3012
        %v3150 = vunpack.c.l.b16 %v3013
        %v3151 = vunpack.c.l.b16 %v3014
        %v3152 = vunpack.c.l.b16 %v3015
        %v3153 = vunpack.c.l.b16 %v3016
        %v3154 = vunpack.c.l.b16 %v3017
        %v3155 = vunpack.c.l.b16 %v3018
        %v3156 = vunpack.c.l.b16 %v3019
        %v3157 = vunpack.c.l.b16 %v3020
        %v3158 = vunpack.c.l.b16 %v3021
        %v3159 = vunpack.c.l.b16 %v3022
        %v3160 = vunpack.c.l.b16 %v3023
        %v3161 = vunpack.c.l.b16 %v3024
        %v3162 = vunpack.c.l.b16 %v3025
        %v3163 = vunpack.c.l.b16 %v3026
        %v3164 = vunpack.c.l.b16 %v3027
        %v3165 = vunpack.c.l.b16 %v3028
        %v3166 = vunpack.c.l.b16 %v3029
        %v3167 = vunpack.c.l.b16 %v3030
        %v3168 = vunpack.c.l.b16 %v3031
        %v3169 = vunpack.c.l.b16 %v3032
        %v3170 = vunpack.c.l.b16 %v3033
        %v3171 = vunpack.c.l.b16 %v3034
        %v3172 = vunpack.c.l.b16 %v3035
        %v3173 = vunpack.c.l.b16 %v3036
        %v3174 = vunpack.c.l.b16 %v3037
        %v3175 = vunpack.c.l.b16 %v3038
        %v3176 = vunpack.c.l.b16 %v3039
        %v3177 = vunpack.c.l.b16 %v3040
        %v3178 = vunpack.c.l.b16 %v3041
        %v3179 = vpack.c.b16 %v3148, %v3147
        %v3180 = vpack.c.b16 %v3150, %v3149
        %v3181 = vpack.c.b16 %v3152, %v3151
        %v3182 = vpack.c.b16 %v3154, %v3153
        %v3183 = vpack.c.b16 %v3156, %v3155
        %v3184 = vpack.c.b16 %v3158, %v3157
        %v3185 = vpack.c.b16 %v3160, %v3159
        %v3186 = vpack.c.b16 %v3162, %v3161
        %v3187 = vpack.c.b16 %v3164, %v3163
        %v3188 = vpack.c.b16 %v3166, %v3165
        %v3189 = vpack.c.b16 %v3168, %v3167
        %v3190 = vpack.c.b16 %v3170, %v3169
        %v3191 = vpack.c.b16 %v3172, %v3171
        %v3192 = vpack.c.b16 %v3174, %v3173
        %v3193 = vpack.c.b16 %v3176, %v3175
        %v3194 = vpack.c.b16 %v3178, %v3177
        %3211 = vmatprep.subr.bf16.mxu0 0
        %3212 = vmatpush1.bf16.msra.mxu0 %v3179
        %3213 = vmatprep.subr.bf16.mxu0 0
        %3214 = vmatpush1.bf16.msra.mxu0 %v3180
        %3215 = vmatprep.subr.bf16.mxu0 0
        %3216 = vmatpush1.bf16.msra.mxu0 %v3181
        %3217 = vmatprep.subr.bf16.mxu0 0
        %3218 = vmatpush1.bf16.msra.mxu0 %v3182
        %3219 = vmatprep.subr.bf16.mxu0 0
        %3220 = vmatpush1.bf16.msra.mxu0 %v3183
        %3221 = vmatprep.subr.bf16.mxu0 0
        %3222 = vmatpush1.bf16.msra.mxu0 %v3184
        %3223 = vmatprep.subr.bf16.mxu0 0
        %3224 = vmatpush1.bf16.msra.mxu0 %v3185
        %3225 = vmatprep.subr.bf16.mxu0 0
        %3226 = vmatpush1.bf16.msra.mxu0 %v3186
        %3227 = vmatprep.subr.bf16.mxu0 0
        %3228 = vmatpush1.bf16.msra.mxu0 %v3187
        %3229 = vmatprep.subr.bf16.mxu0 0
        %3230 = vmatpush1.bf16.msra.mxu0 %v3188
        %3231 = vmatprep.subr.bf16.mxu0 0
        %3232 = vmatpush1.bf16.msra.mxu0 %v3189
        %3233 = vmatprep.subr.bf16.mxu0 0
        %3234 = vmatpush1.bf16.msra.mxu0 %v3190
        %3235 = vmatprep.subr.bf16.mxu0 0
        %3236 = vmatpush1.bf16.msra.mxu0 %v3191
        %3237 = vmatprep.subr.bf16.mxu0 0
        %3238 = vmatpush1.bf16.msra.mxu0 %v3192
        %3239 = vmatprep.subr.bf16.mxu0 0
        %3240 = vmatpush1.bf16.msra.mxu0 %v3193
        %3241 = vmatprep.subr.bf16.mxu0 0
        %3242 = vmatpush1.bf16.msra.mxu0 %v3194
        %3243 = vmatprep.mubr.bf16.mxu0 %v3086
        %3244 = vmatmul.mubr.bf16.gmra.mrb[0].mxu0 %v3074
        %v3245 = vpop.f32.mrb[0].mxu0
        %v3246 = vadd.f32 0.0, %v3245
        %v3247 = vpop.f32.mrb[0].mxu0
        %v3248 = vpop.f32.mrb[0].mxu0
        %v3249 = vadd.f32 0.0, %v3248
        %v3250 = vpop.f32.mrb[0].mxu0
        %3251 = vmatprep.mubr.bf16.mxu0 %v3102
        %3252 = vmatmul.mubr.bf16.gmra.mrb[0].mxu0 %v3094
        %v3253 = vpop.f32.mrb[0].mxu0
        %v3254 = vadd.f32 0.0, %v3253
        %v3255 = vpop.f32.mrb[0].mxu0
        %v3256 = vpop.f32.mrb[0].mxu0
        %v3257 = vadd.f32 0.0, %v3256
        %v3258 = vpop.f32.mrb[0].mxu0
        %3259 = vmatprep.mubr.bf16.mxu0 %v3108
        %3260 = vmatmul.mubr.bf16.gmra.mrb[0].mxu0 %v3105
        %v3261 = vpop.f32.mrb[0].mxu0
        %v3262 = vadd.f32 0.0, %v3261
        %v3263 = vpop.f32.mrb[0].mxu0
        %v3264 = vpop.f32.mrb[0].mxu0
        %v3265 = vpop.f32.mrb[0].mxu0
        %3266 = vdwg.mxu0
        %v3267 = vadd.f32 %v3003, %v3246
        %v3268 = vadd.f32 %v3003, %v3249
        %v3269 = vadd.f32 %v3003, %v3254
        %v3270 = vadd.f32 %v3003, %v3257
        %v3271 = vadd.f32 %v3003, %v3262
        %v3272 = vld [vmem:[#allocation2] sm:$0xee]
        %s3273 = scalar_lea.vmem [#allocation9], 128
        %v3274 = vld [vmem:[%s3273] sm:$0xf]
        %v3275 = vld [vmem:[%s3273 + $0x4] sm:$0xf]
        %v3276 = vld [vmem:[%s3273 + $0x8] sm:$0xf]
        %v3277 = vld [vmem:[%s3273 + $0xc] sm:$0xf]
        %v3278 = vld [vmem:[%s3273 + $0x10] sm:$0xf]
        %v3279 = vld [vmem:[%s3273 + $0x14] sm:$0xf]
        %v3280 = vld [vmem:[%s3273 + $0x18] sm:$0xf]
        %v3281 = vld [vmem:[%s3273 + $0x1c] sm:$0xf]
        %v3282 = vld [vmem:[%s3273 + $0x20] sm:$0xf]
        %v3283 = vld [vmem:[%s3273 + $0x24] sm:$0xf]
        %v3284 = vld [vmem:[%s3273 + $0x28] sm:$0xf]
        %v3285 = vld [vmem:[%s3273 + $0x2c] sm:$0xf]
        %v3286 = vld [vmem:[%s3273 + $0x30] sm:$0xf]
        %v3287 = vld [vmem:[%s3273 + $0x34] sm:$0xf]
        %v3288 = vld [vmem:[%s3273 + $0x38] sm:$0xf]
        %v3289 = vld [vmem:[%s3273 + $0x3c] sm:$0xf]
        %v3290 = vld [vmem:[%s3273 + $0x40] sm:$0xf]
        %v3291 = vld [vmem:[%s3273 + $0x44] sm:$0xf]
        %v3292 = vld [vmem:[%s3273 + $0x48] sm:$0xf]
        %v3293 = vld [vmem:[%s3273 + $0x4c] sm:$0xf]
        %v3294 = vld [vmem:[%s3273 + $0x50] sm:$0xf]
        %v3295 = vld [vmem:[%s3273 + $0x54] sm:$0xf]
        %v3296 = vld [vmem:[%s3273 + $0x58] sm:$0xf]
        %v3297 = vld [vmem:[%s3273 + $0x5c] sm:$0xf]
        %v3298 = vld [vmem:[%s3273 + $0x60] sm:$0xf]
        %v3299 = vld [vmem:[%s3273 + $0x64] sm:$0xf]
        %v3300 = vld [vmem:[%s3273 + $0x68] sm:$0xf]
        %v3301 = vld [vmem:[%s3273 + $0x6c] sm:$0xf]
        %v3302 = vld [vmem:[%s3273 + $0x70] sm:$0xf]
        %v3303 = vld [vmem:[%s3273 + $0x74] sm:$0xf]
        %v3304 = vld [vmem:[%s3273 + $0x78] sm:$0xf]
        %v3305 = vld [vmem:[%s3273 + $0x7c] sm:$0xf]
        %v3307 = vunpack.c.l.b16 %v3272
        %v3308 = vunpack.c.h.b16 %v3272
        %v3309 = vpack.c.b16 %v3049, %v3307
        %v3310 = vpack.c.b16 %v3050, %v3308
        %v3311 = vrot.slane %v3309, 1
        %v3312 = vrot.slane %v3059, 1
        %v3313 = vsel %vm1075, %v3311, %v3312
        %v3314 = vrot.slane %v3310, 1
        %v3315 = vrot.slane %v3060, 1
        %v3316 = vsel %vm1075, %v3314, %v3315
        %v3317 = vrot.slane %v3061, 1
        %v3318 = vsel %vm1075, %v3312, %v3317
        %v3319 = vrot.slane %v3062, 1
        %v3320 = vsel %vm1075, %v3315, %v3319
        %v3359 = vunpack.c.l.b16 %v3274
        %v3360 = vunpack.c.l.b16 %v3275
        %v3361 = vunpack.c.l.b16 %v3276
        %v3362 = vunpack.c.l.b16 %v3277
        %v3363 = vunpack.c.l.b16 %v3278
        %v3364 = vunpack.c.l.b16 %v3279
        %v3365 = vunpack.c.l.b16 %v3280
        %v3366 = vunpack.c.l.b16 %v3281
        %v3367 = vunpack.c.l.b16 %v3282
        %v3368 = vunpack.c.l.b16 %v3283
        %v3369 = vunpack.c.l.b16 %v3284
        %v3370 = vunpack.c.l.b16 %v3285
        %v3371 = vunpack.c.l.b16 %v3286
        %v3372 = vunpack.c.l.b16 %v3287
        %v3373 = vunpack.c.l.b16 %v3288
        %v3374 = vunpack.c.l.b16 %v3289
        %v3375 = vunpack.c.l.b16 %v3290
        %v3376 = vunpack.c.l.b16 %v3291
        %v3377 = vunpack.c.l.b16 %v3292
        %v3378 = vunpack.c.l.b16 %v3293
        %v3379 = vunpack.c.l.b16 %v3294
        %v3380 = vunpack.c.l.b16 %v3295
        %v3381 = vunpack.c.l.b16 %v3296
        %v3382 = vunpack.c.l.b16 %v3297
        %v3383 = vunpack.c.l.b16 %v3298
        %v3384 = vunpack.c.l.b16 %v3299
        %v3385 = vunpack.c.l.b16 %v3300
        %v3386 = vunpack.c.l.b16 %v3301
        %v3387 = vunpack.c.l.b16 %v3302
        %v3388 = vunpack.c.l.b16 %v3303
        %v3389 = vunpack.c.l.b16 %v3304
        %v3390 = vunpack.c.l.b16 %v3305
        %v3391 = vpack.c.b16 %v3360, %v3359
        %v3392 = vpack.c.b16 %v3362, %v3361
        %v3393 = vpack.c.b16 %v3364, %v3363
        %v3394 = vpack.c.b16 %v3366, %v3365
        %v3395 = vpack.c.b16 %v3368, %v3367
        %v3396 = vpack.c.b16 %v3370, %v3369
        %v3397 = vpack.c.b16 %v3372, %v3371
        %v3398 = vpack.c.b16 %v3374, %v3373
        %v3399 = vpack.c.b16 %v3376, %v3375
        %v3400 = vpack.c.b16 %v3378, %v3377
        %v3401 = vpack.c.b16 %v3380, %v3379
        %v3402 = vpack.c.b16 %v3382, %v3381
        %v3403 = vpack.c.b16 %v3384, %v3383
        %v3404 = vpack.c.b16 %v3386, %v3385
        %v3405 = vpack.c.b16 %v3388, %v3387
        %v3406 = vpack.c.b16 %v3390, %v3389
        %3423 = vmatprep.subr.bf16.mxu0 0
        %3424 = vmatpush1.bf16.msra.mxu0 %v3391
        %3425 = vmatprep.subr.bf16.mxu0 0
        %3426 = vmatpush1.bf16.msra.mxu0 %v3392
        %3427 = vmatprep.subr.bf16.mxu0 0
        %3428 = vmatpush1.bf16.msra.mxu0 %v3393
        %3429 = vmatprep.subr.bf16.mxu0 0
        %3430 = vmatpush1.bf16.msra.mxu0 %v3394
        %3431 = vmatprep.subr.bf16.mxu0 0
        %3432 = vmatpush1.bf16.msra.mxu0 %v3395
        %3433 = vmatprep.subr.bf16.mxu0 0
        %3434 = vmatpush1.bf16.msra.mxu0 %v3396
        %3435 = vmatprep.subr.bf16.mxu0 0
        %3436 = vmatpush1.bf16.msra.mxu0 %v3397
        %3437 = vmatprep.subr.bf16.mxu0 0
        %3438 = vmatpush1.bf16.msra.mxu0 %v3398
        %3439 = vmatprep.subr.bf16.mxu0 0
        %3440 = vmatpush1.bf16.msra.mxu0 %v3399
        %3441 = vmatprep.subr.bf16.mxu0 0
        %3442 = vmatpush1.bf16.msra.mxu0 %v3400
        %3443 = vmatprep.subr.bf16.mxu0 0
        %3444 = vmatpush1.bf16.msra.mxu0 %v3401
        %3445 = vmatprep.subr.bf16.mxu0 0
        %3446 = vmatpush1.bf16.msra.mxu0 %v3402
        %3447 = vmatprep.subr.bf16.mxu0 0
        %3448 = vmatpush1.bf16.msra.mxu0 %v3403
        %3449 = vmatprep.subr.bf16.mxu0 0
        %3450 = vmatpush1.bf16.msra.mxu0 %v3404
        %3451 = vmatprep.subr.bf16.mxu0 0
        %3452 = vmatpush1.bf16.msra.mxu0 %v3405
        %3453 = vmatprep.subr.bf16.mxu0 0
        %3454 = vmatpush1.bf16.msra.mxu0 %v3406
        %3455 = vmatprep.mubr.bf16.mxu0 %v3316
        %3456 = vmatmul.mubr.bf16.gmra.mrb[0].mxu0 %v3313
        %v3457 = vpop.f32.mrb[0].mxu0
        %v3458 = vadd.f32 0.0, %v3457
        %v3459 = vpop.f32.mrb[0].mxu0
        %v3460 = vpop.f32.mrb[0].mxu0
        %v3461 = vadd.f32 0.0, %v3460
        %v3462 = vpop.f32.mrb[0].mxu0
        %3463 = vmatprep.mubr.bf16.mxu0 %v3320
        %3464 = vmatmul.mubr.bf16.gmra.mrb[0].mxu0 %v3318
        %v3465 = vpop.f32.mrb[0].mxu0
        %v3466 = vadd.f32 0.0, %v3465
        %v3467 = vpop.f32.mrb[0].mxu0
        %v3468 = vpop.f32.mrb[0].mxu0
        %v3469 = vadd.f32 0.0, %v3468
        %v3470 = vpop.f32.mrb[0].mxu0
        %3471 = vmatprep.mubr.bf16.mxu0 %v3319
        %3472 = vmatmul.mubr.bf16.gmra.mrb[0].mxu0 %v3317
        %v3473 = vpop.f32.mrb[0].mxu0
        %v3474 = vadd.f32 0.0, %v3473
        %v3475 = vpop.f32.mrb[0].mxu0
        %v3476 = vpop.f32.mrb[0].mxu0
        %v3477 = vpop.f32.mrb[0].mxu0
        %3478 = vdwg.mxu0
        %v3479 = vadd.f32 %v3267, %v3458
        %v3480 = vadd.f32 %v3268, %v3461
        %v3481 = vadd.f32 %v3269, %v3466
        %v3482 = vadd.f32 %v3270, %v3469
        %v3483 = vadd.f32 %v3271, %v3474
        %v3484 = vld [vmem:[#allocation2 + $0x20] sm:$0xff]
        %s3485 = scalar_lea.vmem [#allocation9], 256
        %v3486 = vld [vmem:[%s3485] sm:$0xf]
        %v3487 = vld [vmem:[%s3485 + $0x4] sm:$0xf]
        %v3488 = vld [vmem:[%s3485 + $0x8] sm:$0xf]
        %v3489 = vld [vmem:[%s3485 + $0xc] sm:$0xf]
        %v3490 = vld [vmem:[%s3485 + $0x10] sm:$0xf]
        %v3491 = vld [vmem:[%s3485 + $0x14] sm:$0xf]
        %v3492 = vld [vmem:[%s3485 + $0x18] sm:$0xf]
        %v3493 = vld [vmem:[%s3485 + $0x1c] sm:$0xf]
        %v3494 = vld [vmem:[%s3485 + $0x20] sm:$0xf]
        %v3495 = vld [vmem:[%s3485 + $0x24] sm:$0xf]
        %v3496 = vld [vmem:[%s3485 + $0x28] sm:$0xf]
        %v3497 = vld [vmem:[%s3485 + $0x2c] sm:$0xf]
        %v3498 = vld [vmem:[%s3485 + $0x30] sm:$0xf]
        %v3499 = vld [vmem:[%s3485 + $0x34] sm:$0xf]
        %v3500 = vld [vmem:[%s3485 + $0x38] sm:$0xf]
        %v3501 = vld [vmem:[%s3485 + $0x3c] sm:$0xf]
        %v3502 = vld [vmem:[%s3485 + $0x40] sm:$0xf]
        %v3503 = vld [vmem:[%s3485 + $0x44] sm:$0xf]
        %v3504 = vld [vmem:[%s3485 + $0x48] sm:$0xf]
        %v3505 = vld [vmem:[%s3485 + $0x4c] sm:$0xf]
        %v3506 = vld [vmem:[%s3485 + $0x50] sm:$0xf]
        %v3507 = vld [vmem:[%s3485 + $0x54] sm:$0xf]
        %v3508 = vld [vmem:[%s3485 + $0x58] sm:$0xf]
        %v3509 = vld [vmem:[%s3485 + $0x5c] sm:$0xf]
        %v3510 = vld [vmem:[%s3485 + $0x60] sm:$0xf]
        %v3511 = vld [vmem:[%s3485 + $0x64] sm:$0xf]
        %v3512 = vld [vmem:[%s3485 + $0x68] sm:$0xf]
        %v3513 = vld [vmem:[%s3485 + $0x6c] sm:$0xf]
        %v3514 = vld [vmem:[%s3485 + $0x70] sm:$0xf]
        %v3515 = vld [vmem:[%s3485 + $0x74] sm:$0xf]
        %v3516 = vld [vmem:[%s3485 + $0x78] sm:$0xf]
        %v3517 = vld [vmem:[%s3485 + $0x7c] sm:$0xf]
        %v3519 = vunpack.c.l.b16 %v3484
        %v3520 = vunpack.c.h.b16 %v3484
        %v3521 = vpack.c.b16 %v3519, %v3519
        %v3522 = vpack.c.b16 %v3520, %v3520
        %v3524 = vshrl.u32 %v3309, 16
        %v3526 = vrot.slane %v3524, 1
        %v3527 = vshll.u32 %v3309, 16
        %v3529 = vrot.slane %v3527, 2
        %v3530 = vor.u32 %v3526, %v3529
        %v3531 = vrot.slane %v3087, 1
        %v3532 = vrot.slane %v3071, 2
        %v3533 = vor.u32 %v3531, %v3532
        %v3534 = vsel %vm1362, %v3530, %v3533
        %v3536 = vshrl.u32 %v3310, 16
        %v3538 = vrot.slane %v3536, 1
        %v3539 = vshll.u32 %v3310, 16
        %v3541 = vrot.slane %v3539, 2
        %v3542 = vor.u32 %v3538, %v3541
        %v3543 = vrot.slane %v3095, 1
        %v3544 = vrot.slane %v3083, 2
        %v3545 = vor.u32 %v3543, %v3544
        %v3546 = vsel %vm1362, %v3542, %v3545
        %v3548 = vshrl.u32 %v3521, 16
        %v3550 = vrot.slane %v3548, 1
        %v3551 = vshll.u32 %v3521, 16
        %v3553 = vrot.slane %v3551, 2
        %v3554 = vor.u32 %v3550, %v3553
        %v3555 = vsel %vm1362, %v3533, %v3554
        %v3557 = vshrl.u32 %v3522, 16
        %v3559 = vrot.slane %v3557, 1
        %v3560 = vshll.u32 %v3522, 16
        %v3562 = vrot.slane %v3560, 2
        %v3563 = vor.u32 %v3559, %v3562
        %v3564 = vsel %vm1362, %v3545, %v3563
        %v3603 = vunpack.c.l.b16 %v3486
        %v3604 = vunpack.c.l.b16 %v3487
        %v3605 = vunpack.c.l.b16 %v3488
        %v3606 = vunpack.c.l.b16 %v3489
        %v3607 = vunpack.c.l.b16 %v3490
        %v3608 = vunpack.c.l.b16 %v3491
        %v3609 = vunpack.c.l.b16 %v3492
        %v3610 = vunpack.c.l.b16 %v3493
        %v3611 = vunpack.c.l.b16 %v3494
        %v3612 = vunpack.c.l.b16 %v3495
        %v3613 = vunpack.c.l.b16 %v3496
        %v3614 = vunpack.c.l.b16 %v3497
        %v3615 = vunpack.c.l.b16 %v3498
        %v3616 = vunpack.c.l.b16 %v3499
        %v3617 = vunpack.c.l.b16 %v3500
        %v3618 = vunpack.c.l.b16 %v3501
        %v3619 = vunpack.c.l.b16 %v3502
        %v3620 = vunpack.c.l.b16 %v3503
        %v3621 = vunpack.c.l.b16 %v3504
        %v3622 = vunpack.c.l.b16 %v3505
        %v3623 = vunpack.c.l.b16 %v3506
        %v3624 = vunpack.c.l.b16 %v3507
        %v3625 = vunpack.c.l.b16 %v3508
        %v3626 = vunpack.c.l.b16 %v3509
        %v3627 = vunpack.c.l.b16 %v3510
        %v3628 = vunpack.c.l.b16 %v3511
        %v3629 = vunpack.c.l.b16 %v3512
        %v3630 = vunpack.c.l.b16 %v3513
        %v3631 = vunpack.c.l.b16 %v3514
        %v3632 = vunpack.c.l.b16 %v3515
        %v3633 = vunpack.c.l.b16 %v3516
        %v3634 = vunpack.c.l.b16 %v3517
        %v3635 = vpack.c.b16 %v3604, %v3603
        %v3636 = vpack.c.b16 %v3606, %v3605
        %v3637 = vpack.c.b16 %v3608, %v3607
        %v3638 = vpack.c.b16 %v3610, %v3609
        %v3639 = vpack.c.b16 %v3612, %v3611
        %v3640 = vpack.c.b16 %v3614, %v3613
        %v3641 = vpack.c.b16 %v3616, %v3615
        %v3642 = vpack.c.b16 %v3618, %v3617
        %v3643 = vpack.c.b16 %v3620, %v3619
        %v3644 = vpack.c.b16 %v3622, %v3621
        %v3645 = vpack.c.b16 %v3624, %v3623
        %v3646 = vpack.c.b16 %v3626, %v3625
        %v3647 = vpack.c.b16 %v3628, %v3627
        %v3648 = vpack.c.b16 %v3630, %v3629
        %v3649 = vpack.c.b16 %v3632, %v3631
        %v3650 = vpack.c.b16 %v3634, %v3633
        %3667 = vmatprep.subr.bf16.mxu0 0
        %3668 = vmatpush1.bf16.msra.mxu0 %v3635
        %3669 = vmatprep.subr.bf16.mxu0 0
        %3670 = vmatpush1.bf16.msra.mxu0 %v3636
        %3671 = vmatprep.subr.bf16.mxu0 0
        %3672 = vmatpush1.bf16.msra.mxu0 %v3637
        %3673 = vmatprep.subr.bf16.mxu0 0
        %3674 = vmatpush1.bf16.msra.mxu0 %v3638
        %3675 = vmatprep.subr.bf16.mxu0 0
        %3676 = vmatpush1.bf16.msra.mxu0 %v3639
        %3677 = vmatprep.subr.bf16.mxu0 0
        %3678 = vmatpush1.bf16.msra.mxu0 %v3640
        %3679 = vmatprep.subr.bf16.mxu0 0
        %3680 = vmatpush1.bf16.msra.mxu0 %v3641
        %3681 = vmatprep.subr.bf16.mxu0 0
        %3682 = vmatpush1.bf16.msra.mxu0 %v3642
        %3683 = vmatprep.subr.bf16.mxu0 0
        %3684 = vmatpush1.bf16.msra.mxu0 %v3643
        %3685 = vmatprep.subr.bf16.mxu0 0
        %3686 = vmatpush1.bf16.msra.mxu0 %v3644
        %3687 = vmatprep.subr.bf16.mxu0 0
        %3688 = vmatpush1.bf16.msra.mxu0 %v3645
        %3689 = vmatprep.subr.bf16.mxu0 0
        %3690 = vmatpush1.bf16.msra.mxu0 %v3646
        %3691 = vmatprep.subr.bf16.mxu0 0
        %3692 = vmatpush1.bf16.msra.mxu0 %v3647
        %3693 = vmatprep.subr.bf16.mxu0 0
        %3694 = vmatpush1.bf16.msra.mxu0 %v3648
        %3695 = vmatprep.subr.bf16.mxu0 0
        %3696 = vmatpush1.bf16.msra.mxu0 %v3649
        %3697 = vmatprep.subr.bf16.mxu0 0
        %3698 = vmatpush1.bf16.msra.mxu0 %v3650
        %3699 = vmatprep.mubr.bf16.mxu0 %v3546
        %3700 = vmatmul.mubr.bf16.gmra.mrb[0].mxu0 %v3534
        %v3701 = vpop.f32.mrb[0].mxu0
        %v3702 = vadd.f32 0.0, %v3701
        %v3703 = vpop.f32.mrb[0].mxu0
        %v3704 = vpop.f32.mrb[0].mxu0
        %v3705 = vadd.f32 0.0, %v3704
        %v3706 = vpop.f32.mrb[0].mxu0
        %3707 = vmatprep.mubr.bf16.mxu0 %v3564
        %3708 = vmatmul.mubr.bf16.gmra.mrb[0].mxu0 %v3555
        %v3709 = vpop.f32.mrb[0].mxu0
        %v3710 = vadd.f32 0.0, %v3709
        %v3711 = vpop.f32.mrb[0].mxu0
        %v3712 = vpop.f32.mrb[0].mxu0
        %v3713 = vadd.f32 0.0, %v3712
        %v3714 = vpop.f32.mrb[0].mxu0
        %3715 = vmatprep.mubr.bf16.mxu0 %v3563
        %3716 = vmatmul.mubr.bf16.gmra.mrb[0].mxu0 %v3554
        %v3717 = vpop.f32.mrb[0].mxu0
        %v3718 = vadd.f32 0.0, %v3717
        %v3719 = vpop.f32.mrb[0].mxu0
        %v3720 = vpop.f32.mrb[0].mxu0
        %v3721 = vpop.f32.mrb[0].mxu0
        %3722 = vdwg.mxu0
        %v3723 = vadd.f32 %v3479, %v3702
        %v3724 = vadd.f32 %v3480, %v3705
        %v3725 = vadd.f32 %v3481, %v3710
        %v3726 = vadd.f32 %v3482, %v3713
        %v3727 = vadd.f32 %v3483, %v3718
        %3728 = vst [vmem:[%s341] sm:$0xff] %v3723
        %3729 = vst [vmem:[%s341 + $0x8] sm:$0xff] %v3724
        %s3730 = scalar_lea.vmem %s341, 16 [#allocation11]
        %3731 = vst [vmem:[%s3730 - $0x4] sm:$0xf0] %v3725
        %3732 = vst [vmem:[%s3730 + $0x4] sm:$0xff] %v3726
        %3733 = vst [vmem:[%s3730 + $0xc] sm:$0xf] %v3727
        %s3734 = sand.u32 %s186, 1
        %s3735 = scalar_lea.sflag [#allocation5], %s3734
        %s3736 = sand.u32 %s186, 1
        %s3737 = smul.addr %s3736, 32
        %s3738 = scalar_lea.vmem [#allocation11], %s3737
        // Predicated region
        $region65: #{tpu_custom_call.1} parent=47 // pred_check
          %p3739 = pneg %p196
        $region66: #{tpu_custom_call.1} parent=47 // pred_check_branch
          %3741 = sbr.rel (%p3739) target = $region68
        $region67: #{tpu_custom_call.1} parent=47 // pred_region
          %s3742 = smul.u32 2, %s26
          %s3744 = ssub.s32 512, 512
          %3745 = vsyncadd %s3735, %s3744
          %s3746 = smul.addr %s3742, 2
          %s3747 = smul.addr %s3746, 128
          %s3748 = scalar_lea.hbm %s7, %s3747
          %s3749 = sshll.u32 %s3738, 4
          %s3750 = int_to_ptr.vmem [resolvable:$true] %s3749
          %3755 = dma.vmem_to_hbm [thread:$0]  %s3750, 512, %s3748, %s3735, 128, 128, 8
        $region68: #{tpu_custom_call.1} parent=47 // pred_fallthru
          _
      $region48: #{tpu_custom_call.1} parent=5 // pred_fallthru
        _
      %p3756 = scmp.le.s32.totalorder 2, %s21
      // Predicated region
      $region69: #{tpu_custom_call.1} parent=5 // pred_check
        %p3757 = pneg %p3756
      $region70: #{tpu_custom_call.1} parent=5 // pred_check_branch
        %3759 = sbr.rel (%p3757) target = $region72
      $region71: #{tpu_custom_call.1} parent=5 // pred_region
        %s3760 = ssub.s32 %s21, 2
        // Predicated region
        $region73: #{tpu_custom_call.1} parent=71 // pred_check
          %p3761 = pneg %p202
        $region74: #{tpu_custom_call.1} parent=71 // pred_check_branch
          %3763 = sbr.rel (%p3761) target = $region76
        $region75: #{tpu_custom_call.1} parent=71 // pred_region
          %s3764 = sand.u32 %s187, 1
          %s3765 = scalar_lea.sflag [#allocation5], %s3764
          %s3766 = sand.u32 %s187, 1
          %s3767 = smul.addr %s3766, 32
          %s3768 = scalar_lea.vmem [#allocation11], %s3767
          %3769 = dma.done %s3765, 512
        $region76: #{tpu_custom_call.1} parent=71 // pred_fallthru
          _
      $region72: #{tpu_custom_call.1} parent=5 // pred_fallthru
        _
    $region6: #{tpu_custom_call.1} parent=1 // loop_footer
      %s25 = sadd.s32 1, %s21
    $region7: #{tpu_custom_call.1} parent=1 // loop_footer_branch
      %20 = sbr.rel target = $region3
    $region8: #{tpu_custom_call.1} parent=1 // loop_exit
      _
    %3770 = vsyncpa [#allocation4], 1
    %s3771 = scalar_lea.sflag [#allocation4], 1
    %3772 = vsyncpa %s3771, 1
    %3773 = vsyncpa [#allocation7], 1
    %3774 = vsyncpa [#allocation10], 1
    %3775 = vsyncpa [#allocation5], 1
    %s3776 = scalar_lea.sflag [#allocation5], 1
    %3777 = vsyncpa %s3776, 1

</llo_original>
